<compile_context>
chip_gen: v5e
topology: v5e:2x2
jax: 0.10.0
libtpu: 0.0.40
codegen_flags: <defaults>
</compile_context>

<pallas_src>
import jax
import jax.numpy as jnp
from jax import lax
from jax.experimental import pallas as pl
from jax.experimental.pallas import tpu as pltpu


# --------------------------------------------------------------------------
# Fused PSABlock kernel factory (one grid step per batch element)
# --------------------------------------------------------------------------
def _make_psa_kernel(H, W, C, num_heads, key_dim, head_dim):
    N = H * W
    nh_kd = num_heads * key_dim          # total q (= total k) channels
    v_off = 2 * nh_kd                    # first v column (lane-aligned: == C here)

    def kernel(x_ref, wqkv_ref, bqkv_ref, wpe_ref, bpe_ref, wproj_ref, bproj_ref,
               w1_ref, b1_ref, w2_ref, b2_ref, o_ref):
        x = x_ref[...]                                   # (N, C) f32
        xb = x.astype(jnp.bfloat16)

        # ---- qkv: 1x1 conv (+ folded BN); attention scale pre-folded into q columns
        qkv = jnp.dot(xb, wqkv_ref[...],
                      preferred_element_type=jnp.float32) + bqkv_ref[...]   # (N, h)

        qk_bf = qkv[:, :v_off].astype(jnp.bfloat16)      # (N, 2*nh_kd)
        v_f32 = qkv[:, v_off:]                           # (N, C) lane-aligned slice
        v_bf = v_f32.astype(jnp.bfloat16)

        # ---- depthwise 3x3 positional-encoding conv on the v image (zero padding).
        # Each spatial tap is a zero-padded shift of the flattened (N, C) map along
        # the sublane axis (the zero pad handles the row bounds exactly); only the
        # dx != 0 taps additionally need a column-edge mask.  No halo scratch.
        wpe = wpe_ref[...]                               # (9, C) f32, row = (dy+1)*3+(dx+1)
        idx = lax.broadcasted_iota(jnp.int32, (N, 1), 0)
        col = (jnp.bitwise_and(idx, W - 1) if (W & (W - 1)) == 0
               else lax.rem(idx, W))
        not_left = (col >= 1).astype(jnp.float32)        # mask for dx == -1
        not_right = (col <= W - 2).astype(jnp.float32)   # mask for dx == +1

        def shifted(delta):
            # s[n] = v[n + delta] if 0 <= n + delta < N else 0
            if delta == 0:
                return v_f32
            if delta > 0:
                pad = jnp.zeros((delta, C), jnp.float32)
                return jnp.concatenate([v_f32[delta:, :], pad], axis=0)
            pad = jnp.zeros((-delta, C), jnp.float32)
            return jnp.concatenate([pad, v_f32[:N + delta, :]], axis=0)

        pe = v_f32 * wpe[4:5, :]                         # center tap (dy=0, dx=0)
        for dy in (-1, 0, 1):
            for dx in (-1, 0, 1):
                if dy == 0 and dx == 0:
                    continue
                t = (dy + 1) * 3 + (dx + 1)
                contrib = shifted(dy * W + dx) * wpe[t:t + 1, :]
                if dx == -1:
                    contrib = contrib * not_left
                elif dx == 1:
                    contrib = contrib * not_right
                pe = pe + contrib
        pe = pe + bpe_ref[...]                           # (N, C)

        # ---- per-head softmax attention, accumulated directly into the proj output
        # (proj is linear, so sum_h (attn_h + pe_h) @ Wproj[rows_h] == proj(attn + pe))
        wproj = wproj_ref[...]                           # (C, C) bf16
        y = jnp.zeros((N, C), jnp.float32)
        for i in range(num_heads):
            q = qk_bf[:, i * key_dim:(i + 1) * key_dim]                  # (N, kd)
            k = qk_bf[:, nh_kd + i * key_dim:nh_kd + (i + 1) * key_dim]  # (N, kd)
            v = v_bf[:, i * head_dim:(i + 1) * head_dim]                 # (N, hd)
            s = lax.dot_general(q, k, (((1,), (1,)), ((), ())),
                                preferred_element_type=jnp.float32)      # (N, N)
            m = jnp.max(s, axis=-1, keepdims=True)
            pexp = jnp.exp(s - m)                                        # unnormalised
            r = jnp.sum(pexp, axis=-1, keepdims=True)
            attn = jnp.dot(pexp.astype(jnp.bfloat16), v,
                           preferred_element_type=jnp.float32)           # (N, hd)
            attn = attn * pl.reciprocal(r, approx=True)   # deferred softmax norm (EUP)
            pre = (attn + pe[:, i * head_dim:(i + 1) * head_dim]).astype(jnp.bfloat16)
            y = y + jnp.dot(pre, wproj[i * head_dim:(i + 1) * head_dim, :],
                            preferred_element_type=jnp.float32)

        x_attn = x + y + bproj_ref[...]                  # shortcut #1: x + Attention(x)

        # ---- FFN: Conv1x1(C->2C)+SiLU -> Conv1x1(2C->C), shortcut #2
        hdn = jnp.dot(x_attn.astype(jnp.bfloat16), w1_ref[...],
                      preferred_element_type=jnp.float32) + b1_ref[...]  # (N, 2C)
        hdn = hdn * jax.nn.sigmoid(hdn)                  # SiLU in f32 (v5e-safe)
        y2 = jnp.dot(hdn.astype(jnp.bfloat16), w2_ref[...],
                     preferred_element_type=jnp.float32) + b2_ref[...]   # (N, C)
        o_ref[...] = (x_attn + y2).astype(o_ref.dtype)

    return kernel


# --------------------------------------------------------------------------
# Public forward (NCHW in / NCHW out, like the PyTorch module)
# --------------------------------------------------------------------------
def psa_block_forward(x_nchw, p):
    B, C, H, W = x_nchw.shape
    N = H * W
    num_heads, key_dim, head_dim = p["num_heads"], p["key_dim"], p["head_dim"]
    h = C + 2 * key_dim * num_heads

    # NCHW -> lane-dense NHWC rows.
    # TODO(synk): in a full network keep activations NHWC end-to-end so these two
    # transposes (extra HBM passes of the activation) disappear.
    x = jnp.transpose(x_nchw, (0, 2, 3, 1)).reshape(B, N, C)

    kernel = _make_psa_kernel(H, W, C, num_heads, key_dim, head_dim)
    rep = lambda b: (0, 0)  # weights are grid-invariant blocks (fetched once)

    out = pl.pallas_call(
        kernel,
        out_shape=jax.ShapeDtypeStruct((B, N, C), x.dtype),
        grid=(B,),
        in_specs=[
            pl.BlockSpec((None, N, C), lambda b: (b, 0, 0)),   # x (per-batch block)
            pl.BlockSpec((C, h), rep),                         # qkv_w  (bf16)
            pl.BlockSpec((1, h), rep),                         # qkv_b  (f32)
            pl.BlockSpec((9, C), rep),                         # pe_w   (f32)
            pl.BlockSpec((1, C), rep),                         # pe_b   (f32)
            pl.BlockSpec((C, C), rep),                         # proj_w (bf16)
            pl.BlockSpec((1, C), rep),                         # proj_b (f32)
            pl.BlockSpec((C, 2 * C), rep),                     # ffn1_w (bf16)
            pl.BlockSpec((1, 2 * C), rep),                     # ffn1_b (f32)
            pl.BlockSpec((2 * C, C), rep),                     # ffn2_w (bf16)
            pl.BlockSpec((1, C), rep),                         # ffn2_b (f32)
        ],
        out_specs=pl.BlockSpec((None, N, C), lambda b: (b, 0, 0)),
        compiler_params=pltpu.CompilerParams(
            dimension_semantics=("parallel",),
            vmem_limit_bytes=32 * 1024 * 1024),
    )(x, p["qkv_w"], p["qkv_b"], p["pe_w"], p["pe_b"], p["proj_w"], p["proj_b"],
      p["ffn1_w"], p["ffn1_b"], p["ffn2_w"], p["ffn2_b"])

    return jnp.transpose(out.reshape(B, H, W, C), (0, 3, 1, 2))  # NHWC -> NCHW


# --------------------------------------------------------------------------
# Parameter init (deterministic, synthetic; eval-mode BN folded into conv weights)
# --------------------------------------------------------------------------
def _fold_bn(key, c, eps=1e-5):
    k1, k2, k3, k4 = jax.random.split(key, 4)
    gamma = jax.random.uniform(k1, (c,), jnp.float32, 0.8, 1.2)
    beta = 0.1 * jax.random.normal(k2, (c,), jnp.float32)
    mean = 0.1 * jax.random.normal(k3, (c,), jnp.float32)
    var = jax.random.uniform(k4, (c,), jnp.float32, 0.5, 1.5)
    scale = gamma / jnp.sqrt(var + eps)
    bias = beta - mean * scale
    return scale, bias


def init_psa_params(key, c, num_heads=4, attn_ratio=0.5):
    head_dim = c // num_heads
    key_dim = int(head_dim * attn_ratio)
    nh_kd = key_dim * num_heads
    h = c + 2 * nh_kd
    scale = float(key_dim) ** -0.5
    keys = jax.random.split(key, 10)

    def conv_bn(kw_, kb_, cin, cout):
        w = jax.random.normal(kw_, (cin, cout), jnp.float32) / jnp.sqrt(float(cin))
        s, b = _fold_bn(kb_, cout)
        return w * s[None, :], b.reshape(1, cout)

    p = {"num_heads": num_heads, "key_dim": key_dim, "head_dim": head_dim}

    # qkv = Conv(c, h, 1)+BN, columns ordered [q_all | k_all | v_all] (per-head-major
    # inside each group); attention scale folded into the q columns (weight AND bias).
    wqkv, bqkv = conv_bn(keys[0], keys[1], c, h)
    qscale = jnp.concatenate([jnp.full((nh_kd,), scale, jnp.float32),
                              jnp.ones((h - nh_kd,), jnp.float32)])
    p["qkv_w"] = (wqkv * qscale[None, :]).astype(jnp.bfloat16)
    p["qkv_b"] = bqkv * qscale[None, :]

    wproj, bproj = conv_bn(keys[2], keys[3], c, c)                     # Conv(c, c, 1)+BN
    p["proj_w"] = wproj.astype(jnp.bfloat16)
    p["proj_b"] = bproj

    # pe: depthwise Conv(c, c, 3, g=c)+BN; per-channel BN scale folded into taps.
    wpe = jax.random.normal(keys[4], (3, 3, c), jnp.float32) / 3.0
    s, b = _fold_bn(keys[5], c)
    p["pe_w"] = (wpe * s[None, None, :]).reshape(9, c)                 # row = kh*3+kw
    p["pe_b"] = b.reshape(1, c)

    w1, b1 = conv_bn(keys[6], keys[7], c, 2 * c)                       # Conv(c,2c,1)+BN+SiLU
    p["ffn1_w"] = w1.astype(jnp.bfloat16)
    p["ffn1_b"] = b1
    w2, b2 = conv_bn(keys[8], keys[9], 2 * c, c)                       # Conv(2c,c,1)+BN
    p["ffn2_w"] = w2.astype(jnp.bfloat16)
    p["ffn2_b"] = b2
    return p


# --------------------------------------------------------------------------
# Pure-JAX (f32) reference of the same forward, for a numerical sanity check
# --------------------------------------------------------------------------
def psa_reference(x_nchw, p):
    B, C, H, W = x_nchw.shape
    N = H * W
    num_heads, kd, hd = p["num_heads"], p["key_dim"], p["head_dim"]
    nh_kd = num_heads * kd
    x = jnp.transpose(x_nchw, (0, 2, 3, 1)).reshape(B, N, C)

    qkv = x @ p["qkv_w"].astype(jnp.float32) + p["qkv_b"]
    q = qkv[..., :nh_kd].reshape(B, N, num_heads, kd)
    k = qkv[..., nh_kd:2 * nh_kd].reshape(B, N, num_heads, kd)
    v = qkv[..., 2 * nh_kd:]
    vh = v.reshape(B, N, num_heads, hd)
    s = jnp.einsum("bqhd,bkhd->bhqk", q, k)            # scale already folded into q
    a = jax.nn.softmax(s, axis=-1)
    attn = jnp.einsum("bhqk,bkhd->bqhd", a, vh).reshape(B, N, C)

    v_img = v.reshape(B, H, W, C)
    v_pad = jnp.pad(v_img, ((0, 0), (1, 1), (1, 1), (0, 0)))
    wpe = p["pe_w"].reshape(3, 3, C)
    pe = jnp.zeros_like(v_img)
    for i in range(3):
        for j in range(3):
            pe = pe + v_pad[:, i:i + H, j:j + W, :] * wpe[i, j]
    pe = pe + p["pe_b"].reshape(1, 1, 1, C)

    pre = attn + pe.reshape(B, N, C)
    x_attn = x + (pre @ p["proj_w"].astype(jnp.float32) + p["proj_b"])
    hdn = x_attn @ p["ffn1_w"].astype(jnp.float32) + p["ffn1_b"]
    hdn = hdn * jax.nn.sigmoid(hdn)
    out = x_attn + (hdn @ p["ffn2_w"].astype(jnp.float32) + p["ffn2_b"])
    return jnp.transpose(out.reshape(B, H, W, C), (0, 3, 1, 2))


if __name__ == "__main__":
    key = jax.random.PRNGKey(0)
    k_x, k_p = jax.random.split(key)
    B, C, H, W = 2, 128, 16, 16          # lane-dense channels (C = 128), like the docstring
    num_heads = 4
    x = jax.random.normal(k_x, (B, C, H, W), jnp.float32)  # NCHW like PyTorch
    params = init_psa_params(k_p, C, num_heads=num_heads, attn_ratio=0.5)

    out = jax.block_until_ready(psa_block_forward(x, params))
    assert out.shape == (B, C, H, W)

    # Sanity check against the pure-JAX reference (tolerance covers bf16 MXU operands
    # and the approx EUP reciprocal used for the deferred softmax normalisation).
    ref = jax.block_until_ready(psa_reference(x, params))
    err = float(jnp.max(jnp.abs(out - ref)))
    atol = 0.05 + 0.05 * float(jnp.max(jnp.abs(ref)))
    assert err < atol, f"max abs error vs reference: {err} (allowed {atol})"

    print("KERNEL_OK")
</pallas_src>

<mosaic_0001>
module attributes {stable_mosaic.version = 11 : i64} {
  func.func @kernel(%arg0: i32, %arg1: memref<1x256x128xf32, #tpu.memory_space<vmem>>, %arg2: memref<128x256xbf16, #tpu.memory_space<vmem>>, %arg3: memref<1x256xf32, #tpu.memory_space<vmem>>, %arg4: memref<9x128xf32, #tpu.memory_space<vmem>>, %arg5: memref<1x128xf32, #tpu.memory_space<vmem>>, %arg6: memref<128x128xbf16, #tpu.memory_space<vmem>>, %arg7: memref<1x128xf32, #tpu.memory_space<vmem>>, %arg8: memref<128x256xbf16, #tpu.memory_space<vmem>>, %arg9: memref<1x256xf32, #tpu.memory_space<vmem>>, %arg10: memref<256x128xbf16, #tpu.memory_space<vmem>>, %arg11: memref<1x128xf32, #tpu.memory_space<vmem>>, %arg12: memref<1x256x128xf32, #tpu.memory_space<vmem>>) attributes {dimension_semantics = [#tpu.dimension_semantics<parallel>], iteration_bounds = array<i64: 2>, scalar_prefetch = 0 : i64, scratch_operands = 0 : i64, tpu.core_type = #tpu.core_type<tc>, window_params = [{transform_indices = @transform_0, window_bounds = array<i64: 1, 256, 128>}, {pipeline_mode = #tpu.pipeline_mode<synchronous>, transform_indices = @transform_1, window_bounds = array<i64: 128, 256>}, {pipeline_mode = #tpu.pipeline_mode<synchronous>, transform_indices = @transform_2, window_bounds = array<i64: 1, 256>}, {pipeline_mode = #tpu.pipeline_mode<synchronous>, transform_indices = @transform_3, window_bounds = array<i64: 9, 128>}, {pipeline_mode = #tpu.pipeline_mode<synchronous>, transform_indices = @transform_4, window_bounds = array<i64: 1, 128>}, {pipeline_mode = #tpu.pipeline_mode<synchronous>, transform_indices = @transform_5, window_bounds = array<i64: 128, 128>}, {pipeline_mode = #tpu.pipeline_mode<synchronous>, transform_indices = @transform_6, window_bounds = array<i64: 1, 128>}, {pipeline_mode = #tpu.pipeline_mode<synchronous>, transform_indices = @transform_7, window_bounds = array<i64: 128, 256>}, {pipeline_mode = #tpu.pipeline_mode<synchronous>, transform_indices = @transform_8, window_bounds = array<i64: 1, 256>}, {pipeline_mode = #tpu.pipeline_mode<synchronous>, transform_indices = @transform_9, window_bounds = array<i64: 256, 128>}, {pipeline_mode = #tpu.pipeline_mode<synchronous>, transform_indices = @transform_10, window_bounds = array<i64: 1, 128>}, {transform_indices = @transform_11, window_bounds = array<i64: 1, 256, 128>}]} {
    %c0 = arith.constant 0 : index
    %c0_0 = arith.constant 0 : index
    %c0_1 = arith.constant 0 : index
    %0 = vector.load %arg1[%c0, %c0_0, %c0_1] : memref<1x256x128xf32, #tpu.memory_space<vmem>>, vector<1x256x128xf32>
    %1 = vector.shape_cast %0 : vector<1x256x128xf32> to vector<256x128xf32>
    %2 = arith.truncf %1 : vector<256x128xf32> to vector<256x128xbf16>
    %c0_2 = arith.constant 0 : index
    %c0_3 = arith.constant 0 : index
    %3 = vector.load %arg2[%c0_2, %c0_3] : memref<128x256xbf16, #tpu.memory_space<vmem>>, vector<128x256xbf16>
    %cst = arith.constant dense<0.000000e+00> : vector<256x256xf32>
    %4 = tpu.matmul %2, %3, %cst {dimension_numbers = #tpu.dot_dimension_numbers<[1], [0], [0], [1], [0, 0, 1, 1], [], []>} : vector<256x128xbf16>, vector<128x256xbf16>, vector<256x256xf32> -> vector<256x256xf32>
    %c0_4 = arith.constant 0 : index
    %c0_5 = arith.constant 0 : index
    %5 = vector.load %arg3[%c0_4, %c0_5] : memref<1x256xf32, #tpu.memory_space<vmem>>, vector<1x256xf32>
    %6 = vector.broadcast %5 : vector<1x256xf32> to vector<256x256xf32>
    %7 = arith.addf %4, %6 : vector<256x256xf32>
    %8 = vector.extract_strided_slice %7 {offsets = [0, 0], sizes = [256, 128], strides = [1, 1]} : vector<256x256xf32> to vector<256x128xf32>
    %9 = arith.truncf %8 : vector<256x128xf32> to vector<256x128xbf16>
    %10 = vector.extract_strided_slice %7 {offsets = [0, 128], sizes = [256, 128], strides = [1, 1]} : vector<256x256xf32> to vector<256x128xf32>
    %11 = arith.truncf %10 : vector<256x128xf32> to vector<256x128xbf16>
    %c0_6 = arith.constant 0 : index
    %c0_7 = arith.constant 0 : index
    %12 = vector.load %arg4[%c0_6, %c0_7] : memref<9x128xf32, #tpu.memory_space<vmem>>, vector<9x128xf32>
    %13 = tpu.iota {dimensions = array<i32: 0>} : vector<256x1xi32>
    %c15_i32 = arith.constant 15 : i32
    %14 = vector.broadcast %c15_i32 : i32 to vector<256x1xi32>
    %15 = arith.andi %13, %14 : vector<256x1xi32>
    %c1_i32 = arith.constant 1 : i32
    %16 = vector.broadcast %c1_i32 : i32 to vector<256x1xi32>
    %17 = arith.cmpi sge, %15, %16 : vector<256x1xi32>
    %18 = arith.extui %17 : vector<256x1xi1> to vector<256x1xi32>
    %19 = arith.sitofp %18 : vector<256x1xi32> to vector<256x1xf32>
    %c14_i32 = arith.constant 14 : i32
    %20 = vector.broadcast %c14_i32 : i32 to vector<256x1xi32>
    %21 = arith.cmpi sle, %15, %20 : vector<256x1xi32>
    %22 = arith.extui %21 : vector<256x1xi1> to vector<256x1xi32>
    %23 = arith.sitofp %22 : vector<256x1xi32> to vector<256x1xf32>
    %24 = vector.extract_strided_slice %12 {offsets = [4, 0], sizes = [1, 128], strides = [1, 1]} : vector<9x128xf32> to vector<1x128xf32>
    %25 = vector.broadcast %24 : vector<1x128xf32> to vector<256x128xf32>
    %26 = arith.mulf %10, %25 : vector<256x128xf32>
    %cst_8 = arith.constant 0.000000e+00 : f32
    %27 = vector.broadcast %cst_8 : f32 to vector<17x128xf32>
    %28 = vector.extract_strided_slice %10 {offsets = [0, 0], sizes = [239, 128], strides = [1, 1]} : vector<256x128xf32> to vector<239x128xf32>
    %29 = tpu.concatenate %27, %28 in 0 : vector<17x128xf32>, vector<239x128xf32> -> vector<256x128xf32>
    %30 = vector.extract_strided_slice %12 {offsets = [0, 0], sizes = [1, 128], strides = [1, 1]} : vector<9x128xf32> to vector<1x128xf32>
    %31 = vector.broadcast %30 : vector<1x128xf32> to vector<256x128xf32>
    %32 = arith.mulf %29, %31 : vector<256x128xf32>
    %33 = vector.broadcast %19 : vector<256x1xf32> to vector<256x128xf32>
    %34 = arith.mulf %32, %33 : vector<256x128xf32>
    %35 = arith.addf %26, %34 : vector<256x128xf32>
    %cst_9 = arith.constant 0.000000e+00 : f32
    %36 = vector.broadcast %cst_9 : f32 to vector<16x128xf32>
    %37 = vector.extract_strided_slice %10 {offsets = [0, 0], sizes = [240, 128], strides = [1, 1]} : vector<256x128xf32> to vector<240x128xf32>
    %38 = tpu.concatenate %36, %37 in 0 : vector<16x128xf32>, vector<240x128xf32> -> vector<256x128xf32>
    %39 = vector.extract_strided_slice %12 {offsets = [1, 0], sizes = [1, 128], strides = [1, 1]} : vector<9x128xf32> to vector<1x128xf32>
    %40 = vector.broadcast %39 : vector<1x128xf32> to vector<256x128xf32>
    %41 = arith.mulf %38, %40 : vector<256x128xf32>
    %42 = arith.addf %35, %41 : vector<256x128xf32>
    %cst_10 = arith.constant 0.000000e+00 : f32
    %43 = vector.broadcast %cst_10 : f32 to vector<15x128xf32>
    %44 = vector.extract_strided_slice %10 {offsets = [0, 0], sizes = [241, 128], strides = [1, 1]} : vector<256x128xf32> to vector<241x128xf32>
    %45 = tpu.concatenate %43, %44 in 0 : vector<15x128xf32>, vector<241x128xf32> -> vector<256x128xf32>
    %46 = vector.extract_strided_slice %12 {offsets = [2, 0], sizes = [1, 128], strides = [1, 1]} : vector<9x128xf32> to vector<1x128xf32>
    %47 = vector.broadcast %46 : vector<1x128xf32> to vector<256x128xf32>
    %48 = arith.mulf %45, %47 : vector<256x128xf32>
    %49 = vector.broadcast %23 : vector<256x1xf32> to vector<256x128xf32>
    %50 = arith.mulf %48, %49 : vector<256x128xf32>
    %51 = arith.addf %42, %50 : vector<256x128xf32>
    %cst_11 = arith.constant 0.000000e+00 : f32
    %52 = vector.broadcast %cst_11 : f32 to vector<1x128xf32>
    %53 = vector.extract_strided_slice %10 {offsets = [0, 0], sizes = [255, 128], strides = [1, 1]} : vector<256x128xf32> to vector<255x128xf32>
    %54 = tpu.concatenate %52, %53 in 0 : vector<1x128xf32>, vector<255x128xf32> -> vector<256x128xf32>
    %55 = vector.extract_strided_slice %12 {offsets = [3, 0], sizes = [1, 128], strides = [1, 1]} : vector<9x128xf32> to vector<1x128xf32>
    %56 = vector.broadcast %55 : vector<1x128xf32> to vector<256x128xf32>
    %57 = arith.mulf %54, %56 : vector<256x128xf32>
    %58 = vector.broadcast %19 : vector<256x1xf32> to vector<256x128xf32>
    %59 = arith.mulf %57, %58 : vector<256x128xf32>
    %60 = arith.addf %51, %59 : vector<256x128xf32>
    %cst_12 = arith.constant 0.000000e+00 : f32
    %61 = vector.broadcast %cst_12 : f32 to vector<1x128xf32>
    %62 = vector.extract_strided_slice %10 {offsets = [1, 0], sizes = [255, 128], strides = [1, 1]} : vector<256x128xf32> to vector<255x128xf32>
    %63 = tpu.concatenate %62, %61 in 0 : vector<255x128xf32>, vector<1x128xf32> -> vector<256x128xf32>
    %64 = vector.extract_strided_slice %12 {offsets = [5, 0], sizes = [1, 128], strides = [1, 1]} : vector<9x128xf32> to vector<1x128xf32>
    %65 = vector.broadcast %64 : vector<1x128xf32> to vector<256x128xf32>
    %66 = arith.mulf %63, %65 : vector<256x128xf32>
    %67 = vector.broadcast %23 : vector<256x1xf32> to vector<256x128xf32>
    %68 = arith.mulf %66, %67 : vector<256x128xf32>
    %69 = arith.addf %60, %68 : vector<256x128xf32>
    %cst_13 = arith.constant 0.000000e+00 : f32
    %70 = vector.broadcast %cst_13 : f32 to vector<15x128xf32>
    %71 = vector.extract_strided_slice %10 {offsets = [15, 0], sizes = [241, 128], strides = [1, 1]} : vector<256x128xf32> to vector<241x128xf32>
    %72 = tpu.concatenate %71, %70 in 0 : vector<241x128xf32>, vector<15x128xf32> -> vector<256x128xf32>
    %73 = vector.extract_strided_slice %12 {offsets = [6, 0], sizes = [1, 128], strides = [1, 1]} : vector<9x128xf32> to vector<1x128xf32>
    %74 = vector.broadcast %73 : vector<1x128xf32> to vector<256x128xf32>
    %75 = arith.mulf %72, %74 : vector<256x128xf32>
    %76 = vector.broadcast %19 : vector<256x1xf32> to vector<256x128xf32>
    %77 = arith.mulf %75, %76 : vector<256x128xf32>
    %78 = arith.addf %69, %77 : vector<256x128xf32>
    %cst_14 = arith.constant 0.000000e+00 : f32
    %79 = vector.broadcast %cst_14 : f32 to vector<16x128xf32>
    %80 = vector.extract_strided_slice %10 {offsets = [16, 0], sizes = [240, 128], strides = [1, 1]} : vector<256x128xf32> to vector<240x128xf32>
    %81 = tpu.concatenate %80, %79 in 0 : vector<240x128xf32>, vector<16x128xf32> -> vector<256x128xf32>
    %82 = vector.extract_strided_slice %12 {offsets = [7, 0], sizes = [1, 128], strides = [1, 1]} : vector<9x128xf32> to vector<1x128xf32>
    %83 = vector.broadcast %82 : vector<1x128xf32> to vector<256x128xf32>
    %84 = arith.mulf %81, %83 : vector<256x128xf32>
    %85 = arith.addf %78, %84 : vector<256x128xf32>
    %cst_15 = arith.constant 0.000000e+00 : f32
    %86 = vector.broadcast %cst_15 : f32 to vector<17x128xf32>
    %87 = vector.extract_strided_slice %10 {offsets = [17, 0], sizes = [239, 128], strides = [1, 1]} : vector<256x128xf32> to vector<239x128xf32>
    %88 = tpu.concatenate %87, %86 in 0 : vector<239x128xf32>, vector<17x128xf32> -> vector<256x128xf32>
    %89 = vector.extract_strided_slice %12 {offsets = [8, 0], sizes = [1, 128], strides = [1, 1]} : vector<9x128xf32> to vector<1x128xf32>
    %90 = vector.broadcast %89 : vector<1x128xf32> to vector<256x128xf32>
    %91 = arith.mulf %88, %90 : vector<256x128xf32>
    %92 = vector.broadcast %23 : vector<256x1xf32> to vector<256x128xf32>
    %93 = arith.mulf %91, %92 : vector<256x128xf32>
    %94 = arith.addf %85, %93 : vector<256x128xf32>
    %c0_16 = arith.constant 0 : index
    %c0_17 = arith.constant 0 : index
    %95 = vector.load %arg5[%c0_16, %c0_17] : memref<1x128xf32, #tpu.memory_space<vmem>>, vector<1x128xf32>
    %96 = vector.broadcast %95 : vector<1x128xf32> to vector<256x128xf32>
    %97 = arith.addf %94, %96 : vector<256x128xf32>
    %c0_18 = arith.constant 0 : index
    %c0_19 = arith.constant 0 : index
    %98 = vector.load %arg6[%c0_18, %c0_19] : memref<128x128xbf16, #tpu.memory_space<vmem>>, vector<128x128xbf16>
    %cst_20 = arith.constant 0.000000e+00 : f32
    %99 = vector.broadcast %cst_20 : f32 to vector<256x128xf32>
    %100 = vector.extract_strided_slice %9 {offsets = [0, 0], sizes = [256, 16], strides = [1, 1]} : vector<256x128xbf16> to vector<256x16xbf16>
    %101 = vector.extract_strided_slice %9 {offsets = [0, 64], sizes = [256, 16], strides = [1, 1]} : vector<256x128xbf16> to vector<256x16xbf16>
    %102 = vector.extract_strided_slice %11 {offsets = [0, 0], sizes = [256, 32], strides = [1, 1]} : vector<256x128xbf16> to vector<256x32xbf16>
    %cst_21 = arith.constant dense<0.000000e+00> : vector<256x256xf32>
    %103 = tpu.matmul %100, %101, %cst_21 {dimension_numbers = #tpu.dot_dimension_numbers<[1], [1], [0], [0], [0, 0, 1, 0], [], []>} : vector<256x16xbf16>, vector<256x16xbf16>, vector<256x256xf32> -> vector<256x256xf32>
    %cst_22 = arith.constant dense<0xFF800000> : vector<256xf32>
    %104 = vector.multi_reduction <maximumf>, %103, %cst_22 [1] : vector<256x256xf32> to vector<256xf32>
    %105 = vector.shape_cast %104 : vector<256xf32> to vector<256x1xf32>
    %106 = vector.broadcast %105 : vector<256x1xf32> to vector<256x256xf32>
    %107 = arith.subf %103, %106 : vector<256x256xf32>
    %108 = math.exp %107 : vector<256x256xf32>
    %cst_23 = arith.constant dense<0.000000e+00> : vector<256xf32>
    %109 = vector.multi_reduction <add>, %108, %cst_23 [1] : vector<256x256xf32> to vector<256xf32>
    %110 = vector.shape_cast %109 : vector<256xf32> to vector<256x1xf32>
    %111 = arith.truncf %108 : vector<256x256xf32> to vector<256x256xbf16>
    %cst_24 = arith.constant dense<0.000000e+00> : vector<256x32xf32>
    %112 = tpu.matmul %111, %102, %cst_24 {dimension_numbers = #tpu.dot_dimension_numbers<[1], [0], [0], [1], [0, 0, 1, 1], [], []>} : vector<256x256xbf16>, vector<256x32xbf16>, vector<256x32xf32> -> vector<256x32xf32>
    %113 = tpu.reciprocal %110 {approx = true} : vector<256x1xf32> -> vector<256x1xf32>
    %114 = vector.broadcast %113 : vector<256x1xf32> to vector<256x32xf32>
    %115 = arith.mulf %112, %114 : vector<256x32xf32>
    %116 = vector.extract_strided_slice %97 {offsets = [0, 0], sizes = [256, 32], strides = [1, 1]} : vector<256x128xf32> to vector<256x32xf32>
    %117 = arith.addf %115, %116 : vector<256x32xf32>
    %118 = arith.truncf %117 : vector<256x32xf32> to vector<256x32xbf16>
    %119 = vector.extract_strided_slice %98 {offsets = [0, 0], sizes = [32, 128], strides = [1, 1]} : vector<128x128xbf16> to vector<32x128xbf16>
    %cst_25 = arith.constant dense<0.000000e+00> : vector<256x128xf32>
    %120 = tpu.matmul %118, %119, %cst_25 {dimension_numbers = #tpu.dot_dimension_numbers<[1], [0], [0], [1], [0, 0, 1, 1], [], []>} : vector<256x32xbf16>, vector<32x128xbf16>, vector<256x128xf32> -> vector<256x128xf32>
    %121 = arith.addf %99, %120 : vector<256x128xf32>
    %122 = vector.extract_strided_slice %9 {offsets = [0, 16], sizes = [256, 16], strides = [1, 1]} : vector<256x128xbf16> to vector<256x16xbf16>
    %123 = vector.extract_strided_slice %9 {offsets = [0, 80], sizes = [256, 16], strides = [1, 1]} : vector<256x128xbf16> to vector<256x16xbf16>
    %124 = vector.extract_strided_slice %11 {offsets = [0, 32], sizes = [256, 32], strides = [1, 1]} : vector<256x128xbf16> to vector<256x32xbf16>
    %cst_26 = arith.constant dense<0.000000e+00> : vector<256x256xf32>
    %125 = tpu.matmul %122, %123, %cst_26 {dimension_numbers = #tpu.dot_dimension_numbers<[1], [1], [0], [0], [0, 0, 1, 0], [], []>} : vector<256x16xbf16>, vector<256x16xbf16>, vector<256x256xf32> -> vector<256x256xf32>
    %cst_27 = arith.constant dense<0xFF800000> : vector<256xf32>
    %126 = vector.multi_reduction <maximumf>, %125, %cst_27 [1] : vector<256x256xf32> to vector<256xf32>
    %127 = vector.shape_cast %126 : vector<256xf32> to vector<256x1xf32>
    %128 = vector.broadcast %127 : vector<256x1xf32> to vector<256x256xf32>
    %129 = arith.subf %125, %128 : vector<256x256xf32>
    %130 = math.exp %129 : vector<256x256xf32>
    %cst_28 = arith.constant dense<0.000000e+00> : vector<256xf32>
    %131 = vector.multi_reduction <add>, %130, %cst_28 [1] : vector<256x256xf32> to vector<256xf32>
    %132 = vector.shape_cast %131 : vector<256xf32> to vector<256x1xf32>
    %133 = arith.truncf %130 : vector<256x256xf32> to vector<256x256xbf16>
    %cst_29 = arith.constant dense<0.000000e+00> : vector<256x32xf32>
    %134 = tpu.matmul %133, %124, %cst_29 {dimension_numbers = #tpu.dot_dimension_numbers<[1], [0], [0], [1], [0, 0, 1, 1], [], []>} : vector<256x256xbf16>, vector<256x32xbf16>, vector<256x32xf32> -> vector<256x32xf32>
    %135 = tpu.reciprocal %132 {approx = true} : vector<256x1xf32> -> vector<256x1xf32>
    %136 = vector.broadcast %135 : vector<256x1xf32> to vector<256x32xf32>
    %137 = arith.mulf %134, %136 : vector<256x32xf32>
    %138 = vector.extract_strided_slice %97 {offsets = [0, 32], sizes = [256, 32], strides = [1, 1]} : vector<256x128xf32> to vector<256x32xf32>
    %139 = arith.addf %137, %138 : vector<256x32xf32>
    %140 = arith.truncf %139 : vector<256x32xf32> to vector<256x32xbf16>
    %141 = vector.extract_strided_slice %98 {offsets = [32, 0], sizes = [32, 128], strides = [1, 1]} : vector<128x128xbf16> to vector<32x128xbf16>
    %cst_30 = arith.constant dense<0.000000e+00> : vector<256x128xf32>
    %142 = tpu.matmul %140, %141, %cst_30 {dimension_numbers = #tpu.dot_dimension_numbers<[1], [0], [0], [1], [0, 0, 1, 1], [], []>} : vector<256x32xbf16>, vector<32x128xbf16>, vector<256x128xf32> -> vector<256x128xf32>
    %143 = arith.addf %121, %142 : vector<256x128xf32>
    %144 = vector.extract_strided_slice %9 {offsets = [0, 32], sizes = [256, 16], strides = [1, 1]} : vector<256x128xbf16> to vector<256x16xbf16>
    %145 = vector.extract_strided_slice %9 {offsets = [0, 96], sizes = [256, 16], strides = [1, 1]} : vector<256x128xbf16> to vector<256x16xbf16>
    %146 = vector.extract_strided_slice %11 {offsets = [0, 64], sizes = [256, 32], strides = [1, 1]} : vector<256x128xbf16> to vector<256x32xbf16>
    %cst_31 = arith.constant dense<0.000000e+00> : vector<256x256xf32>
    %147 = tpu.matmul %144, %145, %cst_31 {dimension_numbers = #tpu.dot_dimension_numbers<[1], [1], [0], [0], [0, 0, 1, 0], [], []>} : vector<256x16xbf16>, vector<256x16xbf16>, vector<256x256xf32> -> vector<256x256xf32>
    %cst_32 = arith.constant dense<0xFF800000> : vector<256xf32>
    %148 = vector.multi_reduction <maximumf>, %147, %cst_32 [1] : vector<256x256xf32> to vector<256xf32>
    %149 = vector.shape_cast %148 : vector<256xf32> to vector<256x1xf32>
    %150 = vector.broadcast %149 : vector<256x1xf32> to vector<256x256xf32>
    %151 = arith.subf %147, %150 : vector<256x256xf32>
    %152 = math.exp %151 : vector<256x256xf32>
    %cst_33 = arith.constant dense<0.000000e+00> : vector<256xf32>
    %153 = vector.multi_reduction <add>, %152, %cst_33 [1] : vector<256x256xf32> to vector<256xf32>
    %154 = vector.shape_cast %153 : vector<256xf32> to vector<256x1xf32>
    %155 = arith.truncf %152 : vector<256x256xf32> to vector<256x256xbf16>
    %cst_34 = arith.constant dense<0.000000e+00> : vector<256x32xf32>
    %156 = tpu.matmul %155, %146, %cst_34 {dimension_numbers = #tpu.dot_dimension_numbers<[1], [0], [0], [1], [0, 0, 1, 1], [], []>} : vector<256x256xbf16>, vector<256x32xbf16>, vector<256x32xf32> -> vector<256x32xf32>
    %157 = tpu.reciprocal %154 {approx = true} : vector<256x1xf32> -> vector<256x1xf32>
    %158 = vector.broadcast %157 : vector<256x1xf32> to vector<256x32xf32>
    %159 = arith.mulf %156, %158 : vector<256x32xf32>
    %160 = vector.extract_strided_slice %97 {offsets = [0, 64], sizes = [256, 32], strides = [1, 1]} : vector<256x128xf32> to vector<256x32xf32>
    %161 = arith.addf %159, %160 : vector<256x32xf32>
    %162 = arith.truncf %161 : vector<256x32xf32> to vector<256x32xbf16>
    %163 = vector.extract_strided_slice %98 {offsets = [64, 0], sizes = [32, 128], strides = [1, 1]} : vector<128x128xbf16> to vector<32x128xbf16>
    %cst_35 = arith.constant dense<0.000000e+00> : vector<256x128xf32>
    %164 = tpu.matmul %162, %163, %cst_35 {dimension_numbers = #tpu.dot_dimension_numbers<[1], [0], [0], [1], [0, 0, 1, 1], [], []>} : vector<256x32xbf16>, vector<32x128xbf16>, vector<256x128xf32> -> vector<256x128xf32>
    %165 = arith.addf %143, %164 : vector<256x128xf32>
    %166 = vector.extract_strided_slice %9 {offsets = [0, 48], sizes = [256, 16], strides = [1, 1]} : vector<256x128xbf16> to vector<256x16xbf16>
    %167 = vector.extract_strided_slice %9 {offsets = [0, 112], sizes = [256, 16], strides = [1, 1]} : vector<256x128xbf16> to vector<256x16xbf16>
    %168 = vector.extract_strided_slice %11 {offsets = [0, 96], sizes = [256, 32], strides = [1, 1]} : vector<256x128xbf16> to vector<256x32xbf16>
    %cst_36 = arith.constant dense<0.000000e+00> : vector<256x256xf32>
    %169 = tpu.matmul %166, %167, %cst_36 {dimension_numbers = #tpu.dot_dimension_numbers<[1], [1], [0], [0], [0, 0, 1, 0], [], []>} : vector<256x16xbf16>, vector<256x16xbf16>, vector<256x256xf32> -> vector<256x256xf32>
    %cst_37 = arith.constant dense<0xFF800000> : vector<256xf32>
    %170 = vector.multi_reduction <maximumf>, %169, %cst_37 [1] : vector<256x256xf32> to vector<256xf32>
    %171 = vector.shape_cast %170 : vector<256xf32> to vector<256x1xf32>
    %172 = vector.broadcast %171 : vector<256x1xf32> to vector<256x256xf32>
    %173 = arith.subf %169, %172 : vector<256x256xf32>
    %174 = math.exp %173 : vector<256x256xf32>
    %cst_38 = arith.constant dense<0.000000e+00> : vector<256xf32>
    %175 = vector.multi_reduction <add>, %174, %cst_38 [1] : vector<256x256xf32> to vector<256xf32>
    %176 = vector.shape_cast %175 : vector<256xf32> to vector<256x1xf32>
    %177 = arith.truncf %174 : vector<256x256xf32> to vector<256x256xbf16>
    %cst_39 = arith.constant dense<0.000000e+00> : vector<256x32xf32>
    %178 = tpu.matmul %177, %168, %cst_39 {dimension_numbers = #tpu.dot_dimension_numbers<[1], [0], [0], [1], [0, 0, 1, 1], [], []>} : vector<256x256xbf16>, vector<256x32xbf16>, vector<256x32xf32> -> vector<256x32xf32>
    %179 = tpu.reciprocal %176 {approx = true} : vector<256x1xf32> -> vector<256x1xf32>
    %180 = vector.broadcast %179 : vector<256x1xf32> to vector<256x32xf32>
    %181 = arith.mulf %178, %180 : vector<256x32xf32>
    %182 = vector.extract_strided_slice %97 {offsets = [0, 96], sizes = [256, 32], strides = [1, 1]} : vector<256x128xf32> to vector<256x32xf32>
    %183 = arith.addf %181, %182 : vector<256x32xf32>
    %184 = arith.truncf %183 : vector<256x32xf32> to vector<256x32xbf16>
    %185 = vector.extract_strided_slice %98 {offsets = [96, 0], sizes = [32, 128], strides = [1, 1]} : vector<128x128xbf16> to vector<32x128xbf16>
    %cst_40 = arith.constant dense<0.000000e+00> : vector<256x128xf32>
    %186 = tpu.matmul %184, %185, %cst_40 {dimension_numbers = #tpu.dot_dimension_numbers<[1], [0], [0], [1], [0, 0, 1, 1], [], []>} : vector<256x32xbf16>, vector<32x128xbf16>, vector<256x128xf32> -> vector<256x128xf32>
    %187 = arith.addf %165, %186 : vector<256x128xf32>
    %188 = arith.addf %1, %187 : vector<256x128xf32>
    %c0_41 = arith.constant 0 : index
    %c0_42 = arith.constant 0 : index
    %189 = vector.load %arg7[%c0_41, %c0_42] : memref<1x128xf32, #tpu.memory_space<vmem>>, vector<1x128xf32>
    %190 = vector.broadcast %189 : vector<1x128xf32> to vector<256x128xf32>
    %191 = arith.addf %188, %190 : vector<256x128xf32>
    %192 = arith.truncf %191 : vector<256x128xf32> to vector<256x128xbf16>
    %c0_43 = arith.constant 0 : index
    %c0_44 = arith.constant 0 : index
    %193 = vector.load %arg8[%c0_43, %c0_44] : memref<128x256xbf16, #tpu.memory_space<vmem>>, vector<128x256xbf16>
    %cst_45 = arith.constant dense<0.000000e+00> : vector<256x256xf32>
    %194 = tpu.matmul %192, %193, %cst_45 {dimension_numbers = #tpu.dot_dimension_numbers<[1], [0], [0], [1], [0, 0, 1, 1], [], []>} : vector<256x128xbf16>, vector<128x256xbf16>, vector<256x256xf32> -> vector<256x256xf32>
    %c0_46 = arith.constant 0 : index
    %c0_47 = arith.constant 0 : index
    %195 = vector.load %arg9[%c0_46, %c0_47] : memref<1x256xf32, #tpu.memory_space<vmem>>, vector<1x256xf32>
    %196 = vector.broadcast %195 : vector<1x256xf32> to vector<256x256xf32>
    %197 = arith.addf %194, %196 : vector<256x256xf32>
    %198 = arith.negf %197 : vector<256x256xf32>
    %199 = math.exp %198 : vector<256x256xf32>
    %cst_48 = arith.constant 1.000000e+00 : f32
    %200 = vector.broadcast %cst_48 : f32 to vector<256x256xf32>
    %201 = arith.addf %200, %199 : vector<256x256xf32>
    %202 = arith.divf %200, %201 : vector<256x256xf32>
    %203 = arith.mulf %197, %202 : vector<256x256xf32>
    %204 = arith.truncf %203 : vector<256x256xf32> to vector<256x256xbf16>
    %c0_49 = arith.constant 0 : index
    %c0_50 = arith.constant 0 : index
    %205 = vector.load %arg10[%c0_49, %c0_50] : memref<256x128xbf16, #tpu.memory_space<vmem>>, vector<256x128xbf16>
    %cst_51 = arith.constant dense<0.000000e+00> : vector<256x128xf32>
    %206 = tpu.matmul %204, %205, %cst_51 {dimension_numbers = #tpu.dot_dimension_numbers<[1], [0], [0], [1], [0, 0, 1, 1], [], []>} : vector<256x256xbf16>, vector<256x128xbf16>, vector<256x128xf32> -> vector<256x128xf32>
    %c0_52 = arith.constant 0 : index
    %c0_53 = arith.constant 0 : index
    %207 = vector.load %arg11[%c0_52, %c0_53] : memref<1x128xf32, #tpu.memory_space<vmem>>, vector<1x128xf32>
    %208 = vector.broadcast %207 : vector<1x128xf32> to vector<256x128xf32>
    %209 = arith.addf %206, %208 : vector<256x128xf32>
    %210 = arith.addf %191, %209 : vector<256x128xf32>
    %c0_54 = arith.constant 0 : index
    %c0_55 = arith.constant 0 : index
    %c0_56 = arith.constant 0 : index
    %211 = vector.load %arg12[%c0_54, %c0_55, %c0_56] : memref<1x256x128xf32, #tpu.memory_space<vmem>>, vector<1x256x128xf32>
    %212 = vector.shape_cast %211 : vector<1x256x128xf32> to vector<256x128xf32>
    %213 = vector.shape_cast %210 : vector<256x128xf32> to vector<1x256x128xf32>
    tpu.vector_store %arg12[%c0_54, %c0_55, %c0_56], %213 {strides = array<i32>} : memref<1x256x128xf32, #tpu.memory_space<vmem>>, vector<1x256x128xf32>,
    return
  }
  func.func @transform_0(%arg0: i32) -> (i32, i32, i32) {
    %c0_i32 = arith.constant 0 : i32
    %c0_i32_0 = arith.constant 0 : i32
    %c0_i32_1 = arith.constant 0 : i32
    return %arg0, %c0_i32, %c0_i32_0 : i32, i32, i32
  }
  func.func @transform_1(%arg0: i32) -> (i32, i32) {
    %c0_i32 = arith.constant 0 : i32
    %c0_i32_0 = arith.constant 0 : i32
    %c0_i32_1 = arith.constant 0 : i32
    return %c0_i32, %c0_i32_0 : i32, i32
  }
  func.func @transform_2(%arg0: i32) -> (i32, i32) {
    %c0_i32 = arith.constant 0 : i32
    %c0_i32_0 = arith.constant 0 : i32
    %c0_i32_1 = arith.constant 0 : i32
    return %c0_i32, %c0_i32_0 : i32, i32
  }
  func.func @transform_3(%arg0: i32) -> (i32, i32) {
    %c0_i32 = arith.constant 0 : i32
    %c0_i32_0 = arith.constant 0 : i32
    %c0_i32_1 = arith.constant 0 : i32
    return %c0_i32, %c0_i32_0 : i32, i32
  }
  func.func @transform_4(%arg0: i32) -> (i32, i32) {
    %c0_i32 = arith.constant 0 : i32
    %c0_i32_0 = arith.constant 0 : i32
    %c0_i32_1 = arith.constant 0 : i32
    return %c0_i32, %c0_i32_0 : i32, i32
  }
  func.func @transform_5(%arg0: i32) -> (i32, i32) {
    %c0_i32 = arith.constant 0 : i32
    %c0_i32_0 = arith.constant 0 : i32
    %c0_i32_1 = arith.constant 0 : i32
    return %c0_i32, %c0_i32_0 : i32, i32
  }
  func.func @transform_6(%arg0: i32) -> (i32, i32) {
    %c0_i32 = arith.constant 0 : i32
    %c0_i32_0 = arith.constant 0 : i32
    %c0_i32_1 = arith.constant 0 : i32
    return %c0_i32, %c0_i32_0 : i32, i32
  }
  func.func @transform_7(%arg0: i32) -> (i32, i32) {
    %c0_i32 = arith.constant 0 : i32
    %c0_i32_0 = arith.constant 0 : i32
    %c0_i32_1 = arith.constant 0 : i32
    return %c0_i32, %c0_i32_0 : i32, i32
  }
  func.func @transform_8(%arg0: i32) -> (i32, i32) {
    %c0_i32 = arith.constant 0 : i32
    %c0_i32_0 = arith.constant 0 : i32
    %c0_i32_1 = arith.constant 0 : i32
    return %c0_i32, %c0_i32_0 : i32, i32
  }
  func.func @transform_9(%arg0: i32) -> (i32, i32) {
    %c0_i32 = arith.constant 0 : i32
    %c0_i32_0 = arith.constant 0 : i32
    %c0_i32_1 = arith.constant 0 : i32
    return %c0_i32, %c0_i32_0 : i32, i32
  }
  func.func @transform_10(%arg0: i32) -> (i32, i32) {
    %c0_i32 = arith.constant 0 : i32
    %c0_i32_0 = arith.constant 0 : i32
    %c0_i32_1 = arith.constant 0 : i32
    return %c0_i32, %c0_i32_0 : i32, i32
  }
  func.func @transform_11(%arg0: i32) -> (i32, i32, i32) {
    %c0_i32 = arith.constant 0 : i32
    %c0_i32_0 = arith.constant 0 : i32
    %c0_i32_1 = arith.constant 0 : i32
    return %arg0, %c0_i32, %c0_i32_0 : i32, i32, i32
  }
}

</mosaic_0001>

<llo_original>
// kernel: tpu_custom_call.1
$region0: #{tpu_custom_call.1}
  #allocation0 [shape = 'u32[]', space=smem, size = 0x4, offset = 0x4, fixed_abs, tag = 'smem constant byte address 0x4 - core index']
  #allocation1 [shape = 'u32[72,128]{1,0:T(1,128)}', space=vmem, size = 0x9000, scoped, tag = 'internal scratch']
  %s0 = inlined_call_operand.hbm [shape: f32[2,256,128], index: 0, kind: input, shape index: {}]
  %s1 = inlined_call_operand.hbm [shape: bf16[128,256], index: 1, kind: input, shape index: {}]
  %s2 = inlined_call_operand.hbm [shape: f32[1,256], index: 2, kind: input, shape index: {}]
  %s3 = inlined_call_operand.hbm [shape: f32[9,128], index: 3, kind: input, shape index: {}]
  %s4 = inlined_call_operand.vmem [shape: f32[1,128], index: 4, kind: input, shape index: {}]
  %s5 = inlined_call_operand.hbm [shape: bf16[128,128], index: 5, kind: input, shape index: {}]
  %s6 = inlined_call_operand.vmem [shape: f32[1,128], index: 6, kind: input, shape index: {}]
  %s7 = inlined_call_operand.hbm [shape: bf16[128,256], index: 7, kind: input, shape index: {}]
  %s8 = inlined_call_operand.vmem [shape: f32[1,256], index: 8, kind: input, shape index: {}]
  %s9 = inlined_call_operand.hbm [shape: bf16[256,128], index: 9, kind: input, shape index: {}]
  %s10 = inlined_call_operand.vmem [shape: f32[1,128], index: 10, kind: input, shape index: {}]
  %s11 = inlined_call_operand.hbm [shape: f32[2,256,128], index: 11, kind: output, shape index: {}]
  %s12 = sld [smem:[#allocation0]]
  $region105: #{tpu_custom_call.1} parent=0
    _
  %s14 = ssub.s32 1, %s12
  %s15 = scalar_select 0, %s14, %s12
  $region1: #{tpu_custom_call.1} parent=0
    #allocation2 [shape = 'u8[262144]{0}', space=vmem, size = 0x40000, scoped, tag = 'input window, operand 0']
    #allocation3 [shape = 's32[2]{0}', space=sflag, size = 0x8, scoped, tag = 'scoped memory for tpu_custom_call.1']
    #allocation4 [shape = 's32[2]{0}', space=sflag, size = 0x8, scoped, tag = 'scoped memory for tpu_custom_call.1']
    #allocation5 [shape = 'u8[65536]{0}', space=vmem, size = 0x10000, scoped, tag = 'input window, operand 1, single buffered']
    #allocation6 [shape = 's32[1]{0}', space=sflag, size = 0x4, scoped, tag = 'scoped memory for tpu_custom_call.1']
    #allocation7 [shape = 'u8[1024]{0}', space=vmem, size = 0x400, scoped, tag = 'input window, operand 2, single buffered']
    #allocation8 [shape = 'u8[8192]{0}', space=vmem, size = 0x2000, scoped, tag = 'input window, operand 3, single buffered']
    #allocation9 [shape = 's32[1]{0}', space=sflag, size = 0x4, scoped, tag = 'scoped memory for tpu_custom_call.1']
    #allocation10 [shape = 'u8[32768]{0}', space=vmem, size = 0x8000, scoped, tag = 'input window, operand 5, single buffered']
    #allocation11 [shape = 'u8[65536]{0}', space=vmem, size = 0x10000, scoped, tag = 'input window, operand 7, single buffered']
    #allocation12 [shape = 's32[1]{0}', space=sflag, size = 0x4, scoped, tag = 'scoped memory for tpu_custom_call.1']
    #allocation13 [shape = 'u8[65536]{0}', space=vmem, size = 0x10000, scoped, tag = 'input window, operand 9, single buffered']
    #allocation14 [shape = 'u8[262144]{0}', space=vmem, size = 0x40000, scoped, tag = 'output window, operand 0']
    %16 = vsyncpa [#allocation3], 0
    %s17 = scalar_lea.sflag [#allocation3], 1
    %18 = vsyncpa %s17, 0
    %19 = vsyncpa [#allocation6], 0
    %20 = vsyncpa [#allocation9], 0
    %21 = vsyncpa [#allocation12], 0
    %22 = vsyncpa [#allocation4], 0
    %s23 = scalar_lea.sflag [#allocation4], 1
    %24 = vsyncpa %s23, 0
    loop: start=0, step=1, limit=4
    $region2: #{tpu_custom_call.1} parent=1 // loop_pre_header
      _
    $region3: #{tpu_custom_call.1} parent=1 // loop_header
      %s26 = sphi 0, %s30
      %p27 = scmp.ge.s32.totalorder %s26, 4
      %s36 = sphi 0, %s38
      %s39 = sphi 0, %s36
      %s40 = sphi 0, %s39
      %s56 = sphi 0, %s40
      %s60 = sphi 0, %s60
      %s62 = sphi 0, %s60
      %s63 = sphi 0, %s62
      %s77 = sphi 0, %s63
      %s81 = sphi 0, %s81
      %s83 = sphi 0, %s81
      %s84 = sphi 0, %s83
      %s98 = sphi 0, %s84
      %s102 = sphi 0, %s102
      %s104 = sphi 0, %s102
      %s105 = sphi 0, %s104
      %s119 = sphi 0, %s105
      %s123 = sphi 0, %s123
      %s125 = sphi 0, %s123
      %s126 = sphi 0, %s125
      %s140 = sphi 0, %s126
      %s144 = sphi 0, %s144
      %s146 = sphi 0, %s144
      %s147 = sphi 0, %s146
      %s161 = sphi 0, %s147
      %s165 = sphi 0, %s165
      %s167 = sphi 0, %s165
      %s168 = sphi 0, %s167
      %s182 = sphi 0, %s168
      %s186 = sphi 0, %s186
      %s188 = sphi 0, %s186
      %s189 = sphi 0, %s188
      %s203 = sphi 0, %s189
      %s207 = sphi 0, %s207
      %s209 = sphi 0, %s207
      %s210 = sphi 0, %s209
      %s224 = sphi 0, %s210
      %s228 = sphi 0, %s228
      %s230 = sphi 0, %s228
      %s231 = sphi 0, %s230
      %s245 = sphi 0, %s231
      %s249 = sphi 0, %s249
      %s251 = sphi 0, %s249
      %s252 = sphi 0, %s251
      %s266 = sphi 0, %s252
      %s272 = sphi 0, %s274
      %s275 = sphi 0, %s272
      %s276 = sphi 0, %s275
      %s292 = sphi 0, %s276
    $region4: #{tpu_custom_call.1} parent=1 // loop_header_branch
      %29 = sbr.rel (%p27) target = $region8
    $region5: #{tpu_custom_call.1} parent=1 // loop_body
      %s31 = ssub.s32 %s26, 1
      %s32 = ssub.s32 %s26, 2
      %s33 = sadd.s32 %s26, 1
      %s34 = ssub.s32 %s26, %s33
      %p35 = scmp.eq.s32.totalorder %s34, 0
      %s37 = sadd.s32 %s36, 1
      %s38 = scalar_select %p35, %s36, %s37
      %p41 = pneg %p35
      %p42 = scmp.eq.s32.totalorder %s26, 1
      %p43 = por %p41, %p42
      %p44 = scmp.ne.s32.totalorder %s36, %s39
      %p45 = scmp.eq.s32.totalorder %s26, 0
      %p46 = por %p44, %p45
      %p47 = scmp.ne.s32.totalorder %s36, %s39
      %p48 = scmp.eq.s32.totalorder %s31, 1
      %p49 = por %p47, %p48
      %p50 = scmp.ne.s32.totalorder %s39, %s40
      %p51 = scmp.eq.s32.totalorder %s31, 0
      %p52 = por %p50, %p51
      %p53 = scmp.ne.s32.totalorder %s39, %s40
      %p54 = scmp.eq.s32.totalorder %s32, 1
      %p55 = por %p53, %p54
      %p57 = scmp.ne.s32.totalorder %s40, %s56
      %p58 = scmp.eq.s32.totalorder %s32, 0
      %p59 = por %p57, %p58
      %s61 = sadd.s32 %s60, 1
      %p64 = scmp.eq.s32.totalorder %s26, 1
      %p65 = scmp.ne.s32.totalorder %s60, %s62
      %p66 = scmp.eq.s32.totalorder %s26, 0
      %p67 = por %p65, %p66
      %p68 = scmp.ne.s32.totalorder %s60, %s62
      %p69 = scmp.eq.s32.totalorder %s31, 1
      %p70 = por %p68, %p69
      %p71 = scmp.ne.s32.totalorder %s62, %s63
      %p72 = scmp.eq.s32.totalorder %s31, 0
      %p73 = por %p71, %p72
      %p74 = scmp.ne.s32.totalorder %s62, %s63
      %p75 = scmp.eq.s32.totalorder %s32, 1
      %p76 = por %p74, %p75
      %p78 = scmp.ne.s32.totalorder %s63, %s77
      %p79 = scmp.eq.s32.totalorder %s32, 0
      %p80 = por %p78, %p79
      %s82 = sadd.s32 %s81, 1
      %p85 = scmp.eq.s32.totalorder %s26, 1
      %p86 = scmp.ne.s32.totalorder %s81, %s83
      %p87 = scmp.eq.s32.totalorder %s26, 0
      %p88 = por %p86, %p87
      %p89 = scmp.ne.s32.totalorder %s81, %s83
      %p90 = scmp.eq.s32.totalorder %s31, 1
      %p91 = por %p89, %p90
      %p92 = scmp.ne.s32.totalorder %s83, %s84
      %p93 = scmp.eq.s32.totalorder %s31, 0
      %p94 = por %p92, %p93
      %p95 = scmp.ne.s32.totalorder %s83, %s84
      %p96 = scmp.eq.s32.totalorder %s32, 1
      %p97 = por %p95, %p96
      %p99 = scmp.ne.s32.totalorder %s84, %s98
      %p100 = scmp.eq.s32.totalorder %s32, 0
      %p101 = por %p99, %p100
      %s103 = sadd.s32 %s102, 1
      %p106 = scmp.eq.s32.totalorder %s26, 1
      %p107 = scmp.ne.s32.totalorder %s102, %s104
      %p108 = scmp.eq.s32.totalorder %s26, 0
      %p109 = por %p107, %p108
      %p110 = scmp.ne.s32.totalorder %s102, %s104
      %p111 = scmp.eq.s32.totalorder %s31, 1
      %p112 = por %p110, %p111
      %p113 = scmp.ne.s32.totalorder %s104, %s105
      %p114 = scmp.eq.s32.totalorder %s31, 0
      %p115 = por %p113, %p114
      %p116 = scmp.ne.s32.totalorder %s104, %s105
      %p117 = scmp.eq.s32.totalorder %s32, 1
      %p118 = por %p116, %p117
      %p120 = scmp.ne.s32.totalorder %s105, %s119
      %p121 = scmp.eq.s32.totalorder %s32, 0
      %p122 = por %p120, %p121
      %s124 = sadd.s32 %s123, 1
      %p127 = scmp.eq.s32.totalorder %s26, 1
      %p128 = scmp.ne.s32.totalorder %s123, %s125
      %p129 = scmp.eq.s32.totalorder %s26, 0
      %p130 = por %p128, %p129
      %p131 = scmp.ne.s32.totalorder %s123, %s125
      %p132 = scmp.eq.s32.totalorder %s31, 1
      %p133 = por %p131, %p132
      %p134 = scmp.ne.s32.totalorder %s125, %s126
      %p135 = scmp.eq.s32.totalorder %s31, 0
      %p136 = por %p134, %p135
      %p137 = scmp.ne.s32.totalorder %s125, %s126
      %p138 = scmp.eq.s32.totalorder %s32, 1
      %p139 = por %p137, %p138
      %p141 = scmp.ne.s32.totalorder %s126, %s140
      %p142 = scmp.eq.s32.totalorder %s32, 0
      %p143 = por %p141, %p142
      %s145 = sadd.s32 %s144, 1
      %p148 = scmp.eq.s32.totalorder %s26, 1
      %p149 = scmp.ne.s32.totalorder %s144, %s146
      %p150 = scmp.eq.s32.totalorder %s26, 0
      %p151 = por %p149, %p150
      %p152 = scmp.ne.s32.totalorder %s144, %s146
      %p153 = scmp.eq.s32.totalorder %s31, 1
      %p154 = por %p152, %p153
      %p155 = scmp.ne.s32.totalorder %s146, %s147
      %p156 = scmp.eq.s32.totalorder %s31, 0
      %p157 = por %p155, %p156
      %p158 = scmp.ne.s32.totalorder %s146, %s147
      %p159 = scmp.eq.s32.totalorder %s32, 1
      %p160 = por %p158, %p159
      %p162 = scmp.ne.s32.totalorder %s147, %s161
      %p163 = scmp.eq.s32.totalorder %s32, 0
      %p164 = por %p162, %p163
      %s166 = sadd.s32 %s165, 1
      %p169 = scmp.eq.s32.totalorder %s26, 1
      %p170 = scmp.ne.s32.totalorder %s165, %s167
      %p171 = scmp.eq.s32.totalorder %s26, 0
      %p172 = por %p170, %p171
      %p173 = scmp.ne.s32.totalorder %s165, %s167
      %p174 = scmp.eq.s32.totalorder %s31, 1
      %p175 = por %p173, %p174
      %p176 = scmp.ne.s32.totalorder %s167, %s168
      %p177 = scmp.eq.s32.totalorder %s31, 0
      %p178 = por %p176, %p177
      %p179 = scmp.ne.s32.totalorder %s167, %s168
      %p180 = scmp.eq.s32.totalorder %s32, 1
      %p181 = por %p179, %p180
      %p183 = scmp.ne.s32.totalorder %s168, %s182
      %p184 = scmp.eq.s32.totalorder %s32, 0
      %p185 = por %p183, %p184
      %s187 = sadd.s32 %s186, 1
      %p190 = scmp.eq.s32.totalorder %s26, 1
      %p191 = scmp.ne.s32.totalorder %s186, %s188
      %p192 = scmp.eq.s32.totalorder %s26, 0
      %p193 = por %p191, %p192
      %p194 = scmp.ne.s32.totalorder %s186, %s188
      %p195 = scmp.eq.s32.totalorder %s31, 1
      %p196 = por %p194, %p195
      %p197 = scmp.ne.s32.totalorder %s188, %s189
      %p198 = scmp.eq.s32.totalorder %s31, 0
      %p199 = por %p197, %p198
      %p200 = scmp.ne.s32.totalorder %s188, %s189
      %p201 = scmp.eq.s32.totalorder %s32, 1
      %p202 = por %p200, %p201
      %p204 = scmp.ne.s32.totalorder %s189, %s203
      %p205 = scmp.eq.s32.totalorder %s32, 0
      %p206 = por %p204, %p205
      %s208 = sadd.s32 %s207, 1
      %p211 = scmp.eq.s32.totalorder %s26, 1
      %p212 = scmp.ne.s32.totalorder %s207, %s209
      %p213 = scmp.eq.s32.totalorder %s26, 0
      %p214 = por %p212, %p213
      %p215 = scmp.ne.s32.totalorder %s207, %s209
      %p216 = scmp.eq.s32.totalorder %s31, 1
      %p217 = por %p215, %p216
      %p218 = scmp.ne.s32.totalorder %s209, %s210
      %p219 = scmp.eq.s32.totalorder %s31, 0
      %p220 = por %p218, %p219
      %p221 = scmp.ne.s32.totalorder %s209, %s210
      %p222 = scmp.eq.s32.totalorder %s32, 1
      %p223 = por %p221, %p222
      %p225 = scmp.ne.s32.totalorder %s210, %s224
      %p226 = scmp.eq.s32.totalorder %s32, 0
      %p227 = por %p225, %p226
      %s229 = sadd.s32 %s228, 1
      %p232 = scmp.eq.s32.totalorder %s26, 1
      %p233 = scmp.ne.s32.totalorder %s228, %s230
      %p234 = scmp.eq.s32.totalorder %s26, 0
      %p235 = por %p233, %p234
      %p236 = scmp.ne.s32.totalorder %s228, %s230
      %p237 = scmp.eq.s32.totalorder %s31, 1
      %p238 = por %p236, %p237
      %p239 = scmp.ne.s32.totalorder %s230, %s231
      %p240 = scmp.eq.s32.totalorder %s31, 0
      %p241 = por %p239, %p240
      %p242 = scmp.ne.s32.totalorder %s230, %s231
      %p243 = scmp.eq.s32.totalorder %s32, 1
      %p244 = por %p242, %p243
      %p246 = scmp.ne.s32.totalorder %s231, %s245
      %p247 = scmp.eq.s32.totalorder %s32, 0
      %p248 = por %p246, %p247
      %s250 = sadd.s32 %s249, 1
      %p253 = scmp.eq.s32.totalorder %s26, 1
      %p254 = scmp.ne.s32.totalorder %s249, %s251
      %p255 = scmp.eq.s32.totalorder %s26, 0
      %p256 = por %p254, %p255
      %p257 = scmp.ne.s32.totalorder %s249, %s251
      %p258 = scmp.eq.s32.totalorder %s31, 1
      %p259 = por %p257, %p258
      %p260 = scmp.ne.s32.totalorder %s251, %s252
      %p261 = scmp.eq.s32.totalorder %s31, 0
      %p262 = por %p260, %p261
      %p263 = scmp.ne.s32.totalorder %s251, %s252
      %p264 = scmp.eq.s32.totalorder %s32, 1
      %p265 = por %p263, %p264
      %p267 = scmp.ne.s32.totalorder %s252, %s266
      %p268 = scmp.eq.s32.totalorder %s32, 0
      %p269 = por %p267, %p268
      %s270 = ssub.s32 %s26, %s33
      %p271 = scmp.eq.s32.totalorder %s270, 0
      %s273 = sadd.s32 %s272, 1
      %s274 = scalar_select %p271, %s272, %s273
      %p277 = pneg %p271
      %p278 = scmp.eq.s32.totalorder %s26, 1
      %p279 = por %p277, %p278
      %p280 = scmp.ne.s32.totalorder %s272, %s275
      %p281 = scmp.eq.s32.totalorder %s26, 0
      %p282 = por %p280, %p281
      %p283 = scmp.ne.s32.totalorder %s272, %s275
      %p284 = scmp.eq.s32.totalorder %s31, 1
      %p285 = por %p283, %p284
      %p286 = scmp.ne.s32.totalorder %s275, %s276
      %p287 = scmp.eq.s32.totalorder %s31, 0
      %p288 = por %p286, %p287
      %p289 = scmp.ne.s32.totalorder %s275, %s276
      %p290 = scmp.eq.s32.totalorder %s32, 1
      %p291 = por %p289, %p290
      %p293 = scmp.ne.s32.totalorder %s276, %s292
      %p294 = scmp.eq.s32.totalorder %s32, 0
      %p295 = por %p293, %p294
      %p296 = scmp.le.s32.totalorder 1, %s26
      %p297 = scmp.lt.s32.totalorder %s26, 3
      %p298 = pnand %p296, %p297
      %p299 = pneg %p298
      // Predicated region
      $region9: #{tpu_custom_call.1} parent=5 // pred_check
        _
      $region10: #{tpu_custom_call.1} parent=5 // pred_check_branch
        %301 = sbr.rel (%p298) target = $region12
      $region11: #{tpu_custom_call.1} parent=5 // pred_region
        %s302 = ssub.s32 %s26, 1
        // Predicated region
        $region13: #{tpu_custom_call.1} parent=11 // pred_check
          %p303 = pneg %p73
        $region14: #{tpu_custom_call.1} parent=11 // pred_check_branch
          %305 = sbr.rel (%p303) target = $region16
        $region15: #{tpu_custom_call.1} parent=11 // pred_region
          %307 = vsyncadd [#allocation6], 0
          %s308 = sshll.u32 %s1, 4
          %s309 = int_to_ptr.hbm [resolvable:$true] %s308
          %s310 = sshll.u32 [#allocation5], 4
          %s311 = int_to_ptr.vmem [resolvable:$true] %s310
          %316 = dma.hbm_to_vmem [thread:$0]  %s309, 2048, %s311, [#allocation6], 128, 128, 8
        $region16: #{tpu_custom_call.1} parent=11 // pred_fallthru
          _
        // Predicated region
        $region17: #{tpu_custom_call.1} parent=11 // pred_check
          %p317 = pneg %p94
        $region18: #{tpu_custom_call.1} parent=11 // pred_check_branch
          %319 = sbr.rel (%p317) target = $region20
        $region19: #{tpu_custom_call.1} parent=11 // pred_region
          %321 = vsyncadd [#allocation6], 0
          %s323 = sshll.u32 %s2, 4
          %s324 = int_to_ptr.hbm [resolvable:$true] %s323
          %s325 = sshll.u32 [#allocation7], 4
          %s326 = int_to_ptr.vmem [resolvable:$true] %s325
          %328 = dma.hbm_to_vmem [thread:$0]  %s324, 32, %s326, [#allocation6]
        $region20: #{tpu_custom_call.1} parent=11 // pred_fallthru
          _
        // Predicated region
        $region21: #{tpu_custom_call.1} parent=11 // pred_check
          %p329 = pneg %p115
        $region22: #{tpu_custom_call.1} parent=11 // pred_check_branch
          %331 = sbr.rel (%p329) target = $region24
        $region23: #{tpu_custom_call.1} parent=11 // pred_region
          %333 = vsyncadd [#allocation9], 0
          %s334 = sshll.u32 %s3, 4
          %s335 = int_to_ptr.hbm [resolvable:$true] %s334
          %s336 = sshll.u32 [#allocation8], 4
          %s337 = int_to_ptr.vmem [resolvable:$true] %s336
          %342 = dma.hbm_to_vmem [thread:$0]  %s335, 256, %s337, [#allocation9], 128, 128, 8
        $region24: #{tpu_custom_call.1} parent=11 // pred_fallthru
          _
        // Predicated region
        $region25: #{tpu_custom_call.1} parent=11 // pred_check
          %p343 = pneg %p136
        $region26: #{tpu_custom_call.1} parent=11 // pred_check_branch
          %345 = sbr.rel (%p343) target = $region28
        $region27: #{tpu_custom_call.1} parent=11 // pred_region
          _
        $region28: #{tpu_custom_call.1} parent=11 // pred_fallthru
          _
        // Predicated region
        $region29: #{tpu_custom_call.1} parent=11 // pred_check
          %p346 = pneg %p157
        $region30: #{tpu_custom_call.1} parent=11 // pred_check_branch
          %348 = sbr.rel (%p346) target = $region32
        $region31: #{tpu_custom_call.1} parent=11 // pred_region
          %350 = vsyncadd [#allocation9], 0
          %s351 = sshll.u32 %s5, 4
          %s352 = int_to_ptr.hbm [resolvable:$true] %s351
          %s353 = sshll.u32 [#allocation10], 4
          %s354 = int_to_ptr.vmem [resolvable:$true] %s353
          %359 = dma.hbm_to_vmem [thread:$0]  %s352, 1024, %s354, [#allocation9], 64, 64, 4
        $region32: #{tpu_custom_call.1} parent=11 // pred_fallthru
          _
        // Predicated region
        $region33: #{tpu_custom_call.1} parent=11 // pred_check
          %p360 = pneg %p178
        $region34: #{tpu_custom_call.1} parent=11 // pred_check_branch
          %362 = sbr.rel (%p360) target = $region36
        $region35: #{tpu_custom_call.1} parent=11 // pred_region
          _
        $region36: #{tpu_custom_call.1} parent=11 // pred_fallthru
          _
        // Predicated region
        $region37: #{tpu_custom_call.1} parent=11 // pred_check
          %p363 = pneg %p199
        $region38: #{tpu_custom_call.1} parent=11 // pred_check_branch
          %365 = sbr.rel (%p363) target = $region40
        $region39: #{tpu_custom_call.1} parent=11 // pred_region
          %367 = vsyncadd [#allocation12], 0
          %s368 = sshll.u32 %s7, 4
          %s369 = int_to_ptr.hbm [resolvable:$true] %s368
          %s370 = sshll.u32 [#allocation11], 4
          %s371 = int_to_ptr.vmem [resolvable:$true] %s370
          %376 = dma.hbm_to_vmem [thread:$0]  %s369, 2048, %s371, [#allocation12], 128, 128, 8
        $region40: #{tpu_custom_call.1} parent=11 // pred_fallthru
          _
        // Predicated region
        $region41: #{tpu_custom_call.1} parent=11 // pred_check
          %p377 = pneg %p220
        $region42: #{tpu_custom_call.1} parent=11 // pred_check_branch
          %379 = sbr.rel (%p377) target = $region44
        $region43: #{tpu_custom_call.1} parent=11 // pred_region
          _
        $region44: #{tpu_custom_call.1} parent=11 // pred_fallthru
          _
        // Predicated region
        $region45: #{tpu_custom_call.1} parent=11 // pred_check
          %p380 = pneg %p241
        $region46: #{tpu_custom_call.1} parent=11 // pred_check_branch
          %382 = sbr.rel (%p380) target = $region48
        $region47: #{tpu_custom_call.1} parent=11 // pred_region
          %384 = vsyncadd [#allocation12], 0
          %s385 = sshll.u32 %s9, 4
          %s386 = int_to_ptr.hbm [resolvable:$true] %s385
          %s387 = sshll.u32 [#allocation13], 4
          %s388 = int_to_ptr.vmem [resolvable:$true] %s387
          %393 = dma.hbm_to_vmem [thread:$0]  %s386, 2048, %s388, [#allocation12], 64, 64, 4
        $region48: #{tpu_custom_call.1} parent=11 // pred_fallthru
          _
        // Predicated region
        $region49: #{tpu_custom_call.1} parent=11 // pred_check
          %p394 = pneg %p262
        $region50: #{tpu_custom_call.1} parent=11 // pred_check_branch
          %396 = sbr.rel (%p394) target = $region52
        $region51: #{tpu_custom_call.1} parent=11 // pred_region
          _
        $region52: #{tpu_custom_call.1} parent=11 // pred_fallthru
          _
      $region12: #{tpu_custom_call.1} parent=5 // pred_fallthru
        _
      %p397 = scmp.lt.s32.totalorder %s26, 2
      // Predicated region
      $region53: #{tpu_custom_call.1} parent=5 // pred_check
        %p398 = pneg %p397
      $region54: #{tpu_custom_call.1} parent=5 // pred_check_branch
        %400 = sbr.rel (%p398) target = $region56
      $region55: #{tpu_custom_call.1} parent=5 // pred_region
        // Predicated region
        $region57: #{tpu_custom_call.1} parent=55 // pred_check
          %p401 = pneg %p46
        $region58: #{tpu_custom_call.1} parent=55 // pred_check_branch
          %403 = sbr.rel (%p401) target = $region60
        $region59: #{tpu_custom_call.1} parent=55 // pred_region
          %s404 = sand.u32 %s36, 1
          %s405 = scalar_lea.sflag [#allocation3], %s404
          %s406 = sand.u32 %s36, 1
          %s407 = smul.addr %s406, 256
          %s408 = scalar_lea.vmem [#allocation2], %s407
          %410 = vsyncadd %s405, 0
          %s411 = smul.addr %s26, 32
          %s412 = smul.addr %s411, 8
          %s413 = scalar_lea.hbm %s0, %s412
          %s414 = sshll.u32 %s413, 4
          %s415 = int_to_ptr.hbm [resolvable:$true] %s414
          %s416 = sshll.u32 %s408, 4
          %s417 = int_to_ptr.vmem [resolvable:$true] %s416
          %422 = dma.hbm_to_vmem [thread:$0]  %s415, 4096, %s417, %s405, 128, 128, 8
        $region60: #{tpu_custom_call.1} parent=55 // pred_fallthru
          _
      $region56: #{tpu_custom_call.1} parent=5 // pred_fallthru
        _
      %p423 = scmp.le.s32.totalorder 1, %s26
      %p424 = scmp.lt.s32.totalorder %s26, 3
      %p425 = pnand %p423, %p424
      %p426 = pneg %p425
      // Predicated region
      $region61: #{tpu_custom_call.1} parent=5 // pred_check
        _
      $region62: #{tpu_custom_call.1} parent=5 // pred_check_branch
        %428 = sbr.rel (%p425) target = $region64
      $region63: #{tpu_custom_call.1} parent=5 // pred_region
        %s429 = ssub.s32 %s26, 1
        %s430 = sand.u32 %s39, 1
        %s431 = scalar_lea.sflag [#allocation3], %s430
        %s432 = sand.u32 %s39, 1
        %s433 = smul.addr %s432, 256
        %s434 = scalar_lea.vmem [#allocation2], %s433
        // Predicated region
        $region65: #{tpu_custom_call.1} parent=63 // pred_check
          %p435 = pneg %p52
        $region66: #{tpu_custom_call.1} parent=63 // pred_check_branch
          %437 = sbr.rel (%p435) target = $region68
        $region67: #{tpu_custom_call.1} parent=63 // pred_region
          %439 = dma.done %s431, 4096
        $region68: #{tpu_custom_call.1} parent=63 // pred_fallthru
          _
        // Predicated region
        $region69: #{tpu_custom_call.1} parent=63 // pred_check
          %p440 = pneg %p73
        $region70: #{tpu_custom_call.1} parent=63 // pred_check_branch
          %442 = sbr.rel (%p440) target = $region72
        $region71: #{tpu_custom_call.1} parent=63 // pred_region
          %444 = dma.done [#allocation6], 2048
        $region72: #{tpu_custom_call.1} parent=63 // pred_fallthru
          _
        // Predicated region
        $region73: #{tpu_custom_call.1} parent=63 // pred_check
          %p445 = pneg %p94
        $region74: #{tpu_custom_call.1} parent=63 // pred_check_branch
          %447 = sbr.rel (%p445) target = $region76
        $region75: #{tpu_custom_call.1} parent=63 // pred_region
          %449 = dma.done [#allocation6], 32
        $region76: #{tpu_custom_call.1} parent=63 // pred_fallthru
          _
        // Predicated region
        $region77: #{tpu_custom_call.1} parent=63 // pred_check
          %p450 = pneg %p115
        $region78: #{tpu_custom_call.1} parent=63 // pred_check_branch
          %452 = sbr.rel (%p450) target = $region80
        $region79: #{tpu_custom_call.1} parent=63 // pred_region
          %454 = dma.done [#allocation9], 256
        $region80: #{tpu_custom_call.1} parent=63 // pred_fallthru
          _
        // Predicated region
        $region81: #{tpu_custom_call.1} parent=63 // pred_check
          %p455 = pneg %p157
        $region82: #{tpu_custom_call.1} parent=63 // pred_check_branch
          %457 = sbr.rel (%p455) target = $region84
        $region83: #{tpu_custom_call.1} parent=63 // pred_region
          %459 = dma.done [#allocation9], 1024
        $region84: #{tpu_custom_call.1} parent=63 // pred_fallthru
          _
        // Predicated region
        $region85: #{tpu_custom_call.1} parent=63 // pred_check
          %p460 = pneg %p199
        $region86: #{tpu_custom_call.1} parent=63 // pred_check_branch
          %462 = sbr.rel (%p460) target = $region88
        $region87: #{tpu_custom_call.1} parent=63 // pred_region
          %464 = dma.done [#allocation12], 2048
        $region88: #{tpu_custom_call.1} parent=63 // pred_fallthru
          _
        // Predicated region
        $region89: #{tpu_custom_call.1} parent=63 // pred_check
          %p465 = pneg %p241
        $region90: #{tpu_custom_call.1} parent=63 // pred_check_branch
          %467 = sbr.rel (%p465) target = $region92
        $region91: #{tpu_custom_call.1} parent=63 // pred_region
          %469 = dma.done [#allocation12], 2048
        $region92: #{tpu_custom_call.1} parent=63 // pred_fallthru
          _
        %s470 = sand.u32 %s39, 1
        %s471 = scalar_lea.sflag [#allocation3], %s470
        %s472 = sand.u32 %s39, 1
        %s473 = smul.addr %s472, 256
        %s474 = scalar_lea.vmem [#allocation2], %s473
        %p475 = pneg %p52
        %p476 = pneg %p49
        %p477 = pneg %p73
        %p478 = pneg %p70
        %p479 = pneg %p94
        %p480 = pneg %p91
        %p481 = pneg %p115
        %p482 = pneg %p112
        %p483 = pneg %p136
        %p484 = pneg %p133
        %p485 = pneg %p157
        %p486 = pneg %p154
        %p487 = pneg %p178
        %p488 = pneg %p175
        %p489 = pneg %p199
        %p490 = pneg %p196
        %p491 = pneg %p220
        %p492 = pneg %p217
        %p493 = pneg %p241
        %p494 = pneg %p238
        %p495 = pneg %p262
        %p496 = pneg %p259
        %p497 = pneg %p288
        %p498 = pneg %p285
        %s499 = sand.u32 %s275, 1
        %s500 = scalar_lea.sflag [#allocation4], %s499
        %s501 = sand.u32 %s275, 1
        %s502 = smul.addr %s501, 256
        %s503 = scalar_lea.vmem [#allocation14], %s502
        %v505 = vld [vmem:[%s434] sm:$0xff]
        %v506 = vld [vmem:[%s434 + $0x8] sm:$0xff]
        %v507 = vld [vmem:[%s434 + $0x10] sm:$0xff]
        %v508 = vld [vmem:[%s434 + $0x18] sm:$0xff]
        %v509 = vld [vmem:[%s434 + $0x20] sm:$0xff]
        %v510 = vld [vmem:[%s434 + $0x28] sm:$0xff]
        %v511 = vld [vmem:[%s434 + $0x30] sm:$0xff]
        %v512 = vld [vmem:[%s434 + $0x38] sm:$0xff]
        %v513 = vld [vmem:[%s434 + $0x40] sm:$0xff]
        %v514 = vld [vmem:[%s434 + $0x48] sm:$0xff]
        %v515 = vld [vmem:[%s434 + $0x50] sm:$0xff]
        %v516 = vld [vmem:[%s434 + $0x58] sm:$0xff]
        %v517 = vld [vmem:[%s434 + $0x60] sm:$0xff]
        %v518 = vld [vmem:[%s434 + $0x68] sm:$0xff]
        %v519 = vld [vmem:[%s434 + $0x70] sm:$0xff]
        %v520 = vld [vmem:[%s434 + $0x78] sm:$0xff]
        %v521 = vld [vmem:[%s434 + $0x80] sm:$0xff]
        %v522 = vld [vmem:[%s434 + $0x88] sm:$0xff]
        %v523 = vld [vmem:[%s434 + $0x90] sm:$0xff]
        %v524 = vld [vmem:[%s434 + $0x98] sm:$0xff]
        %v525 = vld [vmem:[%s434 + $0xa0] sm:$0xff]
        %v526 = vld [vmem:[%s434 + $0xa8] sm:$0xff]
        %v527 = vld [vmem:[%s434 + $0xb0] sm:$0xff]
        %v528 = vld [vmem:[%s434 + $0xb8] sm:$0xff]
        %v529 = vld [vmem:[%s434 + $0xc0] sm:$0xff]
        %v530 = vld [vmem:[%s434 + $0xc8] sm:$0xff]
        %v531 = vld [vmem:[%s434 + $0xd0] sm:$0xff]
        %v532 = vld [vmem:[%s434 + $0xd8] sm:$0xff]
        %v533 = vld [vmem:[%s434 + $0xe0] sm:$0xff]
        %v534 = vld [vmem:[%s434 + $0xe8] sm:$0xff]
        %v535 = vld [vmem:[%s434 + $0xf0] sm:$0xff]
        %v536 = vld [vmem:[%s434 + $0xf8] sm:$0xff]
        %v537 = vpack.c.bf16 %v506, %v505
        %v538 = vpack.c.bf16 %v508, %v507
        %v539 = vpack.c.bf16 %v510, %v509
        %v540 = vpack.c.bf16 %v512, %v511
        %v541 = vpack.c.bf16 %v514, %v513
        %v542 = vpack.c.bf16 %v516, %v515
        %v543 = vpack.c.bf16 %v518, %v517
        %v544 = vpack.c.bf16 %v520, %v519
        %v545 = vpack.c.bf16 %v522, %v521
        %v546 = vpack.c.bf16 %v524, %v523
        %v547 = vpack.c.bf16 %v526, %v525
        %v548 = vpack.c.bf16 %v528, %v527
        %v549 = vpack.c.bf16 %v530, %v529
        %v550 = vpack.c.bf16 %v532, %v531
        %v551 = vpack.c.bf16 %v534, %v533
        %v552 = vpack.c.bf16 %v536, %v535
        %v553 = vld [vmem:[#allocation5] sm:$0xff]
        %v554 = vld [vmem:[#allocation5 + $0x8] sm:$0xff]
        %v555 = vld [vmem:[#allocation5 + $0x10] sm:$0xff]
        %v556 = vld [vmem:[#allocation5 + $0x18] sm:$0xff]
        %v557 = vld [vmem:[#allocation5 + $0x20] sm:$0xff]
        %v558 = vld [vmem:[#allocation5 + $0x28] sm:$0xff]
        %v559 = vld [vmem:[#allocation5 + $0x30] sm:$0xff]
        %v560 = vld [vmem:[#allocation5 + $0x38] sm:$0xff]
        %v561 = vld [vmem:[#allocation5 + $0x40] sm:$0xff]
        %v562 = vld [vmem:[#allocation5 + $0x48] sm:$0xff]
        %v563 = vld [vmem:[#allocation5 + $0x50] sm:$0xff]
        %v564 = vld [vmem:[#allocation5 + $0x58] sm:$0xff]
        %v565 = vld [vmem:[#allocation5 + $0x60] sm:$0xff]
        %v566 = vld [vmem:[#allocation5 + $0x68] sm:$0xff]
        %v567 = vld [vmem:[#allocation5 + $0x70] sm:$0xff]
        %v568 = vld [vmem:[#allocation5 + $0x78] sm:$0xff]
        %v569 = vld [vmem:[#allocation7] sm:$0x3]
        %v571 = vperm.slane %v569, 0
        %v572 = vperm.slane %v569, 1
        %v591 = vunpack.c.l.b16 %v553
        %v592 = vunpack.c.h.b16 %v553
        %v593 = vunpack.c.l.b16 %v554
        %v594 = vunpack.c.h.b16 %v554
        %v595 = vunpack.c.l.b16 %v555
        %v596 = vunpack.c.h.b16 %v555
        %v597 = vunpack.c.l.b16 %v556
        %v598 = vunpack.c.h.b16 %v556
        %v599 = vunpack.c.l.b16 %v557
        %v600 = vunpack.c.h.b16 %v557
        %v601 = vunpack.c.l.b16 %v558
        %v602 = vunpack.c.h.b16 %v558
        %v603 = vunpack.c.l.b16 %v559
        %v604 = vunpack.c.h.b16 %v559
        %v605 = vunpack.c.l.b16 %v560
        %v606 = vunpack.c.h.b16 %v560
        %v607 = vunpack.c.l.b16 %v561
        %v608 = vunpack.c.h.b16 %v561
        %v609 = vunpack.c.l.b16 %v562
        %v610 = vunpack.c.h.b16 %v562
        %v611 = vunpack.c.l.b16 %v563
        %v612 = vunpack.c.h.b16 %v563
        %v613 = vunpack.c.l.b16 %v564
        %v614 = vunpack.c.h.b16 %v564
        %v615 = vunpack.c.l.b16 %v565
        %v616 = vunpack.c.h.b16 %v565
        %v617 = vunpack.c.l.b16 %v566
        %v618 = vunpack.c.h.b16 %v566
        %v619 = vunpack.c.l.b16 %v567
        %v620 = vunpack.c.h.b16 %v567
        %v621 = vunpack.c.l.b16 %v568
        %v622 = vunpack.c.h.b16 %v568
        %v623 = vpack.c.b16 %v593, %v591
        %v624 = vpack.c.b16 %v594, %v592
        %v625 = vpack.c.b16 %v597, %v595
        %v626 = vpack.c.b16 %v598, %v596
        %v627 = vpack.c.b16 %v601, %v599
        %v628 = vpack.c.b16 %v602, %v600
        %v629 = vpack.c.b16 %v605, %v603
        %v630 = vpack.c.b16 %v606, %v604
        %v631 = vpack.c.b16 %v609, %v607
        %v632 = vpack.c.b16 %v610, %v608
        %v633 = vpack.c.b16 %v613, %v611
        %v634 = vpack.c.b16 %v614, %v612
        %v635 = vpack.c.b16 %v617, %v615
        %v636 = vpack.c.b16 %v618, %v616
        %v637 = vpack.c.b16 %v621, %v619
        %v638 = vpack.c.b16 %v622, %v620
        %655 = vmatpush.bf16.msra.mxu0 %v637
        %656 = vmatpush.bf16.msra.mxu0 %v635
        %657 = vmatpush.bf16.msra.mxu0 %v633
        %658 = vmatpush.bf16.msra.mxu0 %v631
        %659 = vmatpush.bf16.msra.mxu0 %v629
        %660 = vmatpush.bf16.msra.mxu0 %v627
        %661 = vmatpush.bf16.msra.mxu0 %v625
        %662 = vmatpush.bf16.msra.mxu0 %v623
        %663 = vmatmul.bf16.gmra.mxu0 %v537
        %v664 = vpop.f32.mrf.mxu0
        %v665 = vadd.f32 %v571, %v664
        %v666 = vpop.f32.mrf.mxu0
        %v667 = vadd.f32 %v571, %v666
        %668 = vmatmul.bf16.gmra.mxu0 %v538
        %v669 = vpop.f32.mrf.mxu0
        %v670 = vadd.f32 %v571, %v669
        %v671 = vpop.f32.mrf.mxu0
        %v672 = vadd.f32 %v571, %v671
        %673 = vmatmul.bf16.gmra.mxu0 %v539
        %v674 = vpop.f32.mrf.mxu0
        %v675 = vadd.f32 %v571, %v674
        %v676 = vpop.f32.mrf.mxu0
        %v677 = vadd.f32 %v571, %v676
        %678 = vmatmul.bf16.gmra.mxu0 %v540
        %v679 = vpop.f32.mrf.mxu0
        %v680 = vadd.f32 %v571, %v679
        %v681 = vpop.f32.mrf.mxu0
        %v682 = vadd.f32 %v571, %v681
        %683 = vmatmul.bf16.gmra.mxu0 %v541
        %v684 = vpop.f32.mrf.mxu0
        %v685 = vadd.f32 %v571, %v684
        %v686 = vpop.f32.mrf.mxu0
        %v687 = vadd.f32 %v571, %v686
        %688 = vmatmul.bf16.gmra.mxu0 %v542
        %v689 = vpop.f32.mrf.mxu0
        %v690 = vadd.f32 %v571, %v689
        %v691 = vpop.f32.mrf.mxu0
        %v692 = vadd.f32 %v571, %v691
        %693 = vmatmul.bf16.gmra.mxu0 %v543
        %v694 = vpop.f32.mrf.mxu0
        %v695 = vadd.f32 %v571, %v694
        %v696 = vpop.f32.mrf.mxu0
        %v697 = vadd.f32 %v571, %v696
        %698 = vmatmul.bf16.gmra.mxu0 %v544
        %v699 = vpop.f32.mrf.mxu0
        %v700 = vadd.f32 %v571, %v699
        %v701 = vpop.f32.mrf.mxu0
        %v702 = vadd.f32 %v571, %v701
        %703 = vmatmul.bf16.gmra.mxu0 %v545
        %v704 = vpop.f32.mrf.mxu0
        %v705 = vadd.f32 %v571, %v704
        %v706 = vpop.f32.mrf.mxu0
        %v707 = vadd.f32 %v571, %v706
        %708 = vmatmul.bf16.gmra.mxu0 %v546
        %v709 = vpop.f32.mrf.mxu0
        %v710 = vadd.f32 %v571, %v709
        %v711 = vpop.f32.mrf.mxu0
        %v712 = vadd.f32 %v571, %v711
        %713 = vmatmul.bf16.gmra.mxu0 %v547
        %v714 = vpop.f32.mrf.mxu0
        %v715 = vadd.f32 %v571, %v714
        %v716 = vpop.f32.mrf.mxu0
        %v717 = vadd.f32 %v571, %v716
        %718 = vmatmul.bf16.gmra.mxu0 %v548
        %v719 = vpop.f32.mrf.mxu0
        %v720 = vadd.f32 %v571, %v719
        %v721 = vpop.f32.mrf.mxu0
        %v722 = vadd.f32 %v571, %v721
        %723 = vmatmul.bf16.gmra.mxu0 %v549
        %v724 = vpop.f32.mrf.mxu0
        %v725 = vadd.f32 %v571, %v724
        %v726 = vpop.f32.mrf.mxu0
        %v727 = vadd.f32 %v571, %v726
        %728 = vmatmul.bf16.gmra.mxu0 %v550
        %v729 = vpop.f32.mrf.mxu0
        %v730 = vadd.f32 %v571, %v729
        %v731 = vpop.f32.mrf.mxu0
        %v732 = vadd.f32 %v571, %v731
        %733 = vmatmul.bf16.gmra.mxu0 %v551
        %v734 = vpop.f32.mrf.mxu0
        %v735 = vadd.f32 %v571, %v734
        %v736 = vpop.f32.mrf.mxu0
        %v737 = vadd.f32 %v571, %v736
        %738 = vmatmul.bf16.gmra.mxu0 %v552
        %v739 = vpop.f32.mrf.mxu0
        %v740 = vadd.f32 %v571, %v739
        %v741 = vpop.f32.mrf.mxu0
        %v742 = vadd.f32 %v571, %v741
        %743 = vdwg.mxu0
        %744 = vmatpush.bf16.msra.mxu0 %v638
        %745 = vmatpush.bf16.msra.mxu0 %v636
        %746 = vmatpush.bf16.msra.mxu0 %v634
        %747 = vmatpush.bf16.msra.mxu0 %v632
        %748 = vmatpush.bf16.msra.mxu0 %v630
        %749 = vmatpush.bf16.msra.mxu0 %v628
        %750 = vmatpush.bf16.msra.mxu0 %v626
        %751 = vmatpush.bf16.msra.mxu0 %v624
        %752 = vmatmul.bf16.gmra.mxu0 %v537
        %v753 = vpop.f32.mrf.mxu0
        %v754 = vadd.f32 %v572, %v753
        %v755 = vpop.f32.mrf.mxu0
        %v756 = vadd.f32 %v572, %v755
        %757 = vmatmul.bf16.gmra.mxu0 %v538
        %v758 = vpop.f32.mrf.mxu0
        %v759 = vadd.f32 %v572, %v758
        %v760 = vpop.f32.mrf.mxu0
        %v761 = vadd.f32 %v572, %v760
        %762 = vmatmul.bf16.gmra.mxu0 %v539
        %v763 = vpop.f32.mrf.mxu0
        %v764 = vadd.f32 %v572, %v763
        %v765 = vpop.f32.mrf.mxu0
        %v766 = vadd.f32 %v572, %v765
        %767 = vmatmul.bf16.gmra.mxu0 %v540
        %v768 = vpop.f32.mrf.mxu0
        %v769 = vadd.f32 %v572, %v768
        %v770 = vpop.f32.mrf.mxu0
        %v771 = vadd.f32 %v572, %v770
        %772 = vmatmul.bf16.gmra.mxu0 %v541
        %v773 = vpop.f32.mrf.mxu0
        %v774 = vadd.f32 %v572, %v773
        %v775 = vpop.f32.mrf.mxu0
        %v776 = vadd.f32 %v572, %v775
        %777 = vmatmul.bf16.gmra.mxu0 %v542
        %v778 = vpop.f32.mrf.mxu0
        %v779 = vadd.f32 %v572, %v778
        %v780 = vpop.f32.mrf.mxu0
        %v781 = vadd.f32 %v572, %v780
        %782 = vmatmul.bf16.gmra.mxu0 %v543
        %v783 = vpop.f32.mrf.mxu0
        %v784 = vadd.f32 %v572, %v783
        %v785 = vpop.f32.mrf.mxu0
        %v786 = vadd.f32 %v572, %v785
        %787 = vmatmul.bf16.gmra.mxu0 %v544
        %v788 = vpop.f32.mrf.mxu0
        %v789 = vadd.f32 %v572, %v788
        %v790 = vpop.f32.mrf.mxu0
        %v791 = vadd.f32 %v572, %v790
        %792 = vmatmul.bf16.gmra.mxu0 %v545
        %v793 = vpop.f32.mrf.mxu0
        %v794 = vadd.f32 %v572, %v793
        %v795 = vpop.f32.mrf.mxu0
        %v796 = vadd.f32 %v572, %v795
        %797 = vmatmul.bf16.gmra.mxu0 %v546
        %v798 = vpop.f32.mrf.mxu0
        %v799 = vadd.f32 %v572, %v798
        %v800 = vpop.f32.mrf.mxu0
        %v801 = vadd.f32 %v572, %v800
        %802 = vmatmul.bf16.gmra.mxu0 %v547
        %v803 = vpop.f32.mrf.mxu0
        %v804 = vadd.f32 %v572, %v803
        %v805 = vpop.f32.mrf.mxu0
        %v806 = vadd.f32 %v572, %v805
        %807 = vmatmul.bf16.gmra.mxu0 %v548
        %v808 = vpop.f32.mrf.mxu0
        %v809 = vadd.f32 %v572, %v808
        %v810 = vpop.f32.mrf.mxu0
        %v811 = vadd.f32 %v572, %v810
        %812 = vmatmul.bf16.gmra.mxu0 %v549
        %v813 = vpop.f32.mrf.mxu0
        %v814 = vadd.f32 %v572, %v813
        %v815 = vpop.f32.mrf.mxu0
        %v816 = vadd.f32 %v572, %v815
        %817 = vmatmul.bf16.gmra.mxu0 %v550
        %v818 = vpop.f32.mrf.mxu0
        %v819 = vadd.f32 %v572, %v818
        %v820 = vpop.f32.mrf.mxu0
        %v821 = vadd.f32 %v572, %v820
        %822 = vmatmul.bf16.gmra.mxu0 %v551
        %v823 = vpop.f32.mrf.mxu0
        %v824 = vadd.f32 %v572, %v823
        %v825 = vpop.f32.mrf.mxu0
        %v826 = vadd.f32 %v572, %v825
        %827 = vmatmul.bf16.gmra.mxu0 %v552
        %v828 = vpop.f32.mrf.mxu0
        %v829 = vadd.f32 %v572, %v828
        %v830 = vpop.f32.mrf.mxu0
        %v831 = vadd.f32 %v572, %v830
        %832 = vdwg.mxu0
        %v833 = vpack.c.bf16 %v665, %v665
        %v834 = vpack.c.bf16 %v667, %v667
        %v835 = vpack.c.bf16 %v670, %v670
        %v836 = vpack.c.bf16 %v672, %v672
        %v837 = vpack.c.bf16 %v675, %v675
        %v838 = vpack.c.bf16 %v677, %v677
        %v839 = vpack.c.bf16 %v680, %v680
        %v840 = vpack.c.bf16 %v682, %v682
        %v841 = vpack.c.bf16 %v685, %v685
        %v842 = vpack.c.bf16 %v687, %v687
        %v843 = vpack.c.bf16 %v690, %v690
        %v844 = vpack.c.bf16 %v692, %v692
        %v845 = vpack.c.bf16 %v695, %v695
        %v846 = vpack.c.bf16 %v697, %v697
        %v847 = vpack.c.bf16 %v700, %v700
        %v848 = vpack.c.bf16 %v702, %v702
        %v849 = vpack.c.bf16 %v705, %v705
        %v850 = vpack.c.bf16 %v707, %v707
        %v851 = vpack.c.bf16 %v710, %v710
        %v852 = vpack.c.bf16 %v712, %v712
        %v853 = vpack.c.bf16 %v715, %v715
        %v854 = vpack.c.bf16 %v717, %v717
        %v855 = vpack.c.bf16 %v720, %v720
        %v856 = vpack.c.bf16 %v722, %v722
        %v857 = vpack.c.bf16 %v725, %v725
        %v858 = vpack.c.bf16 %v727, %v727
        %v859 = vpack.c.bf16 %v730, %v730
        %v860 = vpack.c.bf16 %v732, %v732
        %v861 = vpack.c.bf16 %v735, %v735
        %v862 = vpack.c.bf16 %v737, %v737
        %v863 = vpack.c.bf16 %v740, %v740
        %v864 = vpack.c.bf16 %v742, %v742
        %v865 = vpack.c.bf16 %v754, %v754
        %v866 = vpack.c.bf16 %v756, %v756
        %v867 = vpack.c.bf16 %v759, %v759
        %v868 = vpack.c.bf16 %v761, %v761
        %v869 = vpack.c.bf16 %v764, %v764
        %v870 = vpack.c.bf16 %v766, %v766
        %v871 = vpack.c.bf16 %v769, %v769
        %v872 = vpack.c.bf16 %v771, %v771
        %v873 = vpack.c.bf16 %v774, %v774
        %v874 = vpack.c.bf16 %v776, %v776
        %v875 = vpack.c.bf16 %v779, %v779
        %v876 = vpack.c.bf16 %v781, %v781
        %v877 = vpack.c.bf16 %v784, %v784
        %v878 = vpack.c.bf16 %v786, %v786
        %v879 = vpack.c.bf16 %v789, %v789
        %v880 = vpack.c.bf16 %v791, %v791
        %v881 = vpack.c.bf16 %v794, %v794
        %v882 = vpack.c.bf16 %v796, %v796
        %v883 = vpack.c.bf16 %v799, %v799
        %v884 = vpack.c.bf16 %v801, %v801
        %v885 = vpack.c.bf16 %v804, %v804
        %v886 = vpack.c.bf16 %v806, %v806
        %v887 = vpack.c.bf16 %v809, %v809
        %v888 = vpack.c.bf16 %v811, %v811
        %v889 = vpack.c.bf16 %v814, %v814
        %v890 = vpack.c.bf16 %v816, %v816
        %v891 = vpack.c.bf16 %v819, %v819
        %v892 = vpack.c.bf16 %v821, %v821
        %v893 = vpack.c.bf16 %v824, %v824
        %v894 = vpack.c.bf16 %v826, %v826
        %v895 = vpack.c.bf16 %v829, %v829
        %v896 = vpack.c.bf16 %v831, %v831
        %v897 = vld [vmem:[#allocation8] sm:$0xff]
        %v898 = vld [vmem:[#allocation8 + $0x8] sm:$0x1]
        %v899 = vlaneseq
        %v900 = vshrl.u32 %v899, 7
        %v901 = vadd.s32 %v900, 8
        %v902 = vadd.s32 %v900, 16
        %v903 = vadd.s32 %v900, 24
        %v904 = vadd.s32 %v900, 32
        %v905 = vadd.s32 %v900, 40
        %v906 = vadd.s32 %v900, 48
        %v907 = vadd.s32 %v900, 56
        %v908 = vadd.s32 %v900, 64
        %v909 = vadd.s32 %v900, 72
        %v910 = vadd.s32 %v900, 80
        %v911 = vadd.s32 %v900, 88
        %v912 = vadd.s32 %v900, 96
        %v913 = vadd.s32 %v900, 104
        %v914 = vadd.s32 %v900, 112
        %v915 = vadd.s32 %v900, 120
        %v916 = vadd.s32 %v900, 128
        %v917 = vadd.s32 %v900, 136
        %v918 = vadd.s32 %v900, 144
        %v919 = vadd.s32 %v900, 152
        %v920 = vadd.s32 %v900, 160
        %v921 = vadd.s32 %v900, 168
        %v922 = vadd.s32 %v900, 176
        %v923 = vadd.s32 %v900, 184
        %v924 = vadd.s32 %v900, 192
        %v925 = vadd.s32 %v900, 200
        %v926 = vadd.s32 %v900, 208
        %v927 = vadd.s32 %v900, 216
        %v928 = vadd.s32 %v900, 224
        %v929 = vadd.s32 %v900, 232
        %v930 = vadd.s32 %v900, 240
        %v931 = vadd.s32 %v900, 248
        %v932 = vand.u32 %v900, 15
        %v933 = vand.u32 %v901, 15
        %v934 = vand.u32 %v902, 15
        %v935 = vand.u32 %v903, 15
        %v936 = vand.u32 %v904, 15
        %v937 = vand.u32 %v905, 15
        %v938 = vand.u32 %v906, 15
        %v939 = vand.u32 %v907, 15
        %v940 = vand.u32 %v908, 15
        %v941 = vand.u32 %v909, 15
        %v942 = vand.u32 %v910, 15
        %v943 = vand.u32 %v911, 15
        %v944 = vand.u32 %v912, 15
        %v945 = vand.u32 %v913, 15
        %v946 = vand.u32 %v914, 15
        %v947 = vand.u32 %v915, 15
        %v948 = vand.u32 %v916, 15
        %v949 = vand.u32 %v917, 15
        %v950 = vand.u32 %v918, 15
        %v951 = vand.u32 %v919, 15
        %v952 = vand.u32 %v920, 15
        %v953 = vand.u32 %v921, 15
        %v954 = vand.u32 %v922, 15
        %v955 = vand.u32 %v923, 15
        %v956 = vand.u32 %v924, 15
        %v957 = vand.u32 %v925, 15
        %v958 = vand.u32 %v926, 15
        %v959 = vand.u32 %v927, 15
        %v960 = vand.u32 %v928, 15
        %v961 = vand.u32 %v929, 15
        %v962 = vand.u32 %v930, 15
        %v963 = vand.u32 %v931, 15
        %vm964 = vcmp.ge.s32.totalorder %v932, 1
        %vm965 = vcmp.ge.s32.totalorder %v933, 1
        %vm966 = vcmp.ge.s32.totalorder %v934, 1
        %vm967 = vcmp.ge.s32.totalorder %v935, 1
        %vm968 = vcmp.ge.s32.totalorder %v936, 1
        %vm969 = vcmp.ge.s32.totalorder %v937, 1
        %vm970 = vcmp.ge.s32.totalorder %v938, 1
        %vm971 = vcmp.ge.s32.totalorder %v939, 1
        %vm972 = vcmp.ge.s32.totalorder %v940, 1
        %vm973 = vcmp.ge.s32.totalorder %v941, 1
        %vm974 = vcmp.ge.s32.totalorder %v942, 1
        %vm975 = vcmp.ge.s32.totalorder %v943, 1
        %vm976 = vcmp.ge.s32.totalorder %v944, 1
        %vm977 = vcmp.ge.s32.totalorder %v945, 1
        %vm978 = vcmp.ge.s32.totalorder %v946, 1
        %vm979 = vcmp.ge.s32.totalorder %v947, 1
        %vm980 = vcmp.ge.s32.totalorder %v948, 1
        %vm981 = vcmp.ge.s32.totalorder %v949, 1
        %vm982 = vcmp.ge.s32.totalorder %v950, 1
        %vm983 = vcmp.ge.s32.totalorder %v951, 1
        %vm984 = vcmp.ge.s32.totalorder %v952, 1
        %vm985 = vcmp.ge.s32.totalorder %v953, 1
        %vm986 = vcmp.ge.s32.totalorder %v954, 1
        %vm987 = vcmp.ge.s32.totalorder %v955, 1
        %vm988 = vcmp.ge.s32.totalorder %v956, 1
        %vm989 = vcmp.ge.s32.totalorder %v957, 1
        %vm990 = vcmp.ge.s32.totalorder %v958, 1
        %vm991 = vcmp.ge.s32.totalorder %v959, 1
        %vm992 = vcmp.ge.s32.totalorder %v960, 1
        %vm993 = vcmp.ge.s32.totalorder %v961, 1
        %vm994 = vcmp.ge.s32.totalorder %v962, 1
        %vm995 = vcmp.ge.s32.totalorder %v963, 1
        %v996 = vsel %vm964, 1, 0
        %v997 = vsel %vm965, 1, 0
        %v998 = vsel %vm966, 1, 0
        %v999 = vsel %vm967, 1, 0
        %v1000 = vsel %vm968, 1, 0
        %v1001 = vsel %vm969, 1, 0
        %v1002 = vsel %vm970, 1, 0
        %v1003 = vsel %vm971, 1, 0
        %v1004 = vsel %vm972, 1, 0
        %v1005 = vsel %vm973, 1, 0
        %v1006 = vsel %vm974, 1, 0
        %v1007 = vsel %vm975, 1, 0
        %v1008 = vsel %vm976, 1, 0
        %v1009 = vsel %vm977, 1, 0
        %v1010 = vsel %vm978, 1, 0
        %v1011 = vsel %vm979, 1, 0
        %v1012 = vsel %vm980, 1, 0
        %v1013 = vsel %vm981, 1, 0
        %v1014 = vsel %vm982, 1, 0
        %v1015 = vsel %vm983, 1, 0
        %v1016 = vsel %vm984, 1, 0
        %v1017 = vsel %vm985, 1, 0
        %v1018 = vsel %vm986, 1, 0
        %v1019 = vsel %vm987, 1, 0
        %v1020 = vsel %vm988, 1, 0
        %v1021 = vsel %vm989, 1, 0
        %v1022 = vsel %vm990, 1, 0
        %v1023 = vsel %vm991, 1, 0
        %v1024 = vsel %vm992, 1, 0
        %v1025 = vsel %vm993, 1, 0
        %v1026 = vsel %vm994, 1, 0
        %v1027 = vsel %vm995, 1, 0
        %v1028 = vcvt.s32.f32 %v996
        %v1029 = vcvt.s32.f32 %v997
        %v1030 = vcvt.s32.f32 %v998
        %v1031 = vcvt.s32.f32 %v999
        %v1032 = vcvt.s32.f32 %v1000
        %v1033 = vcvt.s32.f32 %v1001
        %v1034 = vcvt.s32.f32 %v1002
        %v1035 = vcvt.s32.f32 %v1003
        %v1036 = vcvt.s32.f32 %v1004
        %v1037 = vcvt.s32.f32 %v1005
        %v1038 = vcvt.s32.f32 %v1006
        %v1039 = vcvt.s32.f32 %v1007
        %v1040 = vcvt.s32.f32 %v1008
        %v1041 = vcvt.s32.f32 %v1009
        %v1042 = vcvt.s32.f32 %v1010
        %v1043 = vcvt.s32.f32 %v1011
        %v1044 = vcvt.s32.f32 %v1012
        %v1045 = vcvt.s32.f32 %v1013
        %v1046 = vcvt.s32.f32 %v1014
        %v1047 = vcvt.s32.f32 %v1015
        %v1048 = vcvt.s32.f32 %v1016
        %v1049 = vcvt.s32.f32 %v1017
        %v1050 = vcvt.s32.f32 %v1018
        %v1051 = vcvt.s32.f32 %v1019
        %v1052 = vcvt.s32.f32 %v1020
        %v1053 = vcvt.s32.f32 %v1021
        %v1054 = vcvt.s32.f32 %v1022
        %v1055 = vcvt.s32.f32 %v1023
        %v1056 = vcvt.s32.f32 %v1024
        %v1057 = vcvt.s32.f32 %v1025
        %v1058 = vcvt.s32.f32 %v1026
        %v1059 = vcvt.s32.f32 %v1027
        %vm1060 = vcmp.le.s32.totalorder %v932, 14
        %vm1061 = vcmp.le.s32.totalorder %v933, 14
        %vm1062 = vcmp.le.s32.totalorder %v934, 14
        %vm1063 = vcmp.le.s32.totalorder %v935, 14
        %vm1064 = vcmp.le.s32.totalorder %v936, 14
        %vm1065 = vcmp.le.s32.totalorder %v937, 14
        %vm1066 = vcmp.le.s32.totalorder %v938, 14
        %vm1067 = vcmp.le.s32.totalorder %v939, 14
        %vm1068 = vcmp.le.s32.totalorder %v940, 14
        %vm1069 = vcmp.le.s32.totalorder %v941, 14
        %vm1070 = vcmp.le.s32.totalorder %v942, 14
        %vm1071 = vcmp.le.s32.totalorder %v943, 14
        %vm1072 = vcmp.le.s32.totalorder %v944, 14
        %vm1073 = vcmp.le.s32.totalorder %v945, 14
        %vm1074 = vcmp.le.s32.totalorder %v946, 14
        %vm1075 = vcmp.le.s32.totalorder %v947, 14
        %vm1076 = vcmp.le.s32.totalorder %v948, 14
        %vm1077 = vcmp.le.s32.totalorder %v949, 14
        %vm1078 = vcmp.le.s32.totalorder %v950, 14
        %vm1079 = vcmp.le.s32.totalorder %v951, 14
        %vm1080 = vcmp.le.s32.totalorder %v952, 14
        %vm1081 = vcmp.le.s32.totalorder %v953, 14
        %vm1082 = vcmp.le.s32.totalorder %v954, 14
        %vm1083 = vcmp.le.s32.totalorder %v955, 14
        %vm1084 = vcmp.le.s32.totalorder %v956, 14
        %vm1085 = vcmp.le.s32.totalorder %v957, 14
        %vm1086 = vcmp.le.s32.totalorder %v958, 14
        %vm1087 = vcmp.le.s32.totalorder %v959, 14
        %vm1088 = vcmp.le.s32.totalorder %v960, 14
        %vm1089 = vcmp.le.s32.totalorder %v961, 14
        %vm1090 = vcmp.le.s32.totalorder %v962, 14
        %vm1091 = vcmp.le.s32.totalorder %v963, 14
        %v1092 = vsel %vm1060, 1, 0
        %v1093 = vsel %vm1061, 1, 0
        %v1094 = vsel %vm1062, 1, 0
        %v1095 = vsel %vm1063, 1, 0
        %v1096 = vsel %vm1064, 1, 0
        %v1097 = vsel %vm1065, 1, 0
        %v1098 = vsel %vm1066, 1, 0
        %v1099 = vsel %vm1067, 1, 0
        %v1100 = vsel %vm1068, 1, 0
        %v1101 = vsel %vm1069, 1, 0
        %v1102 = vsel %vm1070, 1, 0
        %v1103 = vsel %vm1071, 1, 0
        %v1104 = vsel %vm1072, 1, 0
        %v1105 = vsel %vm1073, 1, 0
        %v1106 = vsel %vm1074, 1, 0
        %v1107 = vsel %vm1075, 1, 0
        %v1108 = vsel %vm1076, 1, 0
        %v1109 = vsel %vm1077, 1, 0
        %v1110 = vsel %vm1078, 1, 0
        %v1111 = vsel %vm1079, 1, 0
        %v1112 = vsel %vm1080, 1, 0
        %v1113 = vsel %vm1081, 1, 0
        %v1114 = vsel %vm1082, 1, 0
        %v1115 = vsel %vm1083, 1, 0
        %v1116 = vsel %vm1084, 1, 0
        %v1117 = vsel %vm1085, 1, 0
        %v1118 = vsel %vm1086, 1, 0
        %v1119 = vsel %vm1087, 1, 0
        %v1120 = vsel %vm1088, 1, 0
        %v1121 = vsel %vm1089, 1, 0
        %v1122 = vsel %vm1090, 1, 0
        %v1123 = vsel %vm1091, 1, 0
        %v1124 = vcvt.s32.f32 %v1092
        %v1125 = vcvt.s32.f32 %v1093
        %v1126 = vcvt.s32.f32 %v1094
        %v1127 = vcvt.s32.f32 %v1095
        %v1128 = vcvt.s32.f32 %v1096
        %v1129 = vcvt.s32.f32 %v1097
        %v1130 = vcvt.s32.f32 %v1098
        %v1131 = vcvt.s32.f32 %v1099
        %v1132 = vcvt.s32.f32 %v1100
        %v1133 = vcvt.s32.f32 %v1101
        %v1134 = vcvt.s32.f32 %v1102
        %v1135 = vcvt.s32.f32 %v1103
        %v1136 = vcvt.s32.f32 %v1104
        %v1137 = vcvt.s32.f32 %v1105
        %v1138 = vcvt.s32.f32 %v1106
        %v1139 = vcvt.s32.f32 %v1107
        %v1140 = vcvt.s32.f32 %v1108
        %v1141 = vcvt.s32.f32 %v1109
        %v1142 = vcvt.s32.f32 %v1110
        %v1143 = vcvt.s32.f32 %v1111
        %v1144 = vcvt.s32.f32 %v1112
        %v1145 = vcvt.s32.f32 %v1113
        %v1146 = vcvt.s32.f32 %v1114
        %v1147 = vcvt.s32.f32 %v1115
        %v1148 = vcvt.s32.f32 %v1116
        %v1149 = vcvt.s32.f32 %v1117
        %v1150 = vcvt.s32.f32 %v1118
        %v1151 = vcvt.s32.f32 %v1119
        %v1152 = vcvt.s32.f32 %v1120
        %v1153 = vcvt.s32.f32 %v1121
        %v1154 = vcvt.s32.f32 %v1122
        %v1155 = vcvt.s32.f32 %v1123
        %v1156 = vperm.slane %v897, 4
        %v1157 = vmul.f32 %v754, %v1156
        %v1158 = vmul.f32 %v756, %v1156
        %v1159 = vmul.f32 %v759, %v1156
        %v1160 = vmul.f32 %v761, %v1156
        %v1161 = vmul.f32 %v764, %v1156
        %v1162 = vmul.f32 %v766, %v1156
        %v1163 = vmul.f32 %v769, %v1156
        %v1164 = vmul.f32 %v771, %v1156
        %v1165 = vmul.f32 %v774, %v1156
        %v1166 = vmul.f32 %v776, %v1156
        %v1167 = vmul.f32 %v779, %v1156
        %v1168 = vmul.f32 %v781, %v1156
        %v1169 = vmul.f32 %v784, %v1156
        %v1170 = vmul.f32 %v786, %v1156
        %v1171 = vmul.f32 %v789, %v1156
        %v1172 = vmul.f32 %v791, %v1156
        %v1173 = vmul.f32 %v794, %v1156
        %v1174 = vmul.f32 %v796, %v1156
        %v1175 = vmul.f32 %v799, %v1156
        %v1176 = vmul.f32 %v801, %v1156
        %v1177 = vmul.f32 %v804, %v1156
        %v1178 = vmul.f32 %v806, %v1156
        %v1179 = vmul.f32 %v809, %v1156
        %v1180 = vmul.f32 %v811, %v1156
        %v1181 = vmul.f32 %v814, %v1156
        %v1182 = vmul.f32 %v816, %v1156
        %v1183 = vmul.f32 %v819, %v1156
        %v1184 = vmul.f32 %v821, %v1156
        %v1185 = vmul.f32 %v824, %v1156
        %v1186 = vmul.f32 %v826, %v1156
        %v1187 = vmul.f32 %v829, %v1156
        %v1188 = vmul.f32 %v831, %v1156
        %vm1219 = vcmask 1040384
        %v1220 = vrot.slane %v754, 7
        %v1221 = vrot.slane %v756, 7
        %v1222 = vsel %vm1219, %v1220, %v1221
        %v1223 = vrot.slane %v759, 7
        %v1224 = vsel %vm1219, %v1221, %v1223
        %v1225 = vrot.slane %v761, 7
        %v1226 = vsel %vm1219, %v1223, %v1225
        %v1227 = vrot.slane %v764, 7
        %v1228 = vsel %vm1219, %v1225, %v1227
        %v1229 = vrot.slane %v766, 7
        %v1230 = vsel %vm1219, %v1227, %v1229
        %v1231 = vrot.slane %v769, 7
        %v1232 = vsel %vm1219, %v1229, %v1231
        %v1233 = vrot.slane %v771, 7
        %v1234 = vsel %vm1219, %v1231, %v1233
        %v1235 = vrot.slane %v774, 7
        %v1236 = vsel %vm1219, %v1233, %v1235
        %v1237 = vrot.slane %v776, 7
        %v1238 = vsel %vm1219, %v1235, %v1237
        %v1239 = vrot.slane %v779, 7
        %v1240 = vsel %vm1219, %v1237, %v1239
        %v1241 = vrot.slane %v781, 7
        %v1242 = vsel %vm1219, %v1239, %v1241
        %v1243 = vrot.slane %v784, 7
        %v1244 = vsel %vm1219, %v1241, %v1243
        %v1245 = vrot.slane %v786, 7
        %v1246 = vsel %vm1219, %v1243, %v1245
        %v1247 = vrot.slane %v789, 7
        %v1248 = vsel %vm1219, %v1245, %v1247
        %v1249 = vrot.slane %v791, 7
        %v1250 = vsel %vm1219, %v1247, %v1249
        %v1251 = vrot.slane %v794, 7
        %v1252 = vsel %vm1219, %v1249, %v1251
        %v1253 = vrot.slane %v796, 7
        %v1254 = vsel %vm1219, %v1251, %v1253
        %v1255 = vrot.slane %v799, 7
        %v1256 = vsel %vm1219, %v1253, %v1255
        %v1257 = vrot.slane %v801, 7
        %v1258 = vsel %vm1219, %v1255, %v1257
        %v1259 = vrot.slane %v804, 7
        %v1260 = vsel %vm1219, %v1257, %v1259
        %v1261 = vrot.slane %v806, 7
        %v1262 = vsel %vm1219, %v1259, %v1261
        %v1263 = vrot.slane %v809, 7
        %v1264 = vsel %vm1219, %v1261, %v1263
        %v1265 = vrot.slane %v811, 7
        %v1266 = vsel %vm1219, %v1263, %v1265
        %v1267 = vrot.slane %v814, 7
        %v1268 = vsel %vm1219, %v1265, %v1267
        %v1269 = vrot.slane %v816, 7
        %v1270 = vsel %vm1219, %v1267, %v1269
        %v1271 = vrot.slane %v819, 7
        %v1272 = vsel %vm1219, %v1269, %v1271
        %v1273 = vrot.slane %v821, 7
        %v1274 = vsel %vm1219, %v1271, %v1273
        %v1275 = vrot.slane %v824, 7
        %v1276 = vsel %vm1219, %v1273, %v1275
        %v1277 = vrot.slane %v826, 7
        %v1278 = vsel %vm1219, %v1275, %v1277
        %v1309 = vsel %vm1219, 0.0, %v1220
        %v1310 = vperm.slane %v897, 0
        %v1311 = vmul.f32 %v1310, 0.0
        %v1312 = vmul.f32 %v1309, %v1310
        %v1313 = vmul.f32 %v1222, %v1310
        %v1314 = vmul.f32 %v1224, %v1310
        %v1315 = vmul.f32 %v1226, %v1310
        %v1316 = vmul.f32 %v1228, %v1310
        %v1317 = vmul.f32 %v1230, %v1310
        %v1318 = vmul.f32 %v1232, %v1310
        %v1319 = vmul.f32 %v1234, %v1310
        %v1320 = vmul.f32 %v1236, %v1310
        %v1321 = vmul.f32 %v1238, %v1310
        %v1322 = vmul.f32 %v1240, %v1310
        %v1323 = vmul.f32 %v1242, %v1310
        %v1324 = vmul.f32 %v1244, %v1310
        %v1325 = vmul.f32 %v1246, %v1310
        %v1326 = vmul.f32 %v1248, %v1310
        %v1327 = vmul.f32 %v1250, %v1310
        %v1328 = vmul.f32 %v1252, %v1310
        %v1329 = vmul.f32 %v1254, %v1310
        %v1330 = vmul.f32 %v1256, %v1310
        %v1331 = vmul.f32 %v1258, %v1310
        %v1332 = vmul.f32 %v1260, %v1310
        %v1333 = vmul.f32 %v1262, %v1310
        %v1334 = vmul.f32 %v1264, %v1310
        %v1335 = vmul.f32 %v1266, %v1310
        %v1336 = vmul.f32 %v1268, %v1310
        %v1337 = vmul.f32 %v1270, %v1310
        %v1338 = vmul.f32 %v1272, %v1310
        %v1339 = vmul.f32 %v1274, %v1310
        %v1340 = vmul.f32 %v1276, %v1310
        %v1341 = vmul.f32 %v1278, %v1310
        %v1342 = vmul.f32 %v1311, %v1028
        %v1343 = vmul.f32 %v1311, %v1029
        %v1344 = vmul.f32 %v1312, %v1030
        %v1345 = vmul.f32 %v1313, %v1031
        %v1346 = vmul.f32 %v1314, %v1032
        %v1347 = vmul.f32 %v1315, %v1033
        %v1348 = vmul.f32 %v1316, %v1034
        %v1349 = vmul.f32 %v1317, %v1035
        %v1350 = vmul.f32 %v1318, %v1036
        %v1351 = vmul.f32 %v1319, %v1037
        %v1352 = vmul.f32 %v1320, %v1038
        %v1353 = vmul.f32 %v1321, %v1039
        %v1354 = vmul.f32 %v1322, %v1040
        %v1355 = vmul.f32 %v1323, %v1041
        %v1356 = vmul.f32 %v1324, %v1042
        %v1357 = vmul.f32 %v1325, %v1043
        %v1358 = vmul.f32 %v1326, %v1044
        %v1359 = vmul.f32 %v1327, %v1045
        %v1360 = vmul.f32 %v1328, %v1046
        %v1361 = vmul.f32 %v1329, %v1047
        %v1362 = vmul.f32 %v1330, %v1048
        %v1363 = vmul.f32 %v1331, %v1049
        %v1364 = vmul.f32 %v1332, %v1050
        %v1365 = vmul.f32 %v1333, %v1051
        %v1366 = vmul.f32 %v1334, %v1052
        %v1367 = vmul.f32 %v1335, %v1053
        %v1368 = vmul.f32 %v1336, %v1054
        %v1369 = vmul.f32 %v1337, %v1055
        %v1370 = vmul.f32 %v1338, %v1056
        %v1371 = vmul.f32 %v1339, %v1057
        %v1372 = vmul.f32 %v1340, %v1058
        %v1373 = vmul.f32 %v1341, %v1059
        %v1374 = vadd.f32 %v1157, %v1342
        %v1375 = vadd.f32 %v1158, %v1343
        %v1376 = vadd.f32 %v1159, %v1344
        %v1377 = vadd.f32 %v1160, %v1345
        %v1378 = vadd.f32 %v1161, %v1346
        %v1379 = vadd.f32 %v1162, %v1347
        %v1380 = vadd.f32 %v1163, %v1348
        %v1381 = vadd.f32 %v1164, %v1349
        %v1382 = vadd.f32 %v1165, %v1350
        %v1383 = vadd.f32 %v1166, %v1351
        %v1384 = vadd.f32 %v1167, %v1352
        %v1385 = vadd.f32 %v1168, %v1353
        %v1386 = vadd.f32 %v1169, %v1354
        %v1387 = vadd.f32 %v1170, %v1355
        %v1388 = vadd.f32 %v1171, %v1356
        %v1389 = vadd.f32 %v1172, %v1357
        %v1390 = vadd.f32 %v1173, %v1358
        %v1391 = vadd.f32 %v1174, %v1359
        %v1392 = vadd.f32 %v1175, %v1360
        %v1393 = vadd.f32 %v1176, %v1361
        %v1394 = vadd.f32 %v1177, %v1362
        %v1395 = vadd.f32 %v1178, %v1363
        %v1396 = vadd.f32 %v1179, %v1364
        %v1397 = vadd.f32 %v1180, %v1365
        %v1398 = vadd.f32 %v1181, %v1366
        %v1399 = vadd.f32 %v1182, %v1367
        %v1400 = vadd.f32 %v1183, %v1368
        %v1401 = vadd.f32 %v1184, %v1369
        %v1402 = vadd.f32 %v1185, %v1370
        %v1403 = vadd.f32 %v1186, %v1371
        %v1404 = vadd.f32 %v1187, %v1372
        %v1405 = vadd.f32 %v1188, %v1373
        %v1406 = vperm.slane %v897, 1
        %v1407 = vmul.f32 %v1406, 0.0
        %v1408 = vmul.f32 %v754, %v1406
        %v1409 = vmul.f32 %v756, %v1406
        %v1410 = vmul.f32 %v759, %v1406
        %v1411 = vmul.f32 %v761, %v1406
        %v1412 = vmul.f32 %v764, %v1406
        %v1413 = vmul.f32 %v766, %v1406
        %v1414 = vmul.f32 %v769, %v1406
        %v1415 = vmul.f32 %v771, %v1406
        %v1416 = vmul.f32 %v774, %v1406
        %v1417 = vmul.f32 %v776, %v1406
        %v1418 = vmul.f32 %v779, %v1406
        %v1419 = vmul.f32 %v781, %v1406
        %v1420 = vmul.f32 %v784, %v1406
        %v1421 = vmul.f32 %v786, %v1406
        %v1422 = vmul.f32 %v789, %v1406
        %v1423 = vmul.f32 %v791, %v1406
        %v1424 = vmul.f32 %v794, %v1406
        %v1425 = vmul.f32 %v796, %v1406
        %v1426 = vmul.f32 %v799, %v1406
        %v1427 = vmul.f32 %v801, %v1406
        %v1428 = vmul.f32 %v804, %v1406
        %v1429 = vmul.f32 %v806, %v1406
        %v1430 = vmul.f32 %v809, %v1406
        %v1431 = vmul.f32 %v811, %v1406
        %v1432 = vmul.f32 %v814, %v1406
        %v1433 = vmul.f32 %v816, %v1406
        %v1434 = vmul.f32 %v819, %v1406
        %v1435 = vmul.f32 %v821, %v1406
        %v1436 = vmul.f32 %v824, %v1406
        %v1437 = vmul.f32 %v826, %v1406
        %v1438 = vadd.f32 %v1374, %v1407
        %v1439 = vadd.f32 %v1375, %v1407
        %v1440 = vadd.f32 %v1376, %v1408
        %v1441 = vadd.f32 %v1377, %v1409
        %v1442 = vadd.f32 %v1378, %v1410
        %v1443 = vadd.f32 %v1379, %v1411
        %v1444 = vadd.f32 %v1380, %v1412
        %v1445 = vadd.f32 %v1381, %v1413
        %v1446 = vadd.f32 %v1382, %v1414
        %v1447 = vadd.f32 %v1383, %v1415
        %v1448 = vadd.f32 %v1384, %v1416
        %v1449 = vadd.f32 %v1385, %v1417
        %v1450 = vadd.f32 %v1386, %v1418
        %v1451 = vadd.f32 %v1387, %v1419
        %v1452 = vadd.f32 %v1388, %v1420
        %v1453 = vadd.f32 %v1389, %v1421
        %v1454 = vadd.f32 %v1390, %v1422
        %v1455 = vadd.f32 %v1391, %v1423
        %v1456 = vadd.f32 %v1392, %v1424
        %v1457 = vadd.f32 %v1393, %v1425
        %v1458 = vadd.f32 %v1394, %v1426
        %v1459 = vadd.f32 %v1395, %v1427
        %v1460 = vadd.f32 %v1396, %v1428
        %v1461 = vadd.f32 %v1397, %v1429
        %v1462 = vadd.f32 %v1398, %v1430
        %v1463 = vadd.f32 %v1399, %v1431
        %v1464 = vadd.f32 %v1400, %v1432
        %v1465 = vadd.f32 %v1401, %v1433
        %v1466 = vadd.f32 %v1402, %v1434
        %v1467 = vadd.f32 %v1403, %v1435
        %v1468 = vadd.f32 %v1404, %v1436
        %v1469 = vadd.f32 %v1405, %v1437
        %vm1471 = vcmask 1046528
        %v1472 = vrot.slane %v754, 1
        %v1473 = vrot.slane %v756, 1
        %v1474 = vsel %vm1471, %v1472, %v1473
        %v1475 = vrot.slane %v759, 1
        %v1476 = vsel %vm1471, %v1473, %v1475
        %v1477 = vrot.slane %v761, 1
        %v1478 = vsel %vm1471, %v1475, %v1477
        %v1479 = vrot.slane %v764, 1
        %v1480 = vsel %vm1471, %v1477, %v1479
        %v1481 = vrot.slane %v766, 1
        %v1482 = vsel %vm1471, %v1479, %v1481
        %v1483 = vrot.slane %v769, 1
        %v1484 = vsel %vm1471, %v1481, %v1483
        %v1485 = vrot.slane %v771, 1
        %v1486 = vsel %vm1471, %v1483, %v1485
        %v1487 = vrot.slane %v774, 1
        %v1488 = vsel %vm1471, %v1485, %v1487
        %v1489 = vrot.slane %v776, 1
        %v1490 = vsel %vm1471, %v1487, %v1489
        %v1491 = vrot.slane %v779, 1
        %v1492 = vsel %vm1471, %v1489, %v1491
        %v1493 = vrot.slane %v781, 1
        %v1494 = vsel %vm1471, %v1491, %v1493
        %v1495 = vrot.slane %v784, 1
        %v1496 = vsel %vm1471, %v1493, %v1495
        %v1497 = vrot.slane %v786, 1
        %v1498 = vsel %vm1471, %v1495, %v1497
        %v1499 = vrot.slane %v789, 1
        %v1500 = vsel %vm1471, %v1497, %v1499
        %v1501 = vrot.slane %v791, 1
        %v1502 = vsel %vm1471, %v1499, %v1501
        %v1503 = vrot.slane %v794, 1
        %v1504 = vsel %vm1471, %v1501, %v1503
        %v1505 = vrot.slane %v796, 1
        %v1506 = vsel %vm1471, %v1503, %v1505
        %v1507 = vrot.slane %v799, 1
        %v1508 = vsel %vm1471, %v1505, %v1507
        %v1509 = vrot.slane %v801, 1
        %v1510 = vsel %vm1471, %v1507, %v1509
        %v1511 = vrot.slane %v804, 1
        %v1512 = vsel %vm1471, %v1509, %v1511
        %v1513 = vrot.slane %v806, 1
        %v1514 = vsel %vm1471, %v1511, %v1513
        %v1515 = vrot.slane %v809, 1
        %v1516 = vsel %vm1471, %v1513, %v1515
        %v1517 = vrot.slane %v811, 1
        %v1518 = vsel %vm1471, %v1515, %v1517
        %v1519 = vrot.slane %v814, 1
        %v1520 = vsel %vm1471, %v1517, %v1519
        %v1521 = vrot.slane %v816, 1
        %v1522 = vsel %vm1471, %v1519, %v1521
        %v1523 = vrot.slane %v819, 1
        %v1524 = vsel %vm1471, %v1521, %v1523
        %v1525 = vrot.slane %v821, 1
        %v1526 = vsel %vm1471, %v1523, %v1525
        %v1527 = vrot.slane %v824, 1
        %v1528 = vsel %vm1471, %v1525, %v1527
        %v1529 = vrot.slane %v826, 1
        %v1530 = vsel %vm1471, %v1527, %v1529
        %v1531 = vrot.slane %v829, 1
        %v1532 = vsel %vm1471, %v1529, %v1531
        %v1564 = vsel %vm1471, 0.0, %v1472
        %v1565 = vperm.slane %v897, 2
        %v1566 = vmul.f32 %v1565, 0.0
        %v1567 = vmul.f32 %v1564, %v1565
        %v1568 = vmul.f32 %v1474, %v1565
        %v1569 = vmul.f32 %v1476, %v1565
        %v1570 = vmul.f32 %v1478, %v1565
        %v1571 = vmul.f32 %v1480, %v1565
        %v1572 = vmul.f32 %v1482, %v1565
        %v1573 = vmul.f32 %v1484, %v1565
        %v1574 = vmul.f32 %v1486, %v1565
        %v1575 = vmul.f32 %v1488, %v1565
        %v1576 = vmul.f32 %v1490, %v1565
        %v1577 = vmul.f32 %v1492, %v1565
        %v1578 = vmul.f32 %v1494, %v1565
        %v1579 = vmul.f32 %v1496, %v1565
        %v1580 = vmul.f32 %v1498, %v1565
        %v1581 = vmul.f32 %v1500, %v1565
        %v1582 = vmul.f32 %v1502, %v1565
        %v1583 = vmul.f32 %v1504, %v1565
        %v1584 = vmul.f32 %v1506, %v1565
        %v1585 = vmul.f32 %v1508, %v1565
        %v1586 = vmul.f32 %v1510, %v1565
        %v1587 = vmul.f32 %v1512, %v1565
        %v1588 = vmul.f32 %v1514, %v1565
        %v1589 = vmul.f32 %v1516, %v1565
        %v1590 = vmul.f32 %v1518, %v1565
        %v1591 = vmul.f32 %v1520, %v1565
        %v1592 = vmul.f32 %v1522, %v1565
        %v1593 = vmul.f32 %v1524, %v1565
        %v1594 = vmul.f32 %v1526, %v1565
        %v1595 = vmul.f32 %v1528, %v1565
        %v1596 = vmul.f32 %v1530, %v1565
        %v1597 = vmul.f32 %v1532, %v1565
        %v1598 = vmul.f32 %v1566, %v1124
        %v1599 = vmul.f32 %v1567, %v1125
        %v1600 = vmul.f32 %v1568, %v1126
        %v1601 = vmul.f32 %v1569, %v1127
        %v1602 = vmul.f32 %v1570, %v1128
        %v1603 = vmul.f32 %v1571, %v1129
        %v1604 = vmul.f32 %v1572, %v1130
        %v1605 = vmul.f32 %v1573, %v1131
        %v1606 = vmul.f32 %v1574, %v1132
        %v1607 = vmul.f32 %v1575, %v1133
        %v1608 = vmul.f32 %v1576, %v1134
        %v1609 = vmul.f32 %v1577, %v1135
        %v1610 = vmul.f32 %v1578, %v1136
        %v1611 = vmul.f32 %v1579, %v1137
        %v1612 = vmul.f32 %v1580, %v1138
        %v1613 = vmul.f32 %v1581, %v1139
        %v1614 = vmul.f32 %v1582, %v1140
        %v1615 = vmul.f32 %v1583, %v1141
        %v1616 = vmul.f32 %v1584, %v1142
        %v1617 = vmul.f32 %v1585, %v1143
        %v1618 = vmul.f32 %v1586, %v1144
        %v1619 = vmul.f32 %v1587, %v1145
        %v1620 = vmul.f32 %v1588, %v1146
        %v1621 = vmul.f32 %v1589, %v1147
        %v1622 = vmul.f32 %v1590, %v1148
        %v1623 = vmul.f32 %v1591, %v1149
        %v1624 = vmul.f32 %v1592, %v1150
        %v1625 = vmul.f32 %v1593, %v1151
        %v1626 = vmul.f32 %v1594, %v1152
        %v1627 = vmul.f32 %v1595, %v1153
        %v1628 = vmul.f32 %v1596, %v1154
        %v1629 = vmul.f32 %v1597, %v1155
        %v1630 = vadd.f32 %v1438, %v1598
        %v1631 = vadd.f32 %v1439, %v1599
        %v1632 = vadd.f32 %v1440, %v1600
        %v1633 = vadd.f32 %v1441, %v1601
        %v1634 = vadd.f32 %v1442, %v1602
        %v1635 = vadd.f32 %v1443, %v1603
        %v1636 = vadd.f32 %v1444, %v1604
        %v1637 = vadd.f32 %v1445, %v1605
        %v1638 = vadd.f32 %v1446, %v1606
        %v1639 = vadd.f32 %v1447, %v1607
        %v1640 = vadd.f32 %v1448, %v1608
        %v1641 = vadd.f32 %v1449, %v1609
        %v1642 = vadd.f32 %v1450, %v1610
        %v1643 = vadd.f32 %v1451, %v1611
        %v1644 = vadd.f32 %v1452, %v1612
        %v1645 = vadd.f32 %v1453, %v1613
        %v1646 = vadd.f32 %v1454, %v1614
        %v1647 = vadd.f32 %v1455, %v1615
        %v1648 = vadd.f32 %v1456, %v1616
        %v1649 = vadd.f32 %v1457, %v1617
        %v1650 = vadd.f32 %v1458, %v1618
        %v1651 = vadd.f32 %v1459, %v1619
        %v1652 = vadd.f32 %v1460, %v1620
        %v1653 = vadd.f32 %v1461, %v1621
        %v1654 = vadd.f32 %v1462, %v1622
        %v1655 = vadd.f32 %v1463, %v1623
        %v1656 = vadd.f32 %v1464, %v1624
        %v1657 = vadd.f32 %v1465, %v1625
        %v1658 = vadd.f32 %v1466, %v1626
        %v1659 = vadd.f32 %v1467, %v1627
        %v1660 = vadd.f32 %v1468, %v1628
        %v1661 = vadd.f32 %v1469, %v1629
        %v1663 = vrot.slane %v829, 7
        %v1664 = vsel %vm1219, %v1277, %v1663
        %v1665 = vrot.slane %v831, 7
        %v1666 = vsel %vm1219, %v1663, %v1665
        %v1669 = vperm.slane %v897, 3
        %v1670 = vmul.f32 %v1309, %v1669
        %v1671 = vmul.f32 %v1222, %v1669
        %v1672 = vmul.f32 %v1224, %v1669
        %v1673 = vmul.f32 %v1226, %v1669
        %v1674 = vmul.f32 %v1228, %v1669
        %v1675 = vmul.f32 %v1230, %v1669
        %v1676 = vmul.f32 %v1232, %v1669
        %v1677 = vmul.f32 %v1234, %v1669
        %v1678 = vmul.f32 %v1236, %v1669
        %v1679 = vmul.f32 %v1238, %v1669
        %v1680 = vmul.f32 %v1240, %v1669
        %v1681 = vmul.f32 %v1242, %v1669
        %v1682 = vmul.f32 %v1244, %v1669
        %v1683 = vmul.f32 %v1246, %v1669
        %v1684 = vmul.f32 %v1248, %v1669
        %v1685 = vmul.f32 %v1250, %v1669
        %v1686 = vmul.f32 %v1252, %v1669
        %v1687 = vmul.f32 %v1254, %v1669
        %v1688 = vmul.f32 %v1256, %v1669
        %v1689 = vmul.f32 %v1258, %v1669
        %v1690 = vmul.f32 %v1260, %v1669
        %v1691 = vmul.f32 %v1262, %v1669
        %v1692 = vmul.f32 %v1264, %v1669
        %v1693 = vmul.f32 %v1266, %v1669
        %v1694 = vmul.f32 %v1268, %v1669
        %v1695 = vmul.f32 %v1270, %v1669
        %v1696 = vmul.f32 %v1272, %v1669
        %v1697 = vmul.f32 %v1274, %v1669
        %v1698 = vmul.f32 %v1276, %v1669
        %v1699 = vmul.f32 %v1278, %v1669
        %v1700 = vmul.f32 %v1664, %v1669
        %v1701 = vmul.f32 %v1666, %v1669
        %v1702 = vmul.f32 %v1670, %v1028
        %v1703 = vmul.f32 %v1671, %v1029
        %v1704 = vmul.f32 %v1672, %v1030
        %v1705 = vmul.f32 %v1673, %v1031
        %v1706 = vmul.f32 %v1674, %v1032
        %v1707 = vmul.f32 %v1675, %v1033
        %v1708 = vmul.f32 %v1676, %v1034
        %v1709 = vmul.f32 %v1677, %v1035
        %v1710 = vmul.f32 %v1678, %v1036
        %v1711 = vmul.f32 %v1679, %v1037
        %v1712 = vmul.f32 %v1680, %v1038
        %v1713 = vmul.f32 %v1681, %v1039
        %v1714 = vmul.f32 %v1682, %v1040
        %v1715 = vmul.f32 %v1683, %v1041
        %v1716 = vmul.f32 %v1684, %v1042
        %v1717 = vmul.f32 %v1685, %v1043
        %v1718 = vmul.f32 %v1686, %v1044
        %v1719 = vmul.f32 %v1687, %v1045
        %v1720 = vmul.f32 %v1688, %v1046
        %v1721 = vmul.f32 %v1689, %v1047
        %v1722 = vmul.f32 %v1690, %v1048
        %v1723 = vmul.f32 %v1691, %v1049
        %v1724 = vmul.f32 %v1692, %v1050
        %v1725 = vmul.f32 %v1693, %v1051
        %v1726 = vmul.f32 %v1694, %v1052
        %v1727 = vmul.f32 %v1695, %v1053
        %v1728 = vmul.f32 %v1696, %v1054
        %v1729 = vmul.f32 %v1697, %v1055
        %v1730 = vmul.f32 %v1698, %v1056
        %v1731 = vmul.f32 %v1699, %v1057
        %v1732 = vmul.f32 %v1700, %v1058
        %v1733 = vmul.f32 %v1701, %v1059
        %v1734 = vadd.f32 %v1630, %v1702
        %v1735 = vadd.f32 %v1631, %v1703
        %v1736 = vadd.f32 %v1632, %v1704
        %v1737 = vadd.f32 %v1633, %v1705
        %v1738 = vadd.f32 %v1634, %v1706
        %v1739 = vadd.f32 %v1635, %v1707
        %v1740 = vadd.f32 %v1636, %v1708
        %v1741 = vadd.f32 %v1637, %v1709
        %v1742 = vadd.f32 %v1638, %v1710
        %v1743 = vadd.f32 %v1639, %v1711
        %v1744 = vadd.f32 %v1640, %v1712
        %v1745 = vadd.f32 %v1641, %v1713
        %v1746 = vadd.f32 %v1642, %v1714
        %v1747 = vadd.f32 %v1643, %v1715
        %v1748 = vadd.f32 %v1644, %v1716
        %v1749 = vadd.f32 %v1645, %v1717
        %v1750 = vadd.f32 %v1646, %v1718
        %v1751 = vadd.f32 %v1647, %v1719
        %v1752 = vadd.f32 %v1648, %v1720
        %v1753 = vadd.f32 %v1649, %v1721
        %v1754 = vadd.f32 %v1650, %v1722
        %v1755 = vadd.f32 %v1651, %v1723
        %v1756 = vadd.f32 %v1652, %v1724
        %v1757 = vadd.f32 %v1653, %v1725
        %v1758 = vadd.f32 %v1654, %v1726
        %v1759 = vadd.f32 %v1655, %v1727
        %v1760 = vadd.f32 %v1656, %v1728
        %v1761 = vadd.f32 %v1657, %v1729
        %v1762 = vadd.f32 %v1658, %v1730
        %v1763 = vadd.f32 %v1659, %v1731
        %v1764 = vadd.f32 %v1660, %v1732
        %v1765 = vadd.f32 %v1661, %v1733
        %v1766 = vrot.slane %v831, 1
        %v1767 = vsel %vm1471, %v1531, %v1766
        %v1770 = vsel %vm1471, %v1766, 0.0
        %v1771 = vperm.slane %v897, 5
        %v1772 = vmul.f32 %v1474, %v1771
        %v1773 = vmul.f32 %v1476, %v1771
        %v1774 = vmul.f32 %v1478, %v1771
        %v1775 = vmul.f32 %v1480, %v1771
        %v1776 = vmul.f32 %v1482, %v1771
        %v1777 = vmul.f32 %v1484, %v1771
        %v1778 = vmul.f32 %v1486, %v1771
        %v1779 = vmul.f32 %v1488, %v1771
        %v1780 = vmul.f32 %v1490, %v1771
        %v1781 = vmul.f32 %v1492, %v1771
        %v1782 = vmul.f32 %v1494, %v1771
        %v1783 = vmul.f32 %v1496, %v1771
        %v1784 = vmul.f32 %v1498, %v1771
        %v1785 = vmul.f32 %v1500, %v1771
        %v1786 = vmul.f32 %v1502, %v1771
        %v1787 = vmul.f32 %v1504, %v1771
        %v1788 = vmul.f32 %v1506, %v1771
        %v1789 = vmul.f32 %v1508, %v1771
        %v1790 = vmul.f32 %v1510, %v1771
        %v1791 = vmul.f32 %v1512, %v1771
        %v1792 = vmul.f32 %v1514, %v1771
        %v1793 = vmul.f32 %v1516, %v1771
        %v1794 = vmul.f32 %v1518, %v1771
        %v1795 = vmul.f32 %v1520, %v1771
        %v1796 = vmul.f32 %v1522, %v1771
        %v1797 = vmul.f32 %v1524, %v1771
        %v1798 = vmul.f32 %v1526, %v1771
        %v1799 = vmul.f32 %v1528, %v1771
        %v1800 = vmul.f32 %v1530, %v1771
        %v1801 = vmul.f32 %v1532, %v1771
        %v1802 = vmul.f32 %v1767, %v1771
        %v1803 = vmul.f32 %v1770, %v1771
        %v1804 = vmul.f32 %v1772, %v1124
        %v1805 = vmul.f32 %v1773, %v1125
        %v1806 = vmul.f32 %v1774, %v1126
        %v1807 = vmul.f32 %v1775, %v1127
        %v1808 = vmul.f32 %v1776, %v1128
        %v1809 = vmul.f32 %v1777, %v1129
        %v1810 = vmul.f32 %v1778, %v1130
        %v1811 = vmul.f32 %v1779, %v1131
        %v1812 = vmul.f32 %v1780, %v1132
        %v1813 = vmul.f32 %v1781, %v1133
        %v1814 = vmul.f32 %v1782, %v1134
        %v1815 = vmul.f32 %v1783, %v1135
        %v1816 = vmul.f32 %v1784, %v1136
        %v1817 = vmul.f32 %v1785, %v1137
        %v1818 = vmul.f32 %v1786, %v1138
        %v1819 = vmul.f32 %v1787, %v1139
        %v1820 = vmul.f32 %v1788, %v1140
        %v1821 = vmul.f32 %v1789, %v1141
        %v1822 = vmul.f32 %v1790, %v1142
        %v1823 = vmul.f32 %v1791, %v1143
        %v1824 = vmul.f32 %v1792, %v1144
        %v1825 = vmul.f32 %v1793, %v1145
        %v1826 = vmul.f32 %v1794, %v1146
        %v1827 = vmul.f32 %v1795, %v1147
        %v1828 = vmul.f32 %v1796, %v1148
        %v1829 = vmul.f32 %v1797, %v1149
        %v1830 = vmul.f32 %v1798, %v1150
        %v1831 = vmul.f32 %v1799, %v1151
        %v1832 = vmul.f32 %v1800, %v1152
        %v1833 = vmul.f32 %v1801, %v1153
        %v1834 = vmul.f32 %v1802, %v1154
        %v1835 = vmul.f32 %v1803, %v1155
        %v1836 = vadd.f32 %v1734, %v1804
        %v1837 = vadd.f32 %v1735, %v1805
        %v1838 = vadd.f32 %v1736, %v1806
        %v1839 = vadd.f32 %v1737, %v1807
        %v1840 = vadd.f32 %v1738, %v1808
        %v1841 = vadd.f32 %v1739, %v1809
        %v1842 = vadd.f32 %v1740, %v1810
        %v1843 = vadd.f32 %v1741, %v1811
        %v1844 = vadd.f32 %v1742, %v1812
        %v1845 = vadd.f32 %v1743, %v1813
        %v1846 = vadd.f32 %v1744, %v1814
        %v1847 = vadd.f32 %v1745, %v1815
        %v1848 = vadd.f32 %v1746, %v1816
        %v1849 = vadd.f32 %v1747, %v1817
        %v1850 = vadd.f32 %v1748, %v1818
        %v1851 = vadd.f32 %v1749, %v1819
        %v1852 = vadd.f32 %v1750, %v1820
        %v1853 = vadd.f32 %v1751, %v1821
        %v1854 = vadd.f32 %v1752, %v1822
        %v1855 = vadd.f32 %v1753, %v1823
        %v1856 = vadd.f32 %v1754, %v1824
        %v1857 = vadd.f32 %v1755, %v1825
        %v1858 = vadd.f32 %v1756, %v1826
        %v1859 = vadd.f32 %v1757, %v1827
        %v1860 = vadd.f32 %v1758, %v1828
        %v1861 = vadd.f32 %v1759, %v1829
        %v1862 = vadd.f32 %v1760, %v1830
        %v1863 = vadd.f32 %v1761, %v1831
        %v1864 = vadd.f32 %v1762, %v1832
        %v1865 = vadd.f32 %v1763, %v1833
        %v1866 = vadd.f32 %v1764, %v1834
        %v1867 = vadd.f32 %v1765, %v1835
        %v1869 = vsel %vm1219, %v1665, 0.0
        %v1870 = vperm.slane %v897, 6
        %v1871 = vmul.f32 %v1224, %v1870
        %v1872 = vmul.f32 %v1226, %v1870
        %v1873 = vmul.f32 %v1228, %v1870
        %v1874 = vmul.f32 %v1230, %v1870
        %v1875 = vmul.f32 %v1232, %v1870
        %v1876 = vmul.f32 %v1234, %v1870
        %v1877 = vmul.f32 %v1236, %v1870
        %v1878 = vmul.f32 %v1238, %v1870
        %v1879 = vmul.f32 %v1240, %v1870
        %v1880 = vmul.f32 %v1242, %v1870
        %v1881 = vmul.f32 %v1244, %v1870
        %v1882 = vmul.f32 %v1246, %v1870
        %v1883 = vmul.f32 %v1248, %v1870
        %v1884 = vmul.f32 %v1250, %v1870
        %v1885 = vmul.f32 %v1252, %v1870
        %v1886 = vmul.f32 %v1254, %v1870
        %v1887 = vmul.f32 %v1256, %v1870
        %v1888 = vmul.f32 %v1258, %v1870
        %v1889 = vmul.f32 %v1260, %v1870
        %v1890 = vmul.f32 %v1262, %v1870
        %v1891 = vmul.f32 %v1264, %v1870
        %v1892 = vmul.f32 %v1266, %v1870
        %v1893 = vmul.f32 %v1268, %v1870
        %v1894 = vmul.f32 %v1270, %v1870
        %v1895 = vmul.f32 %v1272, %v1870
        %v1896 = vmul.f32 %v1274, %v1870
        %v1897 = vmul.f32 %v1276, %v1870
        %v1898 = vmul.f32 %v1278, %v1870
        %v1899 = vmul.f32 %v1664, %v1870
        %v1900 = vmul.f32 %v1666, %v1870
        %v1901 = vmul.f32 %v1869, %v1870
        %v1902 = vmul.f32 %v1870, 0.0
        %v1903 = vmul.f32 %v1871, %v1028
        %v1904 = vmul.f32 %v1872, %v1029
        %v1905 = vmul.f32 %v1873, %v1030
        %v1906 = vmul.f32 %v1874, %v1031
        %v1907 = vmul.f32 %v1875, %v1032
        %v1908 = vmul.f32 %v1876, %v1033
        %v1909 = vmul.f32 %v1877, %v1034
        %v1910 = vmul.f32 %v1878, %v1035
        %v1911 = vmul.f32 %v1879, %v1036
        %v1912 = vmul.f32 %v1880, %v1037
        %v1913 = vmul.f32 %v1881, %v1038
        %v1914 = vmul.f32 %v1882, %v1039
        %v1915 = vmul.f32 %v1883, %v1040
        %v1916 = vmul.f32 %v1884, %v1041
        %v1917 = vmul.f32 %v1885, %v1042
        %v1918 = vmul.f32 %v1886, %v1043
        %v1919 = vmul.f32 %v1887, %v1044
        %v1920 = vmul.f32 %v1888, %v1045
        %v1921 = vmul.f32 %v1889, %v1046
        %v1922 = vmul.f32 %v1890, %v1047
        %v1923 = vmul.f32 %v1891, %v1048
        %v1924 = vmul.f32 %v1892, %v1049
        %v1925 = vmul.f32 %v1893, %v1050
        %v1926 = vmul.f32 %v1894, %v1051
        %v1927 = vmul.f32 %v1895, %v1052
        %v1928 = vmul.f32 %v1896, %v1053
        %v1929 = vmul.f32 %v1897, %v1054
        %v1930 = vmul.f32 %v1898, %v1055
        %v1931 = vmul.f32 %v1899, %v1056
        %v1932 = vmul.f32 %v1900, %v1057
        %v1933 = vmul.f32 %v1901, %v1058
        %v1934 = vmul.f32 %v1902, %v1059
        %v1935 = vadd.f32 %v1836, %v1903
        %v1936 = vadd.f32 %v1837, %v1904
        %v1937 = vadd.f32 %v1838, %v1905
        %v1938 = vadd.f32 %v1839, %v1906
        %v1939 = vadd.f32 %v1840, %v1907
        %v1940 = vadd.f32 %v1841, %v1908
        %v1941 = vadd.f32 %v1842, %v1909
        %v1942 = vadd.f32 %v1843, %v1910
        %v1943 = vadd.f32 %v1844, %v1911
        %v1944 = vadd.f32 %v1845, %v1912
        %v1945 = vadd.f32 %v1846, %v1913
        %v1946 = vadd.f32 %v1847, %v1914
        %v1947 = vadd.f32 %v1848, %v1915
        %v1948 = vadd.f32 %v1849, %v1916
        %v1949 = vadd.f32 %v1850, %v1917
        %v1950 = vadd.f32 %v1851, %v1918
        %v1951 = vadd.f32 %v1852, %v1919
        %v1952 = vadd.f32 %v1853, %v1920
        %v1953 = vadd.f32 %v1854, %v1921
        %v1954 = vadd.f32 %v1855, %v1922
        %v1955 = vadd.f32 %v1856, %v1923
        %v1956 = vadd.f32 %v1857, %v1924
        %v1957 = vadd.f32 %v1858, %v1925
        %v1958 = vadd.f32 %v1859, %v1926
        %v1959 = vadd.f32 %v1860, %v1927
        %v1960 = vadd.f32 %v1861, %v1928
        %v1961 = vadd.f32 %v1862, %v1929
        %v1962 = vadd.f32 %v1863, %v1930
        %v1963 = vadd.f32 %v1864, %v1931
        %v1964 = vadd.f32 %v1865, %v1932
        %v1965 = vadd.f32 %v1866, %v1933
        %v1966 = vadd.f32 %v1867, %v1934
        %v1967 = vperm.slane %v897, 7
        %v1968 = vmul.f32 %v759, %v1967
        %v1969 = vmul.f32 %v761, %v1967
        %v1970 = vmul.f32 %v764, %v1967
        %v1971 = vmul.f32 %v766, %v1967
        %v1972 = vmul.f32 %v769, %v1967
        %v1973 = vmul.f32 %v771, %v1967
        %v1974 = vmul.f32 %v774, %v1967
        %v1975 = vmul.f32 %v776, %v1967
        %v1976 = vmul.f32 %v779, %v1967
        %v1977 = vmul.f32 %v781, %v1967
        %v1978 = vmul.f32 %v784, %v1967
        %v1979 = vmul.f32 %v786, %v1967
        %v1980 = vmul.f32 %v789, %v1967
        %v1981 = vmul.f32 %v791, %v1967
        %v1982 = vmul.f32 %v794, %v1967
        %v1983 = vmul.f32 %v796, %v1967
        %v1984 = vmul.f32 %v799, %v1967
        %v1985 = vmul.f32 %v801, %v1967
        %v1986 = vmul.f32 %v804, %v1967
        %v1987 = vmul.f32 %v806, %v1967
        %v1988 = vmul.f32 %v809, %v1967
        %v1989 = vmul.f32 %v811, %v1967
        %v1990 = vmul.f32 %v814, %v1967
        %v1991 = vmul.f32 %v816, %v1967
        %v1992 = vmul.f32 %v819, %v1967
        %v1993 = vmul.f32 %v821, %v1967
        %v1994 = vmul.f32 %v824, %v1967
        %v1995 = vmul.f32 %v826, %v1967
        %v1996 = vmul.f32 %v829, %v1967
        %v1997 = vmul.f32 %v831, %v1967
        %v1998 = vmul.f32 %v1967, 0.0
        %v1999 = vadd.f32 %v1935, %v1968
        %v2000 = vadd.f32 %v1936, %v1969
        %v2001 = vadd.f32 %v1937, %v1970
        %v2002 = vadd.f32 %v1938, %v1971
        %v2003 = vadd.f32 %v1939, %v1972
        %v2004 = vadd.f32 %v1940, %v1973
        %v2005 = vadd.f32 %v1941, %v1974
        %v2006 = vadd.f32 %v1942, %v1975
        %v2007 = vadd.f32 %v1943, %v1976
        %v2008 = vadd.f32 %v1944, %v1977
        %v2009 = vadd.f32 %v1945, %v1978
        %v2010 = vadd.f32 %v1946, %v1979
        %v2011 = vadd.f32 %v1947, %v1980
        %v2012 = vadd.f32 %v1948, %v1981
        %v2013 = vadd.f32 %v1949, %v1982
        %v2014 = vadd.f32 %v1950, %v1983
        %v2015 = vadd.f32 %v1951, %v1984
        %v2016 = vadd.f32 %v1952, %v1985
        %v2017 = vadd.f32 %v1953, %v1986
        %v2018 = vadd.f32 %v1954, %v1987
        %v2019 = vadd.f32 %v1955, %v1988
        %v2020 = vadd.f32 %v1956, %v1989
        %v2021 = vadd.f32 %v1957, %v1990
        %v2022 = vadd.f32 %v1958, %v1991
        %v2023 = vadd.f32 %v1959, %v1992
        %v2024 = vadd.f32 %v1960, %v1993
        %v2025 = vadd.f32 %v1961, %v1994
        %v2026 = vadd.f32 %v1962, %v1995
        %v2027 = vadd.f32 %v1963, %v1996
        %v2028 = vadd.f32 %v1964, %v1997
        %v2029 = vadd.f32 %v1965, %v1998
        %v2030 = vadd.f32 %v1966, %v1998
        %v2031 = vperm.slane %v898, 0
        %v2032 = vmul.f32 %v1478, %v2031
        %v2033 = vmul.f32 %v1480, %v2031
        %v2034 = vmul.f32 %v1482, %v2031
        %v2035 = vmul.f32 %v1484, %v2031
        %v2036 = vmul.f32 %v1486, %v2031
        %v2037 = vmul.f32 %v1488, %v2031
        %v2038 = vmul.f32 %v1490, %v2031
        %v2039 = vmul.f32 %v1492, %v2031
        %v2040 = vmul.f32 %v1494, %v2031
        %v2041 = vmul.f32 %v1496, %v2031
        %v2042 = vmul.f32 %v1498, %v2031
        %v2043 = vmul.f32 %v1500, %v2031
        %v2044 = vmul.f32 %v1502, %v2031
        %v2045 = vmul.f32 %v1504, %v2031
        %v2046 = vmul.f32 %v1506, %v2031
        %v2047 = vmul.f32 %v1508, %v2031
        %v2048 = vmul.f32 %v1510, %v2031
        %v2049 = vmul.f32 %v1512, %v2031
        %v2050 = vmul.f32 %v1514, %v2031
        %v2051 = vmul.f32 %v1516, %v2031
        %v2052 = vmul.f32 %v1518, %v2031
        %v2053 = vmul.f32 %v1520, %v2031
        %v2054 = vmul.f32 %v1522, %v2031
        %v2055 = vmul.f32 %v1524, %v2031
        %v2056 = vmul.f32 %v1526, %v2031
        %v2057 = vmul.f32 %v1528, %v2031
        %v2058 = vmul.f32 %v1530, %v2031
        %v2059 = vmul.f32 %v1532, %v2031
        %v2060 = vmul.f32 %v1767, %v2031
        %v2061 = vmul.f32 %v1770, %v2031
        %v2062 = vmul.f32 %v2031, 0.0
        %v2063 = vmul.f32 %v2032, %v1124
        %v2064 = vmul.f32 %v2033, %v1125
        %v2065 = vmul.f32 %v2034, %v1126
        %v2066 = vmul.f32 %v2035, %v1127
        %v2067 = vmul.f32 %v2036, %v1128
        %v2068 = vmul.f32 %v2037, %v1129
        %v2069 = vmul.f32 %v2038, %v1130
        %v2070 = vmul.f32 %v2039, %v1131
        %v2071 = vmul.f32 %v2040, %v1132
        %v2072 = vmul.f32 %v2041, %v1133
        %v2073 = vmul.f32 %v2042, %v1134
        %v2074 = vmul.f32 %v2043, %v1135
        %v2075 = vmul.f32 %v2044, %v1136
        %v2076 = vmul.f32 %v2045, %v1137
        %v2077 = vmul.f32 %v2046, %v1138
        %v2078 = vmul.f32 %v2047, %v1139
        %v2079 = vmul.f32 %v2048, %v1140
        %v2080 = vmul.f32 %v2049, %v1141
        %v2081 = vmul.f32 %v2050, %v1142
        %v2082 = vmul.f32 %v2051, %v1143
        %v2083 = vmul.f32 %v2052, %v1144
        %v2084 = vmul.f32 %v2053, %v1145
        %v2085 = vmul.f32 %v2054, %v1146
        %v2086 = vmul.f32 %v2055, %v1147
        %v2087 = vmul.f32 %v2056, %v1148
        %v2088 = vmul.f32 %v2057, %v1149
        %v2089 = vmul.f32 %v2058, %v1150
        %v2090 = vmul.f32 %v2059, %v1151
        %v2091 = vmul.f32 %v2060, %v1152
        %v2092 = vmul.f32 %v2061, %v1153
        %v2093 = vmul.f32 %v2062, %v1154
        %v2094 = vmul.f32 %v2062, %v1155
        %v2095 = vadd.f32 %v1999, %v2063
        %v2096 = vadd.f32 %v2000, %v2064
        %v2097 = vadd.f32 %v2001, %v2065
        %v2098 = vadd.f32 %v2002, %v2066
        %v2099 = vadd.f32 %v2003, %v2067
        %v2100 = vadd.f32 %v2004, %v2068
        %v2101 = vadd.f32 %v2005, %v2069
        %v2102 = vadd.f32 %v2006, %v2070
        %v2103 = vadd.f32 %v2007, %v2071
        %v2104 = vadd.f32 %v2008, %v2072
        %v2105 = vadd.f32 %v2009, %v2073
        %v2106 = vadd.f32 %v2010, %v2074
        %v2107 = vadd.f32 %v2011, %v2075
        %v2108 = vadd.f32 %v2012, %v2076
        %v2109 = vadd.f32 %v2013, %v2077
        %v2110 = vadd.f32 %v2014, %v2078
        %v2111 = vadd.f32 %v2015, %v2079
        %v2112 = vadd.f32 %v2016, %v2080
        %v2113 = vadd.f32 %v2017, %v2081
        %v2114 = vadd.f32 %v2018, %v2082
        %v2115 = vadd.f32 %v2019, %v2083
        %v2116 = vadd.f32 %v2020, %v2084
        %v2117 = vadd.f32 %v2021, %v2085
        %v2118 = vadd.f32 %v2022, %v2086
        %v2119 = vadd.f32 %v2023, %v2087
        %v2120 = vadd.f32 %v2024, %v2088
        %v2121 = vadd.f32 %v2025, %v2089
        %v2122 = vadd.f32 %v2026, %v2090
        %v2123 = vadd.f32 %v2027, %v2091
        %v2124 = vadd.f32 %v2028, %v2092
        %v2125 = vadd.f32 %v2029, %v2093
        %v2126 = vadd.f32 %v2030, %v2094
        %v2127 = vld [vmem:[%s4] sm:$0x1]
        %v2129 = vperm.slane %v2127, 0
        %v2131 = vadd.f32 %v2095, %v2129
        %v2132 = vadd.f32 %v2096, %v2129
        %v2133 = vadd.f32 %v2097, %v2129
        %v2134 = vadd.f32 %v2098, %v2129
        %v2135 = vadd.f32 %v2099, %v2129
        %v2136 = vadd.f32 %v2100, %v2129
        %v2137 = vadd.f32 %v2101, %v2129
        %v2138 = vadd.f32 %v2102, %v2129
        %v2139 = vadd.f32 %v2103, %v2129
        %v2140 = vadd.f32 %v2104, %v2129
        %v2141 = vadd.f32 %v2105, %v2129
        %v2142 = vadd.f32 %v2106, %v2129
        %v2143 = vadd.f32 %v2107, %v2129
        %v2144 = vadd.f32 %v2108, %v2129
        %v2145 = vadd.f32 %v2109, %v2129
        %v2146 = vadd.f32 %v2110, %v2129
        %v2147 = vadd.f32 %v2111, %v2129
        %v2148 = vadd.f32 %v2112, %v2129
        %v2149 = vadd.f32 %v2113, %v2129
        %v2150 = vadd.f32 %v2114, %v2129
        %v2151 = vadd.f32 %v2115, %v2129
        %v2152 = vadd.f32 %v2116, %v2129
        %v2153 = vadd.f32 %v2117, %v2129
        %v2154 = vadd.f32 %v2118, %v2129
        %v2155 = vadd.f32 %v2119, %v2129
        %v2156 = vadd.f32 %v2120, %v2129
        %v2157 = vadd.f32 %v2121, %v2129
        %v2158 = vadd.f32 %v2122, %v2129
        %v2159 = vadd.f32 %v2123, %v2129
        %v2160 = vadd.f32 %v2124, %v2129
        %v2161 = vadd.f32 %v2125, %v2129
        %v2162 = vadd.f32 %v2126, %v2129
        %v2163 = vld [vmem:[#allocation10] sm:$0xf]
        %v2164 = vld [vmem:[#allocation10 + $0x4] sm:$0xf]
        %v2165 = vld [vmem:[#allocation10 + $0x8] sm:$0xf]
        %v2166 = vld [vmem:[#allocation10 + $0xc] sm:$0xf]
        %v2167 = vld [vmem:[#allocation10 + $0x10] sm:$0xf]
        %v2168 = vld [vmem:[#allocation10 + $0x14] sm:$0xf]
        %v2169 = vld [vmem:[#allocation10 + $0x18] sm:$0xf]
        %v2170 = vld [vmem:[#allocation10 + $0x1c] sm:$0xf]
        %v2171 = vld [vmem:[#allocation10 + $0x20] sm:$0xf]
        %v2172 = vld [vmem:[#allocation10 + $0x24] sm:$0xf]
        %v2173 = vld [vmem:[#allocation10 + $0x28] sm:$0xf]
        %v2174 = vld [vmem:[#allocation10 + $0x2c] sm:$0xf]
        %v2175 = vld [vmem:[#allocation10 + $0x30] sm:$0xf]
        %v2176 = vld [vmem:[#allocation10 + $0x34] sm:$0xf]
        %v2177 = vld [vmem:[#allocation10 + $0x38] sm:$0xf]
        %v2178 = vld [vmem:[#allocation10 + $0x3c] sm:$0xf]
        %v2211 = vunpack.c.l.b16 %v833
        %v2212 = vunpack.c.l.b16 %v834
        %v2213 = vunpack.c.l.b16 %v835
        %v2214 = vunpack.c.l.b16 %v836
        %v2215 = vunpack.c.l.b16 %v837
        %v2216 = vunpack.c.l.b16 %v838
        %v2217 = vunpack.c.l.b16 %v839
        %v2218 = vunpack.c.l.b16 %v840
        %v2219 = vunpack.c.l.b16 %v841
        %v2220 = vunpack.c.l.b16 %v842
        %v2221 = vunpack.c.l.b16 %v843
        %v2222 = vunpack.c.l.b16 %v844
        %v2223 = vunpack.c.l.b16 %v845
        %v2224 = vunpack.c.l.b16 %v846
        %v2225 = vunpack.c.l.b16 %v847
        %v2226 = vunpack.c.l.b16 %v848
        %v2227 = vunpack.c.l.b16 %v849
        %v2228 = vunpack.c.l.b16 %v850
        %v2229 = vunpack.c.l.b16 %v851
        %v2230 = vunpack.c.l.b16 %v852
        %v2231 = vunpack.c.l.b16 %v853
        %v2232 = vunpack.c.l.b16 %v854
        %v2233 = vunpack.c.l.b16 %v855
        %v2234 = vunpack.c.l.b16 %v856
        %v2235 = vunpack.c.l.b16 %v857
        %v2236 = vunpack.c.l.b16 %v858
        %v2237 = vunpack.c.l.b16 %v859
        %v2238 = vunpack.c.l.b16 %v860
        %v2239 = vunpack.c.l.b16 %v861
        %v2240 = vunpack.c.l.b16 %v862
        %v2241 = vunpack.c.l.b16 %v863
        %v2242 = vunpack.c.l.b16 %v864
        %v2243 = vpack.c.b16 %v2212, %v2211
        %v2244 = vpack.c.b16 %v2214, %v2213
        %v2245 = vpack.c.b16 %v2216, %v2215
        %v2246 = vpack.c.b16 %v2218, %v2217
        %v2247 = vpack.c.b16 %v2220, %v2219
        %v2248 = vpack.c.b16 %v2222, %v2221
        %v2249 = vpack.c.b16 %v2224, %v2223
        %v2250 = vpack.c.b16 %v2226, %v2225
        %v2251 = vpack.c.b16 %v2228, %v2227
        %v2252 = vpack.c.b16 %v2230, %v2229
        %v2253 = vpack.c.b16 %v2232, %v2231
        %v2254 = vpack.c.b16 %v2234, %v2233
        %v2255 = vpack.c.b16 %v2236, %v2235
        %v2256 = vpack.c.b16 %v2238, %v2237
        %v2257 = vpack.c.b16 %v2240, %v2239
        %v2258 = vpack.c.b16 %v2242, %v2241
        %2259 = vrot.lane.b32.xlu0 %v2243, 64
        %v2260 = vpop.permute.xlu0 %2259
        %2261 = vrot.lane.b32.xlu0 %v2244, 64
        %v2262 = vpop.permute.xlu0 %2261
        %2263 = vrot.lane.b32.xlu0 %v2245, 64
        %v2264 = vpop.permute.xlu0 %2263
        %2265 = vrot.lane.b32.xlu0 %v2246, 64
        %v2266 = vpop.permute.xlu0 %2265
        %2267 = vrot.lane.b32.xlu0 %v2247, 64
        %v2268 = vpop.permute.xlu0 %2267
        %2269 = vrot.lane.b32.xlu0 %v2248, 64
        %v2270 = vpop.permute.xlu0 %2269
        %2271 = vrot.lane.b32.xlu0 %v2249, 64
        %v2272 = vpop.permute.xlu0 %2271
        %2273 = vrot.lane.b32.xlu0 %v2250, 64
        %v2274 = vpop.permute.xlu0 %2273
        %2275 = vrot.lane.b32.xlu0 %v2251, 64
        %v2276 = vpop.permute.xlu0 %2275
        %2277 = vrot.lane.b32.xlu0 %v2252, 64
        %v2278 = vpop.permute.xlu0 %2277
        %2279 = vrot.lane.b32.xlu0 %v2253, 64
        %v2280 = vpop.permute.xlu0 %2279
        %2281 = vrot.lane.b32.xlu0 %v2254, 64
        %v2282 = vpop.permute.xlu0 %2281
        %2283 = vrot.lane.b32.xlu0 %v2255, 64
        %v2284 = vpop.permute.xlu0 %2283
        %2285 = vrot.lane.b32.xlu0 %v2256, 64
        %v2286 = vpop.permute.xlu0 %2285
        %2287 = vrot.lane.b32.xlu0 %v2257, 64
        %v2288 = vpop.permute.xlu0 %2287
        %2289 = vrot.lane.b32.xlu0 %v2258, 64
        %v2290 = vpop.permute.xlu0 %2289
        %vm2291 = vcmask 130048
        %v2293 = vsel %vm2291, %v2243, 0
        %v2296 = vsel %vm2291, %v2244, 0
        %v2299 = vsel %vm2291, %v2245, 0
        %v2302 = vsel %vm2291, %v2246, 0
        %v2305 = vsel %vm2291, %v2247, 0
        %v2308 = vsel %vm2291, %v2248, 0
        %v2311 = vsel %vm2291, %v2249, 0
        %v2314 = vsel %vm2291, %v2250, 0
        %v2317 = vsel %vm2291, %v2251, 0
        %v2320 = vsel %vm2291, %v2252, 0
        %v2323 = vsel %vm2291, %v2253, 0
        %v2326 = vsel %vm2291, %v2254, 0
        %v2329 = vsel %vm2291, %v2255, 0
        %v2332 = vsel %vm2291, %v2256, 0
        %v2335 = vsel %vm2291, %v2257, 0
        %v2338 = vsel %vm2291, %v2258, 0
        %v2341 = vsel %vm2291, %v2260, 0
        %v2344 = vsel %vm2291, %v2262, 0
        %v2347 = vsel %vm2291, %v2264, 0
        %v2350 = vsel %vm2291, %v2266, 0
        %v2353 = vsel %vm2291, %v2268, 0
        %v2356 = vsel %vm2291, %v2270, 0
        %v2359 = vsel %vm2291, %v2272, 0
        %v2362 = vsel %vm2291, %v2274, 0
        %v2365 = vsel %vm2291, %v2276, 0
        %v2368 = vsel %vm2291, %v2278, 0
        %v2371 = vsel %vm2291, %v2280, 0
        %v2374 = vsel %vm2291, %v2282, 0
        %v2377 = vsel %vm2291, %v2284, 0
        %v2380 = vsel %vm2291, %v2286, 0
        %v2383 = vsel %vm2291, %v2288, 0
        %v2386 = vsel %vm2291, %v2290, 0
        %2388 = vmatpush.bf16.xpose.msra.mxu0 %v2362
        %2389 = vmatpush.bf16.xpose.msra.mxu0 %v2359
        %2390 = vmatpush.bf16.xpose.msra.mxu0 %v2356
        %2391 = vmatpush.bf16.xpose.msra.mxu0 %v2353
        %2392 = vmatpush.bf16.xpose.msra.mxu0 %v2350
        %2393 = vmatpush.bf16.xpose.msra.mxu0 %v2347
        %2394 = vmatpush.bf16.xpose.msra.mxu0 %v2344
        %2395 = vmatpush.bf16.xpose.msra.mxu0 %v2341
        %2396 = vmatmul.bf16.gmra.mxu0 %v2293
        %v2397 = vpop.f32.mrf.mxu0
        %v2398 = vadd.f32 0.0, %v2397
        %v2399 = vpop.f32.mrf.mxu0
        %v2400 = vadd.f32 0.0, %v2399
        %2401 = vmatmul.bf16.gmra.mxu0 %v2296
        %v2402 = vpop.f32.mrf.mxu0
        %v2403 = vadd.f32 0.0, %v2402
        %v2404 = vpop.f32.mrf.mxu0
        %v2405 = vadd.f32 0.0, %v2404
        %2406 = vmatmul.bf16.gmra.mxu0 %v2299
        %v2407 = vpop.f32.mrf.mxu0
        %v2408 = vadd.f32 0.0, %v2407
        %v2409 = vpop.f32.mrf.mxu0
        %v2410 = vadd.f32 0.0, %v2409
        %2411 = vmatmul.bf16.gmra.mxu0 %v2302
        %v2412 = vpop.f32.mrf.mxu0
        %v2413 = vadd.f32 0.0, %v2412
        %v2414 = vpop.f32.mrf.mxu0
        %v2415 = vadd.f32 0.0, %v2414
        %2416 = vmatmul.bf16.gmra.mxu0 %v2305
        %v2417 = vpop.f32.mrf.mxu0
        %v2418 = vadd.f32 0.0, %v2417
        %v2419 = vpop.f32.mrf.mxu0
        %v2420 = vadd.f32 0.0, %v2419
        %2421 = vmatmul.bf16.gmra.mxu0 %v2308
        %v2422 = vpop.f32.mrf.mxu0
        %v2423 = vadd.f32 0.0, %v2422
        %v2424 = vpop.f32.mrf.mxu0
        %v2425 = vadd.f32 0.0, %v2424
        %2426 = vmatmul.bf16.gmra.mxu0 %v2311
        %v2427 = vpop.f32.mrf.mxu0
        %v2428 = vadd.f32 0.0, %v2427
        %v2429 = vpop.f32.mrf.mxu0
        %v2430 = vadd.f32 0.0, %v2429
        %2431 = vmatmul.bf16.gmra.mxu0 %v2314
        %v2432 = vpop.f32.mrf.mxu0
        %v2433 = vadd.f32 0.0, %v2432
        %v2434 = vpop.f32.mrf.mxu0
        %v2435 = vadd.f32 0.0, %v2434
        %2436 = vmatmul.bf16.gmra.mxu0 %v2317
        %v2437 = vpop.f32.mrf.mxu0
        %v2438 = vadd.f32 0.0, %v2437
        %v2439 = vpop.f32.mrf.mxu0
        %v2440 = vadd.f32 0.0, %v2439
        %2441 = vmatmul.bf16.gmra.mxu0 %v2320
        %v2442 = vpop.f32.mrf.mxu0
        %v2443 = vadd.f32 0.0, %v2442
        %v2444 = vpop.f32.mrf.mxu0
        %v2445 = vadd.f32 0.0, %v2444
        %2446 = vmatmul.bf16.gmra.mxu0 %v2323
        %v2447 = vpop.f32.mrf.mxu0
        %v2448 = vadd.f32 0.0, %v2447
        %v2449 = vpop.f32.mrf.mxu0
        %v2450 = vadd.f32 0.0, %v2449
        %2451 = vmatmul.bf16.gmra.mxu0 %v2326
        %v2452 = vpop.f32.mrf.mxu0
        %v2453 = vadd.f32 0.0, %v2452
        %v2454 = vpop.f32.mrf.mxu0
        %v2455 = vadd.f32 0.0, %v2454
        %2456 = vmatmul.bf16.gmra.mxu0 %v2329
        %v2457 = vpop.f32.mrf.mxu0
        %v2458 = vadd.f32 0.0, %v2457
        %v2459 = vpop.f32.mrf.mxu0
        %v2460 = vadd.f32 0.0, %v2459
        %2461 = vmatmul.bf16.gmra.mxu0 %v2332
        %v2462 = vpop.f32.mrf.mxu0
        %v2463 = vadd.f32 0.0, %v2462
        %v2464 = vpop.f32.mrf.mxu0
        %v2465 = vadd.f32 0.0, %v2464
        %2466 = vmatmul.bf16.gmra.mxu0 %v2335
        %v2467 = vpop.f32.mrf.mxu0
        %v2468 = vadd.f32 0.0, %v2467
        %v2469 = vpop.f32.mrf.mxu0
        %v2470 = vadd.f32 0.0, %v2469
        %2471 = vmatmul.bf16.gmra.mxu0 %v2338
        %v2472 = vpop.f32.mrf.mxu0
        %v2473 = vadd.f32 0.0, %v2472
        %v2474 = vpop.f32.mrf.mxu0
        %v2475 = vadd.f32 0.0, %v2474
        %2476 = vdwg.mxu0
        %2477 = vmatpush.bf16.xpose.msra.mxu0 %v2386
        %2478 = vmatpush.bf16.xpose.msra.mxu0 %v2383
        %2479 = vmatpush.bf16.xpose.msra.mxu0 %v2380
        %2480 = vmatpush.bf16.xpose.msra.mxu0 %v2377
        %2481 = vmatpush.bf16.xpose.msra.mxu0 %v2374
        %2482 = vmatpush.bf16.xpose.msra.mxu0 %v2371
        %2483 = vmatpush.bf16.xpose.msra.mxu0 %v2368
        %2484 = vmatpush.bf16.xpose.msra.mxu0 %v2365
        %2485 = vmatmul.bf16.gmra.mxu0 %v2293
        %v2486 = vpop.f32.mrf.mxu0
        %v2487 = vadd.f32 0.0, %v2486
        %v2488 = vpop.f32.mrf.mxu0
        %v2489 = vadd.f32 0.0, %v2488
        %2490 = vmatmul.bf16.gmra.mxu0 %v2296
        %v2491 = vpop.f32.mrf.mxu0
        %v2492 = vadd.f32 0.0, %v2491
        %v2493 = vpop.f32.mrf.mxu0
        %v2494 = vadd.f32 0.0, %v2493
        %2495 = vmatmul.bf16.gmra.mxu0 %v2299
        %v2496 = vpop.f32.mrf.mxu0
        %v2497 = vadd.f32 0.0, %v2496
        %v2498 = vpop.f32.mrf.mxu0
        %v2499 = vadd.f32 0.0, %v2498
        %2500 = vmatmul.bf16.gmra.mxu0 %v2302
        %v2501 = vpop.f32.mrf.mxu0
        %v2502 = vadd.f32 0.0, %v2501
        %v2503 = vpop.f32.mrf.mxu0
        %v2504 = vadd.f32 0.0, %v2503
        %2505 = vmatmul.bf16.gmra.mxu0 %v2305
        %v2506 = vpop.f32.mrf.mxu0
        %v2507 = vadd.f32 0.0, %v2506
        %v2508 = vpop.f32.mrf.mxu0
        %v2509 = vadd.f32 0.0, %v2508
        %2510 = vmatmul.bf16.gmra.mxu0 %v2308
        %v2511 = vpop.f32.mrf.mxu0
        %v2512 = vadd.f32 0.0, %v2511
        %v2513 = vpop.f32.mrf.mxu0
        %v2514 = vadd.f32 0.0, %v2513
        %2515 = vmatmul.bf16.gmra.mxu0 %v2311
        %v2516 = vpop.f32.mrf.mxu0
        %v2517 = vadd.f32 0.0, %v2516
        %v2518 = vpop.f32.mrf.mxu0
        %v2519 = vadd.f32 0.0, %v2518
        %2520 = vmatmul.bf16.gmra.mxu0 %v2314
        %v2521 = vpop.f32.mrf.mxu0
        %v2522 = vadd.f32 0.0, %v2521
        %v2523 = vpop.f32.mrf.mxu0
        %v2524 = vadd.f32 0.0, %v2523
        %2525 = vmatmul.bf16.gmra.mxu0 %v2317
        %v2526 = vpop.f32.mrf.mxu0
        %v2527 = vadd.f32 0.0, %v2526
        %v2528 = vpop.f32.mrf.mxu0
        %v2529 = vadd.f32 0.0, %v2528
        %2530 = vmatmul.bf16.gmra.mxu0 %v2320
        %v2531 = vpop.f32.mrf.mxu0
        %v2532 = vadd.f32 0.0, %v2531
        %v2533 = vpop.f32.mrf.mxu0
        %v2534 = vadd.f32 0.0, %v2533
        %2535 = vmatmul.bf16.gmra.mxu0 %v2323
        %v2536 = vpop.f32.mrf.mxu0
        %v2537 = vadd.f32 0.0, %v2536
        %v2538 = vpop.f32.mrf.mxu0
        %v2539 = vadd.f32 0.0, %v2538
        %2540 = vmatmul.bf16.gmra.mxu0 %v2326
        %v2541 = vpop.f32.mrf.mxu0
        %v2542 = vadd.f32 0.0, %v2541
        %v2543 = vpop.f32.mrf.mxu0
        %v2544 = vadd.f32 0.0, %v2543
        %2545 = vmatmul.bf16.gmra.mxu0 %v2329
        %v2546 = vpop.f32.mrf.mxu0
        %v2547 = vadd.f32 0.0, %v2546
        %v2548 = vpop.f32.mrf.mxu0
        %v2549 = vadd.f32 0.0, %v2548
        %2550 = vmatmul.bf16.gmra.mxu0 %v2332
        %v2551 = vpop.f32.mrf.mxu0
        %v2552 = vadd.f32 0.0, %v2551
        %v2553 = vpop.f32.mrf.mxu0
        %v2554 = vadd.f32 0.0, %v2553
        %2555 = vmatmul.bf16.gmra.mxu0 %v2335
        %v2556 = vpop.f32.mrf.mxu0
        %v2557 = vadd.f32 0.0, %v2556
        %v2558 = vpop.f32.mrf.mxu0
        %v2559 = vadd.f32 0.0, %v2558
        %2560 = vmatmul.bf16.gmra.mxu0 %v2338
        %v2561 = vpop.f32.mrf.mxu0
        %v2562 = vadd.f32 0.0, %v2561
        %v2563 = vpop.f32.mrf.mxu0
        %v2564 = vadd.f32 0.0, %v2563
        %2565 = vdwg.mxu0
        %v2566 = vmax.f32 %v2398, %v2487
        %2567 = vmax.xlane.f32.xlu0 %v2566
        %v2568 = vpop.xlane.xlu0 %2567
        %v2569 = vmax.f32 %v2400, %v2489
        %2570 = vmax.xlane.f32.xlu0 %v2569
        %v2571 = vpop.xlane.xlu0 %2570
        %v2572 = vmax.f32 %v2403, %v2492
        %2573 = vmax.xlane.f32.xlu0 %v2572
        %v2574 = vpop.xlane.xlu0 %2573
        %v2575 = vmax.f32 %v2405, %v2494
        %2576 = vmax.xlane.f32.xlu0 %v2575
        %v2577 = vpop.xlane.xlu0 %2576
        %v2578 = vmax.f32 %v2408, %v2497
        %2579 = vmax.xlane.f32.xlu0 %v2578
        %v2580 = vpop.xlane.xlu0 %2579
        %v2581 = vmax.f32 %v2410, %v2499
        %2582 = vmax.xlane.f32.xlu0 %v2581
        %v2583 = vpop.xlane.xlu0 %2582
        %v2584 = vmax.f32 %v2413, %v2502
        %2585 = vmax.xlane.f32.xlu0 %v2584
        %v2586 = vpop.xlane.xlu0 %2585
        %v2587 = vmax.f32 %v2415, %v2504
        %2588 = vmax.xlane.f32.xlu0 %v2587
        %v2589 = vpop.xlane.xlu0 %2588
        %v2590 = vmax.f32 %v2418, %v2507
        %2591 = vmax.xlane.f32.xlu0 %v2590
        %v2592 = vpop.xlane.xlu0 %2591
        %v2593 = vmax.f32 %v2420, %v2509
        %2594 = vmax.xlane.f32.xlu0 %v2593
        %v2595 = vpop.xlane.xlu0 %2594
        %v2596 = vmax.f32 %v2423, %v2512
        %2597 = vmax.xlane.f32.xlu0 %v2596
        %v2598 = vpop.xlane.xlu0 %2597
        %v2599 = vmax.f32 %v2425, %v2514
        %2600 = vmax.xlane.f32.xlu0 %v2599
        %v2601 = vpop.xlane.xlu0 %2600
        %v2602 = vmax.f32 %v2428, %v2517
        %2603 = vmax.xlane.f32.xlu0 %v2602
        %v2604 = vpop.xlane.xlu0 %2603
        %v2605 = vmax.f32 %v2430, %v2519
        %2606 = vmax.xlane.f32.xlu0 %v2605
        %v2607 = vpop.xlane.xlu0 %2606
        %v2608 = vmax.f32 %v2433, %v2522
        %2609 = vmax.xlane.f32.xlu0 %v2608
        %v2610 = vpop.xlane.xlu0 %2609
        %v2611 = vmax.f32 %v2435, %v2524
        %2612 = vmax.xlane.f32.xlu0 %v2611
        %v2613 = vpop.xlane.xlu0 %2612
        %v2614 = vmax.f32 %v2438, %v2527
        %2615 = vmax.xlane.f32.xlu0 %v2614
        %v2616 = vpop.xlane.xlu0 %2615
        %v2617 = vmax.f32 %v2440, %v2529
        %2618 = vmax.xlane.f32.xlu0 %v2617
        %v2619 = vpop.xlane.xlu0 %2618
        %v2620 = vmax.f32 %v2443, %v2532
        %2621 = vmax.xlane.f32.xlu0 %v2620
        %v2622 = vpop.xlane.xlu0 %2621
        %v2623 = vmax.f32 %v2445, %v2534
        %2624 = vmax.xlane.f32.xlu0 %v2623
        %v2625 = vpop.xlane.xlu0 %2624
        %v2626 = vmax.f32 %v2448, %v2537
        %2627 = vmax.xlane.f32.xlu0 %v2626
        %v2628 = vpop.xlane.xlu0 %2627
        %v2629 = vmax.f32 %v2450, %v2539
        %2630 = vmax.xlane.f32.xlu0 %v2629
        %v2631 = vpop.xlane.xlu0 %2630
        %v2632 = vmax.f32 %v2453, %v2542
        %2633 = vmax.xlane.f32.xlu0 %v2632
        %v2634 = vpop.xlane.xlu0 %2633
        %v2635 = vmax.f32 %v2455, %v2544
        %2636 = vmax.xlane.f32.xlu0 %v2635
        %v2637 = vpop.xlane.xlu0 %2636
        %v2638 = vmax.f32 %v2458, %v2547
        %2639 = vmax.xlane.f32.xlu0 %v2638
        %v2640 = vpop.xlane.xlu0 %2639
        %v2641 = vmax.f32 %v2460, %v2549
        %2642 = vmax.xlane.f32.xlu0 %v2641
        %v2643 = vpop.xlane.xlu0 %2642
        %v2644 = vmax.f32 %v2463, %v2552
        %2645 = vmax.xlane.f32.xlu0 %v2644
        %v2646 = vpop.xlane.xlu0 %2645
        %v2647 = vmax.f32 %v2465, %v2554
        %2648 = vmax.xlane.f32.xlu0 %v2647
        %v2649 = vpop.xlane.xlu0 %2648
        %v2650 = vmax.f32 %v2468, %v2557
        %2651 = vmax.xlane.f32.xlu0 %v2650
        %v2652 = vpop.xlane.xlu0 %2651
        %v2653 = vmax.f32 %v2470, %v2559
        %2654 = vmax.xlane.f32.xlu0 %v2653
        %v2655 = vpop.xlane.xlu0 %2654
        %v2656 = vmax.f32 %v2473, %v2562
        %2657 = vmax.xlane.f32.xlu0 %v2656
        %v2658 = vpop.xlane.xlu0 %2657
        %v2659 = vmax.f32 %v2475, %v2564
        %2660 = vmax.xlane.f32.xlu0 %v2659
        %v2661 = vpop.xlane.xlu0 %2660
        %v2662 = vsub.f32 %v2398, %v2568
        %v2663 = vsub.f32 %v2487, %v2568
        %v2664 = vsub.f32 %v2400, %v2571
        %v2665 = vsub.f32 %v2489, %v2571
        %v2666 = vsub.f32 %v2403, %v2574
        %v2667 = vsub.f32 %v2492, %v2574
        %v2668 = vsub.f32 %v2405, %v2577
        %v2669 = vsub.f32 %v2494, %v2577
        %v2670 = vsub.f32 %v2408, %v2580
        %v2671 = vsub.f32 %v2497, %v2580
        %v2672 = vsub.f32 %v2410, %v2583
        %v2673 = vsub.f32 %v2499, %v2583
        %v2674 = vsub.f32 %v2413, %v2586
        %v2675 = vsub.f32 %v2502, %v2586
        %v2676 = vsub.f32 %v2415, %v2589
        %v2677 = vsub.f32 %v2504, %v2589
        %v2678 = vsub.f32 %v2418, %v2592
        %v2679 = vsub.f32 %v2507, %v2592
        %v2680 = vsub.f32 %v2420, %v2595
        %v2681 = vsub.f32 %v2509, %v2595
        %v2682 = vsub.f32 %v2423, %v2598
        %v2683 = vsub.f32 %v2512, %v2598
        %v2684 = vsub.f32 %v2425, %v2601
        %v2685 = vsub.f32 %v2514, %v2601
        %v2686 = vsub.f32 %v2428, %v2604
        %v2687 = vsub.f32 %v2517, %v2604
        %v2688 = vsub.f32 %v2430, %v2607
        %v2689 = vsub.f32 %v2519, %v2607
        %v2690 = vsub.f32 %v2433, %v2610
        %v2691 = vsub.f32 %v2522, %v2610
        %v2692 = vsub.f32 %v2435, %v2613
        %v2693 = vsub.f32 %v2524, %v2613
        %v2694 = vsub.f32 %v2438, %v2616
        %v2695 = vsub.f32 %v2527, %v2616
        %v2696 = vsub.f32 %v2440, %v2619
        %v2697 = vsub.f32 %v2529, %v2619
        %v2698 = vsub.f32 %v2443, %v2622
        %v2699 = vsub.f32 %v2532, %v2622
        %v2700 = vsub.f32 %v2445, %v2625
        %v2701 = vsub.f32 %v2534, %v2625
        %v2702 = vsub.f32 %v2448, %v2628
        %v2703 = vsub.f32 %v2537, %v2628
        %v2704 = vsub.f32 %v2450, %v2631
        %v2705 = vsub.f32 %v2539, %v2631
        %v2706 = vsub.f32 %v2453, %v2634
        %v2707 = vsub.f32 %v2542, %v2634
        %v2708 = vsub.f32 %v2455, %v2637
        %v2709 = vsub.f32 %v2544, %v2637
        %v2710 = vsub.f32 %v2458, %v2640
        %v2711 = vsub.f32 %v2547, %v2640
        %v2712 = vsub.f32 %v2460, %v2643
        %v2713 = vsub.f32 %v2549, %v2643
        %v2714 = vsub.f32 %v2463, %v2646
        %v2715 = vsub.f32 %v2552, %v2646
        %v2716 = vsub.f32 %v2465, %v2649
        %v2717 = vsub.f32 %v2554, %v2649
        %v2718 = vsub.f32 %v2468, %v2652
        %v2719 = vsub.f32 %v2557, %v2652
        %v2720 = vsub.f32 %v2470, %v2655
        %v2721 = vsub.f32 %v2559, %v2655
        %v2722 = vsub.f32 %v2473, %v2658
        %v2723 = vsub.f32 %v2562, %v2658
        %v2724 = vsub.f32 %v2475, %v2661
        %v2725 = vsub.f32 %v2564, %v2661
        %v2726 = vmul.f32 %v2662, 1.442695
        %v2727 = vpow.pop %v2726
        %v2728 = vmul.f32 %v2663, 1.442695
        %v2729 = vpow.pop %v2728
        %v2730 = vmul.f32 %v2664, 1.442695
        %v2731 = vpow.pop %v2730
        %v2732 = vmul.f32 %v2665, 1.442695
        %v2733 = vpow.pop %v2732
        %v2734 = vmul.f32 %v2666, 1.442695
        %v2735 = vpow.pop %v2734
        %v2736 = vmul.f32 %v2667, 1.442695
        %v2737 = vpow.pop %v2736
        %v2738 = vmul.f32 %v2668, 1.442695
        %v2739 = vpow.pop %v2738
        %v2740 = vmul.f32 %v2669, 1.442695
        %v2741 = vpow.pop %v2740
        %v2742 = vmul.f32 %v2670, 1.442695
        %v2743 = vpow.pop %v2742
        %v2744 = vmul.f32 %v2671, 1.442695
        %v2745 = vpow.pop %v2744
        %v2746 = vmul.f32 %v2672, 1.442695
        %v2747 = vpow.pop %v2746
        %v2748 = vmul.f32 %v2673, 1.442695
        %v2749 = vpow.pop %v2748
        %v2750 = vmul.f32 %v2674, 1.442695
        %v2751 = vpow.pop %v2750
        %v2752 = vmul.f32 %v2675, 1.442695
        %v2753 = vpow.pop %v2752
        %v2754 = vmul.f32 %v2676, 1.442695
        %v2755 = vpow.pop %v2754
        %v2756 = vmul.f32 %v2677, 1.442695
        %v2757 = vpow.pop %v2756
        %v2758 = vmul.f32 %v2678, 1.442695
        %v2759 = vpow.pop %v2758
        %v2760 = vmul.f32 %v2679, 1.442695
        %v2761 = vpow.pop %v2760
        %v2762 = vmul.f32 %v2680, 1.442695
        %v2763 = vpow.pop %v2762
        %v2764 = vmul.f32 %v2681, 1.442695
        %v2765 = vpow.pop %v2764
        %v2766 = vmul.f32 %v2682, 1.442695
        %v2767 = vpow.pop %v2766
        %v2768 = vmul.f32 %v2683, 1.442695
        %v2769 = vpow.pop %v2768
        %v2770 = vmul.f32 %v2684, 1.442695
        %v2771 = vpow.pop %v2770
        %v2772 = vmul.f32 %v2685, 1.442695
        %v2773 = vpow.pop %v2772
        %v2774 = vmul.f32 %v2686, 1.442695
        %v2775 = vpow.pop %v2774
        %v2776 = vmul.f32 %v2687, 1.442695
        %v2777 = vpow.pop %v2776
        %v2778 = vmul.f32 %v2688, 1.442695
        %v2779 = vpow.pop %v2778
        %v2780 = vmul.f32 %v2689, 1.442695
        %v2781 = vpow.pop %v2780
        %v2782 = vmul.f32 %v2690, 1.442695
        %v2783 = vpow.pop %v2782
        %v2784 = vmul.f32 %v2691, 1.442695
        %v2785 = vpow.pop %v2784
        %v2786 = vmul.f32 %v2692, 1.442695
        %v2787 = vpow.pop %v2786
        %v2788 = vmul.f32 %v2693, 1.442695
        %v2789 = vpow.pop %v2788
        %v2790 = vmul.f32 %v2694, 1.442695
        %v2791 = vpow.pop %v2790
        %v2792 = vmul.f32 %v2695, 1.442695
        %v2793 = vpow.pop %v2792
        %v2794 = vmul.f32 %v2696, 1.442695
        %v2795 = vpow.pop %v2794
        %v2796 = vmul.f32 %v2697, 1.442695
        %v2797 = vpow.pop %v2796
        %v2798 = vmul.f32 %v2698, 1.442695
        %v2799 = vpow.pop %v2798
        %v2800 = vmul.f32 %v2699, 1.442695
        %v2801 = vpow.pop %v2800
        %v2802 = vmul.f32 %v2700, 1.442695
        %v2803 = vpow.pop %v2802
        %v2804 = vmul.f32 %v2701, 1.442695
        %v2805 = vpow.pop %v2804
        %v2806 = vmul.f32 %v2702, 1.442695
        %v2807 = vpow.pop %v2806
        %v2808 = vmul.f32 %v2703, 1.442695
        %v2809 = vpow.pop %v2808
        %v2810 = vmul.f32 %v2704, 1.442695
        %v2811 = vpow.pop %v2810
        %v2812 = vmul.f32 %v2705, 1.442695
        %v2813 = vpow.pop %v2812
        %v2814 = vmul.f32 %v2706, 1.442695
        %v2815 = vpow.pop %v2814
        %v2816 = vmul.f32 %v2707, 1.442695
        %v2817 = vpow.pop %v2816
        %v2818 = vmul.f32 %v2708, 1.442695
        %v2819 = vpow.pop %v2818
        %v2820 = vmul.f32 %v2709, 1.442695
        %v2821 = vpow.pop %v2820
        %v2822 = vmul.f32 %v2710, 1.442695
        %v2823 = vpow.pop %v2822
        %v2824 = vmul.f32 %v2711, 1.442695
        %v2825 = vpow.pop %v2824
        %v2826 = vmul.f32 %v2712, 1.442695
        %v2827 = vpow.pop %v2826
        %v2828 = vmul.f32 %v2713, 1.442695
        %v2829 = vpow.pop %v2828
        %v2830 = vmul.f32 %v2714, 1.442695
        %v2831 = vpow.pop %v2830
        %v2832 = vmul.f32 %v2715, 1.442695
        %v2833 = vpow.pop %v2832
        %v2834 = vmul.f32 %v2716, 1.442695
        %v2835 = vpow.pop %v2834
        %v2836 = vmul.f32 %v2717, 1.442695
        %v2837 = vpow.pop %v2836
        %v2838 = vmul.f32 %v2718, 1.442695
        %v2839 = vpow.pop %v2838
        %v2840 = vmul.f32 %v2719, 1.442695
        %v2841 = vpow.pop %v2840
        %v2842 = vmul.f32 %v2720, 1.442695
        %v2843 = vpow.pop %v2842
        %v2844 = vmul.f32 %v2721, 1.442695
        %v2845 = vpow.pop %v2844
        %v2846 = vmul.f32 %v2722, 1.442695
        %v2847 = vpow.pop %v2846
        %v2848 = vmul.f32 %v2723, 1.442695
        %v2849 = vpow.pop %v2848
        %v2850 = vmul.f32 %v2724, 1.442695
        %v2851 = vpow.pop %v2850
        %v2852 = vmul.f32 %v2725, 1.442695
        %v2853 = vpow.pop %v2852
        %v2854 = vadd.f32 %v2727, %v2729
        %2855 = vadd.xlane.f32.xlu0 %v2854
        %v2856 = vpop.xlane.xlu0 %2855
        %v2857 = vadd.f32 %v2731, %v2733
        %2858 = vadd.xlane.f32.xlu0 %v2857
        %v2859 = vpop.xlane.xlu0 %2858
        %v2860 = vadd.f32 %v2735, %v2737
        %2861 = vadd.xlane.f32.xlu0 %v2860
        %v2862 = vpop.xlane.xlu0 %2861
        %v2863 = vadd.f32 %v2739, %v2741
        %2864 = vadd.xlane.f32.xlu0 %v2863
        %v2865 = vpop.xlane.xlu0 %2864
        %v2866 = vadd.f32 %v2743, %v2745
        %2867 = vadd.xlane.f32.xlu0 %v2866
        %v2868 = vpop.xlane.xlu0 %2867
        %v2869 = vadd.f32 %v2747, %v2749
        %2870 = vadd.xlane.f32.xlu0 %v2869
        %v2871 = vpop.xlane.xlu0 %2870
        %v2872 = vadd.f32 %v2751, %v2753
        %2873 = vadd.xlane.f32.xlu0 %v2872
        %v2874 = vpop.xlane.xlu0 %2873
        %v2875 = vadd.f32 %v2755, %v2757
        %2876 = vadd.xlane.f32.xlu0 %v2875
        %v2877 = vpop.xlane.xlu0 %2876
        %v2878 = vadd.f32 %v2759, %v2761
        %2879 = vadd.xlane.f32.xlu0 %v2878
        %v2880 = vpop.xlane.xlu0 %2879
        %v2881 = vadd.f32 %v2763, %v2765
        %2882 = vadd.xlane.f32.xlu0 %v2881
        %v2883 = vpop.xlane.xlu0 %2882
        %v2884 = vadd.f32 %v2767, %v2769
        %2885 = vadd.xlane.f32.xlu0 %v2884
        %v2886 = vpop.xlane.xlu0 %2885
        %v2887 = vadd.f32 %v2771, %v2773
        %2888 = vadd.xlane.f32.xlu0 %v2887
        %v2889 = vpop.xlane.xlu0 %2888
        %v2890 = vadd.f32 %v2775, %v2777
        %2891 = vadd.xlane.f32.xlu0 %v2890
        %v2892 = vpop.xlane.xlu0 %2891
        %v2893 = vadd.f32 %v2779, %v2781
        %2894 = vadd.xlane.f32.xlu0 %v2893
        %v2895 = vpop.xlane.xlu0 %2894
        %v2896 = vadd.f32 %v2783, %v2785
        %2897 = vadd.xlane.f32.xlu0 %v2896
        %v2898 = vpop.xlane.xlu0 %2897
        %v2899 = vadd.f32 %v2787, %v2789
        %2900 = vadd.xlane.f32.xlu0 %v2899
        %v2901 = vpop.xlane.xlu0 %2900
        %v2902 = vadd.f32 %v2791, %v2793
        %2903 = vadd.xlane.f32.xlu0 %v2902
        %v2904 = vpop.xlane.xlu0 %2903
        %v2905 = vadd.f32 %v2795, %v2797
        %2906 = vadd.xlane.f32.xlu0 %v2905
        %v2907 = vpop.xlane.xlu0 %2906
        %v2908 = vadd.f32 %v2799, %v2801
        %2909 = vadd.xlane.f32.xlu0 %v2908
        %v2910 = vpop.xlane.xlu0 %2909
        %v2911 = vadd.f32 %v2803, %v2805
        %2912 = vadd.xlane.f32.xlu0 %v2911
        %v2913 = vpop.xlane.xlu0 %2912
        %v2914 = vadd.f32 %v2807, %v2809
        %2915 = vadd.xlane.f32.xlu0 %v2914
        %v2916 = vpop.xlane.xlu0 %2915
        %v2917 = vadd.f32 %v2811, %v2813
        %2918 = vadd.xlane.f32.xlu0 %v2917
        %v2919 = vpop.xlane.xlu0 %2918
        %v2920 = vadd.f32 %v2815, %v2817
        %2921 = vadd.xlane.f32.xlu0 %v2920
        %v2922 = vpop.xlane.xlu0 %2921
        %v2923 = vadd.f32 %v2819, %v2821
        %2924 = vadd.xlane.f32.xlu0 %v2923
        %v2925 = vpop.xlane.xlu0 %2924
        %v2926 = vadd.f32 %v2823, %v2825
        %2927 = vadd.xlane.f32.xlu0 %v2926
        %v2928 = vpop.xlane.xlu0 %2927
        %v2929 = vadd.f32 %v2827, %v2829
        %2930 = vadd.xlane.f32.xlu0 %v2929
        %v2931 = vpop.xlane.xlu0 %2930
        %v2932 = vadd.f32 %v2831, %v2833
        %2933 = vadd.xlane.f32.xlu0 %v2932
        %v2934 = vpop.xlane.xlu0 %2933
        %v2935 = vadd.f32 %v2835, %v2837
        %2936 = vadd.xlane.f32.xlu0 %v2935
        %v2937 = vpop.xlane.xlu0 %2936
        %v2938 = vadd.f32 %v2839, %v2841
        %2939 = vadd.xlane.f32.xlu0 %v2938
        %v2940 = vpop.xlane.xlu0 %2939
        %v2941 = vadd.f32 %v2843, %v2845
        %2942 = vadd.xlane.f32.xlu0 %v2941
        %v2943 = vpop.xlane.xlu0 %2942
        %v2944 = vadd.f32 %v2847, %v2849
        %2945 = vadd.xlane.f32.xlu0 %v2944
        %v2946 = vpop.xlane.xlu0 %2945
        %v2947 = vadd.f32 %v2851, %v2853
        %2948 = vadd.xlane.f32.xlu0 %v2947
        %v2949 = vpop.xlane.xlu0 %2948
        %v2950 = vpack.c.bf16 %v2731, %v2727
        %v2951 = vpack.c.bf16 %v2733, %v2729
        %v2952 = vpack.c.bf16 %v2739, %v2735
        %v2953 = vpack.c.bf16 %v2741, %v2737
        %v2954 = vpack.c.bf16 %v2747, %v2743
        %v2955 = vpack.c.bf16 %v2749, %v2745
        %v2956 = vpack.c.bf16 %v2755, %v2751
        %v2957 = vpack.c.bf16 %v2757, %v2753
        %v2958 = vpack.c.bf16 %v2763, %v2759
        %v2959 = vpack.c.bf16 %v2765, %v2761
        %v2960 = vpack.c.bf16 %v2771, %v2767
        %v2961 = vpack.c.bf16 %v2773, %v2769
        %v2962 = vpack.c.bf16 %v2779, %v2775
        %v2963 = vpack.c.bf16 %v2781, %v2777
        %v2964 = vpack.c.bf16 %v2787, %v2783
        %v2965 = vpack.c.bf16 %v2789, %v2785
        %v2966 = vpack.c.bf16 %v2795, %v2791
        %v2967 = vpack.c.bf16 %v2797, %v2793
        %v2968 = vpack.c.bf16 %v2803, %v2799
        %v2969 = vpack.c.bf16 %v2805, %v2801
        %v2970 = vpack.c.bf16 %v2811, %v2807
        %v2971 = vpack.c.bf16 %v2813, %v2809
        %v2972 = vpack.c.bf16 %v2819, %v2815
        %v2973 = vpack.c.bf16 %v2821, %v2817
        %v2974 = vpack.c.bf16 %v2827, %v2823
        %v2975 = vpack.c.bf16 %v2829, %v2825
        %v2976 = vpack.c.bf16 %v2835, %v2831
        %v2977 = vpack.c.bf16 %v2837, %v2833
        %v2978 = vpack.c.bf16 %v2843, %v2839
        %v2979 = vpack.c.bf16 %v2845, %v2841
        %v2980 = vpack.c.bf16 %v2851, %v2847
        %v2981 = vpack.c.bf16 %v2853, %v2849
        %v3014 = vunpack.c.l.b16 %v865
        %v3015 = vunpack.c.l.b16 %v866
        %v3016 = vunpack.c.l.b16 %v867
        %v3017 = vunpack.c.l.b16 %v868
        %v3018 = vunpack.c.l.b16 %v869
        %v3019 = vunpack.c.l.b16 %v870
        %v3020 = vunpack.c.l.b16 %v871
        %v3021 = vunpack.c.l.b16 %v872
        %v3022 = vunpack.c.l.b16 %v873
        %v3023 = vunpack.c.l.b16 %v874
        %v3024 = vunpack.c.l.b16 %v875
        %v3025 = vunpack.c.l.b16 %v876
        %v3026 = vunpack.c.l.b16 %v877
        %v3027 = vunpack.c.l.b16 %v878
        %v3028 = vunpack.c.l.b16 %v879
        %v3029 = vunpack.c.l.b16 %v880
        %v3030 = vunpack.c.l.b16 %v881
        %v3031 = vunpack.c.l.b16 %v882
        %v3032 = vunpack.c.l.b16 %v883
        %v3033 = vunpack.c.l.b16 %v884
        %v3034 = vunpack.c.l.b16 %v885
        %v3035 = vunpack.c.l.b16 %v886
        %v3036 = vunpack.c.l.b16 %v887
        %v3037 = vunpack.c.l.b16 %v888
        %v3038 = vunpack.c.l.b16 %v889
        %v3039 = vunpack.c.l.b16 %v890
        %v3040 = vunpack.c.l.b16 %v891
        %v3041 = vunpack.c.l.b16 %v892
        %v3042 = vunpack.c.l.b16 %v893
        %v3043 = vunpack.c.l.b16 %v894
        %v3044 = vunpack.c.l.b16 %v895
        %v3045 = vunpack.c.l.b16 %v896
        %v3046 = vpack.c.b16 %v3015, %v3014
        %v3047 = vpack.c.b16 %v3017, %v3016
        %v3048 = vpack.c.b16 %v3019, %v3018
        %v3049 = vpack.c.b16 %v3021, %v3020
        %v3050 = vpack.c.b16 %v3023, %v3022
        %v3051 = vpack.c.b16 %v3025, %v3024
        %v3052 = vpack.c.b16 %v3027, %v3026
        %v3053 = vpack.c.b16 %v3029, %v3028
        %v3054 = vpack.c.b16 %v3031, %v3030
        %v3055 = vpack.c.b16 %v3033, %v3032
        %v3056 = vpack.c.b16 %v3035, %v3034
        %v3057 = vpack.c.b16 %v3037, %v3036
        %v3058 = vpack.c.b16 %v3039, %v3038
        %v3059 = vpack.c.b16 %v3041, %v3040
        %v3060 = vpack.c.b16 %v3043, %v3042
        %v3061 = vpack.c.b16 %v3045, %v3044
        %3078 = vmatpush.bf16.msra.mxu0 %v3053
        %3079 = vmatpush.bf16.msra.mxu0 %v3052
        %3080 = vmatpush.bf16.msra.mxu0 %v3051
        %3081 = vmatpush.bf16.msra.mxu0 %v3050
        %3082 = vmatpush.bf16.msra.mxu0 %v3049
        %3083 = vmatpush.bf16.msra.mxu0 %v3048
        %3084 = vmatpush.bf16.msra.mxu0 %v3047
        %3085 = vmatpush.bf16.msra.mxu0 %v3046
        %3086 = vmatmul.bf16.gmra.mxu0 %v2950
        %v3087 = vpop.f32.mrf.mxu0
        %v3088 = vadd.f32 0.0, %v3087
        %v3089 = vpop.f32.mrf.mxu0
        %v3090 = vadd.f32 0.0, %v3089
        %3091 = vmatmul.bf16.gmra.mxu0 %v2952
        %v3092 = vpop.f32.mrf.mxu0
        %v3093 = vadd.f32 0.0, %v3092
        %v3094 = vpop.f32.mrf.mxu0
        %v3095 = vadd.f32 0.0, %v3094
        %3096 = vmatmul.bf16.gmra.mxu0 %v2954
        %v3097 = vpop.f32.mrf.mxu0
        %v3098 = vadd.f32 0.0, %v3097
        %v3099 = vpop.f32.mrf.mxu0
        %v3100 = vadd.f32 0.0, %v3099
        %3101 = vmatmul.bf16.gmra.mxu0 %v2956
        %v3102 = vpop.f32.mrf.mxu0
        %v3103 = vadd.f32 0.0, %v3102
        %v3104 = vpop.f32.mrf.mxu0
        %v3105 = vadd.f32 0.0, %v3104
        %3106 = vmatmul.bf16.gmra.mxu0 %v2958
        %v3107 = vpop.f32.mrf.mxu0
        %v3108 = vadd.f32 0.0, %v3107
        %v3109 = vpop.f32.mrf.mxu0
        %v3110 = vadd.f32 0.0, %v3109
        %3111 = vmatmul.bf16.gmra.mxu0 %v2960
        %v3112 = vpop.f32.mrf.mxu0
        %v3113 = vadd.f32 0.0, %v3112
        %v3114 = vpop.f32.mrf.mxu0
        %v3115 = vadd.f32 0.0, %v3114
        %3116 = vmatmul.bf16.gmra.mxu0 %v2962
        %v3117 = vpop.f32.mrf.mxu0
        %v3118 = vadd.f32 0.0, %v3117
        %v3119 = vpop.f32.mrf.mxu0
        %v3120 = vadd.f32 0.0, %v3119
        %3121 = vmatmul.bf16.gmra.mxu0 %v2964
        %v3122 = vpop.f32.mrf.mxu0
        %v3123 = vadd.f32 0.0, %v3122
        %v3124 = vpop.f32.mrf.mxu0
        %v3125 = vadd.f32 0.0, %v3124
        %3126 = vmatmul.bf16.gmra.mxu0 %v2966
        %v3127 = vpop.f32.mrf.mxu0
        %v3128 = vadd.f32 0.0, %v3127
        %v3129 = vpop.f32.mrf.mxu0
        %v3130 = vadd.f32 0.0, %v3129
        %3131 = vmatmul.bf16.gmra.mxu0 %v2968
        %v3132 = vpop.f32.mrf.mxu0
        %v3133 = vadd.f32 0.0, %v3132
        %v3134 = vpop.f32.mrf.mxu0
        %v3135 = vadd.f32 0.0, %v3134
        %3136 = vmatmul.bf16.gmra.mxu0 %v2970
        %v3137 = vpop.f32.mrf.mxu0
        %v3138 = vadd.f32 0.0, %v3137
        %v3139 = vpop.f32.mrf.mxu0
        %v3140 = vadd.f32 0.0, %v3139
        %3141 = vmatmul.bf16.gmra.mxu0 %v2972
        %v3142 = vpop.f32.mrf.mxu0
        %v3143 = vadd.f32 0.0, %v3142
        %v3144 = vpop.f32.mrf.mxu0
        %v3145 = vadd.f32 0.0, %v3144
        %3146 = vmatmul.bf16.gmra.mxu0 %v2974
        %v3147 = vpop.f32.mrf.mxu0
        %v3148 = vadd.f32 0.0, %v3147
        %v3149 = vpop.f32.mrf.mxu0
        %v3150 = vadd.f32 0.0, %v3149
        %3151 = vmatmul.bf16.gmra.mxu0 %v2976
        %v3152 = vpop.f32.mrf.mxu0
        %v3153 = vadd.f32 0.0, %v3152
        %v3154 = vpop.f32.mrf.mxu0
        %v3155 = vadd.f32 0.0, %v3154
        %3156 = vmatmul.bf16.gmra.mxu0 %v2978
        %v3157 = vpop.f32.mrf.mxu0
        %v3158 = vadd.f32 0.0, %v3157
        %v3159 = vpop.f32.mrf.mxu0
        %v3160 = vadd.f32 0.0, %v3159
        %3161 = vmatmul.bf16.gmra.mxu0 %v2980
        %v3162 = vpop.f32.mrf.mxu0
        %v3163 = vadd.f32 0.0, %v3162
        %v3164 = vpop.f32.mrf.mxu0
        %v3165 = vadd.f32 0.0, %v3164
        %3166 = vdwg.mxu0
        %3167 = vmatpush.bf16.msra.mxu0 %v3061
        %3168 = vmatpush.bf16.msra.mxu0 %v3060
        %3169 = vmatpush.bf16.msra.mxu0 %v3059
        %3170 = vmatpush.bf16.msra.mxu0 %v3058
        %3171 = vmatpush.bf16.msra.mxu0 %v3057
        %3172 = vmatpush.bf16.msra.mxu0 %v3056
        %3173 = vmatpush.bf16.msra.mxu0 %v3055
        %3174 = vmatpush.bf16.msra.mxu0 %v3054
        %3175 = vmatmul.bf16.gmra.mxu0 %v2951
        %v3176 = vpop.f32.mrf.mxu0
        %v3177 = vadd.f32 %v3088, %v3176
        %v3178 = vpop.f32.mrf.mxu0
        %v3179 = vadd.f32 %v3090, %v3178
        %3180 = vmatmul.bf16.gmra.mxu0 %v2953
        %v3181 = vpop.f32.mrf.mxu0
        %v3182 = vadd.f32 %v3093, %v3181
        %v3183 = vpop.f32.mrf.mxu0
        %v3184 = vadd.f32 %v3095, %v3183
        %3185 = vmatmul.bf16.gmra.mxu0 %v2955
        %v3186 = vpop.f32.mrf.mxu0
        %v3187 = vadd.f32 %v3098, %v3186
        %v3188 = vpop.f32.mrf.mxu0
        %v3189 = vadd.f32 %v3100, %v3188
        %3190 = vmatmul.bf16.gmra.mxu0 %v2957
        %v3191 = vpop.f32.mrf.mxu0
        %v3192 = vadd.f32 %v3103, %v3191
        %v3193 = vpop.f32.mrf.mxu0
        %v3194 = vadd.f32 %v3105, %v3193
        %3195 = vmatmul.bf16.gmra.mxu0 %v2959
        %v3196 = vpop.f32.mrf.mxu0
        %v3197 = vadd.f32 %v3108, %v3196
        %v3198 = vpop.f32.mrf.mxu0
        %v3199 = vadd.f32 %v3110, %v3198
        %3200 = vmatmul.bf16.gmra.mxu0 %v2961
        %v3201 = vpop.f32.mrf.mxu0
        %v3202 = vadd.f32 %v3113, %v3201
        %v3203 = vpop.f32.mrf.mxu0
        %v3204 = vadd.f32 %v3115, %v3203
        %3205 = vmatmul.bf16.gmra.mxu0 %v2963
        %v3206 = vpop.f32.mrf.mxu0
        %v3207 = vadd.f32 %v3118, %v3206
        %v3208 = vpop.f32.mrf.mxu0
        %v3209 = vadd.f32 %v3120, %v3208
        %3210 = vmatmul.bf16.gmra.mxu0 %v2965
        %v3211 = vpop.f32.mrf.mxu0
        %v3212 = vadd.f32 %v3123, %v3211
        %v3213 = vpop.f32.mrf.mxu0
        %v3214 = vadd.f32 %v3125, %v3213
        %3215 = vmatmul.bf16.gmra.mxu0 %v2967
        %v3216 = vpop.f32.mrf.mxu0
        %v3217 = vadd.f32 %v3128, %v3216
        %v3218 = vpop.f32.mrf.mxu0
        %v3219 = vadd.f32 %v3130, %v3218
        %3220 = vmatmul.bf16.gmra.mxu0 %v2969
        %v3221 = vpop.f32.mrf.mxu0
        %v3222 = vadd.f32 %v3133, %v3221
        %v3223 = vpop.f32.mrf.mxu0
        %v3224 = vadd.f32 %v3135, %v3223
        %3225 = vmatmul.bf16.gmra.mxu0 %v2971
        %v3226 = vpop.f32.mrf.mxu0
        %v3227 = vadd.f32 %v3138, %v3226
        %v3228 = vpop.f32.mrf.mxu0
        %v3229 = vadd.f32 %v3140, %v3228
        %3230 = vmatmul.bf16.gmra.mxu0 %v2973
        %v3231 = vpop.f32.mrf.mxu0
        %v3232 = vadd.f32 %v3143, %v3231
        %v3233 = vpop.f32.mrf.mxu0
        %v3234 = vadd.f32 %v3145, %v3233
        %3235 = vmatmul.bf16.gmra.mxu0 %v2975
        %v3236 = vpop.f32.mrf.mxu0
        %v3237 = vadd.f32 %v3148, %v3236
        %v3238 = vpop.f32.mrf.mxu0
        %v3239 = vadd.f32 %v3150, %v3238
        %3240 = vmatmul.bf16.gmra.mxu0 %v2977
        %v3241 = vpop.f32.mrf.mxu0
        %v3242 = vadd.f32 %v3153, %v3241
        %v3243 = vpop.f32.mrf.mxu0
        %v3244 = vadd.f32 %v3155, %v3243
        %3245 = vmatmul.bf16.gmra.mxu0 %v2979
        %v3246 = vpop.f32.mrf.mxu0
        %v3247 = vadd.f32 %v3158, %v3246
        %v3248 = vpop.f32.mrf.mxu0
        %v3249 = vadd.f32 %v3160, %v3248
        %3250 = vmatmul.bf16.gmra.mxu0 %v2981
        %v3251 = vpop.f32.mrf.mxu0
        %v3252 = vadd.f32 %v3163, %v3251
        %v3253 = vpop.f32.mrf.mxu0
        %v3254 = vadd.f32 %v3165, %v3253
        %3255 = vdwg.mxu0
        %v3256 = vrcp.pop %v2856
        %v3257 = vrcp.pop %v2859
        %v3258 = vrcp.pop %v2862
        %v3259 = vrcp.pop %v2865
        %v3260 = vrcp.pop %v2868
        %v3261 = vrcp.pop %v2871
        %v3262 = vrcp.pop %v2874
        %v3263 = vrcp.pop %v2877
        %v3264 = vrcp.pop %v2880
        %v3265 = vrcp.pop %v2883
        %v3266 = vrcp.pop %v2886
        %v3267 = vrcp.pop %v2889
        %v3268 = vrcp.pop %v2892
        %v3269 = vrcp.pop %v2895
        %v3270 = vrcp.pop %v2898
        %v3271 = vrcp.pop %v2901
        %v3272 = vrcp.pop %v2904
        %v3273 = vrcp.pop %v2907
        %v3274 = vrcp.pop %v2910
        %v3275 = vrcp.pop %v2913
        %v3276 = vrcp.pop %v2916
        %v3277 = vrcp.pop %v2919
        %v3278 = vrcp.pop %v2922
        %v3279 = vrcp.pop %v2925
        %v3280 = vrcp.pop %v2928
        %v3281 = vrcp.pop %v2931
        %v3282 = vrcp.pop %v2934
        %v3283 = vrcp.pop %v2937
        %v3284 = vrcp.pop %v2940
        %v3285 = vrcp.pop %v2943
        %v3286 = vrcp.pop %v2946
        %v3287 = vrcp.pop %v2949
        %v3288 = vmul.f32 %v3177, %v3256
        %v3289 = vmul.f32 %v3179, %v3257
        %v3290 = vmul.f32 %v3182, %v3258
        %v3291 = vmul.f32 %v3184, %v3259
        %v3292 = vmul.f32 %v3187, %v3260
        %v3293 = vmul.f32 %v3189, %v3261
        %v3294 = vmul.f32 %v3192, %v3262
        %v3295 = vmul.f32 %v3194, %v3263
        %v3296 = vmul.f32 %v3197, %v3264
        %v3297 = vmul.f32 %v3199, %v3265
        %v3298 = vmul.f32 %v3202, %v3266
        %v3299 = vmul.f32 %v3204, %v3267
        %v3300 = vmul.f32 %v3207, %v3268
        %v3301 = vmul.f32 %v3209, %v3269
        %v3302 = vmul.f32 %v3212, %v3270
        %v3303 = vmul.f32 %v3214, %v3271
        %v3304 = vmul.f32 %v3217, %v3272
        %v3305 = vmul.f32 %v3219, %v3273
        %v3306 = vmul.f32 %v3222, %v3274
        %v3307 = vmul.f32 %v3224, %v3275
        %v3308 = vmul.f32 %v3227, %v3276
        %v3309 = vmul.f32 %v3229, %v3277
        %v3310 = vmul.f32 %v3232, %v3278
        %v3311 = vmul.f32 %v3234, %v3279
        %v3312 = vmul.f32 %v3237, %v3280
        %v3313 = vmul.f32 %v3239, %v3281
        %v3314 = vmul.f32 %v3242, %v3282
        %v3315 = vmul.f32 %v3244, %v3283
        %v3316 = vmul.f32 %v3247, %v3284
        %v3317 = vmul.f32 %v3249, %v3285
        %v3318 = vmul.f32 %v3252, %v3286
        %v3319 = vmul.f32 %v3254, %v3287
        %v3320 = vadd.f32 %v3288, %v2131
        %v3321 = vadd.f32 %v3289, %v2132
        %v3322 = vadd.f32 %v3290, %v2133
        %v3323 = vadd.f32 %v3291, %v2134
        %v3324 = vadd.f32 %v3292, %v2135
        %v3325 = vadd.f32 %v3293, %v2136
        %v3326 = vadd.f32 %v3294, %v2137
        %v3327 = vadd.f32 %v3295, %v2138
        %v3328 = vadd.f32 %v3296, %v2139
        %v3329 = vadd.f32 %v3297, %v2140
        %v3330 = vadd.f32 %v3298, %v2141
        %v3331 = vadd.f32 %v3299, %v2142
        %v3332 = vadd.f32 %v3300, %v2143
        %v3333 = vadd.f32 %v3301, %v2144
        %v3334 = vadd.f32 %v3302, %v2145
        %v3335 = vadd.f32 %v3303, %v2146
        %v3336 = vadd.f32 %v3304, %v2147
        %v3337 = vadd.f32 %v3305, %v2148
        %v3338 = vadd.f32 %v3306, %v2149
        %v3339 = vadd.f32 %v3307, %v2150
        %v3340 = vadd.f32 %v3308, %v2151
        %v3341 = vadd.f32 %v3309, %v2152
        %v3342 = vadd.f32 %v3310, %v2153
        %v3343 = vadd.f32 %v3311, %v2154
        %v3344 = vadd.f32 %v3312, %v2155
        %v3345 = vadd.f32 %v3313, %v2156
        %v3346 = vadd.f32 %v3314, %v2157
        %v3347 = vadd.f32 %v3315, %v2158
        %v3348 = vadd.f32 %v3316, %v2159
        %v3349 = vadd.f32 %v3317, %v2160
        %v3350 = vadd.f32 %v3318, %v2161
        %v3351 = vadd.f32 %v3319, %v2162
        %v3352 = vpack.c.bf16 %v3321, %v3320
        %v3353 = vpack.c.bf16 %v3323, %v3322
        %v3354 = vpack.c.bf16 %v3325, %v3324
        %v3355 = vpack.c.bf16 %v3327, %v3326
        %v3356 = vpack.c.bf16 %v3329, %v3328
        %v3357 = vpack.c.bf16 %v3331, %v3330
        %v3358 = vpack.c.bf16 %v3333, %v3332
        %v3359 = vpack.c.bf16 %v3335, %v3334
        %v3360 = vpack.c.bf16 %v3337, %v3336
        %v3361 = vpack.c.bf16 %v3339, %v3338
        %v3362 = vpack.c.bf16 %v3341, %v3340
        %v3363 = vpack.c.bf16 %v3343, %v3342
        %v3364 = vpack.c.bf16 %v3345, %v3344
        %v3365 = vpack.c.bf16 %v3347, %v3346
        %v3366 = vpack.c.bf16 %v3349, %v3348
        %v3367 = vpack.c.bf16 %v3351, %v3350
        %3368 = vrot.lane.b32.xlu0 %v2243, 112
        %v3369 = vpop.permute.xlu0 %3368
        %3370 = vrot.lane.b32.xlu0 %v2244, 112
        %v3371 = vpop.permute.xlu0 %3370
        %3372 = vrot.lane.b32.xlu0 %v2245, 112
        %v3373 = vpop.permute.xlu0 %3372
        %3374 = vrot.lane.b32.xlu0 %v2246, 112
        %v3375 = vpop.permute.xlu0 %3374
        %3376 = vrot.lane.b32.xlu0 %v2247, 112
        %v3377 = vpop.permute.xlu0 %3376
        %3378 = vrot.lane.b32.xlu0 %v2248, 112
        %v3379 = vpop.permute.xlu0 %3378
        %3380 = vrot.lane.b32.xlu0 %v2249, 112
        %v3381 = vpop.permute.xlu0 %3380
        %3382 = vrot.lane.b32.xlu0 %v2250, 112
        %v3383 = vpop.permute.xlu0 %3382
        %3384 = vrot.lane.b32.xlu0 %v2251, 112
        %v3385 = vpop.permute.xlu0 %3384
        %3386 = vrot.lane.b32.xlu0 %v2252, 112
        %v3387 = vpop.permute.xlu0 %3386
        %3388 = vrot.lane.b32.xlu0 %v2253, 112
        %v3389 = vpop.permute.xlu0 %3388
        %3390 = vrot.lane.b32.xlu0 %v2254, 112
        %v3391 = vpop.permute.xlu0 %3390
        %3392 = vrot.lane.b32.xlu0 %v2255, 112
        %v3393 = vpop.permute.xlu0 %3392
        %3394 = vrot.lane.b32.xlu0 %v2256, 112
        %v3395 = vpop.permute.xlu0 %3394
        %3396 = vrot.lane.b32.xlu0 %v2257, 112
        %v3397 = vpop.permute.xlu0 %3396
        %3398 = vrot.lane.b32.xlu0 %v2258, 112
        %v3399 = vpop.permute.xlu0 %3398
        %3400 = vrot.lane.b32.xlu0 %v2243, 48
        %v3401 = vpop.permute.xlu0 %3400
        %3402 = vrot.lane.b32.xlu0 %v2244, 48
        %v3403 = vpop.permute.xlu0 %3402
        %3404 = vrot.lane.b32.xlu0 %v2245, 48
        %v3405 = vpop.permute.xlu0 %3404
        %3406 = vrot.lane.b32.xlu0 %v2246, 48
        %v3407 = vpop.permute.xlu0 %3406
        %3408 = vrot.lane.b32.xlu0 %v2247, 48
        %v3409 = vpop.permute.xlu0 %3408
        %3410 = vrot.lane.b32.xlu0 %v2248, 48
        %v3411 = vpop.permute.xlu0 %3410
        %3412 = vrot.lane.b32.xlu0 %v2249, 48
        %v3413 = vpop.permute.xlu0 %3412
        %3414 = vrot.lane.b32.xlu0 %v2250, 48
        %v3415 = vpop.permute.xlu0 %3414
        %3416 = vrot.lane.b32.xlu0 %v2251, 48
        %v3417 = vpop.permute.xlu0 %3416
        %3418 = vrot.lane.b32.xlu0 %v2252, 48
        %v3419 = vpop.permute.xlu0 %3418
        %3420 = vrot.lane.b32.xlu0 %v2253, 48
        %v3421 = vpop.permute.xlu0 %3420
        %3422 = vrot.lane.b32.xlu0 %v2254, 48
        %v3423 = vpop.permute.xlu0 %3422
        %3424 = vrot.lane.b32.xlu0 %v2255, 48
        %v3425 = vpop.permute.xlu0 %3424
        %3426 = vrot.lane.b32.xlu0 %v2256, 48
        %v3427 = vpop.permute.xlu0 %3426
        %3428 = vrot.lane.b32.xlu0 %v2257, 48
        %v3429 = vpop.permute.xlu0 %3428
        %3430 = vrot.lane.b32.xlu0 %v2258, 48
        %v3431 = vpop.permute.xlu0 %3430
        %v3433 = vsel %vm2291, %v3369, 0
        %v3436 = vsel %vm2291, %v3371, 0
        %v3439 = vsel %vm2291, %v3373, 0
        %v3442 = vsel %vm2291, %v3375, 0
        %v3445 = vsel %vm2291, %v3377, 0
        %v3448 = vsel %vm2291, %v3379, 0
        %v3451 = vsel %vm2291, %v3381, 0
        %v3454 = vsel %vm2291, %v3383, 0
        %v3457 = vsel %vm2291, %v3385, 0
        %v3460 = vsel %vm2291, %v3387, 0
        %v3463 = vsel %vm2291, %v3389, 0
        %v3466 = vsel %vm2291, %v3391, 0
        %v3469 = vsel %vm2291, %v3393, 0
        %v3472 = vsel %vm2291, %v3395, 0
        %v3475 = vsel %vm2291, %v3397, 0
        %v3478 = vsel %vm2291, %v3399, 0
        %v3481 = vsel %vm2291, %v3401, 0
        %v3484 = vsel %vm2291, %v3403, 0
        %v3487 = vsel %vm2291, %v3405, 0
        %v3490 = vsel %vm2291, %v3407, 0
        %v3493 = vsel %vm2291, %v3409, 0
        %v3496 = vsel %vm2291, %v3411, 0
        %v3499 = vsel %vm2291, %v3413, 0
        %v3502 = vsel %vm2291, %v3415, 0
        %v3505 = vsel %vm2291, %v3417, 0
        %v3508 = vsel %vm2291, %v3419, 0
        %v3511 = vsel %vm2291, %v3421, 0
        %v3514 = vsel %vm2291, %v3423, 0
        %v3517 = vsel %vm2291, %v3425, 0
        %v3520 = vsel %vm2291, %v3427, 0
        %v3523 = vsel %vm2291, %v3429, 0
        %v3526 = vsel %vm2291, %v3431, 0
        %3528 = vmatpush.bf16.xpose.msra.mxu0 %v3502
        %3529 = vmatpush.bf16.xpose.msra.mxu0 %v3499
        %3530 = vmatpush.bf16.xpose.msra.mxu0 %v3496
        %3531 = vmatpush.bf16.xpose.msra.mxu0 %v3493
        %3532 = vmatpush.bf16.xpose.msra.mxu0 %v3490
        %3533 = vmatpush.bf16.xpose.msra.mxu0 %v3487
        %3534 = vmatpush.bf16.xpose.msra.mxu0 %v3484
        %3535 = vmatpush.bf16.xpose.msra.mxu0 %v3481
        %3536 = vmatmul.bf16.gmra.mxu0 %v3433
        %v3537 = vpop.f32.mrf.mxu0
        %v3538 = vadd.f32 0.0, %v3537
        %v3539 = vpop.f32.mrf.mxu0
        %v3540 = vadd.f32 0.0, %v3539
        %3541 = vmatmul.bf16.gmra.mxu0 %v3436
        %v3542 = vpop.f32.mrf.mxu0
        %v3543 = vadd.f32 0.0, %v3542
        %v3544 = vpop.f32.mrf.mxu0
        %v3545 = vadd.f32 0.0, %v3544
        %3546 = vmatmul.bf16.gmra.mxu0 %v3439
        %v3547 = vpop.f32.mrf.mxu0
        %v3548 = vadd.f32 0.0, %v3547
        %v3549 = vpop.f32.mrf.mxu0
        %v3550 = vadd.f32 0.0, %v3549
        %3551 = vmatmul.bf16.gmra.mxu0 %v3442
        %v3552 = vpop.f32.mrf.mxu0
        %v3553 = vadd.f32 0.0, %v3552
        %v3554 = vpop.f32.mrf.mxu0
        %v3555 = vadd.f32 0.0, %v3554
        %3556 = vmatmul.bf16.gmra.mxu0 %v3445
        %v3557 = vpop.f32.mrf.mxu0
        %v3558 = vadd.f32 0.0, %v3557
        %v3559 = vpop.f32.mrf.mxu0
        %v3560 = vadd.f32 0.0, %v3559
        %3561 = vmatmul.bf16.gmra.mxu0 %v3448
        %v3562 = vpop.f32.mrf.mxu0
        %v3563 = vadd.f32 0.0, %v3562
        %v3564 = vpop.f32.mrf.mxu0
        %v3565 = vadd.f32 0.0, %v3564
        %3566 = vmatmul.bf16.gmra.mxu0 %v3451
        %v3567 = vpop.f32.mrf.mxu0
        %v3568 = vadd.f32 0.0, %v3567
        %v3569 = vpop.f32.mrf.mxu0
        %v3570 = vadd.f32 0.0, %v3569
        %3571 = vmatmul.bf16.gmra.mxu0 %v3454
        %v3572 = vpop.f32.mrf.mxu0
        %v3573 = vadd.f32 0.0, %v3572
        %v3574 = vpop.f32.mrf.mxu0
        %v3575 = vadd.f32 0.0, %v3574
        %3576 = vmatmul.bf16.gmra.mxu0 %v3457
        %v3577 = vpop.f32.mrf.mxu0
        %v3578 = vadd.f32 0.0, %v3577
        %v3579 = vpop.f32.mrf.mxu0
        %v3580 = vadd.f32 0.0, %v3579
        %3581 = vmatmul.bf16.gmra.mxu0 %v3460
        %v3582 = vpop.f32.mrf.mxu0
        %v3583 = vadd.f32 0.0, %v3582
        %v3584 = vpop.f32.mrf.mxu0
        %v3585 = vadd.f32 0.0, %v3584
        %3586 = vmatmul.bf16.gmra.mxu0 %v3463
        %v3587 = vpop.f32.mrf.mxu0
        %v3588 = vadd.f32 0.0, %v3587
        %v3589 = vpop.f32.mrf.mxu0
        %v3590 = vadd.f32 0.0, %v3589
        %3591 = vmatmul.bf16.gmra.mxu0 %v3466
        %v3592 = vpop.f32.mrf.mxu0
        %v3593 = vadd.f32 0.0, %v3592
        %v3594 = vpop.f32.mrf.mxu0
        %v3595 = vadd.f32 0.0, %v3594
        %3596 = vmatmul.bf16.gmra.mxu0 %v3469
        %v3597 = vpop.f32.mrf.mxu0
        %v3598 = vadd.f32 0.0, %v3597
        %v3599 = vpop.f32.mrf.mxu0
        %v3600 = vadd.f32 0.0, %v3599
        %3601 = vmatmul.bf16.gmra.mxu0 %v3472
        %v3602 = vpop.f32.mrf.mxu0
        %v3603 = vadd.f32 0.0, %v3602
        %v3604 = vpop.f32.mrf.mxu0
        %v3605 = vadd.f32 0.0, %v3604
        %3606 = vmatmul.bf16.gmra.mxu0 %v3475
        %v3607 = vpop.f32.mrf.mxu0
        %v3608 = vadd.f32 0.0, %v3607
        %v3609 = vpop.f32.mrf.mxu0
        %v3610 = vadd.f32 0.0, %v3609
        %3611 = vmatmul.bf16.gmra.mxu0 %v3478
        %v3612 = vpop.f32.mrf.mxu0
        %v3613 = vadd.f32 0.0, %v3612
        %v3614 = vpop.f32.mrf.mxu0
        %v3615 = vadd.f32 0.0, %v3614
        %3616 = vdwg.mxu0
        %3617 = vmatpush.bf16.xpose.msra.mxu0 %v3526
        %3618 = vmatpush.bf16.xpose.msra.mxu0 %v3523
        %3619 = vmatpush.bf16.xpose.msra.mxu0 %v3520
        %3620 = vmatpush.bf16.xpose.msra.mxu0 %v3517
        %3621 = vmatpush.bf16.xpose.msra.mxu0 %v3514
        %3622 = vmatpush.bf16.xpose.msra.mxu0 %v3511
        %3623 = vmatpush.bf16.xpose.msra.mxu0 %v3508
        %3624 = vmatpush.bf16.xpose.msra.mxu0 %v3505
        %3625 = vmatmul.bf16.gmra.mxu0 %v3433
        %v3626 = vpop.f32.mrf.mxu0
        %v3627 = vadd.f32 0.0, %v3626
        %v3628 = vpop.f32.mrf.mxu0
        %v3629 = vadd.f32 0.0, %v3628
        %3630 = vmatmul.bf16.gmra.mxu0 %v3436
        %v3631 = vpop.f32.mrf.mxu0
        %v3632 = vadd.f32 0.0, %v3631
        %v3633 = vpop.f32.mrf.mxu0
        %v3634 = vadd.f32 0.0, %v3633
        %3635 = vmatmul.bf16.gmra.mxu0 %v3439
        %v3636 = vpop.f32.mrf.mxu0
        %v3637 = vadd.f32 0.0, %v3636
        %v3638 = vpop.f32.mrf.mxu0
        %v3639 = vadd.f32 0.0, %v3638
        %3640 = vmatmul.bf16.gmra.mxu0 %v3442
        %v3641 = vpop.f32.mrf.mxu0
        %v3642 = vadd.f32 0.0, %v3641
        %v3643 = vpop.f32.mrf.mxu0
        %v3644 = vadd.f32 0.0, %v3643
        %3645 = vmatmul.bf16.gmra.mxu0 %v3445
        %v3646 = vpop.f32.mrf.mxu0
        %v3647 = vadd.f32 0.0, %v3646
        %v3648 = vpop.f32.mrf.mxu0
        %v3649 = vadd.f32 0.0, %v3648
        %3650 = vmatmul.bf16.gmra.mxu0 %v3448
        %v3651 = vpop.f32.mrf.mxu0
        %v3652 = vadd.f32 0.0, %v3651
        %v3653 = vpop.f32.mrf.mxu0
        %v3654 = vadd.f32 0.0, %v3653
        %3655 = vmatmul.bf16.gmra.mxu0 %v3451
        %v3656 = vpop.f32.mrf.mxu0
        %v3657 = vadd.f32 0.0, %v3656
        %v3658 = vpop.f32.mrf.mxu0
        %v3659 = vadd.f32 0.0, %v3658
        %3660 = vmatmul.bf16.gmra.mxu0 %v3454
        %v3661 = vpop.f32.mrf.mxu0
        %v3662 = vadd.f32 0.0, %v3661
        %v3663 = vpop.f32.mrf.mxu0
        %v3664 = vadd.f32 0.0, %v3663
        %3665 = vmatmul.bf16.gmra.mxu0 %v3457
        %v3666 = vpop.f32.mrf.mxu0
        %v3667 = vadd.f32 0.0, %v3666
        %v3668 = vpop.f32.mrf.mxu0
        %v3669 = vadd.f32 0.0, %v3668
        %3670 = vmatmul.bf16.gmra.mxu0 %v3460
        %v3671 = vpop.f32.mrf.mxu0
        %v3672 = vadd.f32 0.0, %v3671
        %v3673 = vpop.f32.mrf.mxu0
        %v3674 = vadd.f32 0.0, %v3673
        %3675 = vmatmul.bf16.gmra.mxu0 %v3463
        %v3676 = vpop.f32.mrf.mxu0
        %v3677 = vadd.f32 0.0, %v3676
        %v3678 = vpop.f32.mrf.mxu0
        %v3679 = vadd.f32 0.0, %v3678
        %3680 = vmatmul.bf16.gmra.mxu0 %v3466
        %v3681 = vpop.f32.mrf.mxu0
        %v3682 = vadd.f32 0.0, %v3681
        %v3683 = vpop.f32.mrf.mxu0
        %v3684 = vadd.f32 0.0, %v3683
        %3685 = vmatmul.bf16.gmra.mxu0 %v3469
        %v3686 = vpop.f32.mrf.mxu0
        %v3687 = vadd.f32 0.0, %v3686
        %v3688 = vpop.f32.mrf.mxu0
        %v3689 = vadd.f32 0.0, %v3688
        %3690 = vmatmul.bf16.gmra.mxu0 %v3472
        %v3691 = vpop.f32.mrf.mxu0
        %v3692 = vadd.f32 0.0, %v3691
        %v3693 = vpop.f32.mrf.mxu0
        %v3694 = vadd.f32 0.0, %v3693
        %3695 = vmatmul.bf16.gmra.mxu0 %v3475
        %v3696 = vpop.f32.mrf.mxu0
        %v3697 = vadd.f32 0.0, %v3696
        %v3698 = vpop.f32.mrf.mxu0
        %v3699 = vadd.f32 0.0, %v3698
        %3700 = vmatmul.bf16.gmra.mxu0 %v3478
        %v3701 = vpop.f32.mrf.mxu0
        %v3702 = vadd.f32 0.0, %v3701
        %v3703 = vpop.f32.mrf.mxu0
        %v3704 = vadd.f32 0.0, %v3703
        %3705 = vdwg.mxu0
        %v3706 = vmax.f32 %v3538, %v3627
        %3707 = vmax.xlane.f32.xlu0 %v3706
        %v3708 = vpop.xlane.xlu0 %3707
        %v3709 = vmax.f32 %v3540, %v3629
        %3710 = vmax.xlane.f32.xlu0 %v3709
        %v3711 = vpop.xlane.xlu0 %3710
        %v3712 = vmax.f32 %v3543, %v3632
        %3713 = vmax.xlane.f32.xlu0 %v3712
        %v3714 = vpop.xlane.xlu0 %3713
        %v3715 = vmax.f32 %v3545, %v3634
        %3716 = vmax.xlane.f32.xlu0 %v3715
        %v3717 = vpop.xlane.xlu0 %3716
        %v3718 = vmax.f32 %v3548, %v3637
        %3719 = vmax.xlane.f32.xlu0 %v3718
        %v3720 = vpop.xlane.xlu0 %3719
        %v3721 = vmax.f32 %v3550, %v3639
        %3722 = vmax.xlane.f32.xlu0 %v3721
        %v3723 = vpop.xlane.xlu0 %3722
        %v3724 = vmax.f32 %v3553, %v3642
        %3725 = vmax.xlane.f32.xlu0 %v3724
        %v3726 = vpop.xlane.xlu0 %3725
        %v3727 = vmax.f32 %v3555, %v3644
        %3728 = vmax.xlane.f32.xlu0 %v3727
        %v3729 = vpop.xlane.xlu0 %3728
        %v3730 = vmax.f32 %v3558, %v3647
        %3731 = vmax.xlane.f32.xlu0 %v3730
        %v3732 = vpop.xlane.xlu0 %3731
        %v3733 = vmax.f32 %v3560, %v3649
        %3734 = vmax.xlane.f32.xlu0 %v3733
        %v3735 = vpop.xlane.xlu0 %3734
        %v3736 = vmax.f32 %v3563, %v3652
        %3737 = vmax.xlane.f32.xlu0 %v3736
        %v3738 = vpop.xlane.xlu0 %3737
        %v3739 = vmax.f32 %v3565, %v3654
        %3740 = vmax.xlane.f32.xlu0 %v3739
        %v3741 = vpop.xlane.xlu0 %3740
        %v3742 = vmax.f32 %v3568, %v3657
        %3743 = vmax.xlane.f32.xlu0 %v3742
        %v3744 = vpop.xlane.xlu0 %3743
        %v3745 = vmax.f32 %v3570, %v3659
        %3746 = vmax.xlane.f32.xlu0 %v3745
        %v3747 = vpop.xlane.xlu0 %3746
        %v3748 = vmax.f32 %v3573, %v3662
        %3749 = vmax.xlane.f32.xlu0 %v3748
        %v3750 = vpop.xlane.xlu0 %3749
        %v3751 = vmax.f32 %v3575, %v3664
        %3752 = vmax.xlane.f32.xlu0 %v3751
        %v3753 = vpop.xlane.xlu0 %3752
        %v3754 = vmax.f32 %v3578, %v3667
        %3755 = vmax.xlane.f32.xlu0 %v3754
        %v3756 = vpop.xlane.xlu0 %3755
        %v3757 = vmax.f32 %v3580, %v3669
        %3758 = vmax.xlane.f32.xlu0 %v3757
        %v3759 = vpop.xlane.xlu0 %3758
        %v3760 = vmax.f32 %v3583, %v3672
        %3761 = vmax.xlane.f32.xlu0 %v3760
        %v3762 = vpop.xlane.xlu0 %3761
        %v3763 = vmax.f32 %v3585, %v3674
        %3764 = vmax.xlane.f32.xlu0 %v3763
        %v3765 = vpop.xlane.xlu0 %3764
        %v3766 = vmax.f32 %v3588, %v3677
        %3767 = vmax.xlane.f32.xlu0 %v3766
        %v3768 = vpop.xlane.xlu0 %3767
        %v3769 = vmax.f32 %v3590, %v3679
        %3770 = vmax.xlane.f32.xlu0 %v3769
        %v3771 = vpop.xlane.xlu0 %3770
        %v3772 = vmax.f32 %v3593, %v3682
        %3773 = vmax.xlane.f32.xlu0 %v3772
        %v3774 = vpop.xlane.xlu0 %3773
        %v3775 = vmax.f32 %v3595, %v3684
        %3776 = vmax.xlane.f32.xlu0 %v3775
        %v3777 = vpop.xlane.xlu0 %3776
        %v3778 = vmax.f32 %v3598, %v3687
        %3779 = vmax.xlane.f32.xlu0 %v3778
        %v3780 = vpop.xlane.xlu0 %3779
        %v3781 = vmax.f32 %v3600, %v3689
        %3782 = vmax.xlane.f32.xlu0 %v3781
        %v3783 = vpop.xlane.xlu0 %3782
        %v3784 = vmax.f32 %v3603, %v3692
        %3785 = vmax.xlane.f32.xlu0 %v3784
        %v3786 = vpop.xlane.xlu0 %3785
        %v3787 = vmax.f32 %v3605, %v3694
        %3788 = vmax.xlane.f32.xlu0 %v3787
        %v3789 = vpop.xlane.xlu0 %3788
        %v3790 = vmax.f32 %v3608, %v3697
        %3791 = vmax.xlane.f32.xlu0 %v3790
        %v3792 = vpop.xlane.xlu0 %3791
        %v3793 = vmax.f32 %v3610, %v3699
        %3794 = vmax.xlane.f32.xlu0 %v3793
        %v3795 = vpop.xlane.xlu0 %3794
        %v3796 = vmax.f32 %v3613, %v3702
        %3797 = vmax.xlane.f32.xlu0 %v3796
        %v3798 = vpop.xlane.xlu0 %3797
        %v3799 = vmax.f32 %v3615, %v3704
        %3800 = vmax.xlane.f32.xlu0 %v3799
        %v3801 = vpop.xlane.xlu0 %3800
        %v3802 = vsub.f32 %v3538, %v3708
        %v3803 = vsub.f32 %v3627, %v3708
        %v3804 = vsub.f32 %v3540, %v3711
        %v3805 = vsub.f32 %v3629, %v3711
        %v3806 = vsub.f32 %v3543, %v3714
        %v3807 = vsub.f32 %v3632, %v3714
        %v3808 = vsub.f32 %v3545, %v3717
        %v3809 = vsub.f32 %v3634, %v3717
        %v3810 = vsub.f32 %v3548, %v3720
        %v3811 = vsub.f32 %v3637, %v3720
        %v3812 = vsub.f32 %v3550, %v3723
        %v3813 = vsub.f32 %v3639, %v3723
        %v3814 = vsub.f32 %v3553, %v3726
        %v3815 = vsub.f32 %v3642, %v3726
        %v3816 = vsub.f32 %v3555, %v3729
        %v3817 = vsub.f32 %v3644, %v3729
        %v3818 = vsub.f32 %v3558, %v3732
        %v3819 = vsub.f32 %v3647, %v3732
        %v3820 = vsub.f32 %v3560, %v3735
        %v3821 = vsub.f32 %v3649, %v3735
        %v3822 = vsub.f32 %v3563, %v3738
        %v3823 = vsub.f32 %v3652, %v3738
        %v3824 = vsub.f32 %v3565, %v3741
        %v3825 = vsub.f32 %v3654, %v3741
        %v3826 = vsub.f32 %v3568, %v3744
        %v3827 = vsub.f32 %v3657, %v3744
        %v3828 = vsub.f32 %v3570, %v3747
        %v3829 = vsub.f32 %v3659, %v3747
        %v3830 = vsub.f32 %v3573, %v3750
        %v3831 = vsub.f32 %v3662, %v3750
        %v3832 = vsub.f32 %v3575, %v3753
        %v3833 = vsub.f32 %v3664, %v3753
        %v3834 = vsub.f32 %v3578, %v3756
        %v3835 = vsub.f32 %v3667, %v3756
        %v3836 = vsub.f32 %v3580, %v3759
        %v3837 = vsub.f32 %v3669, %v3759
        %v3838 = vsub.f32 %v3583, %v3762
        %v3839 = vsub.f32 %v3672, %v3762
        %v3840 = vsub.f32 %v3585, %v3765
        %v3841 = vsub.f32 %v3674, %v3765
        %v3842 = vsub.f32 %v3588, %v3768
        %v3843 = vsub.f32 %v3677, %v3768
        %v3844 = vsub.f32 %v3590, %v3771
        %v3845 = vsub.f32 %v3679, %v3771
        %v3846 = vsub.f32 %v3593, %v3774
        %v3847 = vsub.f32 %v3682, %v3774
        %v3848 = vsub.f32 %v3595, %v3777
        %v3849 = vsub.f32 %v3684, %v3777
        %v3850 = vsub.f32 %v3598, %v3780
        %v3851 = vsub.f32 %v3687, %v3780
        %v3852 = vsub.f32 %v3600, %v3783
        %v3853 = vsub.f32 %v3689, %v3783
        %v3854 = vsub.f32 %v3603, %v3786
        %v3855 = vsub.f32 %v3692, %v3786
        %v3856 = vsub.f32 %v3605, %v3789
        %v3857 = vsub.f32 %v3694, %v3789
        %v3858 = vsub.f32 %v3608, %v3792
        %v3859 = vsub.f32 %v3697, %v3792
        %v3860 = vsub.f32 %v3610, %v3795
        %v3861 = vsub.f32 %v3699, %v3795
        %v3862 = vsub.f32 %v3613, %v3798
        %v3863 = vsub.f32 %v3702, %v3798
        %v3864 = vsub.f32 %v3615, %v3801
        %v3865 = vsub.f32 %v3704, %v3801
        %v3866 = vmul.f32 %v3802, 1.442695
        %v3867 = vpow.pop %v3866
        %v3868 = vmul.f32 %v3803, 1.442695
        %v3869 = vpow.pop %v3868
        %v3870 = vmul.f32 %v3804, 1.442695
        %v3871 = vpow.pop %v3870
        %v3872 = vmul.f32 %v3805, 1.442695
        %v3873 = vpow.pop %v3872
        %v3874 = vmul.f32 %v3806, 1.442695
        %v3875 = vpow.pop %v3874
        %v3876 = vmul.f32 %v3807, 1.442695
        %v3877 = vpow.pop %v3876
        %v3878 = vmul.f32 %v3808, 1.442695
        %v3879 = vpow.pop %v3878
        %v3880 = vmul.f32 %v3809, 1.442695
        %v3881 = vpow.pop %v3880
        %v3882 = vmul.f32 %v3810, 1.442695
        %v3883 = vpow.pop %v3882
        %v3884 = vmul.f32 %v3811, 1.442695
        %v3885 = vpow.pop %v3884
        %v3886 = vmul.f32 %v3812, 1.442695
        %v3887 = vpow.pop %v3886
        %v3888 = vmul.f32 %v3813, 1.442695
        %v3889 = vpow.pop %v3888
        %v3890 = vmul.f32 %v3814, 1.442695
        %v3891 = vpow.pop %v3890
        %v3892 = vmul.f32 %v3815, 1.442695
        %v3893 = vpow.pop %v3892
        %v3894 = vmul.f32 %v3816, 1.442695
        %v3895 = vpow.pop %v3894
        %v3896 = vmul.f32 %v3817, 1.442695
        %v3897 = vpow.pop %v3896
        %v3898 = vmul.f32 %v3818, 1.442695
        %v3899 = vpow.pop %v3898
        %v3900 = vmul.f32 %v3819, 1.442695
        %v3901 = vpow.pop %v3900
        %v3902 = vmul.f32 %v3820, 1.442695
        %v3903 = vpow.pop %v3902
        %v3904 = vmul.f32 %v3821, 1.442695
        %v3905 = vpow.pop %v3904
        %v3906 = vmul.f32 %v3822, 1.442695
        %v3907 = vpow.pop %v3906
        %v3908 = vmul.f32 %v3823, 1.442695
        %v3909 = vpow.pop %v3908
        %v3910 = vmul.f32 %v3824, 1.442695
        %v3911 = vpow.pop %v3910
        %v3912 = vmul.f32 %v3825, 1.442695
        %v3913 = vpow.pop %v3912
        %v3914 = vmul.f32 %v3826, 1.442695
        %v3915 = vpow.pop %v3914
        %v3916 = vmul.f32 %v3827, 1.442695
        %v3917 = vpow.pop %v3916
        %v3918 = vmul.f32 %v3828, 1.442695
        %v3919 = vpow.pop %v3918
        %v3920 = vmul.f32 %v3829, 1.442695
        %v3921 = vpow.pop %v3920
        %v3922 = vmul.f32 %v3830, 1.442695
        %v3923 = vpow.pop %v3922
        %v3924 = vmul.f32 %v3831, 1.442695
        %v3925 = vpow.pop %v3924
        %v3926 = vmul.f32 %v3832, 1.442695
        %v3927 = vpow.pop %v3926
        %v3928 = vmul.f32 %v3833, 1.442695
        %v3929 = vpow.pop %v3928
        %v3930 = vmul.f32 %v3834, 1.442695
        %v3931 = vpow.pop %v3930
        %v3932 = vmul.f32 %v3835, 1.442695
        %v3933 = vpow.pop %v3932
        %v3934 = vmul.f32 %v3836, 1.442695
        %v3935 = vpow.pop %v3934
        %v3936 = vmul.f32 %v3837, 1.442695
        %v3937 = vpow.pop %v3936
        %v3938 = vmul.f32 %v3838, 1.442695
        %v3939 = vpow.pop %v3938
        %v3940 = vmul.f32 %v3839, 1.442695
        %v3941 = vpow.pop %v3940
        %v3942 = vmul.f32 %v3840, 1.442695
        %v3943 = vpow.pop %v3942
        %v3944 = vmul.f32 %v3841, 1.442695
        %v3945 = vpow.pop %v3944
        %v3946 = vmul.f32 %v3842, 1.442695
        %v3947 = vpow.pop %v3946
        %v3948 = vmul.f32 %v3843, 1.442695
        %v3949 = vpow.pop %v3948
        %v3950 = vmul.f32 %v3844, 1.442695
        %v3951 = vpow.pop %v3950
        %v3952 = vmul.f32 %v3845, 1.442695
        %v3953 = vpow.pop %v3952
        %v3954 = vmul.f32 %v3846, 1.442695
        %v3955 = vpow.pop %v3954
        %v3956 = vmul.f32 %v3847, 1.442695
        %v3957 = vpow.pop %v3956
        %v3958 = vmul.f32 %v3848, 1.442695
        %v3959 = vpow.pop %v3958
        %v3960 = vmul.f32 %v3849, 1.442695
        %v3961 = vpow.pop %v3960
        %v3962 = vmul.f32 %v3850, 1.442695
        %v3963 = vpow.pop %v3962
        %v3964 = vmul.f32 %v3851, 1.442695
        %v3965 = vpow.pop %v3964
        %v3966 = vmul.f32 %v3852, 1.442695
        %v3967 = vpow.pop %v3966
        %v3968 = vmul.f32 %v3853, 1.442695
        %v3969 = vpow.pop %v3968
        %v3970 = vmul.f32 %v3854, 1.442695
        %v3971 = vpow.pop %v3970
        %v3972 = vmul.f32 %v3855, 1.442695
        %v3973 = vpow.pop %v3972
        %v3974 = vmul.f32 %v3856, 1.442695
        %v3975 = vpow.pop %v3974
        %v3976 = vmul.f32 %v3857, 1.442695
        %v3977 = vpow.pop %v3976
        %v3978 = vmul.f32 %v3858, 1.442695
        %v3979 = vpow.pop %v3978
        %v3980 = vmul.f32 %v3859, 1.442695
        %v3981 = vpow.pop %v3980
        %v3982 = vmul.f32 %v3860, 1.442695
        %v3983 = vpow.pop %v3982
        %v3984 = vmul.f32 %v3861, 1.442695
        %v3985 = vpow.pop %v3984
        %v3986 = vmul.f32 %v3862, 1.442695
        %v3987 = vpow.pop %v3986
        %v3988 = vmul.f32 %v3863, 1.442695
        %v3989 = vpow.pop %v3988
        %v3990 = vmul.f32 %v3864, 1.442695
        %v3991 = vpow.pop %v3990
        %v3992 = vmul.f32 %v3865, 1.442695
        %v3993 = vpow.pop %v3992
        %v3994 = vadd.f32 %v3867, %v3869
        %3995 = vadd.xlane.f32.xlu0 %v3994
        %v3996 = vpop.xlane.xlu0 %3995
        %v3997 = vadd.f32 %v3871, %v3873
        %3998 = vadd.xlane.f32.xlu0 %v3997
        %v3999 = vpop.xlane.xlu0 %3998
        %v4000 = vadd.f32 %v3875, %v3877
        %4001 = vadd.xlane.f32.xlu0 %v4000
        %v4002 = vpop.xlane.xlu0 %4001
        %v4003 = vadd.f32 %v3879, %v3881
        %4004 = vadd.xlane.f32.xlu0 %v4003
        %v4005 = vpop.xlane.xlu0 %4004
        %v4006 = vadd.f32 %v3883, %v3885
        %4007 = vadd.xlane.f32.xlu0 %v4006
        %v4008 = vpop.xlane.xlu0 %4007
        %v4009 = vadd.f32 %v3887, %v3889
        %4010 = vadd.xlane.f32.xlu0 %v4009
        %v4011 = vpop.xlane.xlu0 %4010
        %v4012 = vadd.f32 %v3891, %v3893
        %4013 = vadd.xlane.f32.xlu0 %v4012
        %v4014 = vpop.xlane.xlu0 %4013
        %v4015 = vadd.f32 %v3895, %v3897
        %4016 = vadd.xlane.f32.xlu0 %v4015
        %v4017 = vpop.xlane.xlu0 %4016
        %v4018 = vadd.f32 %v3899, %v3901
        %4019 = vadd.xlane.f32.xlu0 %v4018
        %v4020 = vpop.xlane.xlu0 %4019
        %v4021 = vadd.f32 %v3903, %v3905
        %4022 = vadd.xlane.f32.xlu0 %v4021
        %v4023 = vpop.xlane.xlu0 %4022
        %v4024 = vadd.f32 %v3907, %v3909
        %4025 = vadd.xlane.f32.xlu0 %v4024
        %v4026 = vpop.xlane.xlu0 %4025
        %v4027 = vadd.f32 %v3911, %v3913
        %4028 = vadd.xlane.f32.xlu0 %v4027
        %v4029 = vpop.xlane.xlu0 %4028
        %v4030 = vadd.f32 %v3915, %v3917
        %4031 = vadd.xlane.f32.xlu0 %v4030
        %v4032 = vpop.xlane.xlu0 %4031
        %v4033 = vadd.f32 %v3919, %v3921
        %4034 = vadd.xlane.f32.xlu0 %v4033
        %v4035 = vpop.xlane.xlu0 %4034
        %v4036 = vadd.f32 %v3923, %v3925
        %4037 = vadd.xlane.f32.xlu0 %v4036
        %v4038 = vpop.xlane.xlu0 %4037
        %v4039 = vadd.f32 %v3927, %v3929
        %4040 = vadd.xlane.f32.xlu0 %v4039
        %v4041 = vpop.xlane.xlu0 %4040
        %v4042 = vadd.f32 %v3931, %v3933
        %4043 = vadd.xlane.f32.xlu0 %v4042
        %v4044 = vpop.xlane.xlu0 %4043
        %v4045 = vadd.f32 %v3935, %v3937
        %4046 = vadd.xlane.f32.xlu0 %v4045
        %v4047 = vpop.xlane.xlu0 %4046
        %v4048 = vadd.f32 %v3939, %v3941
        %4049 = vadd.xlane.f32.xlu0 %v4048
        %v4050 = vpop.xlane.xlu0 %4049
        %v4051 = vadd.f32 %v3943, %v3945
        %4052 = vadd.xlane.f32.xlu0 %v4051
        %v4053 = vpop.xlane.xlu0 %4052
        %v4054 = vadd.f32 %v3947, %v3949
        %4055 = vadd.xlane.f32.xlu0 %v4054
        %v4056 = vpop.xlane.xlu0 %4055
        %v4057 = vadd.f32 %v3951, %v3953
        %4058 = vadd.xlane.f32.xlu0 %v4057
        %v4059 = vpop.xlane.xlu0 %4058
        %v4060 = vadd.f32 %v3955, %v3957
        %4061 = vadd.xlane.f32.xlu0 %v4060
        %v4062 = vpop.xlane.xlu0 %4061
        %v4063 = vadd.f32 %v3959, %v3961
        %4064 = vadd.xlane.f32.xlu0 %v4063
        %v4065 = vpop.xlane.xlu0 %4064
        %v4066 = vadd.f32 %v3963, %v3965
        %4067 = vadd.xlane.f32.xlu0 %v4066
        %v4068 = vpop.xlane.xlu0 %4067
        %v4069 = vadd.f32 %v3967, %v3969
        %4070 = vadd.xlane.f32.xlu0 %v4069
        %v4071 = vpop.xlane.xlu0 %4070
        %v4072 = vadd.f32 %v3971, %v3973
        %4073 = vadd.xlane.f32.xlu0 %v4072
        %v4074 = vpop.xlane.xlu0 %4073
        %v4075 = vadd.f32 %v3975, %v3977
        %4076 = vadd.xlane.f32.xlu0 %v4075
        %v4077 = vpop.xlane.xlu0 %4076
        %v4078 = vadd.f32 %v3979, %v3981
        %4079 = vadd.xlane.f32.xlu0 %v4078
        %v4080 = vpop.xlane.xlu0 %4079
        %v4081 = vadd.f32 %v3983, %v3985
        %4082 = vadd.xlane.f32.xlu0 %v4081
        %v4083 = vpop.xlane.xlu0 %4082
        %v4084 = vadd.f32 %v3987, %v3989
        %4085 = vadd.xlane.f32.xlu0 %v4084
        %v4086 = vpop.xlane.xlu0 %4085
        %v4087 = vadd.f32 %v3991, %v3993
        %4088 = vadd.xlane.f32.xlu0 %v4087
        %v4089 = vpop.xlane.xlu0 %4088
        %v4090 = vpack.c.bf16 %v3871, %v3867
        %v4091 = vpack.c.bf16 %v3873, %v3869
        %v4092 = vpack.c.bf16 %v3879, %v3875
        %v4093 = vpack.c.bf16 %v3881, %v3877
        %v4094 = vpack.c.bf16 %v3887, %v3883
        %v4095 = vpack.c.bf16 %v3889, %v3885
        %v4096 = vpack.c.bf16 %v3895, %v3891
        %v4097 = vpack.c.bf16 %v3897, %v3893
        %v4098 = vpack.c.bf16 %v3903, %v3899
        %v4099 = vpack.c.bf16 %v3905, %v3901
        %v4100 = vpack.c.bf16 %v3911, %v3907
        %v4101 = vpack.c.bf16 %v3913, %v3909
        %v4102 = vpack.c.bf16 %v3919, %v3915
        %v4103 = vpack.c.bf16 %v3921, %v3917
        %v4104 = vpack.c.bf16 %v3927, %v3923
        %v4105 = vpack.c.bf16 %v3929, %v3925
        %v4106 = vpack.c.bf16 %v3935, %v3931
        %v4107 = vpack.c.bf16 %v3937, %v3933
        %v4108 = vpack.c.bf16 %v3943, %v3939
        %v4109 = vpack.c.bf16 %v3945, %v3941
        %v4110 = vpack.c.bf16 %v3951, %v3947
        %v4111 = vpack.c.bf16 %v3953, %v3949
        %v4112 = vpack.c.bf16 %v3959, %v3955
        %v4113 = vpack.c.bf16 %v3961, %v3957
        %v4114 = vpack.c.bf16 %v3967, %v3963
        %v4115 = vpack.c.bf16 %v3969, %v3965
        %v4116 = vpack.c.bf16 %v3975, %v3971
        %v4117 = vpack.c.bf16 %v3977, %v3973
        %v4118 = vpack.c.bf16 %v3983, %v3979
        %v4119 = vpack.c.bf16 %v3985, %v3981
        %v4120 = vpack.c.bf16 %v3991, %v3987
        %v4121 = vpack.c.bf16 %v3993, %v3989
        %4122 = vrot.lane.b32.xlu0 %v3046, 96
        %v4123 = vpop.permute.xlu0 %4122
        %4124 = vrot.lane.b32.xlu0 %v3047, 96
        %v4125 = vpop.permute.xlu0 %4124
        %4126 = vrot.lane.b32.xlu0 %v3048, 96
        %v4127 = vpop.permute.xlu0 %4126
        %4128 = vrot.lane.b32.xlu0 %v3049, 96
        %v4129 = vpop.permute.xlu0 %4128
        %4130 = vrot.lane.b32.xlu0 %v3050, 96
        %v4131 = vpop.permute.xlu0 %4130
        %4132 = vrot.lane.b32.xlu0 %v3051, 96
        %v4133 = vpop.permute.xlu0 %4132
        %4134 = vrot.lane.b32.xlu0 %v3052, 96
        %v4135 = vpop.permute.xlu0 %4134
        %4136 = vrot.lane.b32.xlu0 %v3053, 96
        %v4137 = vpop.permute.xlu0 %4136
        %4138 = vrot.lane.b32.xlu0 %v3054, 96
        %v4139 = vpop.permute.xlu0 %4138
        %4140 = vrot.lane.b32.xlu0 %v3055, 96
        %v4141 = vpop.permute.xlu0 %4140
        %4142 = vrot.lane.b32.xlu0 %v3056, 96
        %v4143 = vpop.permute.xlu0 %4142
        %4144 = vrot.lane.b32.xlu0 %v3057, 96
        %v4145 = vpop.permute.xlu0 %4144
        %4146 = vrot.lane.b32.xlu0 %v3058, 96
        %v4147 = vpop.permute.xlu0 %4146
        %4148 = vrot.lane.b32.xlu0 %v3059, 96
        %v4149 = vpop.permute.xlu0 %4148
        %4150 = vrot.lane.b32.xlu0 %v3060, 96
        %v4151 = vpop.permute.xlu0 %4150
        %4152 = vrot.lane.b32.xlu0 %v3061, 96
        %v4153 = vpop.permute.xlu0 %4152
        %4170 = vmatpush.bf16.msra.mxu0 %v4137
        %4171 = vmatpush.bf16.msra.mxu0 %v4135
        %4172 = vmatpush.bf16.msra.mxu0 %v4133
        %4173 = vmatpush.bf16.msra.mxu0 %v4131
        %4174 = vmatpush.bf16.msra.mxu0 %v4129
        %4175 = vmatpush.bf16.msra.mxu0 %v4127
        %4176 = vmatpush.bf16.msra.mxu0 %v4125
        %4177 = vmatpush.bf16.msra.mxu0 %v4123
        %4178 = vmatmul.bf16.gmra.mxu0 %v4090
        %v4179 = vpop.f32.mrf.mxu0
        %v4180 = vadd.f32 0.0, %v4179
        %v4181 = vpop.f32.mrf.mxu0
        %v4182 = vadd.f32 0.0, %v4181
        %4183 = vmatmul.bf16.gmra.mxu0 %v4092
        %v4184 = vpop.f32.mrf.mxu0
        %v4185 = vadd.f32 0.0, %v4184
        %v4186 = vpop.f32.mrf.mxu0
        %v4187 = vadd.f32 0.0, %v4186
        %4188 = vmatmul.bf16.gmra.mxu0 %v4094
        %v4189 = vpop.f32.mrf.mxu0
        %v4190 = vadd.f32 0.0, %v4189
        %v4191 = vpop.f32.mrf.mxu0
        %v4192 = vadd.f32 0.0, %v4191
        %4193 = vmatmul.bf16.gmra.mxu0 %v4096
        %v4194 = vpop.f32.mrf.mxu0
        %v4195 = vadd.f32 0.0, %v4194
        %v4196 = vpop.f32.mrf.mxu0
        %v4197 = vadd.f32 0.0, %v4196
        %4198 = vmatmul.bf16.gmra.mxu0 %v4098
        %v4199 = vpop.f32.mrf.mxu0
        %v4200 = vadd.f32 0.0, %v4199
        %v4201 = vpop.f32.mrf.mxu0
        %v4202 = vadd.f32 0.0, %v4201
        %4203 = vmatmul.bf16.gmra.mxu0 %v4100
        %v4204 = vpop.f32.mrf.mxu0
        %v4205 = vadd.f32 0.0, %v4204
        %v4206 = vpop.f32.mrf.mxu0
        %v4207 = vadd.f32 0.0, %v4206
        %4208 = vmatmul.bf16.gmra.mxu0 %v4102
        %v4209 = vpop.f32.mrf.mxu0
        %v4210 = vadd.f32 0.0, %v4209
        %v4211 = vpop.f32.mrf.mxu0
        %v4212 = vadd.f32 0.0, %v4211
        %4213 = vmatmul.bf16.gmra.mxu0 %v4104
        %v4214 = vpop.f32.mrf.mxu0
        %v4215 = vadd.f32 0.0, %v4214
        %v4216 = vpop.f32.mrf.mxu0
        %v4217 = vadd.f32 0.0, %v4216
        %4218 = vmatmul.bf16.gmra.mxu0 %v4106
        %v4219 = vpop.f32.mrf.mxu0
        %v4220 = vadd.f32 0.0, %v4219
        %v4221 = vpop.f32.mrf.mxu0
        %v4222 = vadd.f32 0.0, %v4221
        %4223 = vmatmul.bf16.gmra.mxu0 %v4108
        %v4224 = vpop.f32.mrf.mxu0
        %v4225 = vadd.f32 0.0, %v4224
        %v4226 = vpop.f32.mrf.mxu0
        %v4227 = vadd.f32 0.0, %v4226
        %4228 = vmatmul.bf16.gmra.mxu0 %v4110
        %v4229 = vpop.f32.mrf.mxu0
        %v4230 = vadd.f32 0.0, %v4229
        %v4231 = vpop.f32.mrf.mxu0
        %v4232 = vadd.f32 0.0, %v4231
        %4233 = vmatmul.bf16.gmra.mxu0 %v4112
        %v4234 = vpop.f32.mrf.mxu0
        %v4235 = vadd.f32 0.0, %v4234
        %v4236 = vpop.f32.mrf.mxu0
        %v4237 = vadd.f32 0.0, %v4236
        %4238 = vmatmul.bf16.gmra.mxu0 %v4114
        %v4239 = vpop.f32.mrf.mxu0
        %v4240 = vadd.f32 0.0, %v4239
        %v4241 = vpop.f32.mrf.mxu0
        %v4242 = vadd.f32 0.0, %v4241
        %4243 = vmatmul.bf16.gmra.mxu0 %v4116
        %v4244 = vpop.f32.mrf.mxu0
        %v4245 = vadd.f32 0.0, %v4244
        %v4246 = vpop.f32.mrf.mxu0
        %v4247 = vadd.f32 0.0, %v4246
        %4248 = vmatmul.bf16.gmra.mxu0 %v4118
        %v4249 = vpop.f32.mrf.mxu0
        %v4250 = vadd.f32 0.0, %v4249
        %v4251 = vpop.f32.mrf.mxu0
        %v4252 = vadd.f32 0.0, %v4251
        %4253 = vmatmul.bf16.gmra.mxu0 %v4120
        %v4254 = vpop.f32.mrf.mxu0
        %v4255 = vadd.f32 0.0, %v4254
        %v4256 = vpop.f32.mrf.mxu0
        %v4257 = vadd.f32 0.0, %v4256
        %4258 = vdwg.mxu0
        %4259 = vmatpush.bf16.msra.mxu0 %v4153
        %4260 = vmatpush.bf16.msra.mxu0 %v4151
        %4261 = vmatpush.bf16.msra.mxu0 %v4149
        %4262 = vmatpush.bf16.msra.mxu0 %v4147
        %4263 = vmatpush.bf16.msra.mxu0 %v4145
        %4264 = vmatpush.bf16.msra.mxu0 %v4143
        %4265 = vmatpush.bf16.msra.mxu0 %v4141
        %4266 = vmatpush.bf16.msra.mxu0 %v4139
        %4267 = vmatmul.bf16.gmra.mxu0 %v4091
        %v4268 = vpop.f32.mrf.mxu0
        %v4269 = vadd.f32 %v4180, %v4268
        %v4270 = vpop.f32.mrf.mxu0
        %v4271 = vadd.f32 %v4182, %v4270
        %4272 = vmatmul.bf16.gmra.mxu0 %v4093
        %v4273 = vpop.f32.mrf.mxu0
        %v4274 = vadd.f32 %v4185, %v4273
        %v4275 = vpop.f32.mrf.mxu0
        %v4276 = vadd.f32 %v4187, %v4275
        %4277 = vmatmul.bf16.gmra.mxu0 %v4095
        %v4278 = vpop.f32.mrf.mxu0
        %v4279 = vadd.f32 %v4190, %v4278
        %v4280 = vpop.f32.mrf.mxu0
        %v4281 = vadd.f32 %v4192, %v4280
        %4282 = vmatmul.bf16.gmra.mxu0 %v4097
        %v4283 = vpop.f32.mrf.mxu0
        %v4284 = vadd.f32 %v4195, %v4283
        %v4285 = vpop.f32.mrf.mxu0
        %v4286 = vadd.f32 %v4197, %v4285
        %4287 = vmatmul.bf16.gmra.mxu0 %v4099
        %v4288 = vpop.f32.mrf.mxu0
        %v4289 = vadd.f32 %v4200, %v4288
        %v4290 = vpop.f32.mrf.mxu0
        %v4291 = vadd.f32 %v4202, %v4290
        %4292 = vmatmul.bf16.gmra.mxu0 %v4101
        %v4293 = vpop.f32.mrf.mxu0
        %v4294 = vadd.f32 %v4205, %v4293
        %v4295 = vpop.f32.mrf.mxu0
        %v4296 = vadd.f32 %v4207, %v4295
        %4297 = vmatmul.bf16.gmra.mxu0 %v4103
        %v4298 = vpop.f32.mrf.mxu0
        %v4299 = vadd.f32 %v4210, %v4298
        %v4300 = vpop.f32.mrf.mxu0
        %v4301 = vadd.f32 %v4212, %v4300
        %4302 = vmatmul.bf16.gmra.mxu0 %v4105
        %v4303 = vpop.f32.mrf.mxu0
        %v4304 = vadd.f32 %v4215, %v4303
        %v4305 = vpop.f32.mrf.mxu0
        %v4306 = vadd.f32 %v4217, %v4305
        %4307 = vmatmul.bf16.gmra.mxu0 %v4107
        %v4308 = vpop.f32.mrf.mxu0
        %v4309 = vadd.f32 %v4220, %v4308
        %v4310 = vpop.f32.mrf.mxu0
        %v4311 = vadd.f32 %v4222, %v4310
        %4312 = vmatmul.bf16.gmra.mxu0 %v4109
        %v4313 = vpop.f32.mrf.mxu0
        %v4314 = vadd.f32 %v4225, %v4313
        %v4315 = vpop.f32.mrf.mxu0
        %v4316 = vadd.f32 %v4227, %v4315
        %4317 = vmatmul.bf16.gmra.mxu0 %v4111
        %v4318 = vpop.f32.mrf.mxu0
        %v4319 = vadd.f32 %v4230, %v4318
        %v4320 = vpop.f32.mrf.mxu0
        %v4321 = vadd.f32 %v4232, %v4320
        %4322 = vmatmul.bf16.gmra.mxu0 %v4113
        %v4323 = vpop.f32.mrf.mxu0
        %v4324 = vadd.f32 %v4235, %v4323
        %v4325 = vpop.f32.mrf.mxu0
        %v4326 = vadd.f32 %v4237, %v4325
        %4327 = vmatmul.bf16.gmra.mxu0 %v4115
        %v4328 = vpop.f32.mrf.mxu0
        %v4329 = vadd.f32 %v4240, %v4328
        %v4330 = vpop.f32.mrf.mxu0
        %v4331 = vadd.f32 %v4242, %v4330
        %4332 = vmatmul.bf16.gmra.mxu0 %v4117
        %v4333 = vpop.f32.mrf.mxu0
        %v4334 = vadd.f32 %v4245, %v4333
        %v4335 = vpop.f32.mrf.mxu0
        %v4336 = vadd.f32 %v4247, %v4335
        %4337 = vmatmul.bf16.gmra.mxu0 %v4119
        %v4338 = vpop.f32.mrf.mxu0
        %v4339 = vadd.f32 %v4250, %v4338
        %v4340 = vpop.f32.mrf.mxu0
        %v4341 = vadd.f32 %v4252, %v4340
        %4342 = vmatmul.bf16.gmra.mxu0 %v4121
        %v4343 = vpop.f32.mrf.mxu0
        %v4344 = vadd.f32 %v4255, %v4343
        %v4345 = vpop.f32.mrf.mxu0
        %v4346 = vadd.f32 %v4257, %v4345
        %4347 = vdwg.mxu0
        %v4348 = vrcp.pop %v3996
        %v4349 = vrcp.pop %v3999
        %v4350 = vrcp.pop %v4002
        %v4351 = vrcp.pop %v4005
        %v4352 = vrcp.pop %v4008
        %v4353 = vrcp.pop %v4011
        %v4354 = vrcp.pop %v4014
        %v4355 = vrcp.pop %v4017
        %v4356 = vrcp.pop %v4020
        %v4357 = vrcp.pop %v4023
        %v4358 = vrcp.pop %v4026
        %v4359 = vrcp.pop %v4029
        %v4360 = vrcp.pop %v4032
        %v4361 = vrcp.pop %v4035
        %v4362 = vrcp.pop %v4038
        %v4363 = vrcp.pop %v4041
        %v4364 = vrcp.pop %v4044
        %v4365 = vrcp.pop %v4047
        %v4366 = vrcp.pop %v4050
        %v4367 = vrcp.pop %v4053
        %v4368 = vrcp.pop %v4056
        %v4369 = vrcp.pop %v4059
        %v4370 = vrcp.pop %v4062
        %v4371 = vrcp.pop %v4065
        %v4372 = vrcp.pop %v4068
        %v4373 = vrcp.pop %v4071
        %v4374 = vrcp.pop %v4074
        %v4375 = vrcp.pop %v4077
        %v4376 = vrcp.pop %v4080
        %v4377 = vrcp.pop %v4083
        %v4378 = vrcp.pop %v4086
        %v4379 = vrcp.pop %v4089
        %v4380 = vmul.f32 %v4269, %v4348
        %v4381 = vmul.f32 %v4271, %v4349
        %v4382 = vmul.f32 %v4274, %v4350
        %v4383 = vmul.f32 %v4276, %v4351
        %v4384 = vmul.f32 %v4279, %v4352
        %v4385 = vmul.f32 %v4281, %v4353
        %v4386 = vmul.f32 %v4284, %v4354
        %v4387 = vmul.f32 %v4286, %v4355
        %v4388 = vmul.f32 %v4289, %v4356
        %v4389 = vmul.f32 %v4291, %v4357
        %v4390 = vmul.f32 %v4294, %v4358
        %v4391 = vmul.f32 %v4296, %v4359
        %v4392 = vmul.f32 %v4299, %v4360
        %v4393 = vmul.f32 %v4301, %v4361
        %v4394 = vmul.f32 %v4304, %v4362
        %v4395 = vmul.f32 %v4306, %v4363
        %v4396 = vmul.f32 %v4309, %v4364
        %v4397 = vmul.f32 %v4311, %v4365
        %v4398 = vmul.f32 %v4314, %v4366
        %v4399 = vmul.f32 %v4316, %v4367
        %v4400 = vmul.f32 %v4319, %v4368
        %v4401 = vmul.f32 %v4321, %v4369
        %v4402 = vmul.f32 %v4324, %v4370
        %v4403 = vmul.f32 %v4326, %v4371
        %v4404 = vmul.f32 %v4329, %v4372
        %v4405 = vmul.f32 %v4331, %v4373
        %v4406 = vmul.f32 %v4334, %v4374
        %v4407 = vmul.f32 %v4336, %v4375
        %v4408 = vmul.f32 %v4339, %v4376
        %v4409 = vmul.f32 %v4341, %v4377
        %v4410 = vmul.f32 %v4344, %v4378
        %v4411 = vmul.f32 %v4346, %v4379
        %4444 = vrot.lane.b32.xlu0 %v2131, 96
        %v4445 = vpop.permute.xlu0 %4444
        %4446 = vrot.lane.b32.xlu0 %v2132, 96
        %v4447 = vpop.permute.xlu0 %4446
        %4448 = vrot.lane.b32.xlu0 %v2133, 96
        %v4449 = vpop.permute.xlu0 %4448
        %4450 = vrot.lane.b32.xlu0 %v2134, 96
        %v4451 = vpop.permute.xlu0 %4450
        %4452 = vrot.lane.b32.xlu0 %v2135, 96
        %v4453 = vpop.permute.xlu0 %4452
        %4454 = vrot.lane.b32.xlu0 %v2136, 96
        %v4455 = vpop.permute.xlu0 %4454
        %4456 = vrot.lane.b32.xlu0 %v2137, 96
        %v4457 = vpop.permute.xlu0 %4456
        %4458 = vrot.lane.b32.xlu0 %v2138, 96
        %v4459 = vpop.permute.xlu0 %4458
        %4460 = vrot.lane.b32.xlu0 %v2139, 96
        %v4461 = vpop.permute.xlu0 %4460
        %4462 = vrot.lane.b32.xlu0 %v2140, 96
        %v4463 = vpop.permute.xlu0 %4462
        %4464 = vrot.lane.b32.xlu0 %v2141, 96
        %v4465 = vpop.permute.xlu0 %4464
        %4466 = vrot.lane.b32.xlu0 %v2142, 96
        %v4467 = vpop.permute.xlu0 %4466
        %4468 = vrot.lane.b32.xlu0 %v2143, 96
        %v4469 = vpop.permute.xlu0 %4468
        %4470 = vrot.lane.b32.xlu0 %v2144, 96
        %v4471 = vpop.permute.xlu0 %4470
        %4472 = vrot.lane.b32.xlu0 %v2145, 96
        %v4473 = vpop.permute.xlu0 %4472
        %4474 = vrot.lane.b32.xlu0 %v2146, 96
        %v4475 = vpop.permute.xlu0 %4474
        %4476 = vrot.lane.b32.xlu0 %v2147, 96
        %v4477 = vpop.permute.xlu0 %4476
        %4478 = vrot.lane.b32.xlu0 %v2148, 96
        %v4479 = vpop.permute.xlu0 %4478
        %4480 = vrot.lane.b32.xlu0 %v2149, 96
        %v4481 = vpop.permute.xlu0 %4480
        %4482 = vrot.lane.b32.xlu0 %v2150, 96
        %v4483 = vpop.permute.xlu0 %4482
        %4484 = vrot.lane.b32.xlu0 %v2151, 96
        %v4485 = vpop.permute.xlu0 %4484
        %4486 = vrot.lane.b32.xlu0 %v2152, 96
        %v4487 = vpop.permute.xlu0 %4486
        %4488 = vrot.lane.b32.xlu0 %v2153, 96
        %v4489 = vpop.permute.xlu0 %4488
        %4490 = vrot.lane.b32.xlu0 %v2154, 96
        %v4491 = vpop.permute.xlu0 %4490
        %4492 = vrot.lane.b32.xlu0 %v2155, 96
        %v4493 = vpop.permute.xlu0 %4492
        %4494 = vrot.lane.b32.xlu0 %v2156, 96
        %v4495 = vpop.permute.xlu0 %4494
        %4496 = vrot.lane.b32.xlu0 %v2157, 96
        %v4497 = vpop.permute.xlu0 %4496
        %4498 = vrot.lane.b32.xlu0 %v2158, 96
        %v4499 = vpop.permute.xlu0 %4498
        %4500 = vrot.lane.b32.xlu0 %v2159, 96
        %v4501 = vpop.permute.xlu0 %4500
        %4502 = vrot.lane.b32.xlu0 %v2160, 96
        %v4503 = vpop.permute.xlu0 %4502
        %4504 = vrot.lane.b32.xlu0 %v2161, 96
        %v4505 = vpop.permute.xlu0 %4504
        %4506 = vrot.lane.b32.xlu0 %v2162, 96
        %v4507 = vpop.permute.xlu0 %4506
        %v4540 = vadd.f32 %v4380, %v4445
        %v4541 = vadd.f32 %v4381, %v4447
        %v4542 = vadd.f32 %v4382, %v4449
        %v4543 = vadd.f32 %v4383, %v4451
        %v4544 = vadd.f32 %v4384, %v4453
        %v4545 = vadd.f32 %v4385, %v4455
        %v4546 = vadd.f32 %v4386, %v4457
        %v4547 = vadd.f32 %v4387, %v4459
        %v4548 = vadd.f32 %v4388, %v4461
        %v4549 = vadd.f32 %v4389, %v4463
        %v4550 = vadd.f32 %v4390, %v4465
        %v4551 = vadd.f32 %v4391, %v4467
        %v4552 = vadd.f32 %v4392, %v4469
        %v4553 = vadd.f32 %v4393, %v4471
        %v4554 = vadd.f32 %v4394, %v4473
        %v4555 = vadd.f32 %v4395, %v4475
        %v4556 = vadd.f32 %v4396, %v4477
        %v4557 = vadd.f32 %v4397, %v4479
        %v4558 = vadd.f32 %v4398, %v4481
        %v4559 = vadd.f32 %v4399, %v4483
        %v4560 = vadd.f32 %v4400, %v4485
        %v4561 = vadd.f32 %v4401, %v4487
        %v4562 = vadd.f32 %v4402, %v4489
        %v4563 = vadd.f32 %v4403, %v4491
        %v4564 = vadd.f32 %v4404, %v4493
        %v4565 = vadd.f32 %v4405, %v4495
        %v4566 = vadd.f32 %v4406, %v4497
        %v4567 = vadd.f32 %v4407, %v4499
        %v4568 = vadd.f32 %v4408, %v4501
        %v4569 = vadd.f32 %v4409, %v4503
        %v4570 = vadd.f32 %v4410, %v4505
        %v4571 = vadd.f32 %v4411, %v4507
        %v4572 = vpack.c.bf16 %v4541, %v4540
        %v4573 = vpack.c.bf16 %v4543, %v4542
        %v4574 = vpack.c.bf16 %v4545, %v4544
        %v4575 = vpack.c.bf16 %v4547, %v4546
        %v4576 = vpack.c.bf16 %v4549, %v4548
        %v4577 = vpack.c.bf16 %v4551, %v4550
        %v4578 = vpack.c.bf16 %v4553, %v4552
        %v4579 = vpack.c.bf16 %v4555, %v4554
        %v4580 = vpack.c.bf16 %v4557, %v4556
        %v4581 = vpack.c.bf16 %v4559, %v4558
        %v4582 = vpack.c.bf16 %v4561, %v4560
        %v4583 = vpack.c.bf16 %v4563, %v4562
        %v4584 = vpack.c.bf16 %v4565, %v4564
        %v4585 = vpack.c.bf16 %v4567, %v4566
        %v4586 = vpack.c.bf16 %v4569, %v4568
        %v4587 = vpack.c.bf16 %v4571, %v4570
        %v4592 = vunpack.c.l.b16 %v2167
        %v4593 = vunpack.c.l.b16 %v2168
        %v4594 = vunpack.c.l.b16 %v2169
        %v4595 = vunpack.c.l.b16 %v2170
        %v4596 = vpack.c.b16 %v4593, %v4592
        %v4597 = vpack.c.b16 %v4595, %v4594
        %vm4600 = vcmask 261120
        %v4602 = vsel %vm4600, %v4572, 0
        %v4605 = vsel %vm4600, %v4573, 0
        %v4608 = vsel %vm4600, %v4574, 0
        %v4611 = vsel %vm4600, %v4575, 0
        %v4614 = vsel %vm4600, %v4576, 0
        %v4617 = vsel %vm4600, %v4577, 0
        %v4620 = vsel %vm4600, %v4578, 0
        %v4623 = vsel %vm4600, %v4579, 0
        %v4626 = vsel %vm4600, %v4580, 0
        %v4629 = vsel %vm4600, %v4581, 0
        %v4632 = vsel %vm4600, %v4582, 0
        %v4635 = vsel %vm4600, %v4583, 0
        %v4638 = vsel %vm4600, %v4584, 0
        %v4641 = vsel %vm4600, %v4585, 0
        %v4644 = vsel %vm4600, %v4586, 0
        %v4647 = vsel %vm4600, %v4587, 0
        %4649 = vmatpush.bf16.msra.mxu0 0
        %4650 = vmatpush.bf16.msra.mxu0 0
        %4651 = vmatpush.bf16.msra.mxu0 0
        %4652 = vmatpush.bf16.msra.mxu0 0
        %4653 = vmatpush.bf16.msra.mxu0 0
        %4654 = vmatpush.bf16.msra.mxu0 0
        %4655 = vmatpush.bf16.msra.mxu0 %v4597
        %4656 = vmatpush.bf16.msra.mxu0 %v4596
        %4657 = vmatmul.bf16.gmra.mxu0 %v4602
        %v4658 = vpop.f32.mrf.mxu0
        %v4659 = vadd.f32 0.0, %v4658
        %v4660 = vpop.f32.mrf.mxu0
        %v4661 = vadd.f32 0.0, %v4660
        %4662 = vmatmul.bf16.gmra.mxu0 %v4605
        %v4663 = vpop.f32.mrf.mxu0
        %v4664 = vadd.f32 0.0, %v4663
        %v4665 = vpop.f32.mrf.mxu0
        %v4666 = vadd.f32 0.0, %v4665
        %4667 = vmatmul.bf16.gmra.mxu0 %v4608
        %v4668 = vpop.f32.mrf.mxu0
        %v4669 = vadd.f32 0.0, %v4668
        %v4670 = vpop.f32.mrf.mxu0
        %v4671 = vadd.f32 0.0, %v4670
        %4672 = vmatmul.bf16.gmra.mxu0 %v4611
        %v4673 = vpop.f32.mrf.mxu0
        %v4674 = vadd.f32 0.0, %v4673
        %v4675 = vpop.f32.mrf.mxu0
        %v4676 = vadd.f32 0.0, %v4675
        %4677 = vmatmul.bf16.gmra.mxu0 %v4614
        %v4678 = vpop.f32.mrf.mxu0
        %v4679 = vadd.f32 0.0, %v4678
        %v4680 = vpop.f32.mrf.mxu0
        %v4681 = vadd.f32 0.0, %v4680
        %4682 = vmatmul.bf16.gmra.mxu0 %v4617
        %v4683 = vpop.f32.mrf.mxu0
        %v4684 = vadd.f32 0.0, %v4683
        %v4685 = vpop.f32.mrf.mxu0
        %v4686 = vadd.f32 0.0, %v4685
        %4687 = vmatmul.bf16.gmra.mxu0 %v4620
        %v4688 = vpop.f32.mrf.mxu0
        %v4689 = vadd.f32 0.0, %v4688
        %v4690 = vpop.f32.mrf.mxu0
        %v4691 = vadd.f32 0.0, %v4690
        %4692 = vmatmul.bf16.gmra.mxu0 %v4623
        %v4693 = vpop.f32.mrf.mxu0
        %v4694 = vadd.f32 0.0, %v4693
        %v4695 = vpop.f32.mrf.mxu0
        %v4696 = vadd.f32 0.0, %v4695
        %4697 = vmatmul.bf16.gmra.mxu0 %v4626
        %v4698 = vpop.f32.mrf.mxu0
        %v4699 = vadd.f32 0.0, %v4698
        %v4700 = vpop.f32.mrf.mxu0
        %v4701 = vadd.f32 0.0, %v4700
        %4702 = vmatmul.bf16.gmra.mxu0 %v4629
        %v4703 = vpop.f32.mrf.mxu0
        %v4704 = vadd.f32 0.0, %v4703
        %v4705 = vpop.f32.mrf.mxu0
        %v4706 = vadd.f32 0.0, %v4705
        %4707 = vmatmul.bf16.gmra.mxu0 %v4632
        %v4708 = vpop.f32.mrf.mxu0
        %v4709 = vadd.f32 0.0, %v4708
        %v4710 = vpop.f32.mrf.mxu0
        %v4711 = vadd.f32 0.0, %v4710
        %4712 = vmatmul.bf16.gmra.mxu0 %v4635
        %v4713 = vpop.f32.mrf.mxu0
        %v4714 = vadd.f32 0.0, %v4713
        %v4715 = vpop.f32.mrf.mxu0
        %v4716 = vadd.f32 0.0, %v4715
        %4717 = vmatmul.bf16.gmra.mxu0 %v4638
        %v4718 = vpop.f32.mrf.mxu0
        %v4719 = vadd.f32 0.0, %v4718
        %v4720 = vpop.f32.mrf.mxu0
        %v4721 = vadd.f32 0.0, %v4720
        %4722 = vmatmul.bf16.gmra.mxu0 %v4641
        %v4723 = vpop.f32.mrf.mxu0
        %v4724 = vadd.f32 0.0, %v4723
        %v4725 = vpop.f32.mrf.mxu0
        %v4726 = vadd.f32 0.0, %v4725
        %4727 = vmatmul.bf16.gmra.mxu0 %v4644
        %v4728 = vpop.f32.mrf.mxu0
        %v4729 = vadd.f32 0.0, %v4728
        %v4730 = vpop.f32.mrf.mxu0
        %v4731 = vadd.f32 0.0, %v4730
        %4732 = vmatmul.bf16.gmra.mxu0 %v4647
        %v4733 = vpop.f32.mrf.mxu0
        %v4734 = vadd.f32 0.0, %v4733
        %v4735 = vpop.f32.mrf.mxu0
        %v4736 = vadd.f32 0.0, %v4735
        %4737 = vdwg.mxu0
        %v4742 = vunpack.c.l.b16 %v2163
        %v4743 = vunpack.c.l.b16 %v2164
        %v4744 = vunpack.c.l.b16 %v2165
        %v4745 = vunpack.c.l.b16 %v2166
        %v4746 = vpack.c.b16 %v4743, %v4742
        %v4747 = vpack.c.b16 %v4745, %v4744
        %v4751 = vsel %vm4600, %v3352, 0
        %v4754 = vsel %vm4600, %v3353, 0
        %v4757 = vsel %vm4600, %v3354, 0
        %v4760 = vsel %vm4600, %v3355, 0
        %v4763 = vsel %vm4600, %v3356, 0
        %v4766 = vsel %vm4600, %v3357, 0
        %v4769 = vsel %vm4600, %v3358, 0
        %v4772 = vsel %vm4600, %v3359, 0
        %v4775 = vsel %vm4600, %v3360, 0
        %v4778 = vsel %vm4600, %v3361, 0
        %v4781 = vsel %vm4600, %v3362, 0
        %v4784 = vsel %vm4600, %v3363, 0
        %v4787 = vsel %vm4600, %v3364, 0
        %v4790 = vsel %vm4600, %v3365, 0
        %v4793 = vsel %vm4600, %v3366, 0
        %v4796 = vsel %vm4600, %v3367, 0
        %4798 = vmatpush.bf16.msra.mxu0 0
        %4799 = vmatpush.bf16.msra.mxu0 0
        %4800 = vmatpush.bf16.msra.mxu0 0
        %4801 = vmatpush.bf16.msra.mxu0 0
        %4802 = vmatpush.bf16.msra.mxu0 0
        %4803 = vmatpush.bf16.msra.mxu0 0
        %4804 = vmatpush.bf16.msra.mxu0 %v4747
        %4805 = vmatpush.bf16.msra.mxu0 %v4746
        %4806 = vmatmul.bf16.gmra.mxu0 %v4751
        %v4807 = vpop.f32.mrf.mxu0
        %v4808 = vadd.f32 %v4659, %v4807
        %v4809 = vpop.f32.mrf.mxu0
        %v4810 = vadd.f32 %v4661, %v4809
        %4811 = vmatmul.bf16.gmra.mxu0 %v4754
        %v4812 = vpop.f32.mrf.mxu0
        %v4813 = vadd.f32 %v4664, %v4812
        %v4814 = vpop.f32.mrf.mxu0
        %v4815 = vadd.f32 %v4666, %v4814
        %4816 = vmatmul.bf16.gmra.mxu0 %v4757
        %v4817 = vpop.f32.mrf.mxu0
        %v4818 = vadd.f32 %v4669, %v4817
        %v4819 = vpop.f32.mrf.mxu0
        %v4820 = vadd.f32 %v4671, %v4819
        %4821 = vmatmul.bf16.gmra.mxu0 %v4760
        %v4822 = vpop.f32.mrf.mxu0
        %v4823 = vadd.f32 %v4674, %v4822
        %v4824 = vpop.f32.mrf.mxu0
        %v4825 = vadd.f32 %v4676, %v4824
        %4826 = vmatmul.bf16.gmra.mxu0 %v4763
        %v4827 = vpop.f32.mrf.mxu0
        %v4828 = vadd.f32 %v4679, %v4827
        %v4829 = vpop.f32.mrf.mxu0
        %v4830 = vadd.f32 %v4681, %v4829
        %4831 = vmatmul.bf16.gmra.mxu0 %v4766
        %v4832 = vpop.f32.mrf.mxu0
        %v4833 = vadd.f32 %v4684, %v4832
        %v4834 = vpop.f32.mrf.mxu0
        %v4835 = vadd.f32 %v4686, %v4834
        %4836 = vmatmul.bf16.gmra.mxu0 %v4769
        %v4837 = vpop.f32.mrf.mxu0
        %v4838 = vadd.f32 %v4689, %v4837
        %v4839 = vpop.f32.mrf.mxu0
        %v4840 = vadd.f32 %v4691, %v4839
        %4841 = vmatmul.bf16.gmra.mxu0 %v4772
        %v4842 = vpop.f32.mrf.mxu0
        %v4843 = vadd.f32 %v4694, %v4842
        %v4844 = vpop.f32.mrf.mxu0
        %v4845 = vadd.f32 %v4696, %v4844
        %4846 = vmatmul.bf16.gmra.mxu0 %v4775
        %v4847 = vpop.f32.mrf.mxu0
        %v4848 = vadd.f32 %v4699, %v4847
        %v4849 = vpop.f32.mrf.mxu0
        %v4850 = vadd.f32 %v4701, %v4849
        %4851 = vmatmul.bf16.gmra.mxu0 %v4778
        %v4852 = vpop.f32.mrf.mxu0
        %v4853 = vadd.f32 %v4704, %v4852
        %v4854 = vpop.f32.mrf.mxu0
        %v4855 = vadd.f32 %v4706, %v4854
        %4856 = vmatmul.bf16.gmra.mxu0 %v4781
        %v4857 = vpop.f32.mrf.mxu0
        %v4858 = vadd.f32 %v4709, %v4857
        %v4859 = vpop.f32.mrf.mxu0
        %v4860 = vadd.f32 %v4711, %v4859
        %4861 = vmatmul.bf16.gmra.mxu0 %v4784
        %v4862 = vpop.f32.mrf.mxu0
        %v4863 = vadd.f32 %v4714, %v4862
        %v4864 = vpop.f32.mrf.mxu0
        %v4865 = vadd.f32 %v4716, %v4864
        %4866 = vmatmul.bf16.gmra.mxu0 %v4787
        %v4867 = vpop.f32.mrf.mxu0
        %v4868 = vadd.f32 %v4719, %v4867
        %v4869 = vpop.f32.mrf.mxu0
        %v4870 = vadd.f32 %v4721, %v4869
        %4871 = vmatmul.bf16.gmra.mxu0 %v4790
        %v4872 = vpop.f32.mrf.mxu0
        %v4873 = vadd.f32 %v4724, %v4872
        %v4874 = vpop.f32.mrf.mxu0
        %v4875 = vadd.f32 %v4726, %v4874
        %4876 = vmatmul.bf16.gmra.mxu0 %v4793
        %v4877 = vpop.f32.mrf.mxu0
        %v4878 = vadd.f32 %v4729, %v4877
        %v4879 = vpop.f32.mrf.mxu0
        %v4880 = vadd.f32 %v4731, %v4879
        %4881 = vmatmul.bf16.gmra.mxu0 %v4796
        %v4882 = vpop.f32.mrf.mxu0
        %v4883 = vadd.f32 %v4734, %v4882
        %v4884 = vpop.f32.mrf.mxu0
        %v4885 = vadd.f32 %v4736, %v4884
        %4886 = vdwg.mxu0
        %4887 = vrot.lane.b32.xlu0 %v2243, 96
        %v4888 = vpop.permute.xlu0 %4887
        %4889 = vrot.lane.b32.xlu0 %v2244, 96
        %v4890 = vpop.permute.xlu0 %4889
        %4891 = vrot.lane.b32.xlu0 %v2245, 96
        %v4892 = vpop.permute.xlu0 %4891
        %4893 = vrot.lane.b32.xlu0 %v2246, 96
        %v4894 = vpop.permute.xlu0 %4893
        %4895 = vrot.lane.b32.xlu0 %v2247, 96
        %v4896 = vpop.permute.xlu0 %4895
        %4897 = vrot.lane.b32.xlu0 %v2248, 96
        %v4898 = vpop.permute.xlu0 %4897
        %4899 = vrot.lane.b32.xlu0 %v2249, 96
        %v4900 = vpop.permute.xlu0 %4899
        %4901 = vrot.lane.b32.xlu0 %v2250, 96
        %v4902 = vpop.permute.xlu0 %4901
        %4903 = vrot.lane.b32.xlu0 %v2251, 96
        %v4904 = vpop.permute.xlu0 %4903
        %4905 = vrot.lane.b32.xlu0 %v2252, 96
        %v4906 = vpop.permute.xlu0 %4905
        %4907 = vrot.lane.b32.xlu0 %v2253, 96
        %v4908 = vpop.permute.xlu0 %4907
        %4909 = vrot.lane.b32.xlu0 %v2254, 96
        %v4910 = vpop.permute.xlu0 %4909
        %4911 = vrot.lane.b32.xlu0 %v2255, 96
        %v4912 = vpop.permute.xlu0 %4911
        %4913 = vrot.lane.b32.xlu0 %v2256, 96
        %v4914 = vpop.permute.xlu0 %4913
        %4915 = vrot.lane.b32.xlu0 %v2257, 96
        %v4916 = vpop.permute.xlu0 %4915
        %4917 = vrot.lane.b32.xlu0 %v2258, 96
        %v4918 = vpop.permute.xlu0 %4917
        %4919 = vrot.lane.b32.xlu0 %v2243, 32
        %v4920 = vpop.permute.xlu0 %4919
        %4921 = vrot.lane.b32.xlu0 %v2244, 32
        %v4922 = vpop.permute.xlu0 %4921
        %4923 = vrot.lane.b32.xlu0 %v2245, 32
        %v4924 = vpop.permute.xlu0 %4923
        %4925 = vrot.lane.b32.xlu0 %v2246, 32
        %v4926 = vpop.permute.xlu0 %4925
        %4927 = vrot.lane.b32.xlu0 %v2247, 32
        %v4928 = vpop.permute.xlu0 %4927
        %4929 = vrot.lane.b32.xlu0 %v2248, 32
        %v4930 = vpop.permute.xlu0 %4929
        %4931 = vrot.lane.b32.xlu0 %v2249, 32
        %v4932 = vpop.permute.xlu0 %4931
        %4933 = vrot.lane.b32.xlu0 %v2250, 32
        %v4934 = vpop.permute.xlu0 %4933
        %4935 = vrot.lane.b32.xlu0 %v2251, 32
        %v4936 = vpop.permute.xlu0 %4935
        %4937 = vrot.lane.b32.xlu0 %v2252, 32
        %v4938 = vpop.permute.xlu0 %4937
        %4939 = vrot.lane.b32.xlu0 %v2253, 32
        %v4940 = vpop.permute.xlu0 %4939
        %4941 = vrot.lane.b32.xlu0 %v2254, 32
        %v4942 = vpop.permute.xlu0 %4941
        %4943 = vrot.lane.b32.xlu0 %v2255, 32
        %v4944 = vpop.permute.xlu0 %4943
        %4945 = vrot.lane.b32.xlu0 %v2256, 32
        %v4946 = vpop.permute.xlu0 %4945
        %4947 = vrot.lane.b32.xlu0 %v2257, 32
        %v4948 = vpop.permute.xlu0 %4947
        %4949 = vrot.lane.b32.xlu0 %v2258, 32
        %v4950 = vpop.permute.xlu0 %4949
        %v4952 = vsel %vm2291, %v4888, 0
        %v4955 = vsel %vm2291, %v4890, 0
        %v4958 = vsel %vm2291, %v4892, 0
        %v4961 = vsel %vm2291, %v4894, 0
        %v4964 = vsel %vm2291, %v4896, 0
        %v4967 = vsel %vm2291, %v4898, 0
        %v4970 = vsel %vm2291, %v4900, 0
        %v4973 = vsel %vm2291, %v4902, 0
        %v4976 = vsel %vm2291, %v4904, 0
        %v4979 = vsel %vm2291, %v4906, 0
        %v4982 = vsel %vm2291, %v4908, 0
        %v4985 = vsel %vm2291, %v4910, 0
        %v4988 = vsel %vm2291, %v4912, 0
        %v4991 = vsel %vm2291, %v4914, 0
        %v4994 = vsel %vm2291, %v4916, 0
        %v4997 = vsel %vm2291, %v4918, 0
        %v5000 = vsel %vm2291, %v4920, 0
        %v5003 = vsel %vm2291, %v4922, 0
        %v5006 = vsel %vm2291, %v4924, 0
        %v5009 = vsel %vm2291, %v4926, 0
        %v5012 = vsel %vm2291, %v4928, 0
        %v5015 = vsel %vm2291, %v4930, 0
        %v5018 = vsel %vm2291, %v4932, 0
        %v5021 = vsel %vm2291, %v4934, 0
        %v5024 = vsel %vm2291, %v4936, 0
        %v5027 = vsel %vm2291, %v4938, 0
        %v5030 = vsel %vm2291, %v4940, 0
        %v5033 = vsel %vm2291, %v4942, 0
        %v5036 = vsel %vm2291, %v4944, 0
        %v5039 = vsel %vm2291, %v4946, 0
        %v5042 = vsel %vm2291, %v4948, 0
        %v5045 = vsel %vm2291, %v4950, 0
        %5047 = vmatpush.bf16.xpose.msra.mxu0 %v5021
        %5048 = vmatpush.bf16.xpose.msra.mxu0 %v5018
        %5049 = vmatpush.bf16.xpose.msra.mxu0 %v5015
        %5050 = vmatpush.bf16.xpose.msra.mxu0 %v5012
        %5051 = vmatpush.bf16.xpose.msra.mxu0 %v5009
        %5052 = vmatpush.bf16.xpose.msra.mxu0 %v5006
        %5053 = vmatpush.bf16.xpose.msra.mxu0 %v5003
        %5054 = vmatpush.bf16.xpose.msra.mxu0 %v5000
        %5055 = vmatmul.bf16.gmra.mxu0 %v4952
        %v5056 = vpop.f32.mrf.mxu0
        %v5057 = vadd.f32 0.0, %v5056
        %v5058 = vpop.f32.mrf.mxu0
        %v5059 = vadd.f32 0.0, %v5058
        %5060 = vmatmul.bf16.gmra.mxu0 %v4955
        %v5061 = vpop.f32.mrf.mxu0
        %v5062 = vadd.f32 0.0, %v5061
        %v5063 = vpop.f32.mrf.mxu0
        %v5064 = vadd.f32 0.0, %v5063
        %5065 = vmatmul.bf16.gmra.mxu0 %v4958
        %v5066 = vpop.f32.mrf.mxu0
        %v5067 = vadd.f32 0.0, %v5066
        %v5068 = vpop.f32.mrf.mxu0
        %v5069 = vadd.f32 0.0, %v5068
        %5070 = vmatmul.bf16.gmra.mxu0 %v4961
        %v5071 = vpop.f32.mrf.mxu0
        %v5072 = vadd.f32 0.0, %v5071
        %v5073 = vpop.f32.mrf.mxu0
        %v5074 = vadd.f32 0.0, %v5073
        %5075 = vmatmul.bf16.gmra.mxu0 %v4964
        %v5076 = vpop.f32.mrf.mxu0
        %v5077 = vadd.f32 0.0, %v5076
        %v5078 = vpop.f32.mrf.mxu0
        %v5079 = vadd.f32 0.0, %v5078
        %5080 = vmatmul.bf16.gmra.mxu0 %v4967
        %v5081 = vpop.f32.mrf.mxu0
        %v5082 = vadd.f32 0.0, %v5081
        %v5083 = vpop.f32.mrf.mxu0
        %v5084 = vadd.f32 0.0, %v5083
        %5085 = vmatmul.bf16.gmra.mxu0 %v4970
        %v5086 = vpop.f32.mrf.mxu0
        %v5087 = vadd.f32 0.0, %v5086
        %v5088 = vpop.f32.mrf.mxu0
        %v5089 = vadd.f32 0.0, %v5088
        %5090 = vmatmul.bf16.gmra.mxu0 %v4973
        %v5091 = vpop.f32.mrf.mxu0
        %v5092 = vadd.f32 0.0, %v5091
        %v5093 = vpop.f32.mrf.mxu0
        %v5094 = vadd.f32 0.0, %v5093
        %5095 = vmatmul.bf16.gmra.mxu0 %v4976
        %v5096 = vpop.f32.mrf.mxu0
        %v5097 = vadd.f32 0.0, %v5096
        %v5098 = vpop.f32.mrf.mxu0
        %v5099 = vadd.f32 0.0, %v5098
        %5100 = vmatmul.bf16.gmra.mxu0 %v4979
        %v5101 = vpop.f32.mrf.mxu0
        %v5102 = vadd.f32 0.0, %v5101
        %v5103 = vpop.f32.mrf.mxu0
        %v5104 = vadd.f32 0.0, %v5103
        %5105 = vmatmul.bf16.gmra.mxu0 %v4982
        %v5106 = vpop.f32.mrf.mxu0
        %v5107 = vadd.f32 0.0, %v5106
        %v5108 = vpop.f32.mrf.mxu0
        %v5109 = vadd.f32 0.0, %v5108
        %5110 = vmatmul.bf16.gmra.mxu0 %v4985
        %v5111 = vpop.f32.mrf.mxu0
        %v5112 = vadd.f32 0.0, %v5111
        %v5113 = vpop.f32.mrf.mxu0
        %v5114 = vadd.f32 0.0, %v5113
        %5115 = vmatmul.bf16.gmra.mxu0 %v4988
        %v5116 = vpop.f32.mrf.mxu0
        %v5117 = vadd.f32 0.0, %v5116
        %v5118 = vpop.f32.mrf.mxu0
        %v5119 = vadd.f32 0.0, %v5118
        %5120 = vmatmul.bf16.gmra.mxu0 %v4991
        %v5121 = vpop.f32.mrf.mxu0
        %v5122 = vadd.f32 0.0, %v5121
        %v5123 = vpop.f32.mrf.mxu0
        %v5124 = vadd.f32 0.0, %v5123
        %5125 = vmatmul.bf16.gmra.mxu0 %v4994
        %v5126 = vpop.f32.mrf.mxu0
        %v5127 = vadd.f32 0.0, %v5126
        %v5128 = vpop.f32.mrf.mxu0
        %v5129 = vadd.f32 0.0, %v5128
        %5130 = vmatmul.bf16.gmra.mxu0 %v4997
        %v5131 = vpop.f32.mrf.mxu0
        %v5132 = vadd.f32 0.0, %v5131
        %v5133 = vpop.f32.mrf.mxu0
        %v5134 = vadd.f32 0.0, %v5133
        %5135 = vdwg.mxu0
        %5136 = vmatpush.bf16.xpose.msra.mxu0 %v5045
        %5137 = vmatpush.bf16.xpose.msra.mxu0 %v5042
        %5138 = vmatpush.bf16.xpose.msra.mxu0 %v5039
        %5139 = vmatpush.bf16.xpose.msra.mxu0 %v5036
        %5140 = vmatpush.bf16.xpose.msra.mxu0 %v5033
        %5141 = vmatpush.bf16.xpose.msra.mxu0 %v5030
        %5142 = vmatpush.bf16.xpose.msra.mxu0 %v5027
        %5143 = vmatpush.bf16.xpose.msra.mxu0 %v5024
        %5144 = vmatmul.bf16.gmra.mxu0 %v4952
        %v5145 = vpop.f32.mrf.mxu0
        %v5146 = vadd.f32 0.0, %v5145
        %v5147 = vpop.f32.mrf.mxu0
        %v5148 = vadd.f32 0.0, %v5147
        %5149 = vmatmul.bf16.gmra.mxu0 %v4955
        %v5150 = vpop.f32.mrf.mxu0
        %v5151 = vadd.f32 0.0, %v5150
        %v5152 = vpop.f32.mrf.mxu0
        %v5153 = vadd.f32 0.0, %v5152
        %5154 = vmatmul.bf16.gmra.mxu0 %v4958
        %v5155 = vpop.f32.mrf.mxu0
        %v5156 = vadd.f32 0.0, %v5155
        %v5157 = vpop.f32.mrf.mxu0
        %v5158 = vadd.f32 0.0, %v5157
        %5159 = vmatmul.bf16.gmra.mxu0 %v4961
        %v5160 = vpop.f32.mrf.mxu0
        %v5161 = vadd.f32 0.0, %v5160
        %v5162 = vpop.f32.mrf.mxu0
        %v5163 = vadd.f32 0.0, %v5162
        %5164 = vmatmul.bf16.gmra.mxu0 %v4964
        %v5165 = vpop.f32.mrf.mxu0
        %v5166 = vadd.f32 0.0, %v5165
        %v5167 = vpop.f32.mrf.mxu0
        %v5168 = vadd.f32 0.0, %v5167
        %5169 = vmatmul.bf16.gmra.mxu0 %v4967
        %v5170 = vpop.f32.mrf.mxu0
        %v5171 = vadd.f32 0.0, %v5170
        %v5172 = vpop.f32.mrf.mxu0
        %v5173 = vadd.f32 0.0, %v5172
        %5174 = vmatmul.bf16.gmra.mxu0 %v4970
        %v5175 = vpop.f32.mrf.mxu0
        %v5176 = vadd.f32 0.0, %v5175
        %v5177 = vpop.f32.mrf.mxu0
        %v5178 = vadd.f32 0.0, %v5177
        %5179 = vmatmul.bf16.gmra.mxu0 %v4973
        %v5180 = vpop.f32.mrf.mxu0
        %v5181 = vadd.f32 0.0, %v5180
        %v5182 = vpop.f32.mrf.mxu0
        %v5183 = vadd.f32 0.0, %v5182
        %5184 = vmatmul.bf16.gmra.mxu0 %v4976
        %v5185 = vpop.f32.mrf.mxu0
        %v5186 = vadd.f32 0.0, %v5185
        %v5187 = vpop.f32.mrf.mxu0
        %v5188 = vadd.f32 0.0, %v5187
        %5189 = vmatmul.bf16.gmra.mxu0 %v4979
        %v5190 = vpop.f32.mrf.mxu0
        %v5191 = vadd.f32 0.0, %v5190
        %v5192 = vpop.f32.mrf.mxu0
        %v5193 = vadd.f32 0.0, %v5192
        %5194 = vmatmul.bf16.gmra.mxu0 %v4982
        %v5195 = vpop.f32.mrf.mxu0
        %v5196 = vadd.f32 0.0, %v5195
        %v5197 = vpop.f32.mrf.mxu0
        %v5198 = vadd.f32 0.0, %v5197
        %5199 = vmatmul.bf16.gmra.mxu0 %v4985
        %v5200 = vpop.f32.mrf.mxu0
        %v5201 = vadd.f32 0.0, %v5200
        %v5202 = vpop.f32.mrf.mxu0
        %v5203 = vadd.f32 0.0, %v5202
        %5204 = vmatmul.bf16.gmra.mxu0 %v4988
        %v5205 = vpop.f32.mrf.mxu0
        %v5206 = vadd.f32 0.0, %v5205
        %v5207 = vpop.f32.mrf.mxu0
        %v5208 = vadd.f32 0.0, %v5207
        %5209 = vmatmul.bf16.gmra.mxu0 %v4991
        %v5210 = vpop.f32.mrf.mxu0
        %v5211 = vadd.f32 0.0, %v5210
        %v5212 = vpop.f32.mrf.mxu0
        %v5213 = vadd.f32 0.0, %v5212
        %5214 = vmatmul.bf16.gmra.mxu0 %v4994
        %v5215 = vpop.f32.mrf.mxu0
        %v5216 = vadd.f32 0.0, %v5215
        %v5217 = vpop.f32.mrf.mxu0
        %v5218 = vadd.f32 0.0, %v5217
        %5219 = vmatmul.bf16.gmra.mxu0 %v4997
        %v5220 = vpop.f32.mrf.mxu0
        %v5221 = vadd.f32 0.0, %v5220
        %v5222 = vpop.f32.mrf.mxu0
        %v5223 = vadd.f32 0.0, %v5222
        %5224 = vdwg.mxu0
        %v5225 = vmax.f32 %v5057, %v5146
        %5226 = vmax.xlane.f32.xlu0 %v5225
        %v5227 = vpop.xlane.xlu0 %5226
        %v5228 = vmax.f32 %v5059, %v5148
        %5229 = vmax.xlane.f32.xlu0 %v5228
        %v5230 = vpop.xlane.xlu0 %5229
        %v5231 = vmax.f32 %v5062, %v5151
        %5232 = vmax.xlane.f32.xlu0 %v5231
        %v5233 = vpop.xlane.xlu0 %5232
        %v5234 = vmax.f32 %v5064, %v5153
        %5235 = vmax.xlane.f32.xlu0 %v5234
        %v5236 = vpop.xlane.xlu0 %5235
        %v5237 = vmax.f32 %v5067, %v5156
        %5238 = vmax.xlane.f32.xlu0 %v5237
        %v5239 = vpop.xlane.xlu0 %5238
        %v5240 = vmax.f32 %v5069, %v5158
        %5241 = vmax.xlane.f32.xlu0 %v5240
        %v5242 = vpop.xlane.xlu0 %5241
        %v5243 = vmax.f32 %v5072, %v5161
        %5244 = vmax.xlane.f32.xlu0 %v5243
        %v5245 = vpop.xlane.xlu0 %5244
        %v5246 = vmax.f32 %v5074, %v5163
        %5247 = vmax.xlane.f32.xlu0 %v5246
        %v5248 = vpop.xlane.xlu0 %5247
        %v5249 = vmax.f32 %v5077, %v5166
        %5250 = vmax.xlane.f32.xlu0 %v5249
        %v5251 = vpop.xlane.xlu0 %5250
        %v5252 = vmax.f32 %v5079, %v5168
        %5253 = vmax.xlane.f32.xlu0 %v5252
        %v5254 = vpop.xlane.xlu0 %5253
        %v5255 = vmax.f32 %v5082, %v5171
        %5256 = vmax.xlane.f32.xlu0 %v5255
        %v5257 = vpop.xlane.xlu0 %5256
        %v5258 = vmax.f32 %v5084, %v5173
        %5259 = vmax.xlane.f32.xlu0 %v5258
        %v5260 = vpop.xlane.xlu0 %5259
        %v5261 = vmax.f32 %v5087, %v5176
        %5262 = vmax.xlane.f32.xlu0 %v5261
        %v5263 = vpop.xlane.xlu0 %5262
        %v5264 = vmax.f32 %v5089, %v5178
        %5265 = vmax.xlane.f32.xlu0 %v5264
        %v5266 = vpop.xlane.xlu0 %5265
        %v5267 = vmax.f32 %v5092, %v5181
        %5268 = vmax.xlane.f32.xlu0 %v5267
        %v5269 = vpop.xlane.xlu0 %5268
        %v5270 = vmax.f32 %v5094, %v5183
        %5271 = vmax.xlane.f32.xlu0 %v5270
        %v5272 = vpop.xlane.xlu0 %5271
        %v5273 = vmax.f32 %v5097, %v5186
        %5274 = vmax.xlane.f32.xlu0 %v5273
        %v5275 = vpop.xlane.xlu0 %5274
        %v5276 = vmax.f32 %v5099, %v5188
        %5277 = vmax.xlane.f32.xlu0 %v5276
        %v5278 = vpop.xlane.xlu0 %5277
        %v5279 = vmax.f32 %v5102, %v5191
        %5280 = vmax.xlane.f32.xlu0 %v5279
        %v5281 = vpop.xlane.xlu0 %5280
        %v5282 = vmax.f32 %v5104, %v5193
        %5283 = vmax.xlane.f32.xlu0 %v5282
        %v5284 = vpop.xlane.xlu0 %5283
        %v5285 = vmax.f32 %v5107, %v5196
        %5286 = vmax.xlane.f32.xlu0 %v5285
        %v5287 = vpop.xlane.xlu0 %5286
        %v5288 = vmax.f32 %v5109, %v5198
        %5289 = vmax.xlane.f32.xlu0 %v5288
        %v5290 = vpop.xlane.xlu0 %5289
        %v5291 = vmax.f32 %v5112, %v5201
        %5292 = vmax.xlane.f32.xlu0 %v5291
        %v5293 = vpop.xlane.xlu0 %5292
        %v5294 = vmax.f32 %v5114, %v5203
        %5295 = vmax.xlane.f32.xlu0 %v5294
        %v5296 = vpop.xlane.xlu0 %5295
        %v5297 = vmax.f32 %v5117, %v5206
        %5298 = vmax.xlane.f32.xlu0 %v5297
        %v5299 = vpop.xlane.xlu0 %5298
        %v5300 = vmax.f32 %v5119, %v5208
        %5301 = vmax.xlane.f32.xlu0 %v5300
        %v5302 = vpop.xlane.xlu0 %5301
        %v5303 = vmax.f32 %v5122, %v5211
        %5304 = vmax.xlane.f32.xlu0 %v5303
        %v5305 = vpop.xlane.xlu0 %5304
        %v5306 = vmax.f32 %v5124, %v5213
        %5307 = vmax.xlane.f32.xlu0 %v5306
        %v5308 = vpop.xlane.xlu0 %5307
        %v5309 = vmax.f32 %v5127, %v5216
        %5310 = vmax.xlane.f32.xlu0 %v5309
        %v5311 = vpop.xlane.xlu0 %5310
        %v5312 = vmax.f32 %v5129, %v5218
        %5313 = vmax.xlane.f32.xlu0 %v5312
        %v5314 = vpop.xlane.xlu0 %5313
        %v5315 = vmax.f32 %v5132, %v5221
        %5316 = vmax.xlane.f32.xlu0 %v5315
        %v5317 = vpop.xlane.xlu0 %5316
        %v5318 = vmax.f32 %v5134, %v5223
        %5319 = vmax.xlane.f32.xlu0 %v5318
        %v5320 = vpop.xlane.xlu0 %5319
        %v5321 = vsub.f32 %v5057, %v5227
        %v5322 = vsub.f32 %v5146, %v5227
        %v5323 = vsub.f32 %v5059, %v5230
        %v5324 = vsub.f32 %v5148, %v5230
        %v5325 = vsub.f32 %v5062, %v5233
        %v5326 = vsub.f32 %v5151, %v5233
        %v5327 = vsub.f32 %v5064, %v5236
        %v5328 = vsub.f32 %v5153, %v5236
        %v5329 = vsub.f32 %v5067, %v5239
        %v5330 = vsub.f32 %v5156, %v5239
        %v5331 = vsub.f32 %v5069, %v5242
        %v5332 = vsub.f32 %v5158, %v5242
        %v5333 = vsub.f32 %v5072, %v5245
        %v5334 = vsub.f32 %v5161, %v5245
        %v5335 = vsub.f32 %v5074, %v5248
        %v5336 = vsub.f32 %v5163, %v5248
        %v5337 = vsub.f32 %v5077, %v5251
        %v5338 = vsub.f32 %v5166, %v5251
        %v5339 = vsub.f32 %v5079, %v5254
        %v5340 = vsub.f32 %v5168, %v5254
        %v5341 = vsub.f32 %v5082, %v5257
        %v5342 = vsub.f32 %v5171, %v5257
        %v5343 = vsub.f32 %v5084, %v5260
        %v5344 = vsub.f32 %v5173, %v5260
        %v5345 = vsub.f32 %v5087, %v5263
        %v5346 = vsub.f32 %v5176, %v5263
        %v5347 = vsub.f32 %v5089, %v5266
        %v5348 = vsub.f32 %v5178, %v5266
        %v5349 = vsub.f32 %v5092, %v5269
        %v5350 = vsub.f32 %v5181, %v5269
        %v5351 = vsub.f32 %v5094, %v5272
        %v5352 = vsub.f32 %v5183, %v5272
        %v5353 = vsub.f32 %v5097, %v5275
        %v5354 = vsub.f32 %v5186, %v5275
        %v5355 = vsub.f32 %v5099, %v5278
        %v5356 = vsub.f32 %v5188, %v5278
        %v5357 = vsub.f32 %v5102, %v5281
        %v5358 = vsub.f32 %v5191, %v5281
        %v5359 = vsub.f32 %v5104, %v5284
        %v5360 = vsub.f32 %v5193, %v5284
        %v5361 = vsub.f32 %v5107, %v5287
        %v5362 = vsub.f32 %v5196, %v5287
        %v5363 = vsub.f32 %v5109, %v5290
        %v5364 = vsub.f32 %v5198, %v5290
        %v5365 = vsub.f32 %v5112, %v5293
        %v5366 = vsub.f32 %v5201, %v5293
        %v5367 = vsub.f32 %v5114, %v5296
        %v5368 = vsub.f32 %v5203, %v5296
        %v5369 = vsub.f32 %v5117, %v5299
        %v5370 = vsub.f32 %v5206, %v5299
        %v5371 = vsub.f32 %v5119, %v5302
        %v5372 = vsub.f32 %v5208, %v5302
        %v5373 = vsub.f32 %v5122, %v5305
        %v5374 = vsub.f32 %v5211, %v5305
        %v5375 = vsub.f32 %v5124, %v5308
        %v5376 = vsub.f32 %v5213, %v5308
        %v5377 = vsub.f32 %v5127, %v5311
        %v5378 = vsub.f32 %v5216, %v5311
        %v5379 = vsub.f32 %v5129, %v5314
        %v5380 = vsub.f32 %v5218, %v5314
        %v5381 = vsub.f32 %v5132, %v5317
        %v5382 = vsub.f32 %v5221, %v5317
        %v5383 = vsub.f32 %v5134, %v5320
        %v5384 = vsub.f32 %v5223, %v5320
        %v5385 = vmul.f32 %v5321, 1.442695
        %v5386 = vpow.pop %v5385
        %v5387 = vmul.f32 %v5322, 1.442695
        %v5388 = vpow.pop %v5387
        %v5389 = vmul.f32 %v5323, 1.442695
        %v5390 = vpow.pop %v5389
        %v5391 = vmul.f32 %v5324, 1.442695
        %v5392 = vpow.pop %v5391
        %v5393 = vmul.f32 %v5325, 1.442695
        %v5394 = vpow.pop %v5393
        %v5395 = vmul.f32 %v5326, 1.442695
        %v5396 = vpow.pop %v5395
        %v5397 = vmul.f32 %v5327, 1.442695
        %v5398 = vpow.pop %v5397
        %v5399 = vmul.f32 %v5328, 1.442695
        %v5400 = vpow.pop %v5399
        %v5401 = vmul.f32 %v5329, 1.442695
        %v5402 = vpow.pop %v5401
        %v5403 = vmul.f32 %v5330, 1.442695
        %v5404 = vpow.pop %v5403
        %v5405 = vmul.f32 %v5331, 1.442695
        %v5406 = vpow.pop %v5405
        %v5407 = vmul.f32 %v5332, 1.442695
        %v5408 = vpow.pop %v5407
        %v5409 = vmul.f32 %v5333, 1.442695
        %v5410 = vpow.pop %v5409
        %v5411 = vmul.f32 %v5334, 1.442695
        %v5412 = vpow.pop %v5411
        %v5413 = vmul.f32 %v5335, 1.442695
        %v5414 = vpow.pop %v5413
        %v5415 = vmul.f32 %v5336, 1.442695
        %v5416 = vpow.pop %v5415
        %v5417 = vmul.f32 %v5337, 1.442695
        %v5418 = vpow.pop %v5417
        %v5419 = vmul.f32 %v5338, 1.442695
        %v5420 = vpow.pop %v5419
        %v5421 = vmul.f32 %v5339, 1.442695
        %v5422 = vpow.pop %v5421
        %v5423 = vmul.f32 %v5340, 1.442695
        %v5424 = vpow.pop %v5423
        %v5425 = vmul.f32 %v5341, 1.442695
        %v5426 = vpow.pop %v5425
        %v5427 = vmul.f32 %v5342, 1.442695
        %v5428 = vpow.pop %v5427
        %v5429 = vmul.f32 %v5343, 1.442695
        %v5430 = vpow.pop %v5429
        %v5431 = vmul.f32 %v5344, 1.442695
        %v5432 = vpow.pop %v5431
        %v5433 = vmul.f32 %v5345, 1.442695
        %v5434 = vpow.pop %v5433
        %v5435 = vmul.f32 %v5346, 1.442695
        %v5436 = vpow.pop %v5435
        %v5437 = vmul.f32 %v5347, 1.442695
        %v5438 = vpow.pop %v5437
        %v5439 = vmul.f32 %v5348, 1.442695
        %v5440 = vpow.pop %v5439
        %v5441 = vmul.f32 %v5349, 1.442695
        %v5442 = vpow.pop %v5441
        %v5443 = vmul.f32 %v5350, 1.442695
        %v5444 = vpow.pop %v5443
        %v5445 = vmul.f32 %v5351, 1.442695
        %v5446 = vpow.pop %v5445
        %v5447 = vmul.f32 %v5352, 1.442695
        %v5448 = vpow.pop %v5447
        %v5449 = vmul.f32 %v5353, 1.442695
        %v5450 = vpow.pop %v5449
        %v5451 = vmul.f32 %v5354, 1.442695
        %v5452 = vpow.pop %v5451
        %v5453 = vmul.f32 %v5355, 1.442695
        %v5454 = vpow.pop %v5453
        %v5455 = vmul.f32 %v5356, 1.442695
        %v5456 = vpow.pop %v5455
        %v5457 = vmul.f32 %v5357, 1.442695
        %v5458 = vpow.pop %v5457
        %v5459 = vmul.f32 %v5358, 1.442695
        %v5460 = vpow.pop %v5459
        %v5461 = vmul.f32 %v5359, 1.442695
        %v5462 = vpow.pop %v5461
        %v5463 = vmul.f32 %v5360, 1.442695
        %v5464 = vpow.pop %v5463
        %v5465 = vmul.f32 %v5361, 1.442695
        %v5466 = vpow.pop %v5465
        %v5467 = vmul.f32 %v5362, 1.442695
        %v5468 = vpow.pop %v5467
        %v5469 = vmul.f32 %v5363, 1.442695
        %v5470 = vpow.pop %v5469
        %v5471 = vmul.f32 %v5364, 1.442695
        %v5472 = vpow.pop %v5471
        %v5473 = vmul.f32 %v5365, 1.442695
        %v5474 = vpow.pop %v5473
        %v5475 = vmul.f32 %v5366, 1.442695
        %v5476 = vpow.pop %v5475
        %v5477 = vmul.f32 %v5367, 1.442695
        %v5478 = vpow.pop %v5477
        %v5479 = vmul.f32 %v5368, 1.442695
        %v5480 = vpow.pop %v5479
        %v5481 = vmul.f32 %v5369, 1.442695
        %v5482 = vpow.pop %v5481
        %v5483 = vmul.f32 %v5370, 1.442695
        %v5484 = vpow.pop %v5483
        %v5485 = vmul.f32 %v5371, 1.442695
        %v5486 = vpow.pop %v5485
        %v5487 = vmul.f32 %v5372, 1.442695
        %v5488 = vpow.pop %v5487
        %v5489 = vmul.f32 %v5373, 1.442695
        %v5490 = vpow.pop %v5489
        %v5491 = vmul.f32 %v5374, 1.442695
        %v5492 = vpow.pop %v5491
        %v5493 = vmul.f32 %v5375, 1.442695
        %v5494 = vpow.pop %v5493
        %v5495 = vmul.f32 %v5376, 1.442695
        %v5496 = vpow.pop %v5495
        %v5497 = vmul.f32 %v5377, 1.442695
        %v5498 = vpow.pop %v5497
        %v5499 = vmul.f32 %v5378, 1.442695
        %v5500 = vpow.pop %v5499
        %v5501 = vmul.f32 %v5379, 1.442695
        %v5502 = vpow.pop %v5501
        %v5503 = vmul.f32 %v5380, 1.442695
        %v5504 = vpow.pop %v5503
        %v5505 = vmul.f32 %v5381, 1.442695
        %v5506 = vpow.pop %v5505
        %v5507 = vmul.f32 %v5382, 1.442695
        %v5508 = vpow.pop %v5507
        %v5509 = vmul.f32 %v5383, 1.442695
        %v5510 = vpow.pop %v5509
        %v5511 = vmul.f32 %v5384, 1.442695
        %v5512 = vpow.pop %v5511
        %v5513 = vadd.f32 %v5386, %v5388
        %5514 = vadd.xlane.f32.xlu0 %v5513
        %v5515 = vpop.xlane.xlu0 %5514
        %v5516 = vadd.f32 %v5390, %v5392
        %5517 = vadd.xlane.f32.xlu0 %v5516
        %v5518 = vpop.xlane.xlu0 %5517
        %v5519 = vadd.f32 %v5394, %v5396
        %5520 = vadd.xlane.f32.xlu0 %v5519
        %v5521 = vpop.xlane.xlu0 %5520
        %v5522 = vadd.f32 %v5398, %v5400
        %5523 = vadd.xlane.f32.xlu0 %v5522
        %v5524 = vpop.xlane.xlu0 %5523
        %v5525 = vadd.f32 %v5402, %v5404
        %5526 = vadd.xlane.f32.xlu0 %v5525
        %v5527 = vpop.xlane.xlu0 %5526
        %v5528 = vadd.f32 %v5406, %v5408
        %5529 = vadd.xlane.f32.xlu0 %v5528
        %v5530 = vpop.xlane.xlu0 %5529
        %v5531 = vadd.f32 %v5410, %v5412
        %5532 = vadd.xlane.f32.xlu0 %v5531
        %v5533 = vpop.xlane.xlu0 %5532
        %v5534 = vadd.f32 %v5414, %v5416
        %5535 = vadd.xlane.f32.xlu0 %v5534
        %v5536 = vpop.xlane.xlu0 %5535
        %v5537 = vadd.f32 %v5418, %v5420
        %5538 = vadd.xlane.f32.xlu0 %v5537
        %v5539 = vpop.xlane.xlu0 %5538
        %v5540 = vadd.f32 %v5422, %v5424
        %5541 = vadd.xlane.f32.xlu0 %v5540
        %v5542 = vpop.xlane.xlu0 %5541
        %v5543 = vadd.f32 %v5426, %v5428
        %5544 = vadd.xlane.f32.xlu0 %v5543
        %v5545 = vpop.xlane.xlu0 %5544
        %v5546 = vadd.f32 %v5430, %v5432
        %5547 = vadd.xlane.f32.xlu0 %v5546
        %v5548 = vpop.xlane.xlu0 %5547
        %v5549 = vadd.f32 %v5434, %v5436
        %5550 = vadd.xlane.f32.xlu0 %v5549
        %v5551 = vpop.xlane.xlu0 %5550
        %v5552 = vadd.f32 %v5438, %v5440
        %5553 = vadd.xlane.f32.xlu0 %v5552
        %v5554 = vpop.xlane.xlu0 %5553
        %v5555 = vadd.f32 %v5442, %v5444
        %5556 = vadd.xlane.f32.xlu0 %v5555
        %v5557 = vpop.xlane.xlu0 %5556
        %v5558 = vadd.f32 %v5446, %v5448
        %5559 = vadd.xlane.f32.xlu0 %v5558
        %v5560 = vpop.xlane.xlu0 %5559
        %v5561 = vadd.f32 %v5450, %v5452
        %5562 = vadd.xlane.f32.xlu0 %v5561
        %v5563 = vpop.xlane.xlu0 %5562
        %v5564 = vadd.f32 %v5454, %v5456
        %5565 = vadd.xlane.f32.xlu0 %v5564
        %v5566 = vpop.xlane.xlu0 %5565
        %v5567 = vadd.f32 %v5458, %v5460
        %5568 = vadd.xlane.f32.xlu0 %v5567
        %v5569 = vpop.xlane.xlu0 %5568
        %v5570 = vadd.f32 %v5462, %v5464
        %5571 = vadd.xlane.f32.xlu0 %v5570
        %v5572 = vpop.xlane.xlu0 %5571
        %v5573 = vadd.f32 %v5466, %v5468
        %5574 = vadd.xlane.f32.xlu0 %v5573
        %v5575 = vpop.xlane.xlu0 %5574
        %v5576 = vadd.f32 %v5470, %v5472
        %5577 = vadd.xlane.f32.xlu0 %v5576
        %v5578 = vpop.xlane.xlu0 %5577
        %v5579 = vadd.f32 %v5474, %v5476
        %5580 = vadd.xlane.f32.xlu0 %v5579
        %v5581 = vpop.xlane.xlu0 %5580
        %v5582 = vadd.f32 %v5478, %v5480
        %5583 = vadd.xlane.f32.xlu0 %v5582
        %v5584 = vpop.xlane.xlu0 %5583
        %v5585 = vadd.f32 %v5482, %v5484
        %5586 = vadd.xlane.f32.xlu0 %v5585
        %v5587 = vpop.xlane.xlu0 %5586
        %v5588 = vadd.f32 %v5486, %v5488
        %5589 = vadd.xlane.f32.xlu0 %v5588
        %v5590 = vpop.xlane.xlu0 %5589
        %v5591 = vadd.f32 %v5490, %v5492
        %5592 = vadd.xlane.f32.xlu0 %v5591
        %v5593 = vpop.xlane.xlu0 %5592
        %v5594 = vadd.f32 %v5494, %v5496
        %5595 = vadd.xlane.f32.xlu0 %v5594
        %v5596 = vpop.xlane.xlu0 %5595
        %v5597 = vadd.f32 %v5498, %v5500
        %5598 = vadd.xlane.f32.xlu0 %v5597
        %v5599 = vpop.xlane.xlu0 %5598
        %v5600 = vadd.f32 %v5502, %v5504
        %5601 = vadd.xlane.f32.xlu0 %v5600
        %v5602 = vpop.xlane.xlu0 %5601
        %v5603 = vadd.f32 %v5506, %v5508
        %5604 = vadd.xlane.f32.xlu0 %v5603
        %v5605 = vpop.xlane.xlu0 %5604
        %v5606 = vadd.f32 %v5510, %v5512
        %5607 = vadd.xlane.f32.xlu0 %v5606
        %v5608 = vpop.xlane.xlu0 %5607
        %v5609 = vpack.c.bf16 %v5390, %v5386
        %v5610 = vpack.c.bf16 %v5392, %v5388
        %v5611 = vpack.c.bf16 %v5398, %v5394
        %v5612 = vpack.c.bf16 %v5400, %v5396
        %v5613 = vpack.c.bf16 %v5406, %v5402
        %v5614 = vpack.c.bf16 %v5408, %v5404
        %v5615 = vpack.c.bf16 %v5414, %v5410
        %v5616 = vpack.c.bf16 %v5416, %v5412
        %v5617 = vpack.c.bf16 %v5422, %v5418
        %v5618 = vpack.c.bf16 %v5424, %v5420
        %v5619 = vpack.c.bf16 %v5430, %v5426
        %v5620 = vpack.c.bf16 %v5432, %v5428
        %v5621 = vpack.c.bf16 %v5438, %v5434
        %v5622 = vpack.c.bf16 %v5440, %v5436
        %v5623 = vpack.c.bf16 %v5446, %v5442
        %v5624 = vpack.c.bf16 %v5448, %v5444
        %v5625 = vpack.c.bf16 %v5454, %v5450
        %v5626 = vpack.c.bf16 %v5456, %v5452
        %v5627 = vpack.c.bf16 %v5462, %v5458
        %v5628 = vpack.c.bf16 %v5464, %v5460
        %v5629 = vpack.c.bf16 %v5470, %v5466
        %v5630 = vpack.c.bf16 %v5472, %v5468
        %v5631 = vpack.c.bf16 %v5478, %v5474
        %v5632 = vpack.c.bf16 %v5480, %v5476
        %v5633 = vpack.c.bf16 %v5486, %v5482
        %v5634 = vpack.c.bf16 %v5488, %v5484
        %v5635 = vpack.c.bf16 %v5494, %v5490
        %v5636 = vpack.c.bf16 %v5496, %v5492
        %v5637 = vpack.c.bf16 %v5502, %v5498
        %v5638 = vpack.c.bf16 %v5504, %v5500
        %v5639 = vpack.c.bf16 %v5510, %v5506
        %v5640 = vpack.c.bf16 %v5512, %v5508
        %5641 = vrot.lane.b32.xlu0 %v3046, 64
        %v5642 = vpop.permute.xlu0 %5641
        %5643 = vrot.lane.b32.xlu0 %v3047, 64
        %v5644 = vpop.permute.xlu0 %5643
        %5645 = vrot.lane.b32.xlu0 %v3048, 64
        %v5646 = vpop.permute.xlu0 %5645
        %5647 = vrot.lane.b32.xlu0 %v3049, 64
        %v5648 = vpop.permute.xlu0 %5647
        %5649 = vrot.lane.b32.xlu0 %v3050, 64
        %v5650 = vpop.permute.xlu0 %5649
        %5651 = vrot.lane.b32.xlu0 %v3051, 64
        %v5652 = vpop.permute.xlu0 %5651
        %5653 = vrot.lane.b32.xlu0 %v3052, 64
        %v5654 = vpop.permute.xlu0 %5653
        %5655 = vrot.lane.b32.xlu0 %v3053, 64
        %v5656 = vpop.permute.xlu0 %5655
        %5657 = vrot.lane.b32.xlu0 %v3054, 64
        %v5658 = vpop.permute.xlu0 %5657
        %5659 = vrot.lane.b32.xlu0 %v3055, 64
        %v5660 = vpop.permute.xlu0 %5659
        %5661 = vrot.lane.b32.xlu0 %v3056, 64
        %v5662 = vpop.permute.xlu0 %5661
        %5663 = vrot.lane.b32.xlu0 %v3057, 64
        %v5664 = vpop.permute.xlu0 %5663
        %5665 = vrot.lane.b32.xlu0 %v3058, 64
        %v5666 = vpop.permute.xlu0 %5665
        %5667 = vrot.lane.b32.xlu0 %v3059, 64
        %v5668 = vpop.permute.xlu0 %5667
        %5669 = vrot.lane.b32.xlu0 %v3060, 64
        %v5670 = vpop.permute.xlu0 %5669
        %5671 = vrot.lane.b32.xlu0 %v3061, 64
        %v5672 = vpop.permute.xlu0 %5671
        %5689 = vmatpush.bf16.msra.mxu0 %v5656
        %5690 = vmatpush.bf16.msra.mxu0 %v5654
        %5691 = vmatpush.bf16.msra.mxu0 %v5652
        %5692 = vmatpush.bf16.msra.mxu0 %v5650
        %5693 = vmatpush.bf16.msra.mxu0 %v5648
        %5694 = vmatpush.bf16.msra.mxu0 %v5646
        %5695 = vmatpush.bf16.msra.mxu0 %v5644
        %5696 = vmatpush.bf16.msra.mxu0 %v5642
        %5697 = vmatmul.bf16.gmra.mxu0 %v5609
        %v5698 = vpop.f32.mrf.mxu0
        %v5699 = vadd.f32 0.0, %v5698
        %v5700 = vpop.f32.mrf.mxu0
        %v5701 = vadd.f32 0.0, %v5700
        %5702 = vmatmul.bf16.gmra.mxu0 %v5611
        %v5703 = vpop.f32.mrf.mxu0
        %v5704 = vadd.f32 0.0, %v5703
        %v5705 = vpop.f32.mrf.mxu0
        %v5706 = vadd.f32 0.0, %v5705
        %5707 = vmatmul.bf16.gmra.mxu0 %v5613
        %v5708 = vpop.f32.mrf.mxu0
        %v5709 = vadd.f32 0.0, %v5708
        %v5710 = vpop.f32.mrf.mxu0
        %v5711 = vadd.f32 0.0, %v5710
        %5712 = vmatmul.bf16.gmra.mxu0 %v5615
        %v5713 = vpop.f32.mrf.mxu0
        %v5714 = vadd.f32 0.0, %v5713
        %v5715 = vpop.f32.mrf.mxu0
        %v5716 = vadd.f32 0.0, %v5715
        %5717 = vmatmul.bf16.gmra.mxu0 %v5617
        %v5718 = vpop.f32.mrf.mxu0
        %v5719 = vadd.f32 0.0, %v5718
        %v5720 = vpop.f32.mrf.mxu0
        %v5721 = vadd.f32 0.0, %v5720
        %5722 = vmatmul.bf16.gmra.mxu0 %v5619
        %v5723 = vpop.f32.mrf.mxu0
        %v5724 = vadd.f32 0.0, %v5723
        %v5725 = vpop.f32.mrf.mxu0
        %v5726 = vadd.f32 0.0, %v5725
        %5727 = vmatmul.bf16.gmra.mxu0 %v5621
        %v5728 = vpop.f32.mrf.mxu0
        %v5729 = vadd.f32 0.0, %v5728
        %v5730 = vpop.f32.mrf.mxu0
        %v5731 = vadd.f32 0.0, %v5730
        %5732 = vmatmul.bf16.gmra.mxu0 %v5623
        %v5733 = vpop.f32.mrf.mxu0
        %v5734 = vadd.f32 0.0, %v5733
        %v5735 = vpop.f32.mrf.mxu0
        %v5736 = vadd.f32 0.0, %v5735
        %5737 = vmatmul.bf16.gmra.mxu0 %v5625
        %v5738 = vpop.f32.mrf.mxu0
        %v5739 = vadd.f32 0.0, %v5738
        %v5740 = vpop.f32.mrf.mxu0
        %v5741 = vadd.f32 0.0, %v5740
        %5742 = vmatmul.bf16.gmra.mxu0 %v5627
        %v5743 = vpop.f32.mrf.mxu0
        %v5744 = vadd.f32 0.0, %v5743
        %v5745 = vpop.f32.mrf.mxu0
        %v5746 = vadd.f32 0.0, %v5745
        %5747 = vmatmul.bf16.gmra.mxu0 %v5629
        %v5748 = vpop.f32.mrf.mxu0
        %v5749 = vadd.f32 0.0, %v5748
        %v5750 = vpop.f32.mrf.mxu0
        %v5751 = vadd.f32 0.0, %v5750
        %5752 = vmatmul.bf16.gmra.mxu0 %v5631
        %v5753 = vpop.f32.mrf.mxu0
        %v5754 = vadd.f32 0.0, %v5753
        %v5755 = vpop.f32.mrf.mxu0
        %v5756 = vadd.f32 0.0, %v5755
        %5757 = vmatmul.bf16.gmra.mxu0 %v5633
        %v5758 = vpop.f32.mrf.mxu0
        %v5759 = vadd.f32 0.0, %v5758
        %v5760 = vpop.f32.mrf.mxu0
        %v5761 = vadd.f32 0.0, %v5760
        %5762 = vmatmul.bf16.gmra.mxu0 %v5635
        %v5763 = vpop.f32.mrf.mxu0
        %v5764 = vadd.f32 0.0, %v5763
        %v5765 = vpop.f32.mrf.mxu0
        %v5766 = vadd.f32 0.0, %v5765
        %5767 = vmatmul.bf16.gmra.mxu0 %v5637
        %v5768 = vpop.f32.mrf.mxu0
        %v5769 = vadd.f32 0.0, %v5768
        %v5770 = vpop.f32.mrf.mxu0
        %v5771 = vadd.f32 0.0, %v5770
        %5772 = vmatmul.bf16.gmra.mxu0 %v5639
        %v5773 = vpop.f32.mrf.mxu0
        %v5774 = vadd.f32 0.0, %v5773
        %v5775 = vpop.f32.mrf.mxu0
        %v5776 = vadd.f32 0.0, %v5775
        %5777 = vdwg.mxu0
        %5778 = vmatpush.bf16.msra.mxu0 %v5672
        %5779 = vmatpush.bf16.msra.mxu0 %v5670
        %5780 = vmatpush.bf16.msra.mxu0 %v5668
        %5781 = vmatpush.bf16.msra.mxu0 %v5666
        %5782 = vmatpush.bf16.msra.mxu0 %v5664
        %5783 = vmatpush.bf16.msra.mxu0 %v5662
        %5784 = vmatpush.bf16.msra.mxu0 %v5660
        %5785 = vmatpush.bf16.msra.mxu0 %v5658
        %5786 = vmatmul.bf16.gmra.mxu0 %v5610
        %v5787 = vpop.f32.mrf.mxu0
        %v5788 = vadd.f32 %v5699, %v5787
        %v5789 = vpop.f32.mrf.mxu0
        %v5790 = vadd.f32 %v5701, %v5789
        %5791 = vmatmul.bf16.gmra.mxu0 %v5612
        %v5792 = vpop.f32.mrf.mxu0
        %v5793 = vadd.f32 %v5704, %v5792
        %v5794 = vpop.f32.mrf.mxu0
        %v5795 = vadd.f32 %v5706, %v5794
        %5796 = vmatmul.bf16.gmra.mxu0 %v5614
        %v5797 = vpop.f32.mrf.mxu0
        %v5798 = vadd.f32 %v5709, %v5797
        %v5799 = vpop.f32.mrf.mxu0
        %v5800 = vadd.f32 %v5711, %v5799
        %5801 = vmatmul.bf16.gmra.mxu0 %v5616
        %v5802 = vpop.f32.mrf.mxu0
        %v5803 = vadd.f32 %v5714, %v5802
        %v5804 = vpop.f32.mrf.mxu0
        %v5805 = vadd.f32 %v5716, %v5804
        %5806 = vmatmul.bf16.gmra.mxu0 %v5618
        %v5807 = vpop.f32.mrf.mxu0
        %v5808 = vadd.f32 %v5719, %v5807
        %v5809 = vpop.f32.mrf.mxu0
        %v5810 = vadd.f32 %v5721, %v5809
        %5811 = vmatmul.bf16.gmra.mxu0 %v5620
        %v5812 = vpop.f32.mrf.mxu0
        %v5813 = vadd.f32 %v5724, %v5812
        %v5814 = vpop.f32.mrf.mxu0
        %v5815 = vadd.f32 %v5726, %v5814
        %5816 = vmatmul.bf16.gmra.mxu0 %v5622
        %v5817 = vpop.f32.mrf.mxu0
        %v5818 = vadd.f32 %v5729, %v5817
        %v5819 = vpop.f32.mrf.mxu0
        %v5820 = vadd.f32 %v5731, %v5819
        %5821 = vmatmul.bf16.gmra.mxu0 %v5624
        %v5822 = vpop.f32.mrf.mxu0
        %v5823 = vadd.f32 %v5734, %v5822
        %v5824 = vpop.f32.mrf.mxu0
        %v5825 = vadd.f32 %v5736, %v5824
        %5826 = vmatmul.bf16.gmra.mxu0 %v5626
        %v5827 = vpop.f32.mrf.mxu0
        %v5828 = vadd.f32 %v5739, %v5827
        %v5829 = vpop.f32.mrf.mxu0
        %v5830 = vadd.f32 %v5741, %v5829
        %5831 = vmatmul.bf16.gmra.mxu0 %v5628
        %v5832 = vpop.f32.mrf.mxu0
        %v5833 = vadd.f32 %v5744, %v5832
        %v5834 = vpop.f32.mrf.mxu0
        %v5835 = vadd.f32 %v5746, %v5834
        %5836 = vmatmul.bf16.gmra.mxu0 %v5630
        %v5837 = vpop.f32.mrf.mxu0
        %v5838 = vadd.f32 %v5749, %v5837
        %v5839 = vpop.f32.mrf.mxu0
        %v5840 = vadd.f32 %v5751, %v5839
        %5841 = vmatmul.bf16.gmra.mxu0 %v5632
        %v5842 = vpop.f32.mrf.mxu0
        %v5843 = vadd.f32 %v5754, %v5842
        %v5844 = vpop.f32.mrf.mxu0
        %v5845 = vadd.f32 %v5756, %v5844
        %5846 = vmatmul.bf16.gmra.mxu0 %v5634
        %v5847 = vpop.f32.mrf.mxu0
        %v5848 = vadd.f32 %v5759, %v5847
        %v5849 = vpop.f32.mrf.mxu0
        %v5850 = vadd.f32 %v5761, %v5849
        %5851 = vmatmul.bf16.gmra.mxu0 %v5636
        %v5852 = vpop.f32.mrf.mxu0
        %v5853 = vadd.f32 %v5764, %v5852
        %v5854 = vpop.f32.mrf.mxu0
        %v5855 = vadd.f32 %v5766, %v5854
        %5856 = vmatmul.bf16.gmra.mxu0 %v5638
        %v5857 = vpop.f32.mrf.mxu0
        %v5858 = vadd.f32 %v5769, %v5857
        %v5859 = vpop.f32.mrf.mxu0
        %v5860 = vadd.f32 %v5771, %v5859
        %5861 = vmatmul.bf16.gmra.mxu0 %v5640
        %v5862 = vpop.f32.mrf.mxu0
        %v5863 = vadd.f32 %v5774, %v5862
        %v5864 = vpop.f32.mrf.mxu0
        %v5865 = vadd.f32 %v5776, %v5864
        %5866 = vdwg.mxu0
        %v5867 = vrcp.pop %v5515
        %v5868 = vrcp.pop %v5518
        %v5869 = vrcp.pop %v5521
        %v5870 = vrcp.pop %v5524
        %v5871 = vrcp.pop %v5527
        %v5872 = vrcp.pop %v5530
        %v5873 = vrcp.pop %v5533
        %v5874 = vrcp.pop %v5536
        %v5875 = vrcp.pop %v5539
        %v5876 = vrcp.pop %v5542
        %v5877 = vrcp.pop %v5545
        %v5878 = vrcp.pop %v5548
        %v5879 = vrcp.pop %v5551
        %v5880 = vrcp.pop %v5554
        %v5881 = vrcp.pop %v5557
        %v5882 = vrcp.pop %v5560
        %v5883 = vrcp.pop %v5563
        %v5884 = vrcp.pop %v5566
        %v5885 = vrcp.pop %v5569
        %v5886 = vrcp.pop %v5572
        %v5887 = vrcp.pop %v5575
        %v5888 = vrcp.pop %v5578
        %v5889 = vrcp.pop %v5581
        %v5890 = vrcp.pop %v5584
        %v5891 = vrcp.pop %v5587
        %v5892 = vrcp.pop %v5590
        %v5893 = vrcp.pop %v5593
        %v5894 = vrcp.pop %v5596
        %v5895 = vrcp.pop %v5599
        %v5896 = vrcp.pop %v5602
        %v5897 = vrcp.pop %v5605
        %v5898 = vrcp.pop %v5608
        %v5899 = vmul.f32 %v5788, %v5867
        %v5900 = vmul.f32 %v5790, %v5868
        %v5901 = vmul.f32 %v5793, %v5869
        %v5902 = vmul.f32 %v5795, %v5870
        %v5903 = vmul.f32 %v5798, %v5871
        %v5904 = vmul.f32 %v5800, %v5872
        %v5905 = vmul.f32 %v5803, %v5873
        %v5906 = vmul.f32 %v5805, %v5874
        %v5907 = vmul.f32 %v5808, %v5875
        %v5908 = vmul.f32 %v5810, %v5876
        %v5909 = vmul.f32 %v5813, %v5877
        %v5910 = vmul.f32 %v5815, %v5878
        %v5911 = vmul.f32 %v5818, %v5879
        %v5912 = vmul.f32 %v5820, %v5880
        %v5913 = vmul.f32 %v5823, %v5881
        %v5914 = vmul.f32 %v5825, %v5882
        %v5915 = vmul.f32 %v5828, %v5883
        %v5916 = vmul.f32 %v5830, %v5884
        %v5917 = vmul.f32 %v5833, %v5885
        %v5918 = vmul.f32 %v5835, %v5886
        %v5919 = vmul.f32 %v5838, %v5887
        %v5920 = vmul.f32 %v5840, %v5888
        %v5921 = vmul.f32 %v5843, %v5889
        %v5922 = vmul.f32 %v5845, %v5890
        %v5923 = vmul.f32 %v5848, %v5891
        %v5924 = vmul.f32 %v5850, %v5892
        %v5925 = vmul.f32 %v5853, %v5893
        %v5926 = vmul.f32 %v5855, %v5894
        %v5927 = vmul.f32 %v5858, %v5895
        %v5928 = vmul.f32 %v5860, %v5896
        %v5929 = vmul.f32 %v5863, %v5897
        %v5930 = vmul.f32 %v5865, %v5898
        %5931 = vrot.lane.b32.xlu0 %v2131, 64
        %v5932 = vpop.permute.xlu0 %5931
        %5933 = vrot.lane.b32.xlu0 %v2132, 64
        %v5934 = vpop.permute.xlu0 %5933
        %5935 = vrot.lane.b32.xlu0 %v2133, 64
        %v5936 = vpop.permute.xlu0 %5935
        %5937 = vrot.lane.b32.xlu0 %v2134, 64
        %v5938 = vpop.permute.xlu0 %5937
        %5939 = vrot.lane.b32.xlu0 %v2135, 64
        %v5940 = vpop.permute.xlu0 %5939
        %5941 = vrot.lane.b32.xlu0 %v2136, 64
        %v5942 = vpop.permute.xlu0 %5941
        %5943 = vrot.lane.b32.xlu0 %v2137, 64
        %v5944 = vpop.permute.xlu0 %5943
        %5945 = vrot.lane.b32.xlu0 %v2138, 64
        %v5946 = vpop.permute.xlu0 %5945
        %5947 = vrot.lane.b32.xlu0 %v2139, 64
        %v5948 = vpop.permute.xlu0 %5947
        %5949 = vrot.lane.b32.xlu0 %v2140, 64
        %v5950 = vpop.permute.xlu0 %5949
        %5951 = vrot.lane.b32.xlu0 %v2141, 64
        %v5952 = vpop.permute.xlu0 %5951
        %5953 = vrot.lane.b32.xlu0 %v2142, 64
        %v5954 = vpop.permute.xlu0 %5953
        %5955 = vrot.lane.b32.xlu0 %v2143, 64
        %v5956 = vpop.permute.xlu0 %5955
        %5957 = vrot.lane.b32.xlu0 %v2144, 64
        %v5958 = vpop.permute.xlu0 %5957
        %5959 = vrot.lane.b32.xlu0 %v2145, 64
        %v5960 = vpop.permute.xlu0 %5959
        %5961 = vrot.lane.b32.xlu0 %v2146, 64
        %v5962 = vpop.permute.xlu0 %5961
        %5963 = vrot.lane.b32.xlu0 %v2147, 64
        %v5964 = vpop.permute.xlu0 %5963
        %5965 = vrot.lane.b32.xlu0 %v2148, 64
        %v5966 = vpop.permute.xlu0 %5965
        %5967 = vrot.lane.b32.xlu0 %v2149, 64
        %v5968 = vpop.permute.xlu0 %5967
        %5969 = vrot.lane.b32.xlu0 %v2150, 64
        %v5970 = vpop.permute.xlu0 %5969
        %5971 = vrot.lane.b32.xlu0 %v2151, 64
        %v5972 = vpop.permute.xlu0 %5971
        %5973 = vrot.lane.b32.xlu0 %v2152, 64
        %v5974 = vpop.permute.xlu0 %5973
        %5975 = vrot.lane.b32.xlu0 %v2153, 64
        %v5976 = vpop.permute.xlu0 %5975
        %5977 = vrot.lane.b32.xlu0 %v2154, 64
        %v5978 = vpop.permute.xlu0 %5977
        %5979 = vrot.lane.b32.xlu0 %v2155, 64
        %v5980 = vpop.permute.xlu0 %5979
        %5981 = vrot.lane.b32.xlu0 %v2156, 64
        %v5982 = vpop.permute.xlu0 %5981
        %5983 = vrot.lane.b32.xlu0 %v2157, 64
        %v5984 = vpop.permute.xlu0 %5983
        %5985 = vrot.lane.b32.xlu0 %v2158, 64
        %v5986 = vpop.permute.xlu0 %5985
        %5987 = vrot.lane.b32.xlu0 %v2159, 64
        %v5988 = vpop.permute.xlu0 %5987
        %5989 = vrot.lane.b32.xlu0 %v2160, 64
        %v5990 = vpop.permute.xlu0 %5989
        %5991 = vrot.lane.b32.xlu0 %v2161, 64
        %v5992 = vpop.permute.xlu0 %5991
        %5993 = vrot.lane.b32.xlu0 %v2162, 64
        %v5994 = vpop.permute.xlu0 %5993
        %v6027 = vadd.f32 %v5899, %v5932
        %v6028 = vadd.f32 %v5900, %v5934
        %v6029 = vadd.f32 %v5901, %v5936
        %v6030 = vadd.f32 %v5902, %v5938
        %v6031 = vadd.f32 %v5903, %v5940
        %v6032 = vadd.f32 %v5904, %v5942
        %v6033 = vadd.f32 %v5905, %v5944
        %v6034 = vadd.f32 %v5906, %v5946
        %v6035 = vadd.f32 %v5907, %v5948
        %v6036 = vadd.f32 %v5908, %v5950
        %v6037 = vadd.f32 %v5909, %v5952
        %v6038 = vadd.f32 %v5910, %v5954
        %v6039 = vadd.f32 %v5911, %v5956
        %v6040 = vadd.f32 %v5912, %v5958
        %v6041 = vadd.f32 %v5913, %v5960
        %v6042 = vadd.f32 %v5914, %v5962
        %v6043 = vadd.f32 %v5915, %v5964
        %v6044 = vadd.f32 %v5916, %v5966
        %v6045 = vadd.f32 %v5917, %v5968
        %v6046 = vadd.f32 %v5918, %v5970
        %v6047 = vadd.f32 %v5919, %v5972
        %v6048 = vadd.f32 %v5920, %v5974
        %v6049 = vadd.f32 %v5921, %v5976
        %v6050 = vadd.f32 %v5922, %v5978
        %v6051 = vadd.f32 %v5923, %v5980
        %v6052 = vadd.f32 %v5924, %v5982
        %v6053 = vadd.f32 %v5925, %v5984
        %v6054 = vadd.f32 %v5926, %v5986
        %v6055 = vadd.f32 %v5927, %v5988
        %v6056 = vadd.f32 %v5928, %v5990
        %v6057 = vadd.f32 %v5929, %v5992
        %v6058 = vadd.f32 %v5930, %v5994
        %v6059 = vpack.c.bf16 %v6028, %v6027
        %v6060 = vpack.c.bf16 %v6030, %v6029
        %v6061 = vpack.c.bf16 %v6032, %v6031
        %v6062 = vpack.c.bf16 %v6034, %v6033
        %v6063 = vpack.c.bf16 %v6036, %v6035
        %v6064 = vpack.c.bf16 %v6038, %v6037
        %v6065 = vpack.c.bf16 %v6040, %v6039
        %v6066 = vpack.c.bf16 %v6042, %v6041
        %v6067 = vpack.c.bf16 %v6044, %v6043
        %v6068 = vpack.c.bf16 %v6046, %v6045
        %v6069 = vpack.c.bf16 %v6048, %v6047
        %v6070 = vpack.c.bf16 %v6050, %v6049
        %v6071 = vpack.c.bf16 %v6052, %v6051
        %v6072 = vpack.c.bf16 %v6054, %v6053
        %v6073 = vpack.c.bf16 %v6056, %v6055
        %v6074 = vpack.c.bf16 %v6058, %v6057
        %v6079 = vunpack.c.l.b16 %v2171
        %v6080 = vunpack.c.l.b16 %v2172
        %v6081 = vunpack.c.l.b16 %v2173
        %v6082 = vunpack.c.l.b16 %v2174
        %v6083 = vpack.c.b16 %v6080, %v6079
        %v6084 = vpack.c.b16 %v6082, %v6081
        %v6088 = vsel %vm4600, %v6059, 0
        %v6091 = vsel %vm4600, %v6060, 0
        %v6094 = vsel %vm4600, %v6061, 0
        %v6097 = vsel %vm4600, %v6062, 0
        %v6100 = vsel %vm4600, %v6063, 0
        %v6103 = vsel %vm4600, %v6064, 0
        %v6106 = vsel %vm4600, %v6065, 0
        %v6109 = vsel %vm4600, %v6066, 0
        %v6112 = vsel %vm4600, %v6067, 0
        %v6115 = vsel %vm4600, %v6068, 0
        %v6118 = vsel %vm4600, %v6069, 0
        %v6121 = vsel %vm4600, %v6070, 0
        %v6124 = vsel %vm4600, %v6071, 0
        %v6127 = vsel %vm4600, %v6072, 0
        %v6130 = vsel %vm4600, %v6073, 0
        %v6133 = vsel %vm4600, %v6074, 0
        %6135 = vmatpush.bf16.msra.mxu0 0
        %6136 = vmatpush.bf16.msra.mxu0 0
        %6137 = vmatpush.bf16.msra.mxu0 0
        %6138 = vmatpush.bf16.msra.mxu0 0
        %6139 = vmatpush.bf16.msra.mxu0 0
        %6140 = vmatpush.bf16.msra.mxu0 0
        %6141 = vmatpush.bf16.msra.mxu0 %v6084
        %6142 = vmatpush.bf16.msra.mxu0 %v6083
        %6143 = vmatmul.bf16.gmra.mxu0 %v6088
        %v6144 = vpop.f32.mrf.mxu0
        %v6145 = vadd.f32 0.0, %v6144
        %v6146 = vpop.f32.mrf.mxu0
        %v6147 = vadd.f32 0.0, %v6146
        %6148 = vmatmul.bf16.gmra.mxu0 %v6091
        %v6149 = vpop.f32.mrf.mxu0
        %v6150 = vadd.f32 0.0, %v6149
        %v6151 = vpop.f32.mrf.mxu0
        %v6152 = vadd.f32 0.0, %v6151
        %6153 = vmatmul.bf16.gmra.mxu0 %v6094
        %v6154 = vpop.f32.mrf.mxu0
        %v6155 = vadd.f32 0.0, %v6154
        %v6156 = vpop.f32.mrf.mxu0
        %v6157 = vadd.f32 0.0, %v6156
        %6158 = vmatmul.bf16.gmra.mxu0 %v6097
        %v6159 = vpop.f32.mrf.mxu0
        %v6160 = vadd.f32 0.0, %v6159
        %v6161 = vpop.f32.mrf.mxu0
        %v6162 = vadd.f32 0.0, %v6161
        %6163 = vmatmul.bf16.gmra.mxu0 %v6100
        %v6164 = vpop.f32.mrf.mxu0
        %v6165 = vadd.f32 0.0, %v6164
        %v6166 = vpop.f32.mrf.mxu0
        %v6167 = vadd.f32 0.0, %v6166
        %6168 = vmatmul.bf16.gmra.mxu0 %v6103
        %v6169 = vpop.f32.mrf.mxu0
        %v6170 = vadd.f32 0.0, %v6169
        %v6171 = vpop.f32.mrf.mxu0
        %v6172 = vadd.f32 0.0, %v6171
        %6173 = vmatmul.bf16.gmra.mxu0 %v6106
        %v6174 = vpop.f32.mrf.mxu0
        %v6175 = vadd.f32 0.0, %v6174
        %v6176 = vpop.f32.mrf.mxu0
        %v6177 = vadd.f32 0.0, %v6176
        %6178 = vmatmul.bf16.gmra.mxu0 %v6109
        %v6179 = vpop.f32.mrf.mxu0
        %v6180 = vadd.f32 0.0, %v6179
        %v6181 = vpop.f32.mrf.mxu0
        %v6182 = vadd.f32 0.0, %v6181
        %6183 = vmatmul.bf16.gmra.mxu0 %v6112
        %v6184 = vpop.f32.mrf.mxu0
        %v6185 = vadd.f32 0.0, %v6184
        %v6186 = vpop.f32.mrf.mxu0
        %v6187 = vadd.f32 0.0, %v6186
        %6188 = vmatmul.bf16.gmra.mxu0 %v6115
        %v6189 = vpop.f32.mrf.mxu0
        %v6190 = vadd.f32 0.0, %v6189
        %v6191 = vpop.f32.mrf.mxu0
        %v6192 = vadd.f32 0.0, %v6191
        %6193 = vmatmul.bf16.gmra.mxu0 %v6118
        %v6194 = vpop.f32.mrf.mxu0
        %v6195 = vadd.f32 0.0, %v6194
        %v6196 = vpop.f32.mrf.mxu0
        %v6197 = vadd.f32 0.0, %v6196
        %6198 = vmatmul.bf16.gmra.mxu0 %v6121
        %v6199 = vpop.f32.mrf.mxu0
        %v6200 = vadd.f32 0.0, %v6199
        %v6201 = vpop.f32.mrf.mxu0
        %v6202 = vadd.f32 0.0, %v6201
        %6203 = vmatmul.bf16.gmra.mxu0 %v6124
        %v6204 = vpop.f32.mrf.mxu0
        %v6205 = vadd.f32 0.0, %v6204
        %v6206 = vpop.f32.mrf.mxu0
        %v6207 = vadd.f32 0.0, %v6206
        %6208 = vmatmul.bf16.gmra.mxu0 %v6127
        %v6209 = vpop.f32.mrf.mxu0
        %v6210 = vadd.f32 0.0, %v6209
        %v6211 = vpop.f32.mrf.mxu0
        %v6212 = vadd.f32 0.0, %v6211
        %6213 = vmatmul.bf16.gmra.mxu0 %v6130
        %v6214 = vpop.f32.mrf.mxu0
        %v6215 = vadd.f32 0.0, %v6214
        %v6216 = vpop.f32.mrf.mxu0
        %v6217 = vadd.f32 0.0, %v6216
        %6218 = vmatmul.bf16.gmra.mxu0 %v6133
        %v6219 = vpop.f32.mrf.mxu0
        %v6220 = vadd.f32 0.0, %v6219
        %v6221 = vpop.f32.mrf.mxu0
        %v6222 = vadd.f32 0.0, %v6221
        %6223 = vdwg.mxu0
        %v6224 = vadd.f32 %v4808, %v6145
        %v6225 = vadd.f32 %v4810, %v6147
        %v6226 = vadd.f32 %v4813, %v6150
        %v6227 = vadd.f32 %v4815, %v6152
        %v6228 = vadd.f32 %v4818, %v6155
        %v6229 = vadd.f32 %v4820, %v6157
        %v6230 = vadd.f32 %v4823, %v6160
        %v6231 = vadd.f32 %v4825, %v6162
        %v6232 = vadd.f32 %v4828, %v6165
        %v6233 = vadd.f32 %v4830, %v6167
        %v6234 = vadd.f32 %v4833, %v6170
        %v6235 = vadd.f32 %v4835, %v6172
        %v6236 = vadd.f32 %v4838, %v6175
        %v6237 = vadd.f32 %v4840, %v6177
        %v6238 = vadd.f32 %v4843, %v6180
        %v6239 = vadd.f32 %v4845, %v6182
        %v6240 = vadd.f32 %v4848, %v6185
        %v6241 = vadd.f32 %v4850, %v6187
        %v6242 = vadd.f32 %v4853, %v6190
        %v6243 = vadd.f32 %v4855, %v6192
        %v6244 = vadd.f32 %v4858, %v6195
        %v6245 = vadd.f32 %v4860, %v6197
        %v6246 = vadd.f32 %v4863, %v6200
        %v6247 = vadd.f32 %v4865, %v6202
        %v6248 = vadd.f32 %v4868, %v6205
        %v6249 = vadd.f32 %v4870, %v6207
        %v6250 = vadd.f32 %v4873, %v6210
        %v6251 = vadd.f32 %v4875, %v6212
        %v6252 = vadd.f32 %v4878, %v6215
        %v6253 = vadd.f32 %v4880, %v6217
        %v6254 = vadd.f32 %v4883, %v6220
        %v6255 = vadd.f32 %v4885, %v6222
        %6256 = vrot.lane.b32.xlu0 %v2243, 80
        %v6257 = vpop.permute.xlu0 %6256
        %6258 = vrot.lane.b32.xlu0 %v2244, 80
        %v6259 = vpop.permute.xlu0 %6258
        %6260 = vrot.lane.b32.xlu0 %v2245, 80
        %v6261 = vpop.permute.xlu0 %6260
        %6262 = vrot.lane.b32.xlu0 %v2246, 80
        %v6263 = vpop.permute.xlu0 %6262
        %6264 = vrot.lane.b32.xlu0 %v2247, 80
        %v6265 = vpop.permute.xlu0 %6264
        %6266 = vrot.lane.b32.xlu0 %v2248, 80
        %v6267 = vpop.permute.xlu0 %6266
        %6268 = vrot.lane.b32.xlu0 %v2249, 80
        %v6269 = vpop.permute.xlu0 %6268
        %6270 = vrot.lane.b32.xlu0 %v2250, 80
        %v6271 = vpop.permute.xlu0 %6270
        %6272 = vrot.lane.b32.xlu0 %v2251, 80
        %v6273 = vpop.permute.xlu0 %6272
        %6274 = vrot.lane.b32.xlu0 %v2252, 80
        %v6275 = vpop.permute.xlu0 %6274
        %6276 = vrot.lane.b32.xlu0 %v2253, 80
        %v6277 = vpop.permute.xlu0 %6276
        %6278 = vrot.lane.b32.xlu0 %v2254, 80
        %v6279 = vpop.permute.xlu0 %6278
        %6280 = vrot.lane.b32.xlu0 %v2255, 80
        %v6281 = vpop.permute.xlu0 %6280
        %6282 = vrot.lane.b32.xlu0 %v2256, 80
        %v6283 = vpop.permute.xlu0 %6282
        %6284 = vrot.lane.b32.xlu0 %v2257, 80
        %v6285 = vpop.permute.xlu0 %6284
        %6286 = vrot.lane.b32.xlu0 %v2258, 80
        %v6287 = vpop.permute.xlu0 %6286
        %6288 = vrot.lane.b32.xlu0 %v2243, 16
        %v6289 = vpop.permute.xlu0 %6288
        %6290 = vrot.lane.b32.xlu0 %v2244, 16
        %v6291 = vpop.permute.xlu0 %6290
        %6292 = vrot.lane.b32.xlu0 %v2245, 16
        %v6293 = vpop.permute.xlu0 %6292
        %6294 = vrot.lane.b32.xlu0 %v2246, 16
        %v6295 = vpop.permute.xlu0 %6294
        %6296 = vrot.lane.b32.xlu0 %v2247, 16
        %v6297 = vpop.permute.xlu0 %6296
        %6298 = vrot.lane.b32.xlu0 %v2248, 16
        %v6299 = vpop.permute.xlu0 %6298
        %6300 = vrot.lane.b32.xlu0 %v2249, 16
        %v6301 = vpop.permute.xlu0 %6300
        %6302 = vrot.lane.b32.xlu0 %v2250, 16
        %v6303 = vpop.permute.xlu0 %6302
        %6304 = vrot.lane.b32.xlu0 %v2251, 16
        %v6305 = vpop.permute.xlu0 %6304
        %6306 = vrot.lane.b32.xlu0 %v2252, 16
        %v6307 = vpop.permute.xlu0 %6306
        %6308 = vrot.lane.b32.xlu0 %v2253, 16
        %v6309 = vpop.permute.xlu0 %6308
        %6310 = vrot.lane.b32.xlu0 %v2254, 16
        %v6311 = vpop.permute.xlu0 %6310
        %6312 = vrot.lane.b32.xlu0 %v2255, 16
        %v6313 = vpop.permute.xlu0 %6312
        %6314 = vrot.lane.b32.xlu0 %v2256, 16
        %v6315 = vpop.permute.xlu0 %6314
        %6316 = vrot.lane.b32.xlu0 %v2257, 16
        %v6317 = vpop.permute.xlu0 %6316
        %6318 = vrot.lane.b32.xlu0 %v2258, 16
        %v6319 = vpop.permute.xlu0 %6318
        %v6321 = vsel %vm2291, %v6257, 0
        %v6324 = vsel %vm2291, %v6259, 0
        %v6327 = vsel %vm2291, %v6261, 0
        %v6330 = vsel %vm2291, %v6263, 0
        %v6333 = vsel %vm2291, %v6265, 0
        %v6336 = vsel %vm2291, %v6267, 0
        %v6339 = vsel %vm2291, %v6269, 0
        %v6342 = vsel %vm2291, %v6271, 0
        %v6345 = vsel %vm2291, %v6273, 0
        %v6348 = vsel %vm2291, %v6275, 0
        %v6351 = vsel %vm2291, %v6277, 0
        %v6354 = vsel %vm2291, %v6279, 0
        %v6357 = vsel %vm2291, %v6281, 0
        %v6360 = vsel %vm2291, %v6283, 0
        %v6363 = vsel %vm2291, %v6285, 0
        %v6366 = vsel %vm2291, %v6287, 0
        %v6369 = vsel %vm2291, %v6289, 0
        %v6372 = vsel %vm2291, %v6291, 0
        %v6375 = vsel %vm2291, %v6293, 0
        %v6378 = vsel %vm2291, %v6295, 0
        %v6381 = vsel %vm2291, %v6297, 0
        %v6384 = vsel %vm2291, %v6299, 0
        %v6387 = vsel %vm2291, %v6301, 0
        %v6390 = vsel %vm2291, %v6303, 0
        %v6393 = vsel %vm2291, %v6305, 0
        %v6396 = vsel %vm2291, %v6307, 0
        %v6399 = vsel %vm2291, %v6309, 0
        %v6402 = vsel %vm2291, %v6311, 0
        %v6405 = vsel %vm2291, %v6313, 0
        %v6408 = vsel %vm2291, %v6315, 0
        %v6411 = vsel %vm2291, %v6317, 0
        %v6414 = vsel %vm2291, %v6319, 0
        %6416 = vmatpush.bf16.xpose.msra.mxu0 %v6390
        %6417 = vmatpush.bf16.xpose.msra.mxu0 %v6387
        %6418 = vmatpush.bf16.xpose.msra.mxu0 %v6384
        %6419 = vmatpush.bf16.xpose.msra.mxu0 %v6381
        %6420 = vmatpush.bf16.xpose.msra.mxu0 %v6378
        %6421 = vmatpush.bf16.xpose.msra.mxu0 %v6375
        %6422 = vmatpush.bf16.xpose.msra.mxu0 %v6372
        %6423 = vmatpush.bf16.xpose.msra.mxu0 %v6369
        %6424 = vmatmul.bf16.gmra.mxu0 %v6321
        %v6425 = vpop.f32.mrf.mxu0
        %v6426 = vadd.f32 0.0, %v6425
        %v6427 = vpop.f32.mrf.mxu0
        %v6428 = vadd.f32 0.0, %v6427
        %6429 = vmatmul.bf16.gmra.mxu0 %v6324
        %v6430 = vpop.f32.mrf.mxu0
        %v6431 = vadd.f32 0.0, %v6430
        %v6432 = vpop.f32.mrf.mxu0
        %v6433 = vadd.f32 0.0, %v6432
        %6434 = vmatmul.bf16.gmra.mxu0 %v6327
        %v6435 = vpop.f32.mrf.mxu0
        %v6436 = vadd.f32 0.0, %v6435
        %v6437 = vpop.f32.mrf.mxu0
        %v6438 = vadd.f32 0.0, %v6437
        %6439 = vmatmul.bf16.gmra.mxu0 %v6330
        %v6440 = vpop.f32.mrf.mxu0
        %v6441 = vadd.f32 0.0, %v6440
        %v6442 = vpop.f32.mrf.mxu0
        %v6443 = vadd.f32 0.0, %v6442
        %6444 = vmatmul.bf16.gmra.mxu0 %v6333
        %v6445 = vpop.f32.mrf.mxu0
        %v6446 = vadd.f32 0.0, %v6445
        %v6447 = vpop.f32.mrf.mxu0
        %v6448 = vadd.f32 0.0, %v6447
        %6449 = vmatmul.bf16.gmra.mxu0 %v6336
        %v6450 = vpop.f32.mrf.mxu0
        %v6451 = vadd.f32 0.0, %v6450
        %v6452 = vpop.f32.mrf.mxu0
        %v6453 = vadd.f32 0.0, %v6452
        %6454 = vmatmul.bf16.gmra.mxu0 %v6339
        %v6455 = vpop.f32.mrf.mxu0
        %v6456 = vadd.f32 0.0, %v6455
        %v6457 = vpop.f32.mrf.mxu0
        %v6458 = vadd.f32 0.0, %v6457
        %6459 = vmatmul.bf16.gmra.mxu0 %v6342
        %v6460 = vpop.f32.mrf.mxu0
        %v6461 = vadd.f32 0.0, %v6460
        %v6462 = vpop.f32.mrf.mxu0
        %v6463 = vadd.f32 0.0, %v6462
        %6464 = vmatmul.bf16.gmra.mxu0 %v6345
        %v6465 = vpop.f32.mrf.mxu0
        %v6466 = vadd.f32 0.0, %v6465
        %v6467 = vpop.f32.mrf.mxu0
        %v6468 = vadd.f32 0.0, %v6467
        %6469 = vmatmul.bf16.gmra.mxu0 %v6348
        %v6470 = vpop.f32.mrf.mxu0
        %v6471 = vadd.f32 0.0, %v6470
        %v6472 = vpop.f32.mrf.mxu0
        %v6473 = vadd.f32 0.0, %v6472
        %6474 = vmatmul.bf16.gmra.mxu0 %v6351
        %v6475 = vpop.f32.mrf.mxu0
        %v6476 = vadd.f32 0.0, %v6475
        %v6477 = vpop.f32.mrf.mxu0
        %v6478 = vadd.f32 0.0, %v6477
        %6479 = vmatmul.bf16.gmra.mxu0 %v6354
        %v6480 = vpop.f32.mrf.mxu0
        %v6481 = vadd.f32 0.0, %v6480
        %v6482 = vpop.f32.mrf.mxu0
        %v6483 = vadd.f32 0.0, %v6482
        %6484 = vmatmul.bf16.gmra.mxu0 %v6357
        %v6485 = vpop.f32.mrf.mxu0
        %v6486 = vadd.f32 0.0, %v6485
        %v6487 = vpop.f32.mrf.mxu0
        %v6488 = vadd.f32 0.0, %v6487
        %6489 = vmatmul.bf16.gmra.mxu0 %v6360
        %v6490 = vpop.f32.mrf.mxu0
        %v6491 = vadd.f32 0.0, %v6490
        %v6492 = vpop.f32.mrf.mxu0
        %v6493 = vadd.f32 0.0, %v6492
        %6494 = vmatmul.bf16.gmra.mxu0 %v6363
        %v6495 = vpop.f32.mrf.mxu0
        %v6496 = vadd.f32 0.0, %v6495
        %v6497 = vpop.f32.mrf.mxu0
        %v6498 = vadd.f32 0.0, %v6497
        %6499 = vmatmul.bf16.gmra.mxu0 %v6366
        %v6500 = vpop.f32.mrf.mxu0
        %v6501 = vadd.f32 0.0, %v6500
        %v6502 = vpop.f32.mrf.mxu0
        %v6503 = vadd.f32 0.0, %v6502
        %6504 = vdwg.mxu0
        %6505 = vmatpush.bf16.xpose.msra.mxu0 %v6414
        %6506 = vmatpush.bf16.xpose.msra.mxu0 %v6411
        %6507 = vmatpush.bf16.xpose.msra.mxu0 %v6408
        %6508 = vmatpush.bf16.xpose.msra.mxu0 %v6405
        %6509 = vmatpush.bf16.xpose.msra.mxu0 %v6402
        %6510 = vmatpush.bf16.xpose.msra.mxu0 %v6399
        %6511 = vmatpush.bf16.xpose.msra.mxu0 %v6396
        %6512 = vmatpush.bf16.xpose.msra.mxu0 %v6393
        %6513 = vmatmul.bf16.gmra.mxu0 %v6321
        %v6514 = vpop.f32.mrf.mxu0
        %v6515 = vadd.f32 0.0, %v6514
        %v6516 = vpop.f32.mrf.mxu0
        %v6517 = vadd.f32 0.0, %v6516
        %6518 = vmatmul.bf16.gmra.mxu0 %v6324
        %v6519 = vpop.f32.mrf.mxu0
        %v6520 = vadd.f32 0.0, %v6519
        %v6521 = vpop.f32.mrf.mxu0
        %v6522 = vadd.f32 0.0, %v6521
        %6523 = vmatmul.bf16.gmra.mxu0 %v6327
        %v6524 = vpop.f32.mrf.mxu0
        %v6525 = vadd.f32 0.0, %v6524
        %v6526 = vpop.f32.mrf.mxu0
        %v6527 = vadd.f32 0.0, %v6526
        %6528 = vmatmul.bf16.gmra.mxu0 %v6330
        %v6529 = vpop.f32.mrf.mxu0
        %v6530 = vadd.f32 0.0, %v6529
        %v6531 = vpop.f32.mrf.mxu0
        %v6532 = vadd.f32 0.0, %v6531
        %6533 = vmatmul.bf16.gmra.mxu0 %v6333
        %v6534 = vpop.f32.mrf.mxu0
        %v6535 = vadd.f32 0.0, %v6534
        %v6536 = vpop.f32.mrf.mxu0
        %v6537 = vadd.f32 0.0, %v6536
        %6538 = vmatmul.bf16.gmra.mxu0 %v6336
        %v6539 = vpop.f32.mrf.mxu0
        %v6540 = vadd.f32 0.0, %v6539
        %v6541 = vpop.f32.mrf.mxu0
        %v6542 = vadd.f32 0.0, %v6541
        %6543 = vmatmul.bf16.gmra.mxu0 %v6339
        %v6544 = vpop.f32.mrf.mxu0
        %v6545 = vadd.f32 0.0, %v6544
        %v6546 = vpop.f32.mrf.mxu0
        %v6547 = vadd.f32 0.0, %v6546
        %6548 = vmatmul.bf16.gmra.mxu0 %v6342
        %v6549 = vpop.f32.mrf.mxu0
        %v6550 = vadd.f32 0.0, %v6549
        %v6551 = vpop.f32.mrf.mxu0
        %v6552 = vadd.f32 0.0, %v6551
        %6553 = vmatmul.bf16.gmra.mxu0 %v6345
        %v6554 = vpop.f32.mrf.mxu0
        %v6555 = vadd.f32 0.0, %v6554
        %v6556 = vpop.f32.mrf.mxu0
        %v6557 = vadd.f32 0.0, %v6556
        %6558 = vmatmul.bf16.gmra.mxu0 %v6348
        %v6559 = vpop.f32.mrf.mxu0
        %v6560 = vadd.f32 0.0, %v6559
        %v6561 = vpop.f32.mrf.mxu0
        %v6562 = vadd.f32 0.0, %v6561
        %6563 = vmatmul.bf16.gmra.mxu0 %v6351
        %v6564 = vpop.f32.mrf.mxu0
        %v6565 = vadd.f32 0.0, %v6564
        %v6566 = vpop.f32.mrf.mxu0
        %v6567 = vadd.f32 0.0, %v6566
        %6568 = vmatmul.bf16.gmra.mxu0 %v6354
        %v6569 = vpop.f32.mrf.mxu0
        %v6570 = vadd.f32 0.0, %v6569
        %v6571 = vpop.f32.mrf.mxu0
        %v6572 = vadd.f32 0.0, %v6571
        %6573 = vmatmul.bf16.gmra.mxu0 %v6357
        %v6574 = vpop.f32.mrf.mxu0
        %v6575 = vadd.f32 0.0, %v6574
        %v6576 = vpop.f32.mrf.mxu0
        %v6577 = vadd.f32 0.0, %v6576
        %6578 = vmatmul.bf16.gmra.mxu0 %v6360
        %v6579 = vpop.f32.mrf.mxu0
        %v6580 = vadd.f32 0.0, %v6579
        %v6581 = vpop.f32.mrf.mxu0
        %v6582 = vadd.f32 0.0, %v6581
        %6583 = vmatmul.bf16.gmra.mxu0 %v6363
        %v6584 = vpop.f32.mrf.mxu0
        %v6585 = vadd.f32 0.0, %v6584
        %v6586 = vpop.f32.mrf.mxu0
        %v6587 = vadd.f32 0.0, %v6586
        %6588 = vmatmul.bf16.gmra.mxu0 %v6366
        %v6589 = vpop.f32.mrf.mxu0
        %v6590 = vadd.f32 0.0, %v6589
        %v6591 = vpop.f32.mrf.mxu0
        %v6592 = vadd.f32 0.0, %v6591
        %6593 = vdwg.mxu0
        %v6594 = vmax.f32 %v6426, %v6515
        %6595 = vmax.xlane.f32.xlu0 %v6594
        %v6596 = vpop.xlane.xlu0 %6595
        %v6597 = vmax.f32 %v6428, %v6517
        %6598 = vmax.xlane.f32.xlu0 %v6597
        %v6599 = vpop.xlane.xlu0 %6598
        %v6600 = vmax.f32 %v6431, %v6520
        %6601 = vmax.xlane.f32.xlu0 %v6600
        %v6602 = vpop.xlane.xlu0 %6601
        %v6603 = vmax.f32 %v6433, %v6522
        %6604 = vmax.xlane.f32.xlu0 %v6603
        %v6605 = vpop.xlane.xlu0 %6604
        %v6606 = vmax.f32 %v6436, %v6525
        %6607 = vmax.xlane.f32.xlu0 %v6606
        %v6608 = vpop.xlane.xlu0 %6607
        %v6609 = vmax.f32 %v6438, %v6527
        %6610 = vmax.xlane.f32.xlu0 %v6609
        %v6611 = vpop.xlane.xlu0 %6610
        %v6612 = vmax.f32 %v6441, %v6530
        %6613 = vmax.xlane.f32.xlu0 %v6612
        %v6614 = vpop.xlane.xlu0 %6613
        %v6615 = vmax.f32 %v6443, %v6532
        %6616 = vmax.xlane.f32.xlu0 %v6615
        %v6617 = vpop.xlane.xlu0 %6616
        %v6618 = vmax.f32 %v6446, %v6535
        %6619 = vmax.xlane.f32.xlu0 %v6618
        %v6620 = vpop.xlane.xlu0 %6619
        %v6621 = vmax.f32 %v6448, %v6537
        %6622 = vmax.xlane.f32.xlu0 %v6621
        %v6623 = vpop.xlane.xlu0 %6622
        %v6624 = vmax.f32 %v6451, %v6540
        %6625 = vmax.xlane.f32.xlu0 %v6624
        %v6626 = vpop.xlane.xlu0 %6625
        %v6627 = vmax.f32 %v6453, %v6542
        %6628 = vmax.xlane.f32.xlu0 %v6627
        %v6629 = vpop.xlane.xlu0 %6628
        %v6630 = vmax.f32 %v6456, %v6545
        %6631 = vmax.xlane.f32.xlu0 %v6630
        %v6632 = vpop.xlane.xlu0 %6631
        %v6633 = vmax.f32 %v6458, %v6547
        %6634 = vmax.xlane.f32.xlu0 %v6633
        %v6635 = vpop.xlane.xlu0 %6634
        %v6636 = vmax.f32 %v6461, %v6550
        %6637 = vmax.xlane.f32.xlu0 %v6636
        %v6638 = vpop.xlane.xlu0 %6637
        %v6639 = vmax.f32 %v6463, %v6552
        %6640 = vmax.xlane.f32.xlu0 %v6639
        %v6641 = vpop.xlane.xlu0 %6640
        %v6642 = vmax.f32 %v6466, %v6555
        %6643 = vmax.xlane.f32.xlu0 %v6642
        %v6644 = vpop.xlane.xlu0 %6643
        %v6645 = vmax.f32 %v6468, %v6557
        %6646 = vmax.xlane.f32.xlu0 %v6645
        %v6647 = vpop.xlane.xlu0 %6646
        %v6648 = vmax.f32 %v6471, %v6560
        %6649 = vmax.xlane.f32.xlu0 %v6648
        %v6650 = vpop.xlane.xlu0 %6649
        %v6651 = vmax.f32 %v6473, %v6562
        %6652 = vmax.xlane.f32.xlu0 %v6651
        %v6653 = vpop.xlane.xlu0 %6652
        %v6654 = vmax.f32 %v6476, %v6565
        %6655 = vmax.xlane.f32.xlu0 %v6654
        %v6656 = vpop.xlane.xlu0 %6655
        %v6657 = vmax.f32 %v6478, %v6567
        %6658 = vmax.xlane.f32.xlu0 %v6657
        %v6659 = vpop.xlane.xlu0 %6658
        %v6660 = vmax.f32 %v6481, %v6570
        %6661 = vmax.xlane.f32.xlu0 %v6660
        %v6662 = vpop.xlane.xlu0 %6661
        %v6663 = vmax.f32 %v6483, %v6572
        %6664 = vmax.xlane.f32.xlu0 %v6663
        %v6665 = vpop.xlane.xlu0 %6664
        %v6666 = vmax.f32 %v6486, %v6575
        %6667 = vmax.xlane.f32.xlu0 %v6666
        %v6668 = vpop.xlane.xlu0 %6667
        %v6669 = vmax.f32 %v6488, %v6577
        %6670 = vmax.xlane.f32.xlu0 %v6669
        %v6671 = vpop.xlane.xlu0 %6670
        %v6672 = vmax.f32 %v6491, %v6580
        %6673 = vmax.xlane.f32.xlu0 %v6672
        %v6674 = vpop.xlane.xlu0 %6673
        %v6675 = vmax.f32 %v6493, %v6582
        %6676 = vmax.xlane.f32.xlu0 %v6675
        %v6677 = vpop.xlane.xlu0 %6676
        %v6678 = vmax.f32 %v6496, %v6585
        %6679 = vmax.xlane.f32.xlu0 %v6678
        %v6680 = vpop.xlane.xlu0 %6679
        %v6681 = vmax.f32 %v6498, %v6587
        %6682 = vmax.xlane.f32.xlu0 %v6681
        %v6683 = vpop.xlane.xlu0 %6682
        %v6684 = vmax.f32 %v6501, %v6590
        %6685 = vmax.xlane.f32.xlu0 %v6684
        %v6686 = vpop.xlane.xlu0 %6685
        %v6687 = vmax.f32 %v6503, %v6592
        %6688 = vmax.xlane.f32.xlu0 %v6687
        %v6689 = vpop.xlane.xlu0 %6688
        %v6690 = vsub.f32 %v6426, %v6596
        %v6691 = vsub.f32 %v6515, %v6596
        %v6692 = vsub.f32 %v6428, %v6599
        %v6693 = vsub.f32 %v6517, %v6599
        %v6694 = vsub.f32 %v6431, %v6602
        %v6695 = vsub.f32 %v6520, %v6602
        %v6696 = vsub.f32 %v6433, %v6605
        %v6697 = vsub.f32 %v6522, %v6605
        %v6698 = vsub.f32 %v6436, %v6608
        %v6699 = vsub.f32 %v6525, %v6608
        %v6700 = vsub.f32 %v6438, %v6611
        %v6701 = vsub.f32 %v6527, %v6611
        %v6702 = vsub.f32 %v6441, %v6614
        %v6703 = vsub.f32 %v6530, %v6614
        %v6704 = vsub.f32 %v6443, %v6617
        %v6705 = vsub.f32 %v6532, %v6617
        %v6706 = vsub.f32 %v6446, %v6620
        %v6707 = vsub.f32 %v6535, %v6620
        %v6708 = vsub.f32 %v6448, %v6623
        %v6709 = vsub.f32 %v6537, %v6623
        %v6710 = vsub.f32 %v6451, %v6626
        %v6711 = vsub.f32 %v6540, %v6626
        %v6712 = vsub.f32 %v6453, %v6629
        %v6713 = vsub.f32 %v6542, %v6629
        %v6714 = vsub.f32 %v6456, %v6632
        %v6715 = vsub.f32 %v6545, %v6632
        %v6716 = vsub.f32 %v6458, %v6635
        %v6717 = vsub.f32 %v6547, %v6635
        %v6718 = vsub.f32 %v6461, %v6638
        %v6719 = vsub.f32 %v6550, %v6638
        %v6720 = vsub.f32 %v6463, %v6641
        %v6721 = vsub.f32 %v6552, %v6641
        %v6722 = vsub.f32 %v6466, %v6644
        %v6723 = vsub.f32 %v6555, %v6644
        %v6724 = vsub.f32 %v6468, %v6647
        %v6725 = vsub.f32 %v6557, %v6647
        %v6726 = vsub.f32 %v6471, %v6650
        %v6727 = vsub.f32 %v6560, %v6650
        %v6728 = vsub.f32 %v6473, %v6653
        %v6729 = vsub.f32 %v6562, %v6653
        %v6730 = vsub.f32 %v6476, %v6656
        %v6731 = vsub.f32 %v6565, %v6656
        %v6732 = vsub.f32 %v6478, %v6659
        %v6733 = vsub.f32 %v6567, %v6659
        %v6734 = vsub.f32 %v6481, %v6662
        %v6735 = vsub.f32 %v6570, %v6662
        %v6736 = vsub.f32 %v6483, %v6665
        %v6737 = vsub.f32 %v6572, %v6665
        %v6738 = vsub.f32 %v6486, %v6668
        %v6739 = vsub.f32 %v6575, %v6668
        %v6740 = vsub.f32 %v6488, %v6671
        %v6741 = vsub.f32 %v6577, %v6671
        %v6742 = vsub.f32 %v6491, %v6674
        %v6743 = vsub.f32 %v6580, %v6674
        %v6744 = vsub.f32 %v6493, %v6677
        %v6745 = vsub.f32 %v6582, %v6677
        %v6746 = vsub.f32 %v6496, %v6680
        %v6747 = vsub.f32 %v6585, %v6680
        %v6748 = vsub.f32 %v6498, %v6683
        %v6749 = vsub.f32 %v6587, %v6683
        %v6750 = vsub.f32 %v6501, %v6686
        %v6751 = vsub.f32 %v6590, %v6686
        %v6752 = vsub.f32 %v6503, %v6689
        %v6753 = vsub.f32 %v6592, %v6689
        %v6754 = vmul.f32 %v6690, 1.442695
        %v6755 = vpow.pop %v6754
        %v6756 = vmul.f32 %v6691, 1.442695
        %v6757 = vpow.pop %v6756
        %v6758 = vmul.f32 %v6692, 1.442695
        %v6759 = vpow.pop %v6758
        %v6760 = vmul.f32 %v6693, 1.442695
        %v6761 = vpow.pop %v6760
        %v6762 = vmul.f32 %v6694, 1.442695
        %v6763 = vpow.pop %v6762
        %v6764 = vmul.f32 %v6695, 1.442695
        %v6765 = vpow.pop %v6764
        %v6766 = vmul.f32 %v6696, 1.442695
        %v6767 = vpow.pop %v6766
        %v6768 = vmul.f32 %v6697, 1.442695
        %v6769 = vpow.pop %v6768
        %v6770 = vmul.f32 %v6698, 1.442695
        %v6771 = vpow.pop %v6770
        %v6772 = vmul.f32 %v6699, 1.442695
        %v6773 = vpow.pop %v6772
        %v6774 = vmul.f32 %v6700, 1.442695
        %v6775 = vpow.pop %v6774
        %v6776 = vmul.f32 %v6701, 1.442695
        %v6777 = vpow.pop %v6776
        %v6778 = vmul.f32 %v6702, 1.442695
        %v6779 = vpow.pop %v6778
        %v6780 = vmul.f32 %v6703, 1.442695
        %v6781 = vpow.pop %v6780
        %v6782 = vmul.f32 %v6704, 1.442695
        %v6783 = vpow.pop %v6782
        %v6784 = vmul.f32 %v6705, 1.442695
        %v6785 = vpow.pop %v6784
        %v6786 = vmul.f32 %v6706, 1.442695
        %v6787 = vpow.pop %v6786
        %v6788 = vmul.f32 %v6707, 1.442695
        %v6789 = vpow.pop %v6788
        %v6790 = vmul.f32 %v6708, 1.442695
        %v6791 = vpow.pop %v6790
        %v6792 = vmul.f32 %v6709, 1.442695
        %v6793 = vpow.pop %v6792
        %v6794 = vmul.f32 %v6710, 1.442695
        %v6795 = vpow.pop %v6794
        %v6796 = vmul.f32 %v6711, 1.442695
        %v6797 = vpow.pop %v6796
        %v6798 = vmul.f32 %v6712, 1.442695
        %v6799 = vpow.pop %v6798
        %v6800 = vmul.f32 %v6713, 1.442695
        %v6801 = vpow.pop %v6800
        %v6802 = vmul.f32 %v6714, 1.442695
        %v6803 = vpow.pop %v6802
        %v6804 = vmul.f32 %v6715, 1.442695
        %v6805 = vpow.pop %v6804
        %v6806 = vmul.f32 %v6716, 1.442695
        %v6807 = vpow.pop %v6806
        %v6808 = vmul.f32 %v6717, 1.442695
        %v6809 = vpow.pop %v6808
        %v6810 = vmul.f32 %v6718, 1.442695
        %v6811 = vpow.pop %v6810
        %v6812 = vmul.f32 %v6719, 1.442695
        %v6813 = vpow.pop %v6812
        %v6814 = vmul.f32 %v6720, 1.442695
        %v6815 = vpow.pop %v6814
        %v6816 = vmul.f32 %v6721, 1.442695
        %v6817 = vpow.pop %v6816
        %v6818 = vmul.f32 %v6722, 1.442695
        %v6819 = vpow.pop %v6818
        %v6820 = vmul.f32 %v6723, 1.442695
        %v6821 = vpow.pop %v6820
        %v6822 = vmul.f32 %v6724, 1.442695
        %v6823 = vpow.pop %v6822
        %v6824 = vmul.f32 %v6725, 1.442695
        %v6825 = vpow.pop %v6824
        %v6826 = vmul.f32 %v6726, 1.442695
        %v6827 = vpow.pop %v6826
        %v6828 = vmul.f32 %v6727, 1.442695
        %v6829 = vpow.pop %v6828
        %v6830 = vmul.f32 %v6728, 1.442695
        %v6831 = vpow.pop %v6830
        %v6832 = vmul.f32 %v6729, 1.442695
        %v6833 = vpow.pop %v6832
        %v6834 = vmul.f32 %v6730, 1.442695
        %v6835 = vpow.pop %v6834
        %v6836 = vmul.f32 %v6731, 1.442695
        %v6837 = vpow.pop %v6836
        %v6838 = vmul.f32 %v6732, 1.442695
        %v6839 = vpow.pop %v6838
        %v6840 = vmul.f32 %v6733, 1.442695
        %v6841 = vpow.pop %v6840
        %v6842 = vmul.f32 %v6734, 1.442695
        %v6843 = vpow.pop %v6842
        %v6844 = vmul.f32 %v6735, 1.442695
        %v6845 = vpow.pop %v6844
        %v6846 = vmul.f32 %v6736, 1.442695
        %v6847 = vpow.pop %v6846
        %v6848 = vmul.f32 %v6737, 1.442695
        %v6849 = vpow.pop %v6848
        %v6850 = vmul.f32 %v6738, 1.442695
        %v6851 = vpow.pop %v6850
        %v6852 = vmul.f32 %v6739, 1.442695
        %v6853 = vpow.pop %v6852
        %v6854 = vmul.f32 %v6740, 1.442695
        %v6855 = vpow.pop %v6854
        %v6856 = vmul.f32 %v6741, 1.442695
        %v6857 = vpow.pop %v6856
        %v6858 = vmul.f32 %v6742, 1.442695
        %v6859 = vpow.pop %v6858
        %v6860 = vmul.f32 %v6743, 1.442695
        %v6861 = vpow.pop %v6860
        %v6862 = vmul.f32 %v6744, 1.442695
        %v6863 = vpow.pop %v6862
        %v6864 = vmul.f32 %v6745, 1.442695
        %v6865 = vpow.pop %v6864
        %v6866 = vmul.f32 %v6746, 1.442695
        %v6867 = vpow.pop %v6866
        %v6868 = vmul.f32 %v6747, 1.442695
        %v6869 = vpow.pop %v6868
        %v6870 = vmul.f32 %v6748, 1.442695
        %v6871 = vpow.pop %v6870
        %v6872 = vmul.f32 %v6749, 1.442695
        %v6873 = vpow.pop %v6872
        %v6874 = vmul.f32 %v6750, 1.442695
        %v6875 = vpow.pop %v6874
        %v6876 = vmul.f32 %v6751, 1.442695
        %v6877 = vpow.pop %v6876
        %v6878 = vmul.f32 %v6752, 1.442695
        %v6879 = vpow.pop %v6878
        %v6880 = vmul.f32 %v6753, 1.442695
        %v6881 = vpow.pop %v6880
        %v6882 = vadd.f32 %v6755, %v6757
        %6883 = vadd.xlane.f32.xlu0 %v6882
        %v6884 = vpop.xlane.xlu0 %6883
        %v6885 = vadd.f32 %v6759, %v6761
        %6886 = vadd.xlane.f32.xlu0 %v6885
        %v6887 = vpop.xlane.xlu0 %6886
        %v6888 = vadd.f32 %v6763, %v6765
        %6889 = vadd.xlane.f32.xlu0 %v6888
        %v6890 = vpop.xlane.xlu0 %6889
        %v6891 = vadd.f32 %v6767, %v6769
        %6892 = vadd.xlane.f32.xlu0 %v6891
        %v6893 = vpop.xlane.xlu0 %6892
        %v6894 = vadd.f32 %v6771, %v6773
        %6895 = vadd.xlane.f32.xlu0 %v6894
        %v6896 = vpop.xlane.xlu0 %6895
        %v6897 = vadd.f32 %v6775, %v6777
        %6898 = vadd.xlane.f32.xlu0 %v6897
        %v6899 = vpop.xlane.xlu0 %6898
        %v6900 = vadd.f32 %v6779, %v6781
        %6901 = vadd.xlane.f32.xlu0 %v6900
        %v6902 = vpop.xlane.xlu0 %6901
        %v6903 = vadd.f32 %v6783, %v6785
        %6904 = vadd.xlane.f32.xlu0 %v6903
        %v6905 = vpop.xlane.xlu0 %6904
        %v6906 = vadd.f32 %v6787, %v6789
        %6907 = vadd.xlane.f32.xlu0 %v6906
        %v6908 = vpop.xlane.xlu0 %6907
        %v6909 = vadd.f32 %v6791, %v6793
        %6910 = vadd.xlane.f32.xlu0 %v6909
        %v6911 = vpop.xlane.xlu0 %6910
        %v6912 = vadd.f32 %v6795, %v6797
        %6913 = vadd.xlane.f32.xlu0 %v6912
        %v6914 = vpop.xlane.xlu0 %6913
        %v6915 = vadd.f32 %v6799, %v6801
        %6916 = vadd.xlane.f32.xlu0 %v6915
        %v6917 = vpop.xlane.xlu0 %6916
        %v6918 = vadd.f32 %v6803, %v6805
        %6919 = vadd.xlane.f32.xlu0 %v6918
        %v6920 = vpop.xlane.xlu0 %6919
        %v6921 = vadd.f32 %v6807, %v6809
        %6922 = vadd.xlane.f32.xlu0 %v6921
        %v6923 = vpop.xlane.xlu0 %6922
        %v6924 = vadd.f32 %v6811, %v6813
        %6925 = vadd.xlane.f32.xlu0 %v6924
        %v6926 = vpop.xlane.xlu0 %6925
        %v6927 = vadd.f32 %v6815, %v6817
        %6928 = vadd.xlane.f32.xlu0 %v6927
        %v6929 = vpop.xlane.xlu0 %6928
        %v6930 = vadd.f32 %v6819, %v6821
        %6931 = vadd.xlane.f32.xlu0 %v6930
        %v6932 = vpop.xlane.xlu0 %6931
        %v6933 = vadd.f32 %v6823, %v6825
        %6934 = vadd.xlane.f32.xlu0 %v6933
        %v6935 = vpop.xlane.xlu0 %6934
        %v6936 = vadd.f32 %v6827, %v6829
        %6937 = vadd.xlane.f32.xlu0 %v6936
        %v6938 = vpop.xlane.xlu0 %6937
        %v6939 = vadd.f32 %v6831, %v6833
        %6940 = vadd.xlane.f32.xlu0 %v6939
        %v6941 = vpop.xlane.xlu0 %6940
        %v6942 = vadd.f32 %v6835, %v6837
        %6943 = vadd.xlane.f32.xlu0 %v6942
        %v6944 = vpop.xlane.xlu0 %6943
        %v6945 = vadd.f32 %v6839, %v6841
        %6946 = vadd.xlane.f32.xlu0 %v6945
        %v6947 = vpop.xlane.xlu0 %6946
        %v6948 = vadd.f32 %v6843, %v6845
        %6949 = vadd.xlane.f32.xlu0 %v6948
        %v6950 = vpop.xlane.xlu0 %6949
        %v6951 = vadd.f32 %v6847, %v6849
        %6952 = vadd.xlane.f32.xlu0 %v6951
        %v6953 = vpop.xlane.xlu0 %6952
        %v6954 = vadd.f32 %v6851, %v6853
        %6955 = vadd.xlane.f32.xlu0 %v6954
        %v6956 = vpop.xlane.xlu0 %6955
        %v6957 = vadd.f32 %v6855, %v6857
        %6958 = vadd.xlane.f32.xlu0 %v6957
        %v6959 = vpop.xlane.xlu0 %6958
        %v6960 = vadd.f32 %v6859, %v6861
        %6961 = vadd.xlane.f32.xlu0 %v6960
        %v6962 = vpop.xlane.xlu0 %6961
        %v6963 = vadd.f32 %v6863, %v6865
        %6964 = vadd.xlane.f32.xlu0 %v6963
        %v6965 = vpop.xlane.xlu0 %6964
        %v6966 = vadd.f32 %v6867, %v6869
        %6967 = vadd.xlane.f32.xlu0 %v6966
        %v6968 = vpop.xlane.xlu0 %6967
        %v6969 = vadd.f32 %v6871, %v6873
        %6970 = vadd.xlane.f32.xlu0 %v6969
        %v6971 = vpop.xlane.xlu0 %6970
        %v6972 = vadd.f32 %v6875, %v6877
        %6973 = vadd.xlane.f32.xlu0 %v6972
        %v6974 = vpop.xlane.xlu0 %6973
        %v6975 = vadd.f32 %v6879, %v6881
        %6976 = vadd.xlane.f32.xlu0 %v6975
        %v6977 = vpop.xlane.xlu0 %6976
        %v6978 = vpack.c.bf16 %v6759, %v6755
        %v6979 = vpack.c.bf16 %v6761, %v6757
        %v6980 = vpack.c.bf16 %v6767, %v6763
        %v6981 = vpack.c.bf16 %v6769, %v6765
        %v6982 = vpack.c.bf16 %v6775, %v6771
        %v6983 = vpack.c.bf16 %v6777, %v6773
        %v6984 = vpack.c.bf16 %v6783, %v6779
        %v6985 = vpack.c.bf16 %v6785, %v6781
        %v6986 = vpack.c.bf16 %v6791, %v6787
        %v6987 = vpack.c.bf16 %v6793, %v6789
        %v6988 = vpack.c.bf16 %v6799, %v6795
        %v6989 = vpack.c.bf16 %v6801, %v6797
        %v6990 = vpack.c.bf16 %v6807, %v6803
        %v6991 = vpack.c.bf16 %v6809, %v6805
        %v6992 = vpack.c.bf16 %v6815, %v6811
        %v6993 = vpack.c.bf16 %v6817, %v6813
        %v6994 = vpack.c.bf16 %v6823, %v6819
        %v6995 = vpack.c.bf16 %v6825, %v6821
        %v6996 = vpack.c.bf16 %v6831, %v6827
        %v6997 = vpack.c.bf16 %v6833, %v6829
        %v6998 = vpack.c.bf16 %v6839, %v6835
        %v6999 = vpack.c.bf16 %v6841, %v6837
        %v7000 = vpack.c.bf16 %v6847, %v6843
        %v7001 = vpack.c.bf16 %v6849, %v6845
        %v7002 = vpack.c.bf16 %v6855, %v6851
        %v7003 = vpack.c.bf16 %v6857, %v6853
        %v7004 = vpack.c.bf16 %v6863, %v6859
        %v7005 = vpack.c.bf16 %v6865, %v6861
        %v7006 = vpack.c.bf16 %v6871, %v6867
        %v7007 = vpack.c.bf16 %v6873, %v6869
        %v7008 = vpack.c.bf16 %v6879, %v6875
        %v7009 = vpack.c.bf16 %v6881, %v6877
        %7010 = vrot.lane.b32.xlu0 %v3046, 32
        %v7011 = vpop.permute.xlu0 %7010
        %7012 = vrot.lane.b32.xlu0 %v3047, 32
        %v7013 = vpop.permute.xlu0 %7012
        %7014 = vrot.lane.b32.xlu0 %v3048, 32
        %v7015 = vpop.permute.xlu0 %7014
        %7016 = vrot.lane.b32.xlu0 %v3049, 32
        %v7017 = vpop.permute.xlu0 %7016
        %7018 = vrot.lane.b32.xlu0 %v3050, 32
        %v7019 = vpop.permute.xlu0 %7018
        %7020 = vrot.lane.b32.xlu0 %v3051, 32
        %v7021 = vpop.permute.xlu0 %7020
        %7022 = vrot.lane.b32.xlu0 %v3052, 32
        %v7023 = vpop.permute.xlu0 %7022
        %7024 = vrot.lane.b32.xlu0 %v3053, 32
        %v7025 = vpop.permute.xlu0 %7024
        %7026 = vrot.lane.b32.xlu0 %v3054, 32
        %v7027 = vpop.permute.xlu0 %7026
        %7028 = vrot.lane.b32.xlu0 %v3055, 32
        %v7029 = vpop.permute.xlu0 %7028
        %7030 = vrot.lane.b32.xlu0 %v3056, 32
        %v7031 = vpop.permute.xlu0 %7030
        %7032 = vrot.lane.b32.xlu0 %v3057, 32
        %v7033 = vpop.permute.xlu0 %7032
        %7034 = vrot.lane.b32.xlu0 %v3058, 32
        %v7035 = vpop.permute.xlu0 %7034
        %7036 = vrot.lane.b32.xlu0 %v3059, 32
        %v7037 = vpop.permute.xlu0 %7036
        %7038 = vrot.lane.b32.xlu0 %v3060, 32
        %v7039 = vpop.permute.xlu0 %7038
        %7040 = vrot.lane.b32.xlu0 %v3061, 32
        %v7041 = vpop.permute.xlu0 %7040
        %7058 = vmatpush.bf16.msra.mxu0 %v7025
        %7059 = vmatpush.bf16.msra.mxu0 %v7023
        %7060 = vmatpush.bf16.msra.mxu0 %v7021
        %7061 = vmatpush.bf16.msra.mxu0 %v7019
        %7062 = vmatpush.bf16.msra.mxu0 %v7017
        %7063 = vmatpush.bf16.msra.mxu0 %v7015
        %7064 = vmatpush.bf16.msra.mxu0 %v7013
        %7065 = vmatpush.bf16.msra.mxu0 %v7011
        %7066 = vmatmul.bf16.gmra.mxu0 %v6978
        %v7067 = vpop.f32.mrf.mxu0
        %v7068 = vadd.f32 0.0, %v7067
        %v7069 = vpop.f32.mrf.mxu0
        %v7070 = vadd.f32 0.0, %v7069
        %7071 = vmatmul.bf16.gmra.mxu0 %v6980
        %v7072 = vpop.f32.mrf.mxu0
        %v7073 = vadd.f32 0.0, %v7072
        %v7074 = vpop.f32.mrf.mxu0
        %v7075 = vadd.f32 0.0, %v7074
        %7076 = vmatmul.bf16.gmra.mxu0 %v6982
        %v7077 = vpop.f32.mrf.mxu0
        %v7078 = vadd.f32 0.0, %v7077
        %v7079 = vpop.f32.mrf.mxu0
        %v7080 = vadd.f32 0.0, %v7079
        %7081 = vmatmul.bf16.gmra.mxu0 %v6984
        %v7082 = vpop.f32.mrf.mxu0
        %v7083 = vadd.f32 0.0, %v7082
        %v7084 = vpop.f32.mrf.mxu0
        %v7085 = vadd.f32 0.0, %v7084
        %7086 = vmatmul.bf16.gmra.mxu0 %v6986
        %v7087 = vpop.f32.mrf.mxu0
        %v7088 = vadd.f32 0.0, %v7087
        %v7089 = vpop.f32.mrf.mxu0
        %v7090 = vadd.f32 0.0, %v7089
        %7091 = vmatmul.bf16.gmra.mxu0 %v6988
        %v7092 = vpop.f32.mrf.mxu0
        %v7093 = vadd.f32 0.0, %v7092
        %v7094 = vpop.f32.mrf.mxu0
        %v7095 = vadd.f32 0.0, %v7094
        %7096 = vmatmul.bf16.gmra.mxu0 %v6990
        %v7097 = vpop.f32.mrf.mxu0
        %v7098 = vadd.f32 0.0, %v7097
        %v7099 = vpop.f32.mrf.mxu0
        %v7100 = vadd.f32 0.0, %v7099
        %7101 = vmatmul.bf16.gmra.mxu0 %v6992
        %v7102 = vpop.f32.mrf.mxu0
        %v7103 = vadd.f32 0.0, %v7102
        %v7104 = vpop.f32.mrf.mxu0
        %v7105 = vadd.f32 0.0, %v7104
        %7106 = vmatmul.bf16.gmra.mxu0 %v6994
        %v7107 = vpop.f32.mrf.mxu0
        %v7108 = vadd.f32 0.0, %v7107
        %v7109 = vpop.f32.mrf.mxu0
        %v7110 = vadd.f32 0.0, %v7109
        %7111 = vmatmul.bf16.gmra.mxu0 %v6996
        %v7112 = vpop.f32.mrf.mxu0
        %v7113 = vadd.f32 0.0, %v7112
        %v7114 = vpop.f32.mrf.mxu0
        %v7115 = vadd.f32 0.0, %v7114
        %7116 = vmatmul.bf16.gmra.mxu0 %v6998
        %v7117 = vpop.f32.mrf.mxu0
        %v7118 = vadd.f32 0.0, %v7117
        %v7119 = vpop.f32.mrf.mxu0
        %v7120 = vadd.f32 0.0, %v7119
        %7121 = vmatmul.bf16.gmra.mxu0 %v7000
        %v7122 = vpop.f32.mrf.mxu0
        %v7123 = vadd.f32 0.0, %v7122
        %v7124 = vpop.f32.mrf.mxu0
        %v7125 = vadd.f32 0.0, %v7124
        %7126 = vmatmul.bf16.gmra.mxu0 %v7002
        %v7127 = vpop.f32.mrf.mxu0
        %v7128 = vadd.f32 0.0, %v7127
        %v7129 = vpop.f32.mrf.mxu0
        %v7130 = vadd.f32 0.0, %v7129
        %7131 = vmatmul.bf16.gmra.mxu0 %v7004
        %v7132 = vpop.f32.mrf.mxu0
        %v7133 = vadd.f32 0.0, %v7132
        %v7134 = vpop.f32.mrf.mxu0
        %v7135 = vadd.f32 0.0, %v7134
        %7136 = vmatmul.bf16.gmra.mxu0 %v7006
        %v7137 = vpop.f32.mrf.mxu0
        %v7138 = vadd.f32 0.0, %v7137
        %v7139 = vpop.f32.mrf.mxu0
        %v7140 = vadd.f32 0.0, %v7139
        %7141 = vmatmul.bf16.gmra.mxu0 %v7008
        %v7142 = vpop.f32.mrf.mxu0
        %v7143 = vadd.f32 0.0, %v7142
        %v7144 = vpop.f32.mrf.mxu0
        %v7145 = vadd.f32 0.0, %v7144
        %7146 = vdwg.mxu0
        %7147 = vmatpush.bf16.msra.mxu0 %v7041
        %7148 = vmatpush.bf16.msra.mxu0 %v7039
        %7149 = vmatpush.bf16.msra.mxu0 %v7037
        %7150 = vmatpush.bf16.msra.mxu0 %v7035
        %7151 = vmatpush.bf16.msra.mxu0 %v7033
        %7152 = vmatpush.bf16.msra.mxu0 %v7031
        %7153 = vmatpush.bf16.msra.mxu0 %v7029
        %7154 = vmatpush.bf16.msra.mxu0 %v7027
        %7155 = vmatmul.bf16.gmra.mxu0 %v6979
        %v7156 = vpop.f32.mrf.mxu0
        %v7157 = vadd.f32 %v7068, %v7156
        %v7158 = vpop.f32.mrf.mxu0
        %v7159 = vadd.f32 %v7070, %v7158
        %7160 = vmatmul.bf16.gmra.mxu0 %v6981
        %v7161 = vpop.f32.mrf.mxu0
        %v7162 = vadd.f32 %v7073, %v7161
        %v7163 = vpop.f32.mrf.mxu0
        %v7164 = vadd.f32 %v7075, %v7163
        %7165 = vmatmul.bf16.gmra.mxu0 %v6983
        %v7166 = vpop.f32.mrf.mxu0
        %v7167 = vadd.f32 %v7078, %v7166
        %v7168 = vpop.f32.mrf.mxu0
        %v7169 = vadd.f32 %v7080, %v7168
        %7170 = vmatmul.bf16.gmra.mxu0 %v6985
        %v7171 = vpop.f32.mrf.mxu0
        %v7172 = vadd.f32 %v7083, %v7171
        %v7173 = vpop.f32.mrf.mxu0
        %v7174 = vadd.f32 %v7085, %v7173
        %7175 = vmatmul.bf16.gmra.mxu0 %v6987
        %v7176 = vpop.f32.mrf.mxu0
        %v7177 = vadd.f32 %v7088, %v7176
        %v7178 = vpop.f32.mrf.mxu0
        %v7179 = vadd.f32 %v7090, %v7178
        %7180 = vmatmul.bf16.gmra.mxu0 %v6989
        %v7181 = vpop.f32.mrf.mxu0
        %v7182 = vadd.f32 %v7093, %v7181
        %v7183 = vpop.f32.mrf.mxu0
        %v7184 = vadd.f32 %v7095, %v7183
        %7185 = vmatmul.bf16.gmra.mxu0 %v6991
        %v7186 = vpop.f32.mrf.mxu0
        %v7187 = vadd.f32 %v7098, %v7186
        %v7188 = vpop.f32.mrf.mxu0
        %v7189 = vadd.f32 %v7100, %v7188
        %7190 = vmatmul.bf16.gmra.mxu0 %v6993
        %v7191 = vpop.f32.mrf.mxu0
        %v7192 = vadd.f32 %v7103, %v7191
        %v7193 = vpop.f32.mrf.mxu0
        %v7194 = vadd.f32 %v7105, %v7193
        %7195 = vmatmul.bf16.gmra.mxu0 %v6995
        %v7196 = vpop.f32.mrf.mxu0
        %v7197 = vadd.f32 %v7108, %v7196
        %v7198 = vpop.f32.mrf.mxu0
        %v7199 = vadd.f32 %v7110, %v7198
        %7200 = vmatmul.bf16.gmra.mxu0 %v6997
        %v7201 = vpop.f32.mrf.mxu0
        %v7202 = vadd.f32 %v7113, %v7201
        %v7203 = vpop.f32.mrf.mxu0
        %v7204 = vadd.f32 %v7115, %v7203
        %7205 = vmatmul.bf16.gmra.mxu0 %v6999
        %v7206 = vpop.f32.mrf.mxu0
        %v7207 = vadd.f32 %v7118, %v7206
        %v7208 = vpop.f32.mrf.mxu0
        %v7209 = vadd.f32 %v7120, %v7208
        %7210 = vmatmul.bf16.gmra.mxu0 %v7001
        %v7211 = vpop.f32.mrf.mxu0
        %v7212 = vadd.f32 %v7123, %v7211
        %v7213 = vpop.f32.mrf.mxu0
        %v7214 = vadd.f32 %v7125, %v7213
        %7215 = vmatmul.bf16.gmra.mxu0 %v7003
        %v7216 = vpop.f32.mrf.mxu0
        %v7217 = vadd.f32 %v7128, %v7216
        %v7218 = vpop.f32.mrf.mxu0
        %v7219 = vadd.f32 %v7130, %v7218
        %7220 = vmatmul.bf16.gmra.mxu0 %v7005
        %v7221 = vpop.f32.mrf.mxu0
        %v7222 = vadd.f32 %v7133, %v7221
        %v7223 = vpop.f32.mrf.mxu0
        %v7224 = vadd.f32 %v7135, %v7223
        %7225 = vmatmul.bf16.gmra.mxu0 %v7007
        %v7226 = vpop.f32.mrf.mxu0
        %v7227 = vadd.f32 %v7138, %v7226
        %v7228 = vpop.f32.mrf.mxu0
        %v7229 = vadd.f32 %v7140, %v7228
        %7230 = vmatmul.bf16.gmra.mxu0 %v7009
        %v7231 = vpop.f32.mrf.mxu0
        %v7232 = vadd.f32 %v7143, %v7231
        %v7233 = vpop.f32.mrf.mxu0
        %v7234 = vadd.f32 %v7145, %v7233
        %7235 = vdwg.mxu0
        %v7236 = vrcp.pop %v6884
        %v7237 = vrcp.pop %v6887
        %v7238 = vrcp.pop %v6890
        %v7239 = vrcp.pop %v6893
        %v7240 = vrcp.pop %v6896
        %v7241 = vrcp.pop %v6899
        %v7242 = vrcp.pop %v6902
        %v7243 = vrcp.pop %v6905
        %v7244 = vrcp.pop %v6908
        %v7245 = vrcp.pop %v6911
        %v7246 = vrcp.pop %v6914
        %v7247 = vrcp.pop %v6917
        %v7248 = vrcp.pop %v6920
        %v7249 = vrcp.pop %v6923
        %v7250 = vrcp.pop %v6926
        %v7251 = vrcp.pop %v6929
        %v7252 = vrcp.pop %v6932
        %v7253 = vrcp.pop %v6935
        %v7254 = vrcp.pop %v6938
        %v7255 = vrcp.pop %v6941
        %v7256 = vrcp.pop %v6944
        %v7257 = vrcp.pop %v6947
        %v7258 = vrcp.pop %v6950
        %v7259 = vrcp.pop %v6953
        %v7260 = vrcp.pop %v6956
        %v7261 = vrcp.pop %v6959
        %v7262 = vrcp.pop %v6962
        %v7263 = vrcp.pop %v6965
        %v7264 = vrcp.pop %v6968
        %v7265 = vrcp.pop %v6971
        %v7266 = vrcp.pop %v6974
        %v7267 = vrcp.pop %v6977
        %v7268 = vmul.f32 %v7157, %v7236
        %v7269 = vmul.f32 %v7159, %v7237
        %v7270 = vmul.f32 %v7162, %v7238
        %v7271 = vmul.f32 %v7164, %v7239
        %v7272 = vmul.f32 %v7167, %v7240
        %v7273 = vmul.f32 %v7169, %v7241
        %v7274 = vmul.f32 %v7172, %v7242
        %v7275 = vmul.f32 %v7174, %v7243
        %v7276 = vmul.f32 %v7177, %v7244
        %v7277 = vmul.f32 %v7179, %v7245
        %v7278 = vmul.f32 %v7182, %v7246
        %v7279 = vmul.f32 %v7184, %v7247
        %v7280 = vmul.f32 %v7187, %v7248
        %v7281 = vmul.f32 %v7189, %v7249
        %v7282 = vmul.f32 %v7192, %v7250
        %v7283 = vmul.f32 %v7194, %v7251
        %v7284 = vmul.f32 %v7197, %v7252
        %v7285 = vmul.f32 %v7199, %v7253
        %v7286 = vmul.f32 %v7202, %v7254
        %v7287 = vmul.f32 %v7204, %v7255
        %v7288 = vmul.f32 %v7207, %v7256
        %v7289 = vmul.f32 %v7209, %v7257
        %v7290 = vmul.f32 %v7212, %v7258
        %v7291 = vmul.f32 %v7214, %v7259
        %v7292 = vmul.f32 %v7217, %v7260
        %v7293 = vmul.f32 %v7219, %v7261
        %v7294 = vmul.f32 %v7222, %v7262
        %v7295 = vmul.f32 %v7224, %v7263
        %v7296 = vmul.f32 %v7227, %v7264
        %v7297 = vmul.f32 %v7229, %v7265
        %v7298 = vmul.f32 %v7232, %v7266
        %v7299 = vmul.f32 %v7234, %v7267
        %7300 = vrot.lane.b32.xlu0 %v2131, 32
        %v7301 = vpop.permute.xlu0 %7300
        %7302 = vrot.lane.b32.xlu0 %v2132, 32
        %v7303 = vpop.permute.xlu0 %7302
        %7304 = vrot.lane.b32.xlu0 %v2133, 32
        %v7305 = vpop.permute.xlu0 %7304
        %7306 = vrot.lane.b32.xlu0 %v2134, 32
        %v7307 = vpop.permute.xlu0 %7306
        %7308 = vrot.lane.b32.xlu0 %v2135, 32
        %v7309 = vpop.permute.xlu0 %7308
        %7310 = vrot.lane.b32.xlu0 %v2136, 32
        %v7311 = vpop.permute.xlu0 %7310
        %7312 = vrot.lane.b32.xlu0 %v2137, 32
        %v7313 = vpop.permute.xlu0 %7312
        %7314 = vrot.lane.b32.xlu0 %v2138, 32
        %v7315 = vpop.permute.xlu0 %7314
        %7316 = vrot.lane.b32.xlu0 %v2139, 32
        %v7317 = vpop.permute.xlu0 %7316
        %7318 = vrot.lane.b32.xlu0 %v2140, 32
        %v7319 = vpop.permute.xlu0 %7318
        %7320 = vrot.lane.b32.xlu0 %v2141, 32
        %v7321 = vpop.permute.xlu0 %7320
        %7322 = vrot.lane.b32.xlu0 %v2142, 32
        %v7323 = vpop.permute.xlu0 %7322
        %7324 = vrot.lane.b32.xlu0 %v2143, 32
        %v7325 = vpop.permute.xlu0 %7324
        %7326 = vrot.lane.b32.xlu0 %v2144, 32
        %v7327 = vpop.permute.xlu0 %7326
        %7328 = vrot.lane.b32.xlu0 %v2145, 32
        %v7329 = vpop.permute.xlu0 %7328
        %7330 = vrot.lane.b32.xlu0 %v2146, 32
        %v7331 = vpop.permute.xlu0 %7330
        %7332 = vrot.lane.b32.xlu0 %v2147, 32
        %v7333 = vpop.permute.xlu0 %7332
        %7334 = vrot.lane.b32.xlu0 %v2148, 32
        %v7335 = vpop.permute.xlu0 %7334
        %7336 = vrot.lane.b32.xlu0 %v2149, 32
        %v7337 = vpop.permute.xlu0 %7336
        %7338 = vrot.lane.b32.xlu0 %v2150, 32
        %v7339 = vpop.permute.xlu0 %7338
        %7340 = vrot.lane.b32.xlu0 %v2151, 32
        %v7341 = vpop.permute.xlu0 %7340
        %7342 = vrot.lane.b32.xlu0 %v2152, 32
        %v7343 = vpop.permute.xlu0 %7342
        %7344 = vrot.lane.b32.xlu0 %v2153, 32
        %v7345 = vpop.permute.xlu0 %7344
        %7346 = vrot.lane.b32.xlu0 %v2154, 32
        %v7347 = vpop.permute.xlu0 %7346
        %7348 = vrot.lane.b32.xlu0 %v2155, 32
        %v7349 = vpop.permute.xlu0 %7348
        %7350 = vrot.lane.b32.xlu0 %v2156, 32
        %v7351 = vpop.permute.xlu0 %7350
        %7352 = vrot.lane.b32.xlu0 %v2157, 32
        %v7353 = vpop.permute.xlu0 %7352
        %7354 = vrot.lane.b32.xlu0 %v2158, 32
        %v7355 = vpop.permute.xlu0 %7354
        %7356 = vrot.lane.b32.xlu0 %v2159, 32
        %v7357 = vpop.permute.xlu0 %7356
        %7358 = vrot.lane.b32.xlu0 %v2160, 32
        %v7359 = vpop.permute.xlu0 %7358
        %7360 = vrot.lane.b32.xlu0 %v2161, 32
        %v7361 = vpop.permute.xlu0 %7360
        %7362 = vrot.lane.b32.xlu0 %v2162, 32
        %v7363 = vpop.permute.xlu0 %7362
        %v7396 = vadd.f32 %v7268, %v7301
        %v7397 = vadd.f32 %v7269, %v7303
        %v7398 = vadd.f32 %v7270, %v7305
        %v7399 = vadd.f32 %v7271, %v7307
        %v7400 = vadd.f32 %v7272, %v7309
        %v7401 = vadd.f32 %v7273, %v7311
        %v7402 = vadd.f32 %v7274, %v7313
        %v7403 = vadd.f32 %v7275, %v7315
        %v7404 = vadd.f32 %v7276, %v7317
        %v7405 = vadd.f32 %v7277, %v7319
        %v7406 = vadd.f32 %v7278, %v7321
        %v7407 = vadd.f32 %v7279, %v7323
        %v7408 = vadd.f32 %v7280, %v7325
        %v7409 = vadd.f32 %v7281, %v7327
        %v7410 = vadd.f32 %v7282, %v7329
        %v7411 = vadd.f32 %v7283, %v7331
        %v7412 = vadd.f32 %v7284, %v7333
        %v7413 = vadd.f32 %v7285, %v7335
        %v7414 = vadd.f32 %v7286, %v7337
        %v7415 = vadd.f32 %v7287, %v7339
        %v7416 = vadd.f32 %v7288, %v7341
        %v7417 = vadd.f32 %v7289, %v7343
        %v7418 = vadd.f32 %v7290, %v7345
        %v7419 = vadd.f32 %v7291, %v7347
        %v7420 = vadd.f32 %v7292, %v7349
        %v7421 = vadd.f32 %v7293, %v7351
        %v7422 = vadd.f32 %v7294, %v7353
        %v7423 = vadd.f32 %v7295, %v7355
        %v7424 = vadd.f32 %v7296, %v7357
        %v7425 = vadd.f32 %v7297, %v7359
        %v7426 = vadd.f32 %v7298, %v7361
        %v7427 = vadd.f32 %v7299, %v7363
        %v7428 = vpack.c.bf16 %v7397, %v7396
        %v7429 = vpack.c.bf16 %v7399, %v7398
        %v7430 = vpack.c.bf16 %v7401, %v7400
        %v7431 = vpack.c.bf16 %v7403, %v7402
        %v7432 = vpack.c.bf16 %v7405, %v7404
        %v7433 = vpack.c.bf16 %v7407, %v7406
        %v7434 = vpack.c.bf16 %v7409, %v7408
        %v7435 = vpack.c.bf16 %v7411, %v7410
        %v7436 = vpack.c.bf16 %v7413, %v7412
        %v7437 = vpack.c.bf16 %v7415, %v7414
        %v7438 = vpack.c.bf16 %v7417, %v7416
        %v7439 = vpack.c.bf16 %v7419, %v7418
        %v7440 = vpack.c.bf16 %v7421, %v7420
        %v7441 = vpack.c.bf16 %v7423, %v7422
        %v7442 = vpack.c.bf16 %v7425, %v7424
        %v7443 = vpack.c.bf16 %v7427, %v7426
        %v7448 = vunpack.c.l.b16 %v2175
        %v7449 = vunpack.c.l.b16 %v2176
        %v7450 = vunpack.c.l.b16 %v2177
        %v7451 = vunpack.c.l.b16 %v2178
        %v7452 = vpack.c.b16 %v7449, %v7448
        %v7453 = vpack.c.b16 %v7451, %v7450
        %v7457 = vsel %vm4600, %v7428, 0
        %v7460 = vsel %vm4600, %v7429, 0
        %v7463 = vsel %vm4600, %v7430, 0
        %v7466 = vsel %vm4600, %v7431, 0
        %v7469 = vsel %vm4600, %v7432, 0
        %v7472 = vsel %vm4600, %v7433, 0
        %v7475 = vsel %vm4600, %v7434, 0
        %v7478 = vsel %vm4600, %v7435, 0
        %v7481 = vsel %vm4600, %v7436, 0
        %v7484 = vsel %vm4600, %v7437, 0
        %v7487 = vsel %vm4600, %v7438, 0
        %v7490 = vsel %vm4600, %v7439, 0
        %v7493 = vsel %vm4600, %v7440, 0
        %v7496 = vsel %vm4600, %v7441, 0
        %v7499 = vsel %vm4600, %v7442, 0
        %v7502 = vsel %vm4600, %v7443, 0
        %7504 = vmatpush.bf16.msra.mxu0 0
        %7505 = vmatpush.bf16.msra.mxu0 0
        %7506 = vmatpush.bf16.msra.mxu0 0
        %7507 = vmatpush.bf16.msra.mxu0 0
        %7508 = vmatpush.bf16.msra.mxu0 0
        %7509 = vmatpush.bf16.msra.mxu0 0
        %7510 = vmatpush.bf16.msra.mxu0 %v7453
        %7511 = vmatpush.bf16.msra.mxu0 %v7452
        %7512 = vmatmul.bf16.gmra.mxu0 %v7457
        %v7513 = vpop.f32.mrf.mxu0
        %v7514 = vadd.f32 0.0, %v7513
        %v7515 = vpop.f32.mrf.mxu0
        %v7516 = vadd.f32 0.0, %v7515
        %7517 = vmatmul.bf16.gmra.mxu0 %v7460
        %v7518 = vpop.f32.mrf.mxu0
        %v7519 = vadd.f32 0.0, %v7518
        %v7520 = vpop.f32.mrf.mxu0
        %v7521 = vadd.f32 0.0, %v7520
        %7522 = vmatmul.bf16.gmra.mxu0 %v7463
        %v7523 = vpop.f32.mrf.mxu0
        %v7524 = vadd.f32 0.0, %v7523
        %v7525 = vpop.f32.mrf.mxu0
        %v7526 = vadd.f32 0.0, %v7525
        %7527 = vmatmul.bf16.gmra.mxu0 %v7466
        %v7528 = vpop.f32.mrf.mxu0
        %v7529 = vadd.f32 0.0, %v7528
        %v7530 = vpop.f32.mrf.mxu0
        %v7531 = vadd.f32 0.0, %v7530
        %7532 = vmatmul.bf16.gmra.mxu0 %v7469
        %v7533 = vpop.f32.mrf.mxu0
        %v7534 = vadd.f32 0.0, %v7533
        %v7535 = vpop.f32.mrf.mxu0
        %v7536 = vadd.f32 0.0, %v7535
        %7537 = vmatmul.bf16.gmra.mxu0 %v7472
        %v7538 = vpop.f32.mrf.mxu0
        %v7539 = vadd.f32 0.0, %v7538
        %v7540 = vpop.f32.mrf.mxu0
        %v7541 = vadd.f32 0.0, %v7540
        %7542 = vmatmul.bf16.gmra.mxu0 %v7475
        %v7543 = vpop.f32.mrf.mxu0
        %v7544 = vadd.f32 0.0, %v7543
        %v7545 = vpop.f32.mrf.mxu0
        %v7546 = vadd.f32 0.0, %v7545
        %7547 = vmatmul.bf16.gmra.mxu0 %v7478
        %v7548 = vpop.f32.mrf.mxu0
        %v7549 = vadd.f32 0.0, %v7548
        %v7550 = vpop.f32.mrf.mxu0
        %v7551 = vadd.f32 0.0, %v7550
        %7552 = vmatmul.bf16.gmra.mxu0 %v7481
        %v7553 = vpop.f32.mrf.mxu0
        %v7554 = vadd.f32 0.0, %v7553
        %v7555 = vpop.f32.mrf.mxu0
        %v7556 = vadd.f32 0.0, %v7555
        %7557 = vmatmul.bf16.gmra.mxu0 %v7484
        %v7558 = vpop.f32.mrf.mxu0
        %v7559 = vadd.f32 0.0, %v7558
        %v7560 = vpop.f32.mrf.mxu0
        %v7561 = vadd.f32 0.0, %v7560
        %7562 = vmatmul.bf16.gmra.mxu0 %v7487
        %v7563 = vpop.f32.mrf.mxu0
        %v7564 = vadd.f32 0.0, %v7563
        %v7565 = vpop.f32.mrf.mxu0
        %v7566 = vadd.f32 0.0, %v7565
        %7567 = vmatmul.bf16.gmra.mxu0 %v7490
        %v7568 = vpop.f32.mrf.mxu0
        %v7569 = vadd.f32 0.0, %v7568
        %v7570 = vpop.f32.mrf.mxu0
        %v7571 = vadd.f32 0.0, %v7570
        %7572 = vmatmul.bf16.gmra.mxu0 %v7493
        %v7573 = vpop.f32.mrf.mxu0
        %v7574 = vadd.f32 0.0, %v7573
        %v7575 = vpop.f32.mrf.mxu0
        %v7576 = vadd.f32 0.0, %v7575
        %7577 = vmatmul.bf16.gmra.mxu0 %v7496
        %v7578 = vpop.f32.mrf.mxu0
        %v7579 = vadd.f32 0.0, %v7578
        %v7580 = vpop.f32.mrf.mxu0
        %v7581 = vadd.f32 0.0, %v7580
        %7582 = vmatmul.bf16.gmra.mxu0 %v7499
        %v7583 = vpop.f32.mrf.mxu0
        %v7584 = vadd.f32 0.0, %v7583
        %v7585 = vpop.f32.mrf.mxu0
        %v7586 = vadd.f32 0.0, %v7585
        %7587 = vmatmul.bf16.gmra.mxu0 %v7502
        %v7588 = vpop.f32.mrf.mxu0
        %v7589 = vadd.f32 0.0, %v7588
        %v7590 = vpop.f32.mrf.mxu0
        %v7591 = vadd.f32 0.0, %v7590
        %7592 = vdwg.mxu0
        %v7593 = vadd.f32 %v6224, %v7514
        %v7594 = vadd.f32 %v6225, %v7516
        %v7595 = vadd.f32 %v6226, %v7519
        %v7596 = vadd.f32 %v6227, %v7521
        %v7597 = vadd.f32 %v6228, %v7524
        %v7598 = vadd.f32 %v6229, %v7526
        %v7599 = vadd.f32 %v6230, %v7529
        %v7600 = vadd.f32 %v6231, %v7531
        %v7601 = vadd.f32 %v6232, %v7534
        %v7602 = vadd.f32 %v6233, %v7536
        %v7603 = vadd.f32 %v6234, %v7539
        %v7604 = vadd.f32 %v6235, %v7541
        %v7605 = vadd.f32 %v6236, %v7544
        %v7606 = vadd.f32 %v6237, %v7546
        %v7607 = vadd.f32 %v6238, %v7549
        %v7608 = vadd.f32 %v6239, %v7551
        %v7609 = vadd.f32 %v6240, %v7554
        %v7610 = vadd.f32 %v6241, %v7556
        %v7611 = vadd.f32 %v6242, %v7559
        %v7612 = vadd.f32 %v6243, %v7561
        %v7613 = vadd.f32 %v6244, %v7564
        %v7614 = vadd.f32 %v6245, %v7566
        %v7615 = vadd.f32 %v6246, %v7569
        %v7616 = vadd.f32 %v6247, %v7571
        %v7617 = vadd.f32 %v6248, %v7574
        %v7618 = vadd.f32 %v6249, %v7576
        %v7619 = vadd.f32 %v6250, %v7579
        %v7620 = vadd.f32 %v6251, %v7581
        %v7621 = vadd.f32 %v6252, %v7584
        %v7622 = vadd.f32 %v6253, %v7586
        %v7623 = vadd.f32 %v6254, %v7589
        %v7624 = vadd.f32 %v6255, %v7591
        %v7625 = vadd.f32 %v505, %v7593
        %v7626 = vadd.f32 %v506, %v7594
        %v7627 = vadd.f32 %v507, %v7595
        %v7628 = vadd.f32 %v508, %v7596
        %v7629 = vadd.f32 %v509, %v7597
        %v7630 = vadd.f32 %v510, %v7598
        %v7631 = vadd.f32 %v511, %v7599
        %v7632 = vadd.f32 %v512, %v7600
        %v7633 = vadd.f32 %v513, %v7601
        %v7634 = vadd.f32 %v514, %v7602
        %v7635 = vadd.f32 %v515, %v7603
        %v7636 = vadd.f32 %v516, %v7604
        %v7637 = vadd.f32 %v517, %v7605
        %v7638 = vadd.f32 %v518, %v7606
        %v7639 = vadd.f32 %v519, %v7607
        %v7640 = vadd.f32 %v520, %v7608
        %v7641 = vadd.f32 %v521, %v7609
        %v7642 = vadd.f32 %v522, %v7610
        %v7643 = vadd.f32 %v523, %v7611
        %v7644 = vadd.f32 %v524, %v7612
        %v7645 = vadd.f32 %v525, %v7613
        %v7646 = vadd.f32 %v526, %v7614
        %v7647 = vadd.f32 %v527, %v7615
        %v7648 = vadd.f32 %v528, %v7616
        %v7649 = vadd.f32 %v529, %v7617
        %v7650 = vadd.f32 %v530, %v7618
        %v7651 = vadd.f32 %v531, %v7619
        %v7652 = vadd.f32 %v532, %v7620
        %v7653 = vadd.f32 %v533, %v7621
        %v7654 = vadd.f32 %v534, %v7622
        %v7655 = vadd.f32 %v535, %v7623
        %v7656 = vadd.f32 %v536, %v7624
        %v7657 = vld [vmem:[%s6] sm:$0x1]
        %v7659 = vperm.slane %v7657, 0
        %v7661 = vadd.f32 %v7625, %v7659
        %v7662 = vadd.f32 %v7626, %v7659
        %v7663 = vadd.f32 %v7627, %v7659
        %v7664 = vadd.f32 %v7628, %v7659
        %v7665 = vadd.f32 %v7629, %v7659
        %v7666 = vadd.f32 %v7630, %v7659
        %v7667 = vadd.f32 %v7631, %v7659
        %v7668 = vadd.f32 %v7632, %v7659
        %v7669 = vadd.f32 %v7633, %v7659
        %v7670 = vadd.f32 %v7634, %v7659
        %v7671 = vadd.f32 %v7635, %v7659
        %v7672 = vadd.f32 %v7636, %v7659
        %v7673 = vadd.f32 %v7637, %v7659
        %v7674 = vadd.f32 %v7638, %v7659
        %v7675 = vadd.f32 %v7639, %v7659
        %v7676 = vadd.f32 %v7640, %v7659
        %v7677 = vadd.f32 %v7641, %v7659
        %v7678 = vadd.f32 %v7642, %v7659
        %v7679 = vadd.f32 %v7643, %v7659
        %v7680 = vadd.f32 %v7644, %v7659
        %v7681 = vadd.f32 %v7645, %v7659
        %v7682 = vadd.f32 %v7646, %v7659
        %v7683 = vadd.f32 %v7647, %v7659
        %v7684 = vadd.f32 %v7648, %v7659
        %v7685 = vadd.f32 %v7649, %v7659
        %v7686 = vadd.f32 %v7650, %v7659
        %v7687 = vadd.f32 %v7651, %v7659
        %v7688 = vadd.f32 %v7652, %v7659
        %v7689 = vadd.f32 %v7653, %v7659
        %v7690 = vadd.f32 %v7654, %v7659
        %v7691 = vadd.f32 %v7655, %v7659
        %v7692 = vadd.f32 %v7656, %v7659
        %v7693 = vpack.c.bf16 %v7662, %v7661
        %v7694 = vpack.c.bf16 %v7664, %v7663
        %v7695 = vpack.c.bf16 %v7666, %v7665
        %v7696 = vpack.c.bf16 %v7668, %v7667
        %v7697 = vpack.c.bf16 %v7670, %v7669
        %v7698 = vpack.c.bf16 %v7672, %v7671
        %v7699 = vpack.c.bf16 %v7674, %v7673
        %v7700 = vpack.c.bf16 %v7676, %v7675
        %v7701 = vpack.c.bf16 %v7678, %v7677
        %v7702 = vpack.c.bf16 %v7680, %v7679
        %v7703 = vpack.c.bf16 %v7682, %v7681
        %v7704 = vpack.c.bf16 %v7684, %v7683
        %v7705 = vpack.c.bf16 %v7686, %v7685
        %v7706 = vpack.c.bf16 %v7688, %v7687
        %v7707 = vpack.c.bf16 %v7690, %v7689
        %v7708 = vpack.c.bf16 %v7692, %v7691
        %v7709 = vld [vmem:[#allocation11] sm:$0xff]
        %v7710 = vld [vmem:[#allocation11 + $0x8] sm:$0xff]
        %v7711 = vld [vmem:[#allocation11 + $0x10] sm:$0xff]
        %v7712 = vld [vmem:[#allocation11 + $0x18] sm:$0xff]
        %v7713 = vld [vmem:[#allocation11 + $0x20] sm:$0xff]
        %v7714 = vld [vmem:[#allocation11 + $0x28] sm:$0xff]
        %v7715 = vld [vmem:[#allocation11 + $0x30] sm:$0xff]
        %v7716 = vld [vmem:[#allocation11 + $0x38] sm:$0xff]
        %v7717 = vld [vmem:[#allocation11 + $0x40] sm:$0xff]
        %v7718 = vld [vmem:[#allocation11 + $0x48] sm:$0xff]
        %v7719 = vld [vmem:[#allocation11 + $0x50] sm:$0xff]
        %v7720 = vld [vmem:[#allocation11 + $0x58] sm:$0xff]
        %v7721 = vld [vmem:[#allocation11 + $0x60] sm:$0xff]
        %v7722 = vld [vmem:[#allocation11 + $0x68] sm:$0xff]
        %v7723 = vld [vmem:[#allocation11 + $0x70] sm:$0xff]
        %v7724 = vld [vmem:[#allocation11 + $0x78] sm:$0xff]
        %v7725 = vld [vmem:[%s8] sm:$0x3]
        %v7727 = vperm.slane %v7725, 0
        %v7728 = vperm.slane %v7725, 1
        %v7747 = vunpack.c.l.b16 %v7709
        %v7748 = vunpack.c.h.b16 %v7709
        %v7749 = vunpack.c.l.b16 %v7710
        %v7750 = vunpack.c.h.b16 %v7710
        %v7751 = vunpack.c.l.b16 %v7711
        %v7752 = vunpack.c.h.b16 %v7711
        %v7753 = vunpack.c.l.b16 %v7712
        %v7754 = vunpack.c.h.b16 %v7712
        %v7755 = vunpack.c.l.b16 %v7713
        %v7756 = vunpack.c.h.b16 %v7713
        %v7757 = vunpack.c.l.b16 %v7714
        %v7758 = vunpack.c.h.b16 %v7714
        %v7759 = vunpack.c.l.b16 %v7715
        %v7760 = vunpack.c.h.b16 %v7715
        %v7761 = vunpack.c.l.b16 %v7716
        %v7762 = vunpack.c.h.b16 %v7716
        %v7763 = vunpack.c.l.b16 %v7717
        %v7764 = vunpack.c.h.b16 %v7717
        %v7765 = vunpack.c.l.b16 %v7718
        %v7766 = vunpack.c.h.b16 %v7718
        %v7767 = vunpack.c.l.b16 %v7719
        %v7768 = vunpack.c.h.b16 %v7719
        %v7769 = vunpack.c.l.b16 %v7720
        %v7770 = vunpack.c.h.b16 %v7720
        %v7771 = vunpack.c.l.b16 %v7721
        %v7772 = vunpack.c.h.b16 %v7721
        %v7773 = vunpack.c.l.b16 %v7722
        %v7774 = vunpack.c.h.b16 %v7722
        %v7775 = vunpack.c.l.b16 %v7723
        %v7776 = vunpack.c.h.b16 %v7723
        %v7777 = vunpack.c.l.b16 %v7724
        %v7778 = vunpack.c.h.b16 %v7724
        %v7779 = vpack.c.b16 %v7749, %v7747
        %v7780 = vpack.c.b16 %v7750, %v7748
        %v7781 = vpack.c.b16 %v7753, %v7751
        %v7782 = vpack.c.b16 %v7754, %v7752
        %v7783 = vpack.c.b16 %v7757, %v7755
        %v7784 = vpack.c.b16 %v7758, %v7756
        %v7785 = vpack.c.b16 %v7761, %v7759
        %v7786 = vpack.c.b16 %v7762, %v7760
        %v7787 = vpack.c.b16 %v7765, %v7763
        %v7788 = vpack.c.b16 %v7766, %v7764
        %v7789 = vpack.c.b16 %v7769, %v7767
        %v7790 = vpack.c.b16 %v7770, %v7768
        %v7791 = vpack.c.b16 %v7773, %v7771
        %v7792 = vpack.c.b16 %v7774, %v7772
        %v7793 = vpack.c.b16 %v7777, %v7775
        %v7794 = vpack.c.b16 %v7778, %v7776
        %7811 = vmatpush.bf16.msra.mxu0 %v7793
        %7812 = vmatpush.bf16.msra.mxu0 %v7791
        %7813 = vmatpush.bf16.msra.mxu0 %v7789
        %7814 = vmatpush.bf16.msra.mxu0 %v7787
        %7815 = vmatpush.bf16.msra.mxu0 %v7785
        %7816 = vmatpush.bf16.msra.mxu0 %v7783
        %7817 = vmatpush.bf16.msra.mxu0 %v7781
        %7818 = vmatpush.bf16.msra.mxu0 %v7779
        %7819 = vmatmul.bf16.gmra.mxu0 %v7693
        %v7820 = vpop.f32.mrf.mxu0
        %v7821 = vadd.f32 %v7727, %v7820
        %v7822 = vpop.f32.mrf.mxu0
        %v7823 = vadd.f32 %v7727, %v7822
        %7824 = vmatmul.bf16.gmra.mxu0 %v7694
        %v7825 = vpop.f32.mrf.mxu0
        %v7826 = vadd.f32 %v7727, %v7825
        %v7827 = vpop.f32.mrf.mxu0
        %v7828 = vadd.f32 %v7727, %v7827
        %7829 = vmatmul.bf16.gmra.mxu0 %v7695
        %v7830 = vpop.f32.mrf.mxu0
        %v7831 = vadd.f32 %v7727, %v7830
        %v7832 = vpop.f32.mrf.mxu0
        %v7833 = vadd.f32 %v7727, %v7832
        %7834 = vmatmul.bf16.gmra.mxu0 %v7696
        %v7835 = vpop.f32.mrf.mxu0
        %v7836 = vadd.f32 %v7727, %v7835
        %v7837 = vpop.f32.mrf.mxu0
        %v7838 = vadd.f32 %v7727, %v7837
        %7839 = vmatmul.bf16.gmra.mxu0 %v7697
        %v7840 = vpop.f32.mrf.mxu0
        %v7841 = vadd.f32 %v7727, %v7840
        %v7842 = vpop.f32.mrf.mxu0
        %v7843 = vadd.f32 %v7727, %v7842
        %7844 = vmatmul.bf16.gmra.mxu0 %v7698
        %v7845 = vpop.f32.mrf.mxu0
        %v7846 = vadd.f32 %v7727, %v7845
        %v7847 = vpop.f32.mrf.mxu0
        %v7848 = vadd.f32 %v7727, %v7847
        %7849 = vmatmul.bf16.gmra.mxu0 %v7699
        %v7850 = vpop.f32.mrf.mxu0
        %v7851 = vadd.f32 %v7727, %v7850
        %v7852 = vpop.f32.mrf.mxu0
        %v7853 = vadd.f32 %v7727, %v7852
        %7854 = vmatmul.bf16.gmra.mxu0 %v7700
        %v7855 = vpop.f32.mrf.mxu0
        %v7856 = vadd.f32 %v7727, %v7855
        %v7857 = vpop.f32.mrf.mxu0
        %v7858 = vadd.f32 %v7727, %v7857
        %7859 = vmatmul.bf16.gmra.mxu0 %v7701
        %v7860 = vpop.f32.mrf.mxu0
        %v7861 = vadd.f32 %v7727, %v7860
        %v7862 = vpop.f32.mrf.mxu0
        %v7863 = vadd.f32 %v7727, %v7862
        %7864 = vmatmul.bf16.gmra.mxu0 %v7702
        %v7865 = vpop.f32.mrf.mxu0
        %v7866 = vadd.f32 %v7727, %v7865
        %v7867 = vpop.f32.mrf.mxu0
        %v7868 = vadd.f32 %v7727, %v7867
        %7869 = vmatmul.bf16.gmra.mxu0 %v7703
        %v7870 = vpop.f32.mrf.mxu0
        %v7871 = vadd.f32 %v7727, %v7870
        %v7872 = vpop.f32.mrf.mxu0
        %v7873 = vadd.f32 %v7727, %v7872
        %7874 = vmatmul.bf16.gmra.mxu0 %v7704
        %v7875 = vpop.f32.mrf.mxu0
        %v7876 = vadd.f32 %v7727, %v7875
        %v7877 = vpop.f32.mrf.mxu0
        %v7878 = vadd.f32 %v7727, %v7877
        %7879 = vmatmul.bf16.gmra.mxu0 %v7705
        %v7880 = vpop.f32.mrf.mxu0
        %v7881 = vadd.f32 %v7727, %v7880
        %v7882 = vpop.f32.mrf.mxu0
        %v7883 = vadd.f32 %v7727, %v7882
        %7884 = vmatmul.bf16.gmra.mxu0 %v7706
        %v7885 = vpop.f32.mrf.mxu0
        %v7886 = vadd.f32 %v7727, %v7885
        %v7887 = vpop.f32.mrf.mxu0
        %v7888 = vadd.f32 %v7727, %v7887
        %7889 = vmatmul.bf16.gmra.mxu0 %v7707
        %v7890 = vpop.f32.mrf.mxu0
        %v7891 = vadd.f32 %v7727, %v7890
        %v7892 = vpop.f32.mrf.mxu0
        %v7893 = vadd.f32 %v7727, %v7892
        %7894 = vmatmul.bf16.gmra.mxu0 %v7708
        %v7895 = vpop.f32.mrf.mxu0
        %v7896 = vadd.f32 %v7727, %v7895
        %v7897 = vpop.f32.mrf.mxu0
        %v7898 = vadd.f32 %v7727, %v7897
        %7899 = vdwg.mxu0
        %7900 = vmatpush.bf16.msra.mxu0 %v7794
        %7901 = vmatpush.bf16.msra.mxu0 %v7792
        %7902 = vmatpush.bf16.msra.mxu0 %v7790
        %7903 = vmatpush.bf16.msra.mxu0 %v7788
        %7904 = vmatpush.bf16.msra.mxu0 %v7786
        %7905 = vmatpush.bf16.msra.mxu0 %v7784
        %7906 = vmatpush.bf16.msra.mxu0 %v7782
        %7907 = vmatpush.bf16.msra.mxu0 %v7780
        %7908 = vmatmul.bf16.gmra.mxu0 %v7693
        %v7909 = vpop.f32.mrf.mxu0
        %v7910 = vadd.f32 %v7728, %v7909
        %v7911 = vpop.f32.mrf.mxu0
        %v7912 = vadd.f32 %v7728, %v7911
        %7913 = vmatmul.bf16.gmra.mxu0 %v7694
        %v7914 = vpop.f32.mrf.mxu0
        %v7915 = vadd.f32 %v7728, %v7914
        %v7916 = vpop.f32.mrf.mxu0
        %v7917 = vadd.f32 %v7728, %v7916
        %7918 = vmatmul.bf16.gmra.mxu0 %v7695
        %v7919 = vpop.f32.mrf.mxu0
        %v7920 = vadd.f32 %v7728, %v7919
        %v7921 = vpop.f32.mrf.mxu0
        %v7922 = vadd.f32 %v7728, %v7921
        %7923 = vmatmul.bf16.gmra.mxu0 %v7696
        %v7924 = vpop.f32.mrf.mxu0
        %v7925 = vadd.f32 %v7728, %v7924
        %v7926 = vpop.f32.mrf.mxu0
        %v7927 = vadd.f32 %v7728, %v7926
        %7928 = vmatmul.bf16.gmra.mxu0 %v7697
        %v7929 = vpop.f32.mrf.mxu0
        %v7930 = vadd.f32 %v7728, %v7929
        %v7931 = vpop.f32.mrf.mxu0
        %v7932 = vadd.f32 %v7728, %v7931
        %7933 = vmatmul.bf16.gmra.mxu0 %v7698
        %v7934 = vpop.f32.mrf.mxu0
        %v7935 = vadd.f32 %v7728, %v7934
        %v7936 = vpop.f32.mrf.mxu0
        %v7937 = vadd.f32 %v7728, %v7936
        %7938 = vmatmul.bf16.gmra.mxu0 %v7699
        %v7939 = vpop.f32.mrf.mxu0
        %v7940 = vadd.f32 %v7728, %v7939
        %v7941 = vpop.f32.mrf.mxu0
        %v7942 = vadd.f32 %v7728, %v7941
        %7943 = vmatmul.bf16.gmra.mxu0 %v7700
        %v7944 = vpop.f32.mrf.mxu0
        %v7945 = vadd.f32 %v7728, %v7944
        %v7946 = vpop.f32.mrf.mxu0
        %v7947 = vadd.f32 %v7728, %v7946
        %7948 = vmatmul.bf16.gmra.mxu0 %v7701
        %v7949 = vpop.f32.mrf.mxu0
        %v7950 = vadd.f32 %v7728, %v7949
        %v7951 = vpop.f32.mrf.mxu0
        %v7952 = vadd.f32 %v7728, %v7951
        %7953 = vmatmul.bf16.gmra.mxu0 %v7702
        %v7954 = vpop.f32.mrf.mxu0
        %v7955 = vadd.f32 %v7728, %v7954
        %v7956 = vpop.f32.mrf.mxu0
        %v7957 = vadd.f32 %v7728, %v7956
        %7958 = vmatmul.bf16.gmra.mxu0 %v7703
        %v7959 = vpop.f32.mrf.mxu0
        %v7960 = vadd.f32 %v7728, %v7959
        %v7961 = vpop.f32.mrf.mxu0
        %v7962 = vadd.f32 %v7728, %v7961
        %7963 = vmatmul.bf16.gmra.mxu0 %v7704
        %v7964 = vpop.f32.mrf.mxu0
        %v7965 = vadd.f32 %v7728, %v7964
        %v7966 = vpop.f32.mrf.mxu0
        %v7967 = vadd.f32 %v7728, %v7966
        %7968 = vmatmul.bf16.gmra.mxu0 %v7705
        %v7969 = vpop.f32.mrf.mxu0
        %v7970 = vadd.f32 %v7728, %v7969
        %v7971 = vpop.f32.mrf.mxu0
        %v7972 = vadd.f32 %v7728, %v7971
        %7973 = vmatmul.bf16.gmra.mxu0 %v7706
        %v7974 = vpop.f32.mrf.mxu0
        %v7975 = vadd.f32 %v7728, %v7974
        %v7976 = vpop.f32.mrf.mxu0
        %v7977 = vadd.f32 %v7728, %v7976
        %7978 = vmatmul.bf16.gmra.mxu0 %v7707
        %v7979 = vpop.f32.mrf.mxu0
        %v7980 = vadd.f32 %v7728, %v7979
        %v7981 = vpop.f32.mrf.mxu0
        %v7982 = vadd.f32 %v7728, %v7981
        %7983 = vmatmul.bf16.gmra.mxu0 %v7708
        %v7984 = vpop.f32.mrf.mxu0
        %v7985 = vadd.f32 %v7728, %v7984
        %v7986 = vpop.f32.mrf.mxu0
        %v7987 = vadd.f32 %v7728, %v7986
        %7988 = vdwg.mxu0
        %v7989 = vxor.u32 %v7821, 2147483648
        %v7990 = vxor.u32 %v7910, 2147483648
        %v7991 = vxor.u32 %v7823, 2147483648
        %v7992 = vxor.u32 %v7912, 2147483648
        %v7993 = vxor.u32 %v7826, 2147483648
        %v7994 = vxor.u32 %v7915, 2147483648
        %v7995 = vxor.u32 %v7828, 2147483648
        %v7996 = vxor.u32 %v7917, 2147483648
        %v7997 = vxor.u32 %v7831, 2147483648
        %v7998 = vxor.u32 %v7920, 2147483648
        %v7999 = vxor.u32 %v7833, 2147483648
        %v8000 = vxor.u32 %v7922, 2147483648
        %v8001 = vxor.u32 %v7836, 2147483648
        %v8002 = vxor.u32 %v7925, 2147483648
        %v8003 = vxor.u32 %v7838, 2147483648
        %v8004 = vxor.u32 %v7927, 2147483648
        %v8005 = vxor.u32 %v7841, 2147483648
        %v8006 = vxor.u32 %v7930, 2147483648
        %v8007 = vxor.u32 %v7843, 2147483648
        %v8008 = vxor.u32 %v7932, 2147483648
        %v8009 = vxor.u32 %v7846, 2147483648
        %v8010 = vxor.u32 %v7935, 2147483648
        %v8011 = vxor.u32 %v7848, 2147483648
        %v8012 = vxor.u32 %v7937, 2147483648
        %v8013 = vxor.u32 %v7851, 2147483648
        %v8014 = vxor.u32 %v7940, 2147483648
        %v8015 = vxor.u32 %v7853, 2147483648
        %v8016 = vxor.u32 %v7942, 2147483648
        %v8017 = vxor.u32 %v7856, 2147483648
        %v8018 = vxor.u32 %v7945, 2147483648
        %v8019 = vxor.u32 %v7858, 2147483648
        %v8020 = vxor.u32 %v7947, 2147483648
        %v8021 = vxor.u32 %v7861, 2147483648
        %v8022 = vxor.u32 %v7950, 2147483648
        %v8023 = vxor.u32 %v7863, 2147483648
        %v8024 = vxor.u32 %v7952, 2147483648
        %v8025 = vxor.u32 %v7866, 2147483648
        %v8026 = vxor.u32 %v7955, 2147483648
        %v8027 = vxor.u32 %v7868, 2147483648
        %v8028 = vxor.u32 %v7957, 2147483648
        %v8029 = vxor.u32 %v7871, 2147483648
        %v8030 = vxor.u32 %v7960, 2147483648
        %v8031 = vxor.u32 %v7873, 2147483648
        %v8032 = vxor.u32 %v7962, 2147483648
        %v8033 = vxor.u32 %v7876, 2147483648
        %v8034 = vxor.u32 %v7965, 2147483648
        %v8035 = vxor.u32 %v7878, 2147483648
        %v8036 = vxor.u32 %v7967, 2147483648
        %v8037 = vxor.u32 %v7881, 2147483648
        %v8038 = vxor.u32 %v7970, 2147483648
        %v8039 = vxor.u32 %v7883, 2147483648
        %v8040 = vxor.u32 %v7972, 2147483648
        %v8041 = vxor.u32 %v7886, 2147483648
        %v8042 = vxor.u32 %v7975, 2147483648
        %v8043 = vxor.u32 %v7888, 2147483648
        %v8044 = vxor.u32 %v7977, 2147483648
        %v8045 = vxor.u32 %v7891, 2147483648
        %v8046 = vxor.u32 %v7980, 2147483648
        %v8047 = vxor.u32 %v7893, 2147483648
        %v8048 = vxor.u32 %v7982, 2147483648
        %v8049 = vxor.u32 %v7896, 2147483648
        %v8050 = vxor.u32 %v7985, 2147483648
        %v8051 = vxor.u32 %v7898, 2147483648
        %v8052 = vxor.u32 %v7987, 2147483648
        %v8053 = vmul.f32 %v7989, 1.442695
        %v8054 = vpow.pop %v8053
        %v8055 = vmul.f32 %v7990, 1.442695
        %v8056 = vpow.pop %v8055
        %v8057 = vmul.f32 %v7991, 1.442695
        %v8058 = vpow.pop %v8057
        %v8059 = vmul.f32 %v7992, 1.442695
        %v8060 = vpow.pop %v8059
        %v8061 = vmul.f32 %v7993, 1.442695
        %v8062 = vpow.pop %v8061
        %v8063 = vmul.f32 %v7994, 1.442695
        %v8064 = vpow.pop %v8063
        %v8065 = vmul.f32 %v7995, 1.442695
        %v8066 = vpow.pop %v8065
        %v8067 = vmul.f32 %v7996, 1.442695
        %v8068 = vpow.pop %v8067
        %v8069 = vmul.f32 %v7997, 1.442695
        %v8070 = vpow.pop %v8069
        %v8071 = vmul.f32 %v7998, 1.442695
        %v8072 = vpow.pop %v8071
        %v8073 = vmul.f32 %v7999, 1.442695
        %v8074 = vpow.pop %v8073
        %v8075 = vmul.f32 %v8000, 1.442695
        %v8076 = vpow.pop %v8075
        %v8077 = vmul.f32 %v8001, 1.442695
        %v8078 = vpow.pop %v8077
        %v8079 = vmul.f32 %v8002, 1.442695
        %v8080 = vpow.pop %v8079
        %v8081 = vmul.f32 %v8003, 1.442695
        %v8082 = vpow.pop %v8081
        %v8083 = vmul.f32 %v8004, 1.442695
        %v8084 = vpow.pop %v8083
        %v8085 = vmul.f32 %v8005, 1.442695
        %v8086 = vpow.pop %v8085
        %v8087 = vmul.f32 %v8006, 1.442695
        %v8088 = vpow.pop %v8087
        %v8089 = vmul.f32 %v8007, 1.442695
        %v8090 = vpow.pop %v8089
        %v8091 = vmul.f32 %v8008, 1.442695
        %v8092 = vpow.pop %v8091
        %v8093 = vmul.f32 %v8009, 1.442695
        %v8094 = vpow.pop %v8093
        %v8095 = vmul.f32 %v8010, 1.442695
        %v8096 = vpow.pop %v8095
        %v8097 = vmul.f32 %v8011, 1.442695
        %v8098 = vpow.pop %v8097
        %v8099 = vmul.f32 %v8012, 1.442695
        %v8100 = vpow.pop %v8099
        %v8101 = vmul.f32 %v8013, 1.442695
        %v8102 = vpow.pop %v8101
        %v8103 = vmul.f32 %v8014, 1.442695
        %v8104 = vpow.pop %v8103
        %v8105 = vmul.f32 %v8015, 1.442695
        %v8106 = vpow.pop %v8105
        %v8107 = vmul.f32 %v8016, 1.442695
        %v8108 = vpow.pop %v8107
        %v8109 = vmul.f32 %v8017, 1.442695
        %v8110 = vpow.pop %v8109
        %v8111 = vmul.f32 %v8018, 1.442695
        %v8112 = vpow.pop %v8111
        %v8113 = vmul.f32 %v8019, 1.442695
        %v8114 = vpow.pop %v8113
        %v8115 = vmul.f32 %v8020, 1.442695
        %v8116 = vpow.pop %v8115
        %v8117 = vmul.f32 %v8021, 1.442695
        %v8118 = vpow.pop %v8117
        %v8119 = vmul.f32 %v8022, 1.442695
        %v8120 = vpow.pop %v8119
        %v8121 = vmul.f32 %v8023, 1.442695
        %v8122 = vpow.pop %v8121
        %v8123 = vmul.f32 %v8024, 1.442695
        %v8124 = vpow.pop %v8123
        %v8125 = vmul.f32 %v8025, 1.442695
        %v8126 = vpow.pop %v8125
        %v8127 = vmul.f32 %v8026, 1.442695
        %v8128 = vpow.pop %v8127
        %v8129 = vmul.f32 %v8027, 1.442695
        %v8130 = vpow.pop %v8129
        %v8131 = vmul.f32 %v8028, 1.442695
        %v8132 = vpow.pop %v8131
        %v8133 = vmul.f32 %v8029, 1.442695
        %v8134 = vpow.pop %v8133
        %v8135 = vmul.f32 %v8030, 1.442695
        %v8136 = vpow.pop %v8135
        %v8137 = vmul.f32 %v8031, 1.442695
        %v8138 = vpow.pop %v8137
        %v8139 = vmul.f32 %v8032, 1.442695
        %v8140 = vpow.pop %v8139
        %v8141 = vmul.f32 %v8033, 1.442695
        %v8142 = vpow.pop %v8141
        %v8143 = vmul.f32 %v8034, 1.442695
        %v8144 = vpow.pop %v8143
        %v8145 = vmul.f32 %v8035, 1.442695
        %v8146 = vpow.pop %v8145
        %v8147 = vmul.f32 %v8036, 1.442695
        %v8148 = vpow.pop %v8147
        %v8149 = vmul.f32 %v8037, 1.442695
        %v8150 = vpow.pop %v8149
        %v8151 = vmul.f32 %v8038, 1.442695
        %v8152 = vpow.pop %v8151
        %v8153 = vmul.f32 %v8039, 1.442695
        %v8154 = vpow.pop %v8153
        %v8155 = vmul.f32 %v8040, 1.442695
        %v8156 = vpow.pop %v8155
        %v8157 = vmul.f32 %v8041, 1.442695
        %v8158 = vpow.pop %v8157
        %v8159 = vmul.f32 %v8042, 1.442695
        %v8160 = vpow.pop %v8159
        %v8161 = vmul.f32 %v8043, 1.442695
        %v8162 = vpow.pop %v8161
        %v8163 = vmul.f32 %v8044, 1.442695
        %v8164 = vpow.pop %v8163
        %v8165 = vmul.f32 %v8045, 1.442695
        %v8166 = vpow.pop %v8165
        %v8167 = vmul.f32 %v8046, 1.442695
        %v8168 = vpow.pop %v8167
        %v8169 = vmul.f32 %v8047, 1.442695
        %v8170 = vpow.pop %v8169
        %v8171 = vmul.f32 %v8048, 1.442695
        %v8172 = vpow.pop %v8171
        %v8173 = vmul.f32 %v8049, 1.442695
        %v8174 = vpow.pop %v8173
        %v8175 = vmul.f32 %v8050, 1.442695
        %v8176 = vpow.pop %v8175
        %v8177 = vmul.f32 %v8051, 1.442695
        %v8178 = vpow.pop %v8177
        %v8179 = vmul.f32 %v8052, 1.442695
        %v8180 = vpow.pop %v8179
        %v8181 = vadd.f32 %v8054, 1.0
        %v8182 = vadd.f32 %v8056, 1.0
        %v8183 = vadd.f32 %v8058, 1.0
        %v8184 = vadd.f32 %v8060, 1.0
        %v8185 = vadd.f32 %v8062, 1.0
        %v8186 = vadd.f32 %v8064, 1.0
        %v8187 = vadd.f32 %v8066, 1.0
        %v8188 = vadd.f32 %v8068, 1.0
        %v8189 = vadd.f32 %v8070, 1.0
        %v8190 = vadd.f32 %v8072, 1.0
        %v8191 = vadd.f32 %v8074, 1.0
        %v8192 = vadd.f32 %v8076, 1.0
        %v8193 = vadd.f32 %v8078, 1.0
        %v8194 = vadd.f32 %v8080, 1.0
        %v8195 = vadd.f32 %v8082, 1.0
        %v8196 = vadd.f32 %v8084, 1.0
        %v8197 = vadd.f32 %v8086, 1.0
        %v8198 = vadd.f32 %v8088, 1.0
        %v8199 = vadd.f32 %v8090, 1.0
        %v8200 = vadd.f32 %v8092, 1.0
        %v8201 = vadd.f32 %v8094, 1.0
        %v8202 = vadd.f32 %v8096, 1.0
        %v8203 = vadd.f32 %v8098, 1.0
        %v8204 = vadd.f32 %v8100, 1.0
        %v8205 = vadd.f32 %v8102, 1.0
        %v8206 = vadd.f32 %v8104, 1.0
        %v8207 = vadd.f32 %v8106, 1.0
        %v8208 = vadd.f32 %v8108, 1.0
        %v8209 = vadd.f32 %v8110, 1.0
        %v8210 = vadd.f32 %v8112, 1.0
        %v8211 = vadd.f32 %v8114, 1.0
        %v8212 = vadd.f32 %v8116, 1.0
        %v8213 = vadd.f32 %v8118, 1.0
        %v8214 = vadd.f32 %v8120, 1.0
        %v8215 = vadd.f32 %v8122, 1.0
        %v8216 = vadd.f32 %v8124, 1.0
        %v8217 = vadd.f32 %v8126, 1.0
        %v8218 = vadd.f32 %v8128, 1.0
        %v8219 = vadd.f32 %v8130, 1.0
        %v8220 = vadd.f32 %v8132, 1.0
        %v8221 = vadd.f32 %v8134, 1.0
        %v8222 = vadd.f32 %v8136, 1.0
        %v8223 = vadd.f32 %v8138, 1.0
        %v8224 = vadd.f32 %v8140, 1.0
        %v8225 = vadd.f32 %v8142, 1.0
        %v8226 = vadd.f32 %v8144, 1.0
        %v8227 = vadd.f32 %v8146, 1.0
        %v8228 = vadd.f32 %v8148, 1.0
        %v8229 = vadd.f32 %v8150, 1.0
        %v8230 = vadd.f32 %v8152, 1.0
        %v8231 = vadd.f32 %v8154, 1.0
        %v8232 = vadd.f32 %v8156, 1.0
        %v8233 = vadd.f32 %v8158, 1.0
        %v8234 = vadd.f32 %v8160, 1.0
        %v8235 = vadd.f32 %v8162, 1.0
        %v8236 = vadd.f32 %v8164, 1.0
        %v8237 = vadd.f32 %v8166, 1.0
        %v8238 = vadd.f32 %v8168, 1.0
        %v8239 = vadd.f32 %v8170, 1.0
        %v8240 = vadd.f32 %v8172, 1.0
        %v8241 = vadd.f32 %v8174, 1.0
        %v8242 = vadd.f32 %v8176, 1.0
        %v8243 = vadd.f32 %v8178, 1.0
        %v8244 = vadd.f32 %v8180, 1.0
        %v8245 = vrcp.pop %v8181
        %v8246 = vmul.f32 %v8181, %v8245
        %v8247 = vsub.f32 1.0, %v8246
        %v8248 = vmul.f32 %v8245, %v8247
        %v8249 = vadd.f32 %v8245, %v8248
        %vm8250 = vweird.f32 %v8181
        %vm8251 = vweird.f32 %v8245
        %vm8252 = vmor %vm8250, %vm8251
        %v8253 = vsel %vm8252, %v8245, %v8249
        %v8254 = vand.u32 2147483647, %v8181
        %vm8255 = vcmp.eq.f32.partialorder %v8254, 8.507059e+37
        %v8256 = vand.u32 %v8181, 2147483648
        %v8257 = vor.u32 1.1754944e-38, %v8256
        %v8258 = vsel %vm8255, %v8257, %v8253
        %v8259 = vmul.f32 1.0, %v8258
        %v8260 = vrcp.pop %v8182
        %v8261 = vmul.f32 %v8182, %v8260
        %v8262 = vsub.f32 1.0, %v8261
        %v8263 = vmul.f32 %v8260, %v8262
        %v8264 = vadd.f32 %v8260, %v8263
        %vm8265 = vweird.f32 %v8182
        %vm8266 = vweird.f32 %v8260
        %vm8267 = vmor %vm8265, %vm8266
        %v8268 = vsel %vm8267, %v8260, %v8264
        %v8269 = vand.u32 2147483647, %v8182
        %vm8270 = vcmp.eq.f32.partialorder %v8269, 8.507059e+37
        %v8271 = vand.u32 %v8182, 2147483648
        %v8272 = vor.u32 1.1754944e-38, %v8271
        %v8273 = vsel %vm8270, %v8272, %v8268
        %v8274 = vmul.f32 1.0, %v8273
        %v8275 = vrcp.pop %v8183
        %v8276 = vmul.f32 %v8183, %v8275
        %v8277 = vsub.f32 1.0, %v8276
        %v8278 = vmul.f32 %v8275, %v8277
        %v8279 = vadd.f32 %v8275, %v8278
        %vm8280 = vweird.f32 %v8183
        %vm8281 = vweird.f32 %v8275
        %vm8282 = vmor %vm8280, %vm8281
        %v8283 = vsel %vm8282, %v8275, %v8279
        %v8284 = vand.u32 2147483647, %v8183
        %vm8285 = vcmp.eq.f32.partialorder %v8284, 8.507059e+37
        %v8286 = vand.u32 %v8183, 2147483648
        %v8287 = vor.u32 1.1754944e-38, %v8286
        %v8288 = vsel %vm8285, %v8287, %v8283
        %v8289 = vmul.f32 1.0, %v8288
        %v8290 = vrcp.pop %v8184
        %v8291 = vmul.f32 %v8184, %v8290
        %v8292 = vsub.f32 1.0, %v8291
        %v8293 = vmul.f32 %v8290, %v8292
        %v8294 = vadd.f32 %v8290, %v8293
        %vm8295 = vweird.f32 %v8184
        %vm8296 = vweird.f32 %v8290
        %vm8297 = vmor %vm8295, %vm8296
        %v8298 = vsel %vm8297, %v8290, %v8294
        %v8299 = vand.u32 2147483647, %v8184
        %vm8300 = vcmp.eq.f32.partialorder %v8299, 8.507059e+37
        %v8301 = vand.u32 %v8184, 2147483648
        %v8302 = vor.u32 1.1754944e-38, %v8301
        %v8303 = vsel %vm8300, %v8302, %v8298
        %v8304 = vmul.f32 1.0, %v8303
        %v8305 = vrcp.pop %v8185
        %v8306 = vmul.f32 %v8185, %v8305
        %v8307 = vsub.f32 1.0, %v8306
        %v8308 = vmul.f32 %v8305, %v8307
        %v8309 = vadd.f32 %v8305, %v8308
        %vm8310 = vweird.f32 %v8185
        %vm8311 = vweird.f32 %v8305
        %vm8312 = vmor %vm8310, %vm8311
        %v8313 = vsel %vm8312, %v8305, %v8309
        %v8314 = vand.u32 2147483647, %v8185
        %vm8315 = vcmp.eq.f32.partialorder %v8314, 8.507059e+37
        %v8316 = vand.u32 %v8185, 2147483648
        %v8317 = vor.u32 1.1754944e-38, %v8316
        %v8318 = vsel %vm8315, %v8317, %v8313
        %v8319 = vmul.f32 1.0, %v8318
        %v8320 = vrcp.pop %v8186
        %v8321 = vmul.f32 %v8186, %v8320
        %v8322 = vsub.f32 1.0, %v8321
        %v8323 = vmul.f32 %v8320, %v8322
        %v8324 = vadd.f32 %v8320, %v8323
        %vm8325 = vweird.f32 %v8186
        %vm8326 = vweird.f32 %v8320
        %vm8327 = vmor %vm8325, %vm8326
        %v8328 = vsel %vm8327, %v8320, %v8324
        %v8329 = vand.u32 2147483647, %v8186
        %vm8330 = vcmp.eq.f32.partialorder %v8329, 8.507059e+37
        %v8331 = vand.u32 %v8186, 2147483648
        %v8332 = vor.u32 1.1754944e-38, %v8331
        %v8333 = vsel %vm8330, %v8332, %v8328
        %v8334 = vmul.f32 1.0, %v8333
        %v8335 = vrcp.pop %v8187
        %v8336 = vmul.f32 %v8187, %v8335
        %v8337 = vsub.f32 1.0, %v8336
        %v8338 = vmul.f32 %v8335, %v8337
        %v8339 = vadd.f32 %v8335, %v8338
        %vm8340 = vweird.f32 %v8187
        %vm8341 = vweird.f32 %v8335
        %vm8342 = vmor %vm8340, %vm8341
        %v8343 = vsel %vm8342, %v8335, %v8339
        %v8344 = vand.u32 2147483647, %v8187
        %vm8345 = vcmp.eq.f32.partialorder %v8344, 8.507059e+37
        %v8346 = vand.u32 %v8187, 2147483648
        %v8347 = vor.u32 1.1754944e-38, %v8346
        %v8348 = vsel %vm8345, %v8347, %v8343
        %v8349 = vmul.f32 1.0, %v8348
        %v8350 = vrcp.pop %v8188
        %v8351 = vmul.f32 %v8188, %v8350
        %v8352 = vsub.f32 1.0, %v8351
        %v8353 = vmul.f32 %v8350, %v8352
        %v8354 = vadd.f32 %v8350, %v8353
        %vm8355 = vweird.f32 %v8188
        %vm8356 = vweird.f32 %v8350
        %vm8357 = vmor %vm8355, %vm8356
        %v8358 = vsel %vm8357, %v8350, %v8354
        %v8359 = vand.u32 2147483647, %v8188
        %vm8360 = vcmp.eq.f32.partialorder %v8359, 8.507059e+37
        %v8361 = vand.u32 %v8188, 2147483648
        %v8362 = vor.u32 1.1754944e-38, %v8361
        %v8363 = vsel %vm8360, %v8362, %v8358
        %v8364 = vmul.f32 1.0, %v8363
        %v8365 = vrcp.pop %v8189
        %v8366 = vmul.f32 %v8189, %v8365
        %v8367 = vsub.f32 1.0, %v8366
        %v8368 = vmul.f32 %v8365, %v8367
        %v8369 = vadd.f32 %v8365, %v8368
        %vm8370 = vweird.f32 %v8189
        %vm8371 = vweird.f32 %v8365
        %vm8372 = vmor %vm8370, %vm8371
        %v8373 = vsel %vm8372, %v8365, %v8369
        %v8374 = vand.u32 2147483647, %v8189
        %vm8375 = vcmp.eq.f32.partialorder %v8374, 8.507059e+37
        %v8376 = vand.u32 %v8189, 2147483648
        %v8377 = vor.u32 1.1754944e-38, %v8376
        %v8378 = vsel %vm8375, %v8377, %v8373
        %v8379 = vmul.f32 1.0, %v8378
        %v8380 = vrcp.pop %v8190
        %v8381 = vmul.f32 %v8190, %v8380
        %v8382 = vsub.f32 1.0, %v8381
        %v8383 = vmul.f32 %v8380, %v8382
        %v8384 = vadd.f32 %v8380, %v8383
        %vm8385 = vweird.f32 %v8190
        %vm8386 = vweird.f32 %v8380
        %vm8387 = vmor %vm8385, %vm8386
        %v8388 = vsel %vm8387, %v8380, %v8384
        %v8389 = vand.u32 2147483647, %v8190
        %vm8390 = vcmp.eq.f32.partialorder %v8389, 8.507059e+37
        %v8391 = vand.u32 %v8190, 2147483648
        %v8392 = vor.u32 1.1754944e-38, %v8391
        %v8393 = vsel %vm8390, %v8392, %v8388
        %v8394 = vmul.f32 1.0, %v8393
        %v8395 = vrcp.pop %v8191
        %v8396 = vmul.f32 %v8191, %v8395
        %v8397 = vsub.f32 1.0, %v8396
        %v8398 = vmul.f32 %v8395, %v8397
        %v8399 = vadd.f32 %v8395, %v8398
        %vm8400 = vweird.f32 %v8191
        %vm8401 = vweird.f32 %v8395
        %vm8402 = vmor %vm8400, %vm8401
        %v8403 = vsel %vm8402, %v8395, %v8399
        %v8404 = vand.u32 2147483647, %v8191
        %vm8405 = vcmp.eq.f32.partialorder %v8404, 8.507059e+37
        %v8406 = vand.u32 %v8191, 2147483648
        %v8407 = vor.u32 1.1754944e-38, %v8406
        %v8408 = vsel %vm8405, %v8407, %v8403
        %v8409 = vmul.f32 1.0, %v8408
        %v8410 = vrcp.pop %v8192
        %v8411 = vmul.f32 %v8192, %v8410
        %v8412 = vsub.f32 1.0, %v8411
        %v8413 = vmul.f32 %v8410, %v8412
        %v8414 = vadd.f32 %v8410, %v8413
        %vm8415 = vweird.f32 %v8192
        %vm8416 = vweird.f32 %v8410
        %vm8417 = vmor %vm8415, %vm8416
        %v8418 = vsel %vm8417, %v8410, %v8414
        %v8419 = vand.u32 2147483647, %v8192
        %vm8420 = vcmp.eq.f32.partialorder %v8419, 8.507059e+37
        %v8421 = vand.u32 %v8192, 2147483648
        %v8422 = vor.u32 1.1754944e-38, %v8421
        %v8423 = vsel %vm8420, %v8422, %v8418
        %v8424 = vmul.f32 1.0, %v8423
        %v8425 = vrcp.pop %v8193
        %v8426 = vmul.f32 %v8193, %v8425
        %v8427 = vsub.f32 1.0, %v8426
        %v8428 = vmul.f32 %v8425, %v8427
        %v8429 = vadd.f32 %v8425, %v8428
        %vm8430 = vweird.f32 %v8193
        %vm8431 = vweird.f32 %v8425
        %vm8432 = vmor %vm8430, %vm8431
        %v8433 = vsel %vm8432, %v8425, %v8429
        %v8434 = vand.u32 2147483647, %v8193
        %vm8435 = vcmp.eq.f32.partialorder %v8434, 8.507059e+37
        %v8436 = vand.u32 %v8193, 2147483648
        %v8437 = vor.u32 1.1754944e-38, %v8436
        %v8438 = vsel %vm8435, %v8437, %v8433
        %v8439 = vmul.f32 1.0, %v8438
        %v8440 = vrcp.pop %v8194
        %v8441 = vmul.f32 %v8194, %v8440
        %v8442 = vsub.f32 1.0, %v8441
        %v8443 = vmul.f32 %v8440, %v8442
        %v8444 = vadd.f32 %v8440, %v8443
        %vm8445 = vweird.f32 %v8194
        %vm8446 = vweird.f32 %v8440
        %vm8447 = vmor %vm8445, %vm8446
        %v8448 = vsel %vm8447, %v8440, %v8444
        %v8449 = vand.u32 2147483647, %v8194
        %vm8450 = vcmp.eq.f32.partialorder %v8449, 8.507059e+37
        %v8451 = vand.u32 %v8194, 2147483648
        %v8452 = vor.u32 1.1754944e-38, %v8451
        %v8453 = vsel %vm8450, %v8452, %v8448
        %v8454 = vmul.f32 1.0, %v8453
        %v8455 = vrcp.pop %v8195
        %v8456 = vmul.f32 %v8195, %v8455
        %v8457 = vsub.f32 1.0, %v8456
        %v8458 = vmul.f32 %v8455, %v8457
        %v8459 = vadd.f32 %v8455, %v8458
        %vm8460 = vweird.f32 %v8195
        %vm8461 = vweird.f32 %v8455
        %vm8462 = vmor %vm8460, %vm8461
        %v8463 = vsel %vm8462, %v8455, %v8459
        %v8464 = vand.u32 2147483647, %v8195
        %vm8465 = vcmp.eq.f32.partialorder %v8464, 8.507059e+37
        %v8466 = vand.u32 %v8195, 2147483648
        %v8467 = vor.u32 1.1754944e-38, %v8466
        %v8468 = vsel %vm8465, %v8467, %v8463
        %v8469 = vmul.f32 1.0, %v8468
        %v8470 = vrcp.pop %v8196
        %v8471 = vmul.f32 %v8196, %v8470
        %v8472 = vsub.f32 1.0, %v8471
        %v8473 = vmul.f32 %v8470, %v8472
        %v8474 = vadd.f32 %v8470, %v8473
        %vm8475 = vweird.f32 %v8196
        %vm8476 = vweird.f32 %v8470
        %vm8477 = vmor %vm8475, %vm8476
        %v8478 = vsel %vm8477, %v8470, %v8474
        %v8479 = vand.u32 2147483647, %v8196
        %vm8480 = vcmp.eq.f32.partialorder %v8479, 8.507059e+37
        %v8481 = vand.u32 %v8196, 2147483648
        %v8482 = vor.u32 1.1754944e-38, %v8481
        %v8483 = vsel %vm8480, %v8482, %v8478
        %v8484 = vmul.f32 1.0, %v8483
        %v8485 = vrcp.pop %v8197
        %v8486 = vmul.f32 %v8197, %v8485
        %v8487 = vsub.f32 1.0, %v8486
        %v8488 = vmul.f32 %v8485, %v8487
        %v8489 = vadd.f32 %v8485, %v8488
        %vm8490 = vweird.f32 %v8197
        %vm8491 = vweird.f32 %v8485
        %vm8492 = vmor %vm8490, %vm8491
        %v8493 = vsel %vm8492, %v8485, %v8489
        %v8494 = vand.u32 2147483647, %v8197
        %vm8495 = vcmp.eq.f32.partialorder %v8494, 8.507059e+37
        %v8496 = vand.u32 %v8197, 2147483648
        %v8497 = vor.u32 1.1754944e-38, %v8496
        %v8498 = vsel %vm8495, %v8497, %v8493
        %v8499 = vmul.f32 1.0, %v8498
        %v8500 = vrcp.pop %v8198
        %v8501 = vmul.f32 %v8198, %v8500
        %v8502 = vsub.f32 1.0, %v8501
        %v8503 = vmul.f32 %v8500, %v8502
        %v8504 = vadd.f32 %v8500, %v8503
        %vm8505 = vweird.f32 %v8198
        %vm8506 = vweird.f32 %v8500
        %vm8507 = vmor %vm8505, %vm8506
        %v8508 = vsel %vm8507, %v8500, %v8504
        %v8509 = vand.u32 2147483647, %v8198
        %vm8510 = vcmp.eq.f32.partialorder %v8509, 8.507059e+37
        %v8511 = vand.u32 %v8198, 2147483648
        %v8512 = vor.u32 1.1754944e-38, %v8511
        %v8513 = vsel %vm8510, %v8512, %v8508
        %v8514 = vmul.f32 1.0, %v8513
        %v8515 = vrcp.pop %v8199
        %v8516 = vmul.f32 %v8199, %v8515
        %v8517 = vsub.f32 1.0, %v8516
        %v8518 = vmul.f32 %v8515, %v8517
        %v8519 = vadd.f32 %v8515, %v8518
        %vm8520 = vweird.f32 %v8199
        %vm8521 = vweird.f32 %v8515
        %vm8522 = vmor %vm8520, %vm8521
        %v8523 = vsel %vm8522, %v8515, %v8519
        %v8524 = vand.u32 2147483647, %v8199
        %vm8525 = vcmp.eq.f32.partialorder %v8524, 8.507059e+37
        %v8526 = vand.u32 %v8199, 2147483648
        %v8527 = vor.u32 1.1754944e-38, %v8526
        %v8528 = vsel %vm8525, %v8527, %v8523
        %v8529 = vmul.f32 1.0, %v8528
        %v8530 = vrcp.pop %v8200
        %v8531 = vmul.f32 %v8200, %v8530
        %v8532 = vsub.f32 1.0, %v8531
        %v8533 = vmul.f32 %v8530, %v8532
        %v8534 = vadd.f32 %v8530, %v8533
        %vm8535 = vweird.f32 %v8200
        %vm8536 = vweird.f32 %v8530
        %vm8537 = vmor %vm8535, %vm8536
        %v8538 = vsel %vm8537, %v8530, %v8534
        %v8539 = vand.u32 2147483647, %v8200
        %vm8540 = vcmp.eq.f32.partialorder %v8539, 8.507059e+37
        %v8541 = vand.u32 %v8200, 2147483648
        %v8542 = vor.u32 1.1754944e-38, %v8541
        %v8543 = vsel %vm8540, %v8542, %v8538
        %v8544 = vmul.f32 1.0, %v8543
        %v8545 = vrcp.pop %v8201
        %v8546 = vmul.f32 %v8201, %v8545
        %v8547 = vsub.f32 1.0, %v8546
        %v8548 = vmul.f32 %v8545, %v8547
        %v8549 = vadd.f32 %v8545, %v8548
        %vm8550 = vweird.f32 %v8201
        %vm8551 = vweird.f32 %v8545
        %vm8552 = vmor %vm8550, %vm8551
        %v8553 = vsel %vm8552, %v8545, %v8549
        %v8554 = vand.u32 2147483647, %v8201
        %vm8555 = vcmp.eq.f32.partialorder %v8554, 8.507059e+37
        %v8556 = vand.u32 %v8201, 2147483648
        %v8557 = vor.u32 1.1754944e-38, %v8556
        %v8558 = vsel %vm8555, %v8557, %v8553
        %v8559 = vmul.f32 1.0, %v8558
        %v8560 = vrcp.pop %v8202
        %v8561 = vmul.f32 %v8202, %v8560
        %v8562 = vsub.f32 1.0, %v8561
        %v8563 = vmul.f32 %v8560, %v8562
        %v8564 = vadd.f32 %v8560, %v8563
        %vm8565 = vweird.f32 %v8202
        %vm8566 = vweird.f32 %v8560
        %vm8567 = vmor %vm8565, %vm8566
        %v8568 = vsel %vm8567, %v8560, %v8564
        %v8569 = vand.u32 2147483647, %v8202
        %vm8570 = vcmp.eq.f32.partialorder %v8569, 8.507059e+37
        %v8571 = vand.u32 %v8202, 2147483648
        %v8572 = vor.u32 1.1754944e-38, %v8571
        %v8573 = vsel %vm8570, %v8572, %v8568
        %v8574 = vmul.f32 1.0, %v8573
        %v8575 = vrcp.pop %v8203
        %v8576 = vmul.f32 %v8203, %v8575
        %v8577 = vsub.f32 1.0, %v8576
        %v8578 = vmul.f32 %v8575, %v8577
        %v8579 = vadd.f32 %v8575, %v8578
        %vm8580 = vweird.f32 %v8203
        %vm8581 = vweird.f32 %v8575
        %vm8582 = vmor %vm8580, %vm8581
        %v8583 = vsel %vm8582, %v8575, %v8579
        %v8584 = vand.u32 2147483647, %v8203
        %vm8585 = vcmp.eq.f32.partialorder %v8584, 8.507059e+37
        %v8586 = vand.u32 %v8203, 2147483648
        %v8587 = vor.u32 1.1754944e-38, %v8586
        %v8588 = vsel %vm8585, %v8587, %v8583
        %v8589 = vmul.f32 1.0, %v8588
        %v8590 = vrcp.pop %v8204
        %v8591 = vmul.f32 %v8204, %v8590
        %v8592 = vsub.f32 1.0, %v8591
        %v8593 = vmul.f32 %v8590, %v8592
        %v8594 = vadd.f32 %v8590, %v8593
        %vm8595 = vweird.f32 %v8204
        %vm8596 = vweird.f32 %v8590
        %vm8597 = vmor %vm8595, %vm8596
        %v8598 = vsel %vm8597, %v8590, %v8594
        %v8599 = vand.u32 2147483647, %v8204
        %vm8600 = vcmp.eq.f32.partialorder %v8599, 8.507059e+37
        %v8601 = vand.u32 %v8204, 2147483648
        %v8602 = vor.u32 1.1754944e-38, %v8601
        %v8603 = vsel %vm8600, %v8602, %v8598
        %v8604 = vmul.f32 1.0, %v8603
        %v8605 = vrcp.pop %v8205
        %v8606 = vmul.f32 %v8205, %v8605
        %v8607 = vsub.f32 1.0, %v8606
        %v8608 = vmul.f32 %v8605, %v8607
        %v8609 = vadd.f32 %v8605, %v8608
        %vm8610 = vweird.f32 %v8205
        %vm8611 = vweird.f32 %v8605
        %vm8612 = vmor %vm8610, %vm8611
        %v8613 = vsel %vm8612, %v8605, %v8609
        %v8614 = vand.u32 2147483647, %v8205
        %vm8615 = vcmp.eq.f32.partialorder %v8614, 8.507059e+37
        %v8616 = vand.u32 %v8205, 2147483648
        %v8617 = vor.u32 1.1754944e-38, %v8616
        %v8618 = vsel %vm8615, %v8617, %v8613
        %v8619 = vmul.f32 1.0, %v8618
        %v8620 = vrcp.pop %v8206
        %v8621 = vmul.f32 %v8206, %v8620
        %v8622 = vsub.f32 1.0, %v8621
        %v8623 = vmul.f32 %v8620, %v8622
        %v8624 = vadd.f32 %v8620, %v8623
        %vm8625 = vweird.f32 %v8206
        %vm8626 = vweird.f32 %v8620
        %vm8627 = vmor %vm8625, %vm8626
        %v8628 = vsel %vm8627, %v8620, %v8624
        %v8629 = vand.u32 2147483647, %v8206
        %vm8630 = vcmp.eq.f32.partialorder %v8629, 8.507059e+37
        %v8631 = vand.u32 %v8206, 2147483648
        %v8632 = vor.u32 1.1754944e-38, %v8631
        %v8633 = vsel %vm8630, %v8632, %v8628
        %v8634 = vmul.f32 1.0, %v8633
        %v8635 = vrcp.pop %v8207
        %v8636 = vmul.f32 %v8207, %v8635
        %v8637 = vsub.f32 1.0, %v8636
        %v8638 = vmul.f32 %v8635, %v8637
        %v8639 = vadd.f32 %v8635, %v8638
        %vm8640 = vweird.f32 %v8207
        %vm8641 = vweird.f32 %v8635
        %vm8642 = vmor %vm8640, %vm8641
        %v8643 = vsel %vm8642, %v8635, %v8639
        %v8644 = vand.u32 2147483647, %v8207
        %vm8645 = vcmp.eq.f32.partialorder %v8644, 8.507059e+37
        %v8646 = vand.u32 %v8207, 2147483648
        %v8647 = vor.u32 1.1754944e-38, %v8646
        %v8648 = vsel %vm8645, %v8647, %v8643
        %v8649 = vmul.f32 1.0, %v8648
        %v8650 = vrcp.pop %v8208
        %v8651 = vmul.f32 %v8208, %v8650
        %v8652 = vsub.f32 1.0, %v8651
        %v8653 = vmul.f32 %v8650, %v8652
        %v8654 = vadd.f32 %v8650, %v8653
        %vm8655 = vweird.f32 %v8208
        %vm8656 = vweird.f32 %v8650
        %vm8657 = vmor %vm8655, %vm8656
        %v8658 = vsel %vm8657, %v8650, %v8654
        %v8659 = vand.u32 2147483647, %v8208
        %vm8660 = vcmp.eq.f32.partialorder %v8659, 8.507059e+37
        %v8661 = vand.u32 %v8208, 2147483648
        %v8662 = vor.u32 1.1754944e-38, %v8661
        %v8663 = vsel %vm8660, %v8662, %v8658
        %v8664 = vmul.f32 1.0, %v8663
        %v8665 = vrcp.pop %v8209
        %v8666 = vmul.f32 %v8209, %v8665
        %v8667 = vsub.f32 1.0, %v8666
        %v8668 = vmul.f32 %v8665, %v8667
        %v8669 = vadd.f32 %v8665, %v8668
        %vm8670 = vweird.f32 %v8209
        %vm8671 = vweird.f32 %v8665
        %vm8672 = vmor %vm8670, %vm8671
        %v8673 = vsel %vm8672, %v8665, %v8669
        %v8674 = vand.u32 2147483647, %v8209
        %vm8675 = vcmp.eq.f32.partialorder %v8674, 8.507059e+37
        %v8676 = vand.u32 %v8209, 2147483648
        %v8677 = vor.u32 1.1754944e-38, %v8676
        %v8678 = vsel %vm8675, %v8677, %v8673
        %v8679 = vmul.f32 1.0, %v8678
        %v8680 = vrcp.pop %v8210
        %v8681 = vmul.f32 %v8210, %v8680
        %v8682 = vsub.f32 1.0, %v8681
        %v8683 = vmul.f32 %v8680, %v8682
        %v8684 = vadd.f32 %v8680, %v8683
        %vm8685 = vweird.f32 %v8210
        %vm8686 = vweird.f32 %v8680
        %vm8687 = vmor %vm8685, %vm8686
        %v8688 = vsel %vm8687, %v8680, %v8684
        %v8689 = vand.u32 2147483647, %v8210
        %vm8690 = vcmp.eq.f32.partialorder %v8689, 8.507059e+37
        %v8691 = vand.u32 %v8210, 2147483648
        %v8692 = vor.u32 1.1754944e-38, %v8691
        %v8693 = vsel %vm8690, %v8692, %v8688
        %v8694 = vmul.f32 1.0, %v8693
        %v8695 = vrcp.pop %v8211
        %v8696 = vmul.f32 %v8211, %v8695
        %v8697 = vsub.f32 1.0, %v8696
        %v8698 = vmul.f32 %v8695, %v8697
        %v8699 = vadd.f32 %v8695, %v8698
        %vm8700 = vweird.f32 %v8211
        %vm8701 = vweird.f32 %v8695
        %vm8702 = vmor %vm8700, %vm8701
        %v8703 = vsel %vm8702, %v8695, %v8699
        %v8704 = vand.u32 2147483647, %v8211
        %vm8705 = vcmp.eq.f32.partialorder %v8704, 8.507059e+37
        %v8706 = vand.u32 %v8211, 2147483648
        %v8707 = vor.u32 1.1754944e-38, %v8706
        %v8708 = vsel %vm8705, %v8707, %v8703
        %v8709 = vmul.f32 1.0, %v8708
        %v8710 = vrcp.pop %v8212
        %v8711 = vmul.f32 %v8212, %v8710
        %v8712 = vsub.f32 1.0, %v8711
        %v8713 = vmul.f32 %v8710, %v8712
        %v8714 = vadd.f32 %v8710, %v8713
        %vm8715 = vweird.f32 %v8212
        %vm8716 = vweird.f32 %v8710
        %vm8717 = vmor %vm8715, %vm8716
        %v8718 = vsel %vm8717, %v8710, %v8714
        %v8719 = vand.u32 2147483647, %v8212
        %vm8720 = vcmp.eq.f32.partialorder %v8719, 8.507059e+37
        %v8721 = vand.u32 %v8212, 2147483648
        %v8722 = vor.u32 1.1754944e-38, %v8721
        %v8723 = vsel %vm8720, %v8722, %v8718
        %v8724 = vmul.f32 1.0, %v8723
        %v8725 = vrcp.pop %v8213
        %v8726 = vmul.f32 %v8213, %v8725
        %v8727 = vsub.f32 1.0, %v8726
        %v8728 = vmul.f32 %v8725, %v8727
        %v8729 = vadd.f32 %v8725, %v8728
        %vm8730 = vweird.f32 %v8213
        %vm8731 = vweird.f32 %v8725
        %vm8732 = vmor %vm8730, %vm8731
        %v8733 = vsel %vm8732, %v8725, %v8729
        %v8734 = vand.u32 2147483647, %v8213
        %vm8735 = vcmp.eq.f32.partialorder %v8734, 8.507059e+37
        %v8736 = vand.u32 %v8213, 2147483648
        %v8737 = vor.u32 1.1754944e-38, %v8736
        %v8738 = vsel %vm8735, %v8737, %v8733
        %v8739 = vmul.f32 1.0, %v8738
        %v8740 = vrcp.pop %v8214
        %v8741 = vmul.f32 %v8214, %v8740
        %v8742 = vsub.f32 1.0, %v8741
        %v8743 = vmul.f32 %v8740, %v8742
        %v8744 = vadd.f32 %v8740, %v8743
        %vm8745 = vweird.f32 %v8214
        %vm8746 = vweird.f32 %v8740
        %vm8747 = vmor %vm8745, %vm8746
        %v8748 = vsel %vm8747, %v8740, %v8744
        %v8749 = vand.u32 2147483647, %v8214
        %vm8750 = vcmp.eq.f32.partialorder %v8749, 8.507059e+37
        %v8751 = vand.u32 %v8214, 2147483648
        %v8752 = vor.u32 1.1754944e-38, %v8751
        %v8753 = vsel %vm8750, %v8752, %v8748
        %v8754 = vmul.f32 1.0, %v8753
        %v8755 = vrcp.pop %v8215
        %v8756 = vmul.f32 %v8215, %v8755
        %v8757 = vsub.f32 1.0, %v8756
        %v8758 = vmul.f32 %v8755, %v8757
        %v8759 = vadd.f32 %v8755, %v8758
        %vm8760 = vweird.f32 %v8215
        %vm8761 = vweird.f32 %v8755
        %vm8762 = vmor %vm8760, %vm8761
        %v8763 = vsel %vm8762, %v8755, %v8759
        %v8764 = vand.u32 2147483647, %v8215
        %vm8765 = vcmp.eq.f32.partialorder %v8764, 8.507059e+37
        %v8766 = vand.u32 %v8215, 2147483648
        %v8767 = vor.u32 1.1754944e-38, %v8766
        %v8768 = vsel %vm8765, %v8767, %v8763
        %v8769 = vmul.f32 1.0, %v8768
        %v8770 = vrcp.pop %v8216
        %v8771 = vmul.f32 %v8216, %v8770
        %v8772 = vsub.f32 1.0, %v8771
        %v8773 = vmul.f32 %v8770, %v8772
        %v8774 = vadd.f32 %v8770, %v8773
        %vm8775 = vweird.f32 %v8216
        %vm8776 = vweird.f32 %v8770
        %vm8777 = vmor %vm8775, %vm8776
        %v8778 = vsel %vm8777, %v8770, %v8774
        %v8779 = vand.u32 2147483647, %v8216
        %vm8780 = vcmp.eq.f32.partialorder %v8779, 8.507059e+37
        %v8781 = vand.u32 %v8216, 2147483648
        %v8782 = vor.u32 1.1754944e-38, %v8781
        %v8783 = vsel %vm8780, %v8782, %v8778
        %v8784 = vmul.f32 1.0, %v8783
        %v8785 = vrcp.pop %v8217
        %v8786 = vmul.f32 %v8217, %v8785
        %v8787 = vsub.f32 1.0, %v8786
        %v8788 = vmul.f32 %v8785, %v8787
        %v8789 = vadd.f32 %v8785, %v8788
        %vm8790 = vweird.f32 %v8217
        %vm8791 = vweird.f32 %v8785
        %vm8792 = vmor %vm8790, %vm8791
        %v8793 = vsel %vm8792, %v8785, %v8789
        %v8794 = vand.u32 2147483647, %v8217
        %vm8795 = vcmp.eq.f32.partialorder %v8794, 8.507059e+37
        %v8796 = vand.u32 %v8217, 2147483648
        %v8797 = vor.u32 1.1754944e-38, %v8796
        %v8798 = vsel %vm8795, %v8797, %v8793
        %v8799 = vmul.f32 1.0, %v8798
        %v8800 = vrcp.pop %v8218
        %v8801 = vmul.f32 %v8218, %v8800
        %v8802 = vsub.f32 1.0, %v8801
        %v8803 = vmul.f32 %v8800, %v8802
        %v8804 = vadd.f32 %v8800, %v8803
        %vm8805 = vweird.f32 %v8218
        %vm8806 = vweird.f32 %v8800
        %vm8807 = vmor %vm8805, %vm8806
        %v8808 = vsel %vm8807, %v8800, %v8804
        %v8809 = vand.u32 2147483647, %v8218
        %vm8810 = vcmp.eq.f32.partialorder %v8809, 8.507059e+37
        %v8811 = vand.u32 %v8218, 2147483648
        %v8812 = vor.u32 1.1754944e-38, %v8811
        %v8813 = vsel %vm8810, %v8812, %v8808
        %v8814 = vmul.f32 1.0, %v8813
        %v8815 = vrcp.pop %v8219
        %v8816 = vmul.f32 %v8219, %v8815
        %v8817 = vsub.f32 1.0, %v8816
        %v8818 = vmul.f32 %v8815, %v8817
        %v8819 = vadd.f32 %v8815, %v8818
        %vm8820 = vweird.f32 %v8219
        %vm8821 = vweird.f32 %v8815
        %vm8822 = vmor %vm8820, %vm8821
        %v8823 = vsel %vm8822, %v8815, %v8819
        %v8824 = vand.u32 2147483647, %v8219
        %vm8825 = vcmp.eq.f32.partialorder %v8824, 8.507059e+37
        %v8826 = vand.u32 %v8219, 2147483648
        %v8827 = vor.u32 1.1754944e-38, %v8826
        %v8828 = vsel %vm8825, %v8827, %v8823
        %v8829 = vmul.f32 1.0, %v8828
        %v8830 = vrcp.pop %v8220
        %v8831 = vmul.f32 %v8220, %v8830
        %v8832 = vsub.f32 1.0, %v8831
        %v8833 = vmul.f32 %v8830, %v8832
        %v8834 = vadd.f32 %v8830, %v8833
        %vm8835 = vweird.f32 %v8220
        %vm8836 = vweird.f32 %v8830
        %vm8837 = vmor %vm8835, %vm8836
        %v8838 = vsel %vm8837, %v8830, %v8834
        %v8839 = vand.u32 2147483647, %v8220
        %vm8840 = vcmp.eq.f32.partialorder %v8839, 8.507059e+37
        %v8841 = vand.u32 %v8220, 2147483648
        %v8842 = vor.u32 1.1754944e-38, %v8841
        %v8843 = vsel %vm8840, %v8842, %v8838
        %v8844 = vmul.f32 1.0, %v8843
        %v8845 = vrcp.pop %v8221
        %v8846 = vmul.f32 %v8221, %v8845
        %v8847 = vsub.f32 1.0, %v8846
        %v8848 = vmul.f32 %v8845, %v8847
        %v8849 = vadd.f32 %v8845, %v8848
        %vm8850 = vweird.f32 %v8221
        %vm8851 = vweird.f32 %v8845
        %vm8852 = vmor %vm8850, %vm8851
        %v8853 = vsel %vm8852, %v8845, %v8849
        %v8854 = vand.u32 2147483647, %v8221
        %vm8855 = vcmp.eq.f32.partialorder %v8854, 8.507059e+37
        %v8856 = vand.u32 %v8221, 2147483648
        %v8857 = vor.u32 1.1754944e-38, %v8856
        %v8858 = vsel %vm8855, %v8857, %v8853
        %v8859 = vmul.f32 1.0, %v8858
        %v8860 = vrcp.pop %v8222
        %v8861 = vmul.f32 %v8222, %v8860
        %v8862 = vsub.f32 1.0, %v8861
        %v8863 = vmul.f32 %v8860, %v8862
        %v8864 = vadd.f32 %v8860, %v8863
        %vm8865 = vweird.f32 %v8222
        %vm8866 = vweird.f32 %v8860
        %vm8867 = vmor %vm8865, %vm8866
        %v8868 = vsel %vm8867, %v8860, %v8864
        %v8869 = vand.u32 2147483647, %v8222
        %vm8870 = vcmp.eq.f32.partialorder %v8869, 8.507059e+37
        %v8871 = vand.u32 %v8222, 2147483648
        %v8872 = vor.u32 1.1754944e-38, %v8871
        %v8873 = vsel %vm8870, %v8872, %v8868
        %v8874 = vmul.f32 1.0, %v8873
        %v8875 = vrcp.pop %v8223
        %v8876 = vmul.f32 %v8223, %v8875
        %v8877 = vsub.f32 1.0, %v8876
        %v8878 = vmul.f32 %v8875, %v8877
        %v8879 = vadd.f32 %v8875, %v8878
        %vm8880 = vweird.f32 %v8223
        %vm8881 = vweird.f32 %v8875
        %vm8882 = vmor %vm8880, %vm8881
        %v8883 = vsel %vm8882, %v8875, %v8879
        %v8884 = vand.u32 2147483647, %v8223
        %vm8885 = vcmp.eq.f32.partialorder %v8884, 8.507059e+37
        %v8886 = vand.u32 %v8223, 2147483648
        %v8887 = vor.u32 1.1754944e-38, %v8886
        %v8888 = vsel %vm8885, %v8887, %v8883
        %v8889 = vmul.f32 1.0, %v8888
        %v8890 = vrcp.pop %v8224
        %v8891 = vmul.f32 %v8224, %v8890
        %v8892 = vsub.f32 1.0, %v8891
        %v8893 = vmul.f32 %v8890, %v8892
        %v8894 = vadd.f32 %v8890, %v8893
        %vm8895 = vweird.f32 %v8224
        %vm8896 = vweird.f32 %v8890
        %vm8897 = vmor %vm8895, %vm8896
        %v8898 = vsel %vm8897, %v8890, %v8894
        %v8899 = vand.u32 2147483647, %v8224
        %vm8900 = vcmp.eq.f32.partialorder %v8899, 8.507059e+37
        %v8901 = vand.u32 %v8224, 2147483648
        %v8902 = vor.u32 1.1754944e-38, %v8901
        %v8903 = vsel %vm8900, %v8902, %v8898
        %v8904 = vmul.f32 1.0, %v8903
        %v8905 = vrcp.pop %v8225
        %v8906 = vmul.f32 %v8225, %v8905
        %v8907 = vsub.f32 1.0, %v8906
        %v8908 = vmul.f32 %v8905, %v8907
        %v8909 = vadd.f32 %v8905, %v8908
        %vm8910 = vweird.f32 %v8225
        %vm8911 = vweird.f32 %v8905
        %vm8912 = vmor %vm8910, %vm8911
        %v8913 = vsel %vm8912, %v8905, %v8909
        %v8914 = vand.u32 2147483647, %v8225
        %vm8915 = vcmp.eq.f32.partialorder %v8914, 8.507059e+37
        %v8916 = vand.u32 %v8225, 2147483648
        %v8917 = vor.u32 1.1754944e-38, %v8916
        %v8918 = vsel %vm8915, %v8917, %v8913
        %v8919 = vmul.f32 1.0, %v8918
        %v8920 = vrcp.pop %v8226
        %v8921 = vmul.f32 %v8226, %v8920
        %v8922 = vsub.f32 1.0, %v8921
        %v8923 = vmul.f32 %v8920, %v8922
        %v8924 = vadd.f32 %v8920, %v8923
        %vm8925 = vweird.f32 %v8226
        %vm8926 = vweird.f32 %v8920
        %vm8927 = vmor %vm8925, %vm8926
        %v8928 = vsel %vm8927, %v8920, %v8924
        %v8929 = vand.u32 2147483647, %v8226
        %vm8930 = vcmp.eq.f32.partialorder %v8929, 8.507059e+37
        %v8931 = vand.u32 %v8226, 2147483648
        %v8932 = vor.u32 1.1754944e-38, %v8931
        %v8933 = vsel %vm8930, %v8932, %v8928
        %v8934 = vmul.f32 1.0, %v8933
        %v8935 = vrcp.pop %v8227
        %v8936 = vmul.f32 %v8227, %v8935
        %v8937 = vsub.f32 1.0, %v8936
        %v8938 = vmul.f32 %v8935, %v8937
        %v8939 = vadd.f32 %v8935, %v8938
        %vm8940 = vweird.f32 %v8227
        %vm8941 = vweird.f32 %v8935
        %vm8942 = vmor %vm8940, %vm8941
        %v8943 = vsel %vm8942, %v8935, %v8939
        %v8944 = vand.u32 2147483647, %v8227
        %vm8945 = vcmp.eq.f32.partialorder %v8944, 8.507059e+37
        %v8946 = vand.u32 %v8227, 2147483648
        %v8947 = vor.u32 1.1754944e-38, %v8946
        %v8948 = vsel %vm8945, %v8947, %v8943
        %v8949 = vmul.f32 1.0, %v8948
        %v8950 = vrcp.pop %v8228
        %v8951 = vmul.f32 %v8228, %v8950
        %v8952 = vsub.f32 1.0, %v8951
        %v8953 = vmul.f32 %v8950, %v8952
        %v8954 = vadd.f32 %v8950, %v8953
        %vm8955 = vweird.f32 %v8228
        %vm8956 = vweird.f32 %v8950
        %vm8957 = vmor %vm8955, %vm8956
        %v8958 = vsel %vm8957, %v8950, %v8954
        %v8959 = vand.u32 2147483647, %v8228
        %vm8960 = vcmp.eq.f32.partialorder %v8959, 8.507059e+37
        %v8961 = vand.u32 %v8228, 2147483648
        %v8962 = vor.u32 1.1754944e-38, %v8961
        %v8963 = vsel %vm8960, %v8962, %v8958
        %v8964 = vmul.f32 1.0, %v8963
        %v8965 = vrcp.pop %v8229
        %v8966 = vmul.f32 %v8229, %v8965
        %v8967 = vsub.f32 1.0, %v8966
        %v8968 = vmul.f32 %v8965, %v8967
        %v8969 = vadd.f32 %v8965, %v8968
        %vm8970 = vweird.f32 %v8229
        %vm8971 = vweird.f32 %v8965
        %vm8972 = vmor %vm8970, %vm8971
        %v8973 = vsel %vm8972, %v8965, %v8969
        %v8974 = vand.u32 2147483647, %v8229
        %vm8975 = vcmp.eq.f32.partialorder %v8974, 8.507059e+37
        %v8976 = vand.u32 %v8229, 2147483648
        %v8977 = vor.u32 1.1754944e-38, %v8976
        %v8978 = vsel %vm8975, %v8977, %v8973
        %v8979 = vmul.f32 1.0, %v8978
        %v8980 = vrcp.pop %v8230
        %v8981 = vmul.f32 %v8230, %v8980
        %v8982 = vsub.f32 1.0, %v8981
        %v8983 = vmul.f32 %v8980, %v8982
        %v8984 = vadd.f32 %v8980, %v8983
        %vm8985 = vweird.f32 %v8230
        %vm8986 = vweird.f32 %v8980
        %vm8987 = vmor %vm8985, %vm8986
        %v8988 = vsel %vm8987, %v8980, %v8984
        %v8989 = vand.u32 2147483647, %v8230
        %vm8990 = vcmp.eq.f32.partialorder %v8989, 8.507059e+37
        %v8991 = vand.u32 %v8230, 2147483648
        %v8992 = vor.u32 1.1754944e-38, %v8991
        %v8993 = vsel %vm8990, %v8992, %v8988
        %v8994 = vmul.f32 1.0, %v8993
        %v8995 = vrcp.pop %v8231
        %v8996 = vmul.f32 %v8231, %v8995
        %v8997 = vsub.f32 1.0, %v8996
        %v8998 = vmul.f32 %v8995, %v8997
        %v8999 = vadd.f32 %v8995, %v8998
        %vm9000 = vweird.f32 %v8231
        %vm9001 = vweird.f32 %v8995
        %vm9002 = vmor %vm9000, %vm9001
        %v9003 = vsel %vm9002, %v8995, %v8999
        %v9004 = vand.u32 2147483647, %v8231
        %vm9005 = vcmp.eq.f32.partialorder %v9004, 8.507059e+37
        %v9006 = vand.u32 %v8231, 2147483648
        %v9007 = vor.u32 1.1754944e-38, %v9006
        %v9008 = vsel %vm9005, %v9007, %v9003
        %v9009 = vmul.f32 1.0, %v9008
        %v9010 = vrcp.pop %v8232
        %v9011 = vmul.f32 %v8232, %v9010
        %v9012 = vsub.f32 1.0, %v9011
        %v9013 = vmul.f32 %v9010, %v9012
        %v9014 = vadd.f32 %v9010, %v9013
        %vm9015 = vweird.f32 %v8232
        %vm9016 = vweird.f32 %v9010
        %vm9017 = vmor %vm9015, %vm9016
        %v9018 = vsel %vm9017, %v9010, %v9014
        %v9019 = vand.u32 2147483647, %v8232
        %vm9020 = vcmp.eq.f32.partialorder %v9019, 8.507059e+37
        %v9021 = vand.u32 %v8232, 2147483648
        %v9022 = vor.u32 1.1754944e-38, %v9021
        %v9023 = vsel %vm9020, %v9022, %v9018
        %v9024 = vmul.f32 1.0, %v9023
        %v9025 = vrcp.pop %v8233
        %v9026 = vmul.f32 %v8233, %v9025
        %v9027 = vsub.f32 1.0, %v9026
        %v9028 = vmul.f32 %v9025, %v9027
        %v9029 = vadd.f32 %v9025, %v9028
        %vm9030 = vweird.f32 %v8233
        %vm9031 = vweird.f32 %v9025
        %vm9032 = vmor %vm9030, %vm9031
        %v9033 = vsel %vm9032, %v9025, %v9029
        %v9034 = vand.u32 2147483647, %v8233
        %vm9035 = vcmp.eq.f32.partialorder %v9034, 8.507059e+37
        %v9036 = vand.u32 %v8233, 2147483648
        %v9037 = vor.u32 1.1754944e-38, %v9036
        %v9038 = vsel %vm9035, %v9037, %v9033
        %v9039 = vmul.f32 1.0, %v9038
        %v9040 = vrcp.pop %v8234
        %v9041 = vmul.f32 %v8234, %v9040
        %v9042 = vsub.f32 1.0, %v9041
        %v9043 = vmul.f32 %v9040, %v9042
        %v9044 = vadd.f32 %v9040, %v9043
        %vm9045 = vweird.f32 %v8234
        %vm9046 = vweird.f32 %v9040
        %vm9047 = vmor %vm9045, %vm9046
        %v9048 = vsel %vm9047, %v9040, %v9044
        %v9049 = vand.u32 2147483647, %v8234
        %vm9050 = vcmp.eq.f32.partialorder %v9049, 8.507059e+37
        %v9051 = vand.u32 %v8234, 2147483648
        %v9052 = vor.u32 1.1754944e-38, %v9051
        %v9053 = vsel %vm9050, %v9052, %v9048
        %v9054 = vmul.f32 1.0, %v9053
        %v9055 = vrcp.pop %v8235
        %v9056 = vmul.f32 %v8235, %v9055
        %v9057 = vsub.f32 1.0, %v9056
        %v9058 = vmul.f32 %v9055, %v9057
        %v9059 = vadd.f32 %v9055, %v9058
        %vm9060 = vweird.f32 %v8235
        %vm9061 = vweird.f32 %v9055
        %vm9062 = vmor %vm9060, %vm9061
        %v9063 = vsel %vm9062, %v9055, %v9059
        %v9064 = vand.u32 2147483647, %v8235
        %vm9065 = vcmp.eq.f32.partialorder %v9064, 8.507059e+37
        %v9066 = vand.u32 %v8235, 2147483648
        %v9067 = vor.u32 1.1754944e-38, %v9066
        %v9068 = vsel %vm9065, %v9067, %v9063
        %v9069 = vmul.f32 1.0, %v9068
        %v9070 = vrcp.pop %v8236
        %v9071 = vmul.f32 %v8236, %v9070
        %v9072 = vsub.f32 1.0, %v9071
        %v9073 = vmul.f32 %v9070, %v9072
        %v9074 = vadd.f32 %v9070, %v9073
        %vm9075 = vweird.f32 %v8236
        %vm9076 = vweird.f32 %v9070
        %vm9077 = vmor %vm9075, %vm9076
        %v9078 = vsel %vm9077, %v9070, %v9074
        %v9079 = vand.u32 2147483647, %v8236
        %vm9080 = vcmp.eq.f32.partialorder %v9079, 8.507059e+37
        %v9081 = vand.u32 %v8236, 2147483648
        %v9082 = vor.u32 1.1754944e-38, %v9081
        %v9083 = vsel %vm9080, %v9082, %v9078
        %v9084 = vmul.f32 1.0, %v9083
        %v9085 = vrcp.pop %v8237
        %v9086 = vmul.f32 %v8237, %v9085
        %v9087 = vsub.f32 1.0, %v9086
        %v9088 = vmul.f32 %v9085, %v9087
        %v9089 = vadd.f32 %v9085, %v9088
        %vm9090 = vweird.f32 %v8237
        %vm9091 = vweird.f32 %v9085
        %vm9092 = vmor %vm9090, %vm9091
        %v9093 = vsel %vm9092, %v9085, %v9089
        %v9094 = vand.u32 2147483647, %v8237
        %vm9095 = vcmp.eq.f32.partialorder %v9094, 8.507059e+37
        %v9096 = vand.u32 %v8237, 2147483648
        %v9097 = vor.u32 1.1754944e-38, %v9096
        %v9098 = vsel %vm9095, %v9097, %v9093
        %v9099 = vmul.f32 1.0, %v9098
        %v9100 = vrcp.pop %v8238
        %v9101 = vmul.f32 %v8238, %v9100
        %v9102 = vsub.f32 1.0, %v9101
        %v9103 = vmul.f32 %v9100, %v9102
        %v9104 = vadd.f32 %v9100, %v9103
        %vm9105 = vweird.f32 %v8238
        %vm9106 = vweird.f32 %v9100
        %vm9107 = vmor %vm9105, %vm9106
        %v9108 = vsel %vm9107, %v9100, %v9104
        %v9109 = vand.u32 2147483647, %v8238
        %vm9110 = vcmp.eq.f32.partialorder %v9109, 8.507059e+37
        %v9111 = vand.u32 %v8238, 2147483648
        %v9112 = vor.u32 1.1754944e-38, %v9111
        %v9113 = vsel %vm9110, %v9112, %v9108
        %v9114 = vmul.f32 1.0, %v9113
        %v9115 = vrcp.pop %v8239
        %v9116 = vmul.f32 %v8239, %v9115
        %v9117 = vsub.f32 1.0, %v9116
        %v9118 = vmul.f32 %v9115, %v9117
        %v9119 = vadd.f32 %v9115, %v9118
        %vm9120 = vweird.f32 %v8239
        %vm9121 = vweird.f32 %v9115
        %vm9122 = vmor %vm9120, %vm9121
        %v9123 = vsel %vm9122, %v9115, %v9119
        %v9124 = vand.u32 2147483647, %v8239
        %vm9125 = vcmp.eq.f32.partialorder %v9124, 8.507059e+37
        %v9126 = vand.u32 %v8239, 2147483648
        %v9127 = vor.u32 1.1754944e-38, %v9126
        %v9128 = vsel %vm9125, %v9127, %v9123
        %v9129 = vmul.f32 1.0, %v9128
        %v9130 = vrcp.pop %v8240
        %v9131 = vmul.f32 %v8240, %v9130
        %v9132 = vsub.f32 1.0, %v9131
        %v9133 = vmul.f32 %v9130, %v9132
        %v9134 = vadd.f32 %v9130, %v9133
        %vm9135 = vweird.f32 %v8240
        %vm9136 = vweird.f32 %v9130
        %vm9137 = vmor %vm9135, %vm9136
        %v9138 = vsel %vm9137, %v9130, %v9134
        %v9139 = vand.u32 2147483647, %v8240
        %vm9140 = vcmp.eq.f32.partialorder %v9139, 8.507059e+37
        %v9141 = vand.u32 %v8240, 2147483648
        %v9142 = vor.u32 1.1754944e-38, %v9141
        %v9143 = vsel %vm9140, %v9142, %v9138
        %v9144 = vmul.f32 1.0, %v9143
        %v9145 = vrcp.pop %v8241
        %v9146 = vmul.f32 %v8241, %v9145
        %v9147 = vsub.f32 1.0, %v9146
        %v9148 = vmul.f32 %v9145, %v9147
        %v9149 = vadd.f32 %v9145, %v9148
        %vm9150 = vweird.f32 %v8241
        %vm9151 = vweird.f32 %v9145
        %vm9152 = vmor %vm9150, %vm9151
        %v9153 = vsel %vm9152, %v9145, %v9149
        %v9154 = vand.u32 2147483647, %v8241
        %vm9155 = vcmp.eq.f32.partialorder %v9154, 8.507059e+37
        %v9156 = vand.u32 %v8241, 2147483648
        %v9157 = vor.u32 1.1754944e-38, %v9156
        %v9158 = vsel %vm9155, %v9157, %v9153
        %v9159 = vmul.f32 1.0, %v9158
        %v9160 = vrcp.pop %v8242
        %v9161 = vmul.f32 %v8242, %v9160
        %v9162 = vsub.f32 1.0, %v9161
        %v9163 = vmul.f32 %v9160, %v9162
        %v9164 = vadd.f32 %v9160, %v9163
        %vm9165 = vweird.f32 %v8242
        %vm9166 = vweird.f32 %v9160
        %vm9167 = vmor %vm9165, %vm9166
        %v9168 = vsel %vm9167, %v9160, %v9164
        %v9169 = vand.u32 2147483647, %v8242
        %vm9170 = vcmp.eq.f32.partialorder %v9169, 8.507059e+37
        %v9171 = vand.u32 %v8242, 2147483648
        %v9172 = vor.u32 1.1754944e-38, %v9171
        %v9173 = vsel %vm9170, %v9172, %v9168
        %v9174 = vmul.f32 1.0, %v9173
        %v9175 = vrcp.pop %v8243
        %v9176 = vmul.f32 %v8243, %v9175
        %v9177 = vsub.f32 1.0, %v9176
        %v9178 = vmul.f32 %v9175, %v9177
        %v9179 = vadd.f32 %v9175, %v9178
        %vm9180 = vweird.f32 %v8243
        %vm9181 = vweird.f32 %v9175
        %vm9182 = vmor %vm9180, %vm9181
        %v9183 = vsel %vm9182, %v9175, %v9179
        %v9184 = vand.u32 2147483647, %v8243
        %vm9185 = vcmp.eq.f32.partialorder %v9184, 8.507059e+37
        %v9186 = vand.u32 %v8243, 2147483648
        %v9187 = vor.u32 1.1754944e-38, %v9186
        %v9188 = vsel %vm9185, %v9187, %v9183
        %v9189 = vmul.f32 1.0, %v9188
        %v9190 = vrcp.pop %v8244
        %v9191 = vmul.f32 %v8244, %v9190
        %v9192 = vsub.f32 1.0, %v9191
        %v9193 = vmul.f32 %v9190, %v9192
        %v9194 = vadd.f32 %v9190, %v9193
        %vm9195 = vweird.f32 %v8244
        %vm9196 = vweird.f32 %v9190
        %vm9197 = vmor %vm9195, %vm9196
        %v9198 = vsel %vm9197, %v9190, %v9194
        %v9199 = vand.u32 2147483647, %v8244
        %vm9200 = vcmp.eq.f32.partialorder %v9199, 8.507059e+37
        %v9201 = vand.u32 %v8244, 2147483648
        %v9202 = vor.u32 1.1754944e-38, %v9201
        %v9203 = vsel %vm9200, %v9202, %v9198
        %v9204 = vmul.f32 1.0, %v9203
        %v9205 = vmul.f32 %v7821, %v8259
        %v9206 = vmul.f32 %v7910, %v8274
        %v9207 = vmul.f32 %v7823, %v8289
        %v9208 = vmul.f32 %v7912, %v8304
        %v9209 = vmul.f32 %v7826, %v8319
        %v9210 = vmul.f32 %v7915, %v8334
        %v9211 = vmul.f32 %v7828, %v8349
        %v9212 = vmul.f32 %v7917, %v8364
        %v9213 = vmul.f32 %v7831, %v8379
        %v9214 = vmul.f32 %v7920, %v8394
        %v9215 = vmul.f32 %v7833, %v8409
        %v9216 = vmul.f32 %v7922, %v8424
        %v9217 = vmul.f32 %v7836, %v8439
        %v9218 = vmul.f32 %v7925, %v8454
        %v9219 = vmul.f32 %v7838, %v8469
        %v9220 = vmul.f32 %v7927, %v8484
        %v9221 = vmul.f32 %v7841, %v8499
        %v9222 = vmul.f32 %v7930, %v8514
        %v9223 = vmul.f32 %v7843, %v8529
        %v9224 = vmul.f32 %v7932, %v8544
        %v9225 = vmul.f32 %v7846, %v8559
        %v9226 = vmul.f32 %v7935, %v8574
        %v9227 = vmul.f32 %v7848, %v8589
        %v9228 = vmul.f32 %v7937, %v8604
        %v9229 = vmul.f32 %v7851, %v8619
        %v9230 = vmul.f32 %v7940, %v8634
        %v9231 = vmul.f32 %v7853, %v8649
        %v9232 = vmul.f32 %v7942, %v8664
        %v9233 = vmul.f32 %v7856, %v8679
        %v9234 = vmul.f32 %v7945, %v8694
        %v9235 = vmul.f32 %v7858, %v8709
        %v9236 = vmul.f32 %v7947, %v8724
        %v9237 = vmul.f32 %v7861, %v8739
        %v9238 = vmul.f32 %v7950, %v8754
        %v9239 = vmul.f32 %v7863, %v8769
        %v9240 = vmul.f32 %v7952, %v8784
        %v9241 = vmul.f32 %v7866, %v8799
        %v9242 = vmul.f32 %v7955, %v8814
        %v9243 = vmul.f32 %v7868, %v8829
        %v9244 = vmul.f32 %v7957, %v8844
        %v9245 = vmul.f32 %v7871, %v8859
        %v9246 = vmul.f32 %v7960, %v8874
        %v9247 = vmul.f32 %v7873, %v8889
        %v9248 = vmul.f32 %v7962, %v8904
        %v9249 = vmul.f32 %v7876, %v8919
        %v9250 = vmul.f32 %v7965, %v8934
        %v9251 = vmul.f32 %v7878, %v8949
        %v9252 = vmul.f32 %v7967, %v8964
        %v9253 = vmul.f32 %v7881, %v8979
        %v9254 = vmul.f32 %v7970, %v8994
        %v9255 = vmul.f32 %v7883, %v9009
        %v9256 = vmul.f32 %v7972, %v9024
        %v9257 = vmul.f32 %v7886, %v9039
        %v9258 = vmul.f32 %v7975, %v9054
        %v9259 = vmul.f32 %v7888, %v9069
        %v9260 = vmul.f32 %v7977, %v9084
        %v9261 = vmul.f32 %v7891, %v9099
        %v9262 = vmul.f32 %v7980, %v9114
        %v9263 = vmul.f32 %v7893, %v9129
        %v9264 = vmul.f32 %v7982, %v9144
        %v9265 = vmul.f32 %v7896, %v9159
        %v9266 = vmul.f32 %v7985, %v9174
        %v9267 = vmul.f32 %v7898, %v9189
        %v9268 = vmul.f32 %v7987, %v9204
        %v9269 = vpack.c.bf16 %v9207, %v9205
        %v9270 = vpack.c.bf16 %v9208, %v9206
        %v9271 = vpack.c.bf16 %v9211, %v9209
        %v9272 = vpack.c.bf16 %v9212, %v9210
        %v9273 = vpack.c.bf16 %v9215, %v9213
        %v9274 = vpack.c.bf16 %v9216, %v9214
        %v9275 = vpack.c.bf16 %v9219, %v9217
        %v9276 = vpack.c.bf16 %v9220, %v9218
        %v9277 = vpack.c.bf16 %v9223, %v9221
        %v9278 = vpack.c.bf16 %v9224, %v9222
        %v9279 = vpack.c.bf16 %v9227, %v9225
        %v9280 = vpack.c.bf16 %v9228, %v9226
        %v9281 = vpack.c.bf16 %v9231, %v9229
        %v9282 = vpack.c.bf16 %v9232, %v9230
        %v9283 = vpack.c.bf16 %v9235, %v9233
        %v9284 = vpack.c.bf16 %v9236, %v9234
        %v9285 = vpack.c.bf16 %v9239, %v9237
        %v9286 = vpack.c.bf16 %v9240, %v9238
        %v9287 = vpack.c.bf16 %v9243, %v9241
        %v9288 = vpack.c.bf16 %v9244, %v9242
        %v9289 = vpack.c.bf16 %v9247, %v9245
        %v9290 = vpack.c.bf16 %v9248, %v9246
        %v9291 = vpack.c.bf16 %v9251, %v9249
        %v9292 = vpack.c.bf16 %v9252, %v9250
        %v9293 = vpack.c.bf16 %v9255, %v9253
        %v9294 = vpack.c.bf16 %v9256, %v9254
        %v9295 = vpack.c.bf16 %v9259, %v9257
        %v9296 = vpack.c.bf16 %v9260, %v9258
        %v9297 = vpack.c.bf16 %v9263, %v9261
        %v9298 = vpack.c.bf16 %v9264, %v9262
        %v9299 = vpack.c.bf16 %v9267, %v9265
        %v9300 = vpack.c.bf16 %v9268, %v9266
        %v9301 = vld [vmem:[#allocation13] sm:$0xf]
        %v9302 = vld [vmem:[#allocation13 + $0x4] sm:$0xf]
        %v9303 = vld [vmem:[#allocation13 + $0x8] sm:$0xf]
        %v9304 = vld [vmem:[#allocation13 + $0xc] sm:$0xf]
        %v9305 = vld [vmem:[#allocation13 + $0x10] sm:$0xf]
        %v9306 = vld [vmem:[#allocation13 + $0x14] sm:$0xf]
        %v9307 = vld [vmem:[#allocation13 + $0x18] sm:$0xf]
        %v9308 = vld [vmem:[#allocation13 + $0x1c] sm:$0xf]
        %v9309 = vld [vmem:[#allocation13 + $0x20] sm:$0xf]
        %v9310 = vld [vmem:[#allocation13 + $0x24] sm:$0xf]
        %v9311 = vld [vmem:[#allocation13 + $0x28] sm:$0xf]
        %v9312 = vld [vmem:[#allocation13 + $0x2c] sm:$0xf]
        %v9313 = vld [vmem:[#allocation13 + $0x30] sm:$0xf]
        %v9314 = vld [vmem:[#allocation13 + $0x34] sm:$0xf]
        %v9315 = vld [vmem:[#allocation13 + $0x38] sm:$0xf]
        %v9316 = vld [vmem:[#allocation13 + $0x3c] sm:$0xf]
        %v9317 = vld [vmem:[#allocation13 + $0x40] sm:$0xf]
        %v9318 = vld [vmem:[#allocation13 + $0x44] sm:$0xf]
        %v9319 = vld [vmem:[#allocation13 + $0x48] sm:$0xf]
        %v9320 = vld [vmem:[#allocation13 + $0x4c] sm:$0xf]
        %v9321 = vld [vmem:[#allocation13 + $0x50] sm:$0xf]
        %v9322 = vld [vmem:[#allocation13 + $0x54] sm:$0xf]
        %v9323 = vld [vmem:[#allocation13 + $0x58] sm:$0xf]
        %v9324 = vld [vmem:[#allocation13 + $0x5c] sm:$0xf]
        %v9325 = vld [vmem:[#allocation13 + $0x60] sm:$0xf]
        %v9326 = vld [vmem:[#allocation13 + $0x64] sm:$0xf]
        %v9327 = vld [vmem:[#allocation13 + $0x68] sm:$0xf]
        %v9328 = vld [vmem:[#allocation13 + $0x6c] sm:$0xf]
        %v9329 = vld [vmem:[#allocation13 + $0x70] sm:$0xf]
        %v9330 = vld [vmem:[#allocation13 + $0x74] sm:$0xf]
        %v9331 = vld [vmem:[#allocation13 + $0x78] sm:$0xf]
        %v9332 = vld [vmem:[#allocation13 + $0x7c] sm:$0xf]
        %v9333 = vld [vmem:[%s10] sm:$0x1]
        %v9335 = vperm.slane %v9333, 0
        %v9369 = vunpack.c.l.b16 %v9301
        %v9370 = vunpack.c.l.b16 %v9302
        %v9371 = vunpack.c.l.b16 %v9303
        %v9372 = vunpack.c.l.b16 %v9304
        %v9373 = vunpack.c.l.b16 %v9305
        %v9374 = vunpack.c.l.b16 %v9306
        %v9375 = vunpack.c.l.b16 %v9307
        %v9376 = vunpack.c.l.b16 %v9308
        %v9377 = vunpack.c.l.b16 %v9309
        %v9378 = vunpack.c.l.b16 %v9310
        %v9379 = vunpack.c.l.b16 %v9311
        %v9380 = vunpack.c.l.b16 %v9312
        %v9381 = vunpack.c.l.b16 %v9313
        %v9382 = vunpack.c.l.b16 %v9314
        %v9383 = vunpack.c.l.b16 %v9315
        %v9384 = vunpack.c.l.b16 %v9316
        %v9385 = vunpack.c.l.b16 %v9317
        %v9386 = vunpack.c.l.b16 %v9318
        %v9387 = vunpack.c.l.b16 %v9319
        %v9388 = vunpack.c.l.b16 %v9320
        %v9389 = vunpack.c.l.b16 %v9321
        %v9390 = vunpack.c.l.b16 %v9322
        %v9391 = vunpack.c.l.b16 %v9323
        %v9392 = vunpack.c.l.b16 %v9324
        %v9393 = vunpack.c.l.b16 %v9325
        %v9394 = vunpack.c.l.b16 %v9326
        %v9395 = vunpack.c.l.b16 %v9327
        %v9396 = vunpack.c.l.b16 %v9328
        %v9397 = vunpack.c.l.b16 %v9329
        %v9398 = vunpack.c.l.b16 %v9330
        %v9399 = vunpack.c.l.b16 %v9331
        %v9400 = vunpack.c.l.b16 %v9332
        %v9401 = vpack.c.b16 %v9370, %v9369
        %v9402 = vpack.c.b16 %v9372, %v9371
        %v9403 = vpack.c.b16 %v9374, %v9373
        %v9404 = vpack.c.b16 %v9376, %v9375
        %v9405 = vpack.c.b16 %v9378, %v9377
        %v9406 = vpack.c.b16 %v9380, %v9379
        %v9407 = vpack.c.b16 %v9382, %v9381
        %v9408 = vpack.c.b16 %v9384, %v9383
        %v9409 = vpack.c.b16 %v9386, %v9385
        %v9410 = vpack.c.b16 %v9388, %v9387
        %v9411 = vpack.c.b16 %v9390, %v9389
        %v9412 = vpack.c.b16 %v9392, %v9391
        %v9413 = vpack.c.b16 %v9394, %v9393
        %v9414 = vpack.c.b16 %v9396, %v9395
        %v9415 = vpack.c.b16 %v9398, %v9397
        %v9416 = vpack.c.b16 %v9400, %v9399
        %9433 = vmatpush.bf16.msra.mxu0 %v9408
        %9434 = vmatpush.bf16.msra.mxu0 %v9407
        %9435 = vmatpush.bf16.msra.mxu0 %v9406
        %9436 = vmatpush.bf16.msra.mxu0 %v9405
        %9437 = vmatpush.bf16.msra.mxu0 %v9404
        %9438 = vmatpush.bf16.msra.mxu0 %v9403
        %9439 = vmatpush.bf16.msra.mxu0 %v9402
        %9440 = vmatpush.bf16.msra.mxu0 %v9401
        %9441 = vmatmul.bf16.gmra.mxu0 %v9269
        %v9442 = vpop.f32.mrf.mxu0
        %v9443 = vadd.f32 %v9335, %v9442
        %v9444 = vpop.f32.mrf.mxu0
        %v9445 = vadd.f32 %v9335, %v9444
        %9446 = vmatmul.bf16.gmra.mxu0 %v9271
        %v9447 = vpop.f32.mrf.mxu0
        %v9448 = vadd.f32 %v9335, %v9447
        %v9449 = vpop.f32.mrf.mxu0
        %v9450 = vadd.f32 %v9335, %v9449
        %9451 = vmatmul.bf16.gmra.mxu0 %v9273
        %v9452 = vpop.f32.mrf.mxu0
        %v9453 = vadd.f32 %v9335, %v9452
        %v9454 = vpop.f32.mrf.mxu0
        %v9455 = vadd.f32 %v9335, %v9454
        %9456 = vmatmul.bf16.gmra.mxu0 %v9275
        %v9457 = vpop.f32.mrf.mxu0
        %v9458 = vadd.f32 %v9335, %v9457
        %v9459 = vpop.f32.mrf.mxu0
        %v9460 = vadd.f32 %v9335, %v9459
        %9461 = vmatmul.bf16.gmra.mxu0 %v9277
        %v9462 = vpop.f32.mrf.mxu0
        %v9463 = vadd.f32 %v9335, %v9462
        %v9464 = vpop.f32.mrf.mxu0
        %v9465 = vadd.f32 %v9335, %v9464
        %9466 = vmatmul.bf16.gmra.mxu0 %v9279
        %v9467 = vpop.f32.mrf.mxu0
        %v9468 = vadd.f32 %v9335, %v9467
        %v9469 = vpop.f32.mrf.mxu0
        %v9470 = vadd.f32 %v9335, %v9469
        %9471 = vmatmul.bf16.gmra.mxu0 %v9281
        %v9472 = vpop.f32.mrf.mxu0
        %v9473 = vadd.f32 %v9335, %v9472
        %v9474 = vpop.f32.mrf.mxu0
        %v9475 = vadd.f32 %v9335, %v9474
        %9476 = vmatmul.bf16.gmra.mxu0 %v9283
        %v9477 = vpop.f32.mrf.mxu0
        %v9478 = vadd.f32 %v9335, %v9477
        %v9479 = vpop.f32.mrf.mxu0
        %v9480 = vadd.f32 %v9335, %v9479
        %9481 = vmatmul.bf16.gmra.mxu0 %v9285
        %v9482 = vpop.f32.mrf.mxu0
        %v9483 = vadd.f32 %v9335, %v9482
        %v9484 = vpop.f32.mrf.mxu0
        %v9485 = vadd.f32 %v9335, %v9484
        %9486 = vmatmul.bf16.gmra.mxu0 %v9287
        %v9487 = vpop.f32.mrf.mxu0
        %v9488 = vadd.f32 %v9335, %v9487
        %v9489 = vpop.f32.mrf.mxu0
        %v9490 = vadd.f32 %v9335, %v9489
        %9491 = vmatmul.bf16.gmra.mxu0 %v9289
        %v9492 = vpop.f32.mrf.mxu0
        %v9493 = vadd.f32 %v9335, %v9492
        %v9494 = vpop.f32.mrf.mxu0
        %v9495 = vadd.f32 %v9335, %v9494
        %9496 = vmatmul.bf16.gmra.mxu0 %v9291
        %v9497 = vpop.f32.mrf.mxu0
        %v9498 = vadd.f32 %v9335, %v9497
        %v9499 = vpop.f32.mrf.mxu0
        %v9500 = vadd.f32 %v9335, %v9499
        %9501 = vmatmul.bf16.gmra.mxu0 %v9293
        %v9502 = vpop.f32.mrf.mxu0
        %v9503 = vadd.f32 %v9335, %v9502
        %v9504 = vpop.f32.mrf.mxu0
        %v9505 = vadd.f32 %v9335, %v9504
        %9506 = vmatmul.bf16.gmra.mxu0 %v9295
        %v9507 = vpop.f32.mrf.mxu0
        %v9508 = vadd.f32 %v9335, %v9507
        %v9509 = vpop.f32.mrf.mxu0
        %v9510 = vadd.f32 %v9335, %v9509
        %9511 = vmatmul.bf16.gmra.mxu0 %v9297
        %v9512 = vpop.f32.mrf.mxu0
        %v9513 = vadd.f32 %v9335, %v9512
        %v9514 = vpop.f32.mrf.mxu0
        %v9515 = vadd.f32 %v9335, %v9514
        %9516 = vmatmul.bf16.gmra.mxu0 %v9299
        %v9517 = vpop.f32.mrf.mxu0
        %v9518 = vadd.f32 %v9335, %v9517
        %v9519 = vpop.f32.mrf.mxu0
        %v9520 = vadd.f32 %v9335, %v9519
        %9521 = vdwg.mxu0
        %9522 = vmatpush.bf16.msra.mxu0 %v9416
        %9523 = vmatpush.bf16.msra.mxu0 %v9415
        %9524 = vmatpush.bf16.msra.mxu0 %v9414
        %9525 = vmatpush.bf16.msra.mxu0 %v9413
        %9526 = vmatpush.bf16.msra.mxu0 %v9412
        %9527 = vmatpush.bf16.msra.mxu0 %v9411
        %9528 = vmatpush.bf16.msra.mxu0 %v9410
        %9529 = vmatpush.bf16.msra.mxu0 %v9409
        %9530 = vmatmul.bf16.gmra.mxu0 %v9270
        %v9531 = vpop.f32.mrf.mxu0
        %v9532 = vadd.f32 %v9443, %v9531
        %v9533 = vpop.f32.mrf.mxu0
        %v9534 = vadd.f32 %v9445, %v9533
        %9535 = vmatmul.bf16.gmra.mxu0 %v9272
        %v9536 = vpop.f32.mrf.mxu0
        %v9537 = vadd.f32 %v9448, %v9536
        %v9538 = vpop.f32.mrf.mxu0
        %v9539 = vadd.f32 %v9450, %v9538
        %9540 = vmatmul.bf16.gmra.mxu0 %v9274
        %v9541 = vpop.f32.mrf.mxu0
        %v9542 = vadd.f32 %v9453, %v9541
        %v9543 = vpop.f32.mrf.mxu0
        %v9544 = vadd.f32 %v9455, %v9543
        %9545 = vmatmul.bf16.gmra.mxu0 %v9276
        %v9546 = vpop.f32.mrf.mxu0
        %v9547 = vadd.f32 %v9458, %v9546
        %v9548 = vpop.f32.mrf.mxu0
        %v9549 = vadd.f32 %v9460, %v9548
        %9550 = vmatmul.bf16.gmra.mxu0 %v9278
        %v9551 = vpop.f32.mrf.mxu0
        %v9552 = vadd.f32 %v9463, %v9551
        %v9553 = vpop.f32.mrf.mxu0
        %v9554 = vadd.f32 %v9465, %v9553
        %9555 = vmatmul.bf16.gmra.mxu0 %v9280
        %v9556 = vpop.f32.mrf.mxu0
        %v9557 = vadd.f32 %v9468, %v9556
        %v9558 = vpop.f32.mrf.mxu0
        %v9559 = vadd.f32 %v9470, %v9558
        %9560 = vmatmul.bf16.gmra.mxu0 %v9282
        %v9561 = vpop.f32.mrf.mxu0
        %v9562 = vadd.f32 %v9473, %v9561
        %v9563 = vpop.f32.mrf.mxu0
        %v9564 = vadd.f32 %v9475, %v9563
        %9565 = vmatmul.bf16.gmra.mxu0 %v9284
        %v9566 = vpop.f32.mrf.mxu0
        %v9567 = vadd.f32 %v9478, %v9566
        %v9568 = vpop.f32.mrf.mxu0
        %v9569 = vadd.f32 %v9480, %v9568
        %9570 = vmatmul.bf16.gmra.mxu0 %v9286
        %v9571 = vpop.f32.mrf.mxu0
        %v9572 = vadd.f32 %v9483, %v9571
        %v9573 = vpop.f32.mrf.mxu0
        %v9574 = vadd.f32 %v9485, %v9573
        %9575 = vmatmul.bf16.gmra.mxu0 %v9288
        %v9576 = vpop.f32.mrf.mxu0
        %v9577 = vadd.f32 %v9488, %v9576
        %v9578 = vpop.f32.mrf.mxu0
        %v9579 = vadd.f32 %v9490, %v9578
        %9580 = vmatmul.bf16.gmra.mxu0 %v9290
        %v9581 = vpop.f32.mrf.mxu0
        %v9582 = vadd.f32 %v9493, %v9581
        %v9583 = vpop.f32.mrf.mxu0
        %v9584 = vadd.f32 %v9495, %v9583
        %9585 = vmatmul.bf16.gmra.mxu0 %v9292
        %v9586 = vpop.f32.mrf.mxu0
        %v9587 = vadd.f32 %v9498, %v9586
        %v9588 = vpop.f32.mrf.mxu0
        %v9589 = vadd.f32 %v9500, %v9588
        %9590 = vmatmul.bf16.gmra.mxu0 %v9294
        %v9591 = vpop.f32.mrf.mxu0
        %v9592 = vadd.f32 %v9503, %v9591
        %v9593 = vpop.f32.mrf.mxu0
        %v9594 = vadd.f32 %v9505, %v9593
        %9595 = vmatmul.bf16.gmra.mxu0 %v9296
        %v9596 = vpop.f32.mrf.mxu0
        %v9597 = vadd.f32 %v9508, %v9596
        %v9598 = vpop.f32.mrf.mxu0
        %v9599 = vadd.f32 %v9510, %v9598
        %9600 = vmatmul.bf16.gmra.mxu0 %v9298
        %v9601 = vpop.f32.mrf.mxu0
        %v9602 = vadd.f32 %v9513, %v9601
        %v9603 = vpop.f32.mrf.mxu0
        %v9604 = vadd.f32 %v9515, %v9603
        %9605 = vmatmul.bf16.gmra.mxu0 %v9300
        %v9606 = vpop.f32.mrf.mxu0
        %v9607 = vadd.f32 %v9518, %v9606
        %v9608 = vpop.f32.mrf.mxu0
        %v9609 = vadd.f32 %v9520, %v9608
        %9610 = vdwg.mxu0
        %v9611 = vadd.f32 %v7661, %v9532
        %v9612 = vadd.f32 %v7662, %v9534
        %v9613 = vadd.f32 %v7663, %v9537
        %v9614 = vadd.f32 %v7664, %v9539
        %v9615 = vadd.f32 %v7665, %v9542
        %v9616 = vadd.f32 %v7666, %v9544
        %v9617 = vadd.f32 %v7667, %v9547
        %v9618 = vadd.f32 %v7668, %v9549
        %v9619 = vadd.f32 %v7669, %v9552
        %v9620 = vadd.f32 %v7670, %v9554
        %v9621 = vadd.f32 %v7671, %v9557
        %v9622 = vadd.f32 %v7672, %v9559
        %v9623 = vadd.f32 %v7673, %v9562
        %v9624 = vadd.f32 %v7674, %v9564
        %v9625 = vadd.f32 %v7675, %v9567
        %v9626 = vadd.f32 %v7676, %v9569
        %v9627 = vadd.f32 %v7677, %v9572
        %v9628 = vadd.f32 %v7678, %v9574
        %v9629 = vadd.f32 %v7679, %v9577
        %v9630 = vadd.f32 %v7680, %v9579
        %v9631 = vadd.f32 %v7681, %v9582
        %v9632 = vadd.f32 %v7682, %v9584
        %v9633 = vadd.f32 %v7683, %v9587
        %v9634 = vadd.f32 %v7684, %v9589
        %v9635 = vadd.f32 %v7685, %v9592
        %v9636 = vadd.f32 %v7686, %v9594
        %v9637 = vadd.f32 %v7687, %v9597
        %v9638 = vadd.f32 %v7688, %v9599
        %v9639 = vadd.f32 %v7689, %v9602
        %v9640 = vadd.f32 %v7690, %v9604
        %v9641 = vadd.f32 %v7691, %v9607
        %v9642 = vadd.f32 %v7692, %v9609
        %9643 = vst [vmem:[%s503] sm:$0xff] %v9611
        %9644 = vst [vmem:[%s503 + $0x8] sm:$0xff] %v9612
        %9645 = vst [vmem:[%s503 + $0x10] sm:$0xff] %v9613
        %9646 = vst [vmem:[%s503 + $0x18] sm:$0xff] %v9614
        %9647 = vst [vmem:[%s503 + $0x20] sm:$0xff] %v9615
        %9648 = vst [vmem:[%s503 + $0x28] sm:$0xff] %v9616
        %9649 = vst [vmem:[%s503 + $0x30] sm:$0xff] %v9617
        %9650 = vst [vmem:[%s503 + $0x38] sm:$0xff] %v9618
        %9651 = vst [vmem:[%s503 + $0x40] sm:$0xff] %v9619
        %9652 = vst [vmem:[%s503 + $0x48] sm:$0xff] %v9620
        %9653 = vst [vmem:[%s503 + $0x50] sm:$0xff] %v9621
        %9654 = vst [vmem:[%s503 + $0x58] sm:$0xff] %v9622
        %9655 = vst [vmem:[%s503 + $0x60] sm:$0xff] %v9623
        %9656 = vst [vmem:[%s503 + $0x68] sm:$0xff] %v9624
        %9657 = vst [vmem:[%s503 + $0x70] sm:$0xff] %v9625
        %9658 = vst [vmem:[%s503 + $0x78] sm:$0xff] %v9626
        %9659 = vst [vmem:[%s503 + $0x80] sm:$0xff] %v9627
        %9660 = vst [vmem:[%s503 + $0x88] sm:$0xff] %v9628
        %9661 = vst [vmem:[%s503 + $0x90] sm:$0xff] %v9629
        %9662 = vst [vmem:[%s503 + $0x98] sm:$0xff] %v9630
        %9663 = vst [vmem:[%s503 + $0xa0] sm:$0xff] %v9631
        %9664 = vst [vmem:[%s503 + $0xa8] sm:$0xff] %v9632
        %9665 = vst [vmem:[%s503 + $0xb0] sm:$0xff] %v9633
        %9666 = vst [vmem:[%s503 + $0xb8] sm:$0xff] %v9634
        %9667 = vst [vmem:[%s503 + $0xc0] sm:$0xff] %v9635
        %9668 = vst [vmem:[%s503 + $0xc8] sm:$0xff] %v9636
        %9669 = vst [vmem:[%s503 + $0xd0] sm:$0xff] %v9637
        %9670 = vst [vmem:[%s503 + $0xd8] sm:$0xff] %v9638
        %9671 = vst [vmem:[%s503 + $0xe0] sm:$0xff] %v9639
        %9672 = vst [vmem:[%s503 + $0xe8] sm:$0xff] %v9640
        %9673 = vst [vmem:[%s503 + $0xf0] sm:$0xff] %v9641
        %9674 = vst [vmem:[%s503 + $0xf8] sm:$0xff] %v9642
        %s9675 = sand.u32 %s275, 1
        %s9676 = scalar_lea.sflag [#allocation4], %s9675
        %s9677 = sand.u32 %s275, 1
        %s9678 = smul.addr %s9677, 256
        %s9679 = scalar_lea.vmem [#allocation14], %s9678
        // Predicated region
        $region93: #{tpu_custom_call.1} parent=63 // pred_check
          %p9680 = pneg %p285
        $region94: #{tpu_custom_call.1} parent=63 // pred_check_branch
          %9682 = sbr.rel (%p9680) target = $region96
        $region95: #{tpu_custom_call.1} parent=63 // pred_region
          %9684 = vsyncadd %s9676, 0
          %s9685 = smul.addr %s31, 32
          %s9686 = smul.addr %s9685, 8
          %s9687 = scalar_lea.hbm %s11, %s9686
          %s9688 = sshll.u32 %s9679, 4
          %s9689 = int_to_ptr.vmem [resolvable:$true] %s9688
          %s9690 = sshll.u32 %s9687, 4
          %s9691 = int_to_ptr.hbm [resolvable:$true] %s9690
          %9696 = dma.vmem_to_hbm [thread:$0]  %s9689, 4096, %s9691, %s9676, 128, 128, 8
        $region96: #{tpu_custom_call.1} parent=63 // pred_fallthru
          _
      $region64: #{tpu_custom_call.1} parent=5 // pred_fallthru
        _
      %p9697 = scmp.le.s32.totalorder 2, %s26
      // Predicated region
      $region97: #{tpu_custom_call.1} parent=5 // pred_check
        %p9698 = pneg %p9697
      $region98: #{tpu_custom_call.1} parent=5 // pred_check_branch
        %9700 = sbr.rel (%p9698) target = $region100
      $region99: #{tpu_custom_call.1} parent=5 // pred_region
        %s9701 = ssub.s32 %s26, 2
        // Predicated region
        $region101: #{tpu_custom_call.1} parent=99 // pred_check
          %p9702 = pneg %p291
        $region102: #{tpu_custom_call.1} parent=99 // pred_check_branch
          %9704 = sbr.rel (%p9702) target = $region104
        $region103: #{tpu_custom_call.1} parent=99 // pred_region
          %s9705 = sand.u32 %s276, 1
          %s9706 = scalar_lea.sflag [#allocation4], %s9705
          %s9707 = sand.u32 %s276, 1
          %s9708 = smul.addr %s9707, 256
          %s9709 = scalar_lea.vmem [#allocation14], %s9708
          %9711 = dma.done %s9706, 4096
        $region104: #{tpu_custom_call.1} parent=99 // pred_fallthru
          _
      $region100: #{tpu_custom_call.1} parent=5 // pred_fallthru
        _
    $region6: #{tpu_custom_call.1} parent=1 // loop_footer
      %s30 = sadd.s32 1, %s26
    $region7: #{tpu_custom_call.1} parent=1 // loop_footer_branch
      %25 = sbr.rel target = $region3
    $region8: #{tpu_custom_call.1} parent=1 // loop_exit
      _
    %9712 = vsyncpa [#allocation3], 1
    %s9713 = scalar_lea.sflag [#allocation3], 1
    %9714 = vsyncpa %s9713, 1
    %9715 = vsyncpa [#allocation6], 1
    %9716 = vsyncpa [#allocation9], 1
    %9717 = vsyncpa [#allocation12], 1
    %9718 = vsyncpa [#allocation4], 1
    %s9719 = scalar_lea.sflag [#allocation4], 1
    %9720 = vsyncpa %s9719, 1

</llo_original>
